<compile_context>
chip_gen: v6e
topology: v6e:2x2x1
jax: 0.10.0
libtpu: 0.0.40
codegen_flags: <defaults>
</compile_context>

<pallas_src>
import jax
import jax.numpy as jnp
from jax.experimental import pallas as pl
from jax.experimental.pallas import tpu as pltpu

# Problem dimensions (consistent with the module's forward).
H, W, C_IN = 16, 16, 4
C_OUT = 32
K = 5
PAD = K // 2
N_CLASSES = 10
N_CLASSES_PAD = 128                      # lane-dense logits slab
POOL_OUT = (H - 3) // 2 + 1              # MaxPool2d(3, stride=2) -> 7
FLAT_DIM = C_OUT * POOL_OUT * POOL_OUT   # 32 * 7 * 7 = 1568
KKC = K * K * C_IN                       # im2col contraction = 100
KKC_PAD = 128                            # zero-padded to full lane width
HID1, HID2 = 256, 128
HW = H * W                               # 256 patch rows per image

B_TARGET = 64                            # images per grid step (VMEM-safe on v7x;
                                         # can be raised to 128-256 on v6e)


def fused_forward_kernel(p_ref, wc_ref, bc_ref, w1_ref, b1_ref,
                         w2_ref, b2_ref, w3_ref, b3_ref,
                         out_ref, flat_ref):
    """B images per grid step: conv5x5('same') as one matmul + ReLU +
    MaxPool(3,2) + flatten + 3-layer MLP."""
    B = out_ref.shape[0]

    # ---- conv as ONE MXU matmul over the whole block of B images.
    #      p_ref: (B*256, 128) bf16 im2col patches (lanes 100..127 are zero,
    #      matching the zero rows of wc_ref).  f32 accumulation.
    conv = jnp.dot(p_ref[...], wc_ref[...],
                   preferred_element_type=jnp.float32)           # (B*256, 32) f32
    y = jnp.maximum(conv + bc_ref[...], 0.0).astype(jnp.bfloat16)
    y = y.reshape(B, H, W, C_OUT)                                # tile-aligned reshape

    # ---- MaxPool2d(kernel=3, stride=2): shifted elementwise maxima, even
    #      window starts picked via minor-dim-preserving reshapes.
    rmax = jnp.maximum(jnp.maximum(y[:, 0:2 * POOL_OUT],
                                   y[:, 1:2 * POOL_OUT + 1]),
                       y[:, 2:2 * POOL_OUT + 2])                 # (B, 14, 16, 32)
    rsel = rmax.reshape(B, POOL_OUT, 2, W, C_OUT)[:, :, 0]       # rows 0,2,..,12
    cmax = jnp.maximum(jnp.maximum(rsel[:, :, 0:2 * POOL_OUT],
                                   rsel[:, :, 1:2 * POOL_OUT + 1]),
                       rsel[:, :, 2:2 * POOL_OUT + 2])           # (B, 7, 14, 32)
    pooled = cmax.reshape(B, POOL_OUT, POOL_OUT, 2, C_OUT)[:, :, :, 0]  # (B,7,7,32)

    # ---- Flatten to a lane-dense (B, 1568) bf16 slab.  w1's rows were
    #      pre-permuted at init so this NHWC-ordered flatten reproduces
    #      PyTorch's NCHW Flatten.  Each store moves (B, 32) -> B sublanes.
    for i in range(POOL_OUT):
        for j in range(POOL_OUT):
            off = (i * POOL_OUT + j) * C_OUT
            flat_ref[:, pl.ds(off, C_OUT)] = pooled[:, i, j, :]
    flat = flat_ref[...]                                         # (B, 1568) bf16

    # ---- MLP: bf16 MXU operands, f32 accumulation, f32 elementwise (v5e-safe).
    h = jnp.dot(flat, w1_ref[...], preferred_element_type=jnp.float32) + b1_ref[...]
    h = jnp.maximum(h, 0.0).astype(jnp.bfloat16)
    h = jnp.dot(h, w2_ref[...], preferred_element_type=jnp.float32) + b2_ref[...]
    h = jnp.maximum(h, 0.0).astype(jnp.bfloat16)
    out_ref[...] = jnp.dot(h, w3_ref[...],
                           preferred_element_type=jnp.float32) + b3_ref[...]


def _fixed(shape):
    """BlockSpec for a weight/bias that is identical for every grid step."""
    return pl.BlockSpec(shape, lambda b: (0,) * len(shape))


def _round_up(x, m):
    return ((x + m - 1) // m) * m


def _im2col_patches(x_nhwc):
    """(N,H,W,C) f32 -> (N*H*W, 128) bf16 im2col patches.  Feature order
    (kh, kw, c) with c fastest (matches conv_w row order); lanes 100..127
    zero-padded so they contract against zero weight rows."""
    xp = jnp.pad(x_nhwc, ((0, 0), (PAD, PAD), (PAD, PAD), (0, 0)))
    cols = [xp[:, kh:kh + H, kw:kw + W, :]
            for kh in range(K) for kw in range(K)]
    patches = jnp.concatenate(cols, axis=-1)                      # (N, H, W, 100)
    patches = jnp.pad(patches, ((0, 0), (0, 0), (0, 0), (0, KKC_PAD - KKC)))
    return patches.reshape(-1, KKC_PAD).astype(jnp.bfloat16)      # (N*256, 128)


def init_params(key):
    """Synthetic parameters (uniform +/- 1/sqrt(fan_in), like PyTorch defaults),
    pre-laid-out for the kernel: conv weight as a zero-padded (128, 32) im2col
    matrix, w1 row-permuted for the NHWC flatten, w3/b3 zero-padded to 128
    output lanes.  Matmul weights are stored in bf16, biases in f32."""
    ks = jax.random.split(key, 8)

    def u(k, shape, fan_in):
        bound = 1.0 / jnp.sqrt(float(fan_in))
        return jax.random.uniform(k, shape, jnp.float32, -bound, bound)

    conv_fan_in = C_IN * K * K

    # Conv weight (K, K, C_IN, C_OUT) -> (100, 32) -> zero-pad rows to (128, 32).
    conv_w = u(ks[0], (K, K, C_IN, C_OUT), conv_fan_in).reshape(KKC, C_OUT)
    conv_w = jnp.pad(conv_w, ((0, KKC_PAD - KKC), (0, 0))).astype(jnp.bfloat16)

    # w1 generated in PyTorch Flatten (C, H, W) row order, then row-permuted so
    # the kernel can consume the NHWC-ordered flatten directly:
    #   nhwc flat index f = (i*7 + j)*32 + c   maps to   pt row c*49 + i*7 + j.
    w1_pt = u(ks[2], (FLAT_DIM, HID1), FLAT_DIM).astype(jnp.bfloat16)
    f = jnp.arange(FLAT_DIM)
    perm = (f % C_OUT) * (POOL_OUT * POOL_OUT) + f // C_OUT
    w1_nhwc = w1_pt[perm, :]

    w3 = u(ks[6], (HID2, N_CLASSES), HID2).astype(jnp.bfloat16)
    b3 = u(ks[7], (1, N_CLASSES), HID2)

    return {
        "conv_w": conv_w,                                            # (128, 32) bf16
        "conv_b": u(ks[1], (1, C_OUT), conv_fan_in),                 # f32
        "w1_pt": w1_pt,                                              # reference only
        "w1": w1_nhwc,                                               # (1568, 256) bf16
        "b1": u(ks[3], (1, HID1), FLAT_DIM),
        "w2": u(ks[4], (HID1, HID2), HID1).astype(jnp.bfloat16),
        "b2": u(ks[5], (1, HID2), HID1),
        "w3": jnp.pad(w3, ((0, 0), (0, N_CLASSES_PAD - N_CLASSES))),  # (128, 128) bf16
        "b3": jnp.pad(b3, ((0, 0), (0, N_CLASSES_PAD - N_CLASSES))),  # (1, 128) f32
    }


@jax.jit
def simple_model_forward(x_nchw, params):
    n = x_nchw.shape[0]
    # PyTorch NCHW -> NHWC, then im2col in XLA (per perf review): the kernel
    # starts at the conv matmul and never touches the lane-sparse raw layout.
    x_nhwc = jnp.transpose(x_nchw, (0, 2, 3, 1)).astype(jnp.float32)
    patches = _im2col_patches(x_nhwc)                              # (n*256, 128) bf16

    # Per-step image block B: amortizes grid-step overhead and fills MXU rows.
    b_step = min(B_TARGET, _round_up(n, 8))
    n_pad = _round_up(n, b_step)
    if n_pad != n:
        patches = jnp.pad(patches, ((0, (n_pad - n) * HW), (0, 0)))  # zero rows

    out_padded = pl.pallas_call(
        fused_forward_kernel,
        out_shape=jax.ShapeDtypeStruct((n_pad, N_CLASSES_PAD), jnp.float32),
        grid_spec=pltpu.PrefetchScalarGridSpec(
            num_scalar_prefetch=0,
            grid=(n_pad // b_step,),
            in_specs=[
                pl.BlockSpec((b_step * HW, KKC_PAD), lambda b: (b, 0)),  # patches
                _fixed((KKC_PAD, C_OUT)),        # conv_w
                _fixed((1, C_OUT)),              # conv_b
                _fixed((FLAT_DIM, HID1)),        # w1
                _fixed((1, HID1)),               # b1
                _fixed((HID1, HID2)),            # w2
                _fixed((1, HID2)),               # b2
                _fixed((HID2, N_CLASSES_PAD)),   # w3 (zero-padded cols)
                _fixed((1, N_CLASSES_PAD)),      # b3 (zero-padded cols)
            ],
            out_specs=pl.BlockSpec((b_step, N_CLASSES_PAD), lambda b: (b, 0)),
            scratch_shapes=[
                pltpu.VMEM((b_step, FLAT_DIM), jnp.bfloat16),  # flatten slab
            ],
        ),
        compiler_params=pltpu.CompilerParams(
            dimension_semantics=("parallel",),     # v7x: batch blocks split across TCs
            vmem_limit_bytes=48 * 1024 * 1024,     # headroom for B=64 blocks, < v7x 64 MiB
        ),
    )(patches, params["conv_w"], params["conv_b"],
      params["w1"], params["b1"], params["w2"], params["b2"],
      params["w3"], params["b3"])

    return out_padded[:n, :N_CLASSES]


@jax.jit
def reference_forward(x_nchw, params):
    """Pure-JAX reference with PyTorch semantics (NCHW Flatten, un-permuted w1)."""
    n = x_nchw.shape[0]
    x = jnp.transpose(x_nchw, (0, 2, 3, 1)).astype(jnp.float32)
    w = params["conv_w"][:KKC].astype(jnp.float32).reshape(K, K, C_IN, C_OUT)
    y = jax.lax.conv_general_dilated(
        x, w, window_strides=(1, 1), padding="SAME",
        dimension_numbers=("NHWC", "HWIO", "NHWC"))
    y = jnp.maximum(y + params["conv_b"].reshape(1, 1, 1, C_OUT), 0.0)
    y = jax.lax.reduce_window(y, -jnp.inf, jax.lax.max,
                              (1, 3, 3, 1), (1, 2, 2, 1), "VALID")
    flat = jnp.transpose(y, (0, 3, 1, 2)).reshape(n, FLAT_DIM)   # PyTorch Flatten
    h = jnp.maximum(flat @ params["w1_pt"].astype(jnp.float32) + params["b1"], 0.0)
    h = jnp.maximum(h @ params["w2"].astype(jnp.float32) + params["b2"], 0.0)
    return (h @ params["w3"][:, :N_CLASSES].astype(jnp.float32)
            + params["b3"][:, :N_CLASSES])


if __name__ == "__main__":
    key = jax.random.PRNGKey(0)
    k_param, k_input = jax.random.split(key)

    params = init_params(k_param)
    # PyTorch-style NCHW input: batch=2, C=4, H=W=16.
    x = jax.random.normal(k_input, (2, C_IN, H, W), jnp.float32)

    logits = simple_model_forward(x, params)
    jax.block_until_ready(logits)
    assert logits.shape == (2, N_CLASSES) and logits.dtype == jnp.float32

    ref = reference_forward(x, params)
    assert jnp.allclose(logits, ref, atol=2e-2, rtol=2e-2), (
        "max |diff| = %f" % float(jnp.max(jnp.abs(logits - ref))))

    print("KERNEL_OK")
</pallas_src>

<mosaic_0001>
module attributes {stable_mosaic.version = 11 : i64} {
  func.func @fused_forward_kernel(%arg0: i32, %arg1: memref<2048x128xbf16, #tpu.memory_space<vmem>>, %arg2: memref<128x32xbf16, #tpu.memory_space<vmem>>, %arg3: memref<1x32xf32, #tpu.memory_space<vmem>>, %arg4: memref<1568x256xbf16, #tpu.memory_space<vmem>>, %arg5: memref<1x256xf32, #tpu.memory_space<vmem>>, %arg6: memref<256x128xbf16, #tpu.memory_space<vmem>>, %arg7: memref<1x128xf32, #tpu.memory_space<vmem>>, %arg8: memref<128x128xbf16, #tpu.memory_space<vmem>>, %arg9: memref<1x128xf32, #tpu.memory_space<vmem>>, %arg10: memref<8x128xf32, #tpu.memory_space<vmem>>, %arg11: memref<8x1568xbf16, #tpu.memory_space<vmem>>) attributes {dimension_semantics = [#tpu.dimension_semantics<parallel>], iteration_bounds = array<i64: 1>, scalar_prefetch = 0 : i64, scratch_operands = 1 : i64, tpu.core_type = #tpu.core_type<tc>, window_params = [{transform_indices = @transform_0, window_bounds = array<i64: 2048, 128>}, {pipeline_mode = #tpu.pipeline_mode<synchronous>, transform_indices = @transform_1, window_bounds = array<i64: 128, 32>}, {pipeline_mode = #tpu.pipeline_mode<synchronous>, transform_indices = @transform_2, window_bounds = array<i64: 1, 32>}, {pipeline_mode = #tpu.pipeline_mode<synchronous>, transform_indices = @transform_3, window_bounds = array<i64: 1568, 256>}, {pipeline_mode = #tpu.pipeline_mode<synchronous>, transform_indices = @transform_4, window_bounds = array<i64: 1, 256>}, {pipeline_mode = #tpu.pipeline_mode<synchronous>, transform_indices = @transform_5, window_bounds = array<i64: 256, 128>}, {pipeline_mode = #tpu.pipeline_mode<synchronous>, transform_indices = @transform_6, window_bounds = array<i64: 1, 128>}, {pipeline_mode = #tpu.pipeline_mode<synchronous>, transform_indices = @transform_7, window_bounds = array<i64: 128, 128>}, {pipeline_mode = #tpu.pipeline_mode<synchronous>, transform_indices = @transform_8, window_bounds = array<i64: 1, 128>}, {transform_indices = @transform_9, window_bounds = array<i64: 8, 128>}]} {
    %c0 = arith.constant 0 : index
    %c0_0 = arith.constant 0 : index
    %0 = vector.load %arg1[%c0, %c0_0] : memref<2048x128xbf16, #tpu.memory_space<vmem>>, vector<2048x128xbf16>
    %c0_1 = arith.constant 0 : index
    %c0_2 = arith.constant 0 : index
    %1 = vector.load %arg2[%c0_1, %c0_2] : memref<128x32xbf16, #tpu.memory_space<vmem>>, vector<128x32xbf16>
    %cst = arith.constant dense<0.000000e+00> : vector<2048x32xf32>
    %2 = tpu.matmul %0, %1, %cst {dimension_numbers = #tpu.dot_dimension_numbers<[1], [0], [0], [1], [0, 0, 1, 1], [], []>} : vector<2048x128xbf16>, vector<128x32xbf16>, vector<2048x32xf32> -> vector<2048x32xf32>
    %c0_3 = arith.constant 0 : index
    %c0_4 = arith.constant 0 : index
    %3 = vector.load %arg3[%c0_3, %c0_4] : memref<1x32xf32, #tpu.memory_space<vmem>>, vector<1x32xf32>
    %4 = vector.broadcast %3 : vector<1x32xf32> to vector<2048x32xf32>
    %5 = arith.addf %2, %4 : vector<2048x32xf32>
    %cst_5 = arith.constant 0.000000e+00 : f32
    %6 = vector.broadcast %cst_5 : f32 to vector<2048x32xf32>
    %7 = arith.maximumf %5, %6 : vector<2048x32xf32>
    %8 = arith.truncf %7 : vector<2048x32xf32> to vector<2048x32xbf16>
    %9 = vector.shape_cast %8 : vector<2048x32xbf16> to vector<8x16x16x32xbf16>
    %10 = vector.extract_strided_slice %9 {offsets = [0, 0, 0, 0], sizes = [8, 14, 16, 32], strides = [1, 1, 1, 1]} : vector<8x16x16x32xbf16> to vector<8x14x16x32xbf16>
    %11 = vector.extract_strided_slice %9 {offsets = [0, 1, 0, 0], sizes = [8, 14, 16, 32], strides = [1, 1, 1, 1]} : vector<8x16x16x32xbf16> to vector<8x14x16x32xbf16>
    %12 = arith.maximumf %10, %11 : vector<8x14x16x32xbf16>
    %13 = vector.extract_strided_slice %9 {offsets = [0, 2, 0, 0], sizes = [8, 14, 16, 32], strides = [1, 1, 1, 1]} : vector<8x16x16x32xbf16> to vector<8x14x16x32xbf16>
    %14 = arith.maximumf %12, %13 : vector<8x14x16x32xbf16>
    %15 = vector.shape_cast %14 : vector<8x14x16x32xbf16> to vector<8x7x2x16x32xbf16>
    %16 = vector.extract_strided_slice %15 {offsets = [0, 0, 0, 0, 0], sizes = [8, 7, 1, 16, 32], strides = [1, 1, 1, 1, 1]} : vector<8x7x2x16x32xbf16> to vector<8x7x1x16x32xbf16>
    %17 = vector.shape_cast %16 : vector<8x7x1x16x32xbf16> to vector<8x7x16x32xbf16>
    %18 = vector.extract_strided_slice %17 {offsets = [0, 0, 0, 0], sizes = [8, 7, 14, 32], strides = [1, 1, 1, 1]} : vector<8x7x16x32xbf16> to vector<8x7x14x32xbf16>
    %19 = vector.extract_strided_slice %17 {offsets = [0, 0, 1, 0], sizes = [8, 7, 14, 32], strides = [1, 1, 1, 1]} : vector<8x7x16x32xbf16> to vector<8x7x14x32xbf16>
    %20 = arith.maximumf %18, %19 : vector<8x7x14x32xbf16>
    %21 = vector.extract_strided_slice %17 {offsets = [0, 0, 2, 0], sizes = [8, 7, 14, 32], strides = [1, 1, 1, 1]} : vector<8x7x16x32xbf16> to vector<8x7x14x32xbf16>
    %22 = arith.maximumf %20, %21 : vector<8x7x14x32xbf16>
    %23 = vector.shape_cast %22 : vector<8x7x14x32xbf16> to vector<8x7x7x2x32xbf16>
    %24 = vector.extract_strided_slice %23 {offsets = [0, 0, 0, 0, 0], sizes = [8, 7, 7, 1, 32], strides = [1, 1, 1, 1, 1]} : vector<8x7x7x2x32xbf16> to vector<8x7x7x1x32xbf16>
    %25 = vector.shape_cast %24 : vector<8x7x7x1x32xbf16> to vector<8x7x7x32xbf16>
    %26 = vector.extract_strided_slice %25 {offsets = [0, 0, 0, 0], sizes = [8, 1, 1, 32], strides = [1, 1, 1, 1]} : vector<8x7x7x32xbf16> to vector<8x1x1x32xbf16>
    %27 = vector.shape_cast %26 : vector<8x1x1x32xbf16> to vector<8x32xbf16>
    %c0_6 = arith.constant 0 : index
    %c0_7 = arith.constant 0 : index
    %28 = vector.load %arg11[%c0_6, %c0_7] : memref<8x1568xbf16, #tpu.memory_space<vmem>>, vector<8x32xbf16>
    tpu.vector_store %arg11[%c0_6, %c0_7], %27 {strides = array<i32>} : memref<8x1568xbf16, #tpu.memory_space<vmem>>, vector<8x32xbf16>,
    %29 = vector.extract_strided_slice %25 {offsets = [0, 0, 1, 0], sizes = [8, 1, 1, 32], strides = [1, 1, 1, 1]} : vector<8x7x7x32xbf16> to vector<8x1x1x32xbf16>
    %30 = vector.shape_cast %29 : vector<8x1x1x32xbf16> to vector<8x32xbf16>
    %c0_8 = arith.constant 0 : index
    %c32 = arith.constant 32 : index
    %31 = vector.load %arg11[%c0_8, %c32] : memref<8x1568xbf16, #tpu.memory_space<vmem>>, vector<8x32xbf16>
    tpu.vector_store %arg11[%c0_8, %c32], %30 {strides = array<i32>} : memref<8x1568xbf16, #tpu.memory_space<vmem>>, vector<8x32xbf16>,
    %32 = vector.extract_strided_slice %25 {offsets = [0, 0, 2, 0], sizes = [8, 1, 1, 32], strides = [1, 1, 1, 1]} : vector<8x7x7x32xbf16> to vector<8x1x1x32xbf16>
    %33 = vector.shape_cast %32 : vector<8x1x1x32xbf16> to vector<8x32xbf16>
    %c0_9 = arith.constant 0 : index
    %c64 = arith.constant 64 : index
    %34 = vector.load %arg11[%c0_9, %c64] : memref<8x1568xbf16, #tpu.memory_space<vmem>>, vector<8x32xbf16>
    tpu.vector_store %arg11[%c0_9, %c64], %33 {strides = array<i32>} : memref<8x1568xbf16, #tpu.memory_space<vmem>>, vector<8x32xbf16>,
    %35 = vector.extract_strided_slice %25 {offsets = [0, 0, 3, 0], sizes = [8, 1, 1, 32], strides = [1, 1, 1, 1]} : vector<8x7x7x32xbf16> to vector<8x1x1x32xbf16>
    %36 = vector.shape_cast %35 : vector<8x1x1x32xbf16> to vector<8x32xbf16>
    %c0_10 = arith.constant 0 : index
    %c96 = arith.constant 96 : index
    %37 = vector.load %arg11[%c0_10, %c96] : memref<8x1568xbf16, #tpu.memory_space<vmem>>, vector<8x32xbf16>
    tpu.vector_store %arg11[%c0_10, %c96], %36 {strides = array<i32>} : memref<8x1568xbf16, #tpu.memory_space<vmem>>, vector<8x32xbf16>,
    %38 = vector.extract_strided_slice %25 {offsets = [0, 0, 4, 0], sizes = [8, 1, 1, 32], strides = [1, 1, 1, 1]} : vector<8x7x7x32xbf16> to vector<8x1x1x32xbf16>
    %39 = vector.shape_cast %38 : vector<8x1x1x32xbf16> to vector<8x32xbf16>
    %c0_11 = arith.constant 0 : index
    %c128 = arith.constant 128 : index
    %40 = vector.load %arg11[%c0_11, %c128] : memref<8x1568xbf16, #tpu.memory_space<vmem>>, vector<8x32xbf16>
    tpu.vector_store %arg11[%c0_11, %c128], %39 {strides = array<i32>} : memref<8x1568xbf16, #tpu.memory_space<vmem>>, vector<8x32xbf16>,
    %41 = vector.extract_strided_slice %25 {offsets = [0, 0, 5, 0], sizes = [8, 1, 1, 32], strides = [1, 1, 1, 1]} : vector<8x7x7x32xbf16> to vector<8x1x1x32xbf16>
    %42 = vector.shape_cast %41 : vector<8x1x1x32xbf16> to vector<8x32xbf16>
    %c0_12 = arith.constant 0 : index
    %c160 = arith.constant 160 : index
    %43 = vector.load %arg11[%c0_12, %c160] : memref<8x1568xbf16, #tpu.memory_space<vmem>>, vector<8x32xbf16>
    tpu.vector_store %arg11[%c0_12, %c160], %42 {strides = array<i32>} : memref<8x1568xbf16, #tpu.memory_space<vmem>>, vector<8x32xbf16>,
    %44 = vector.extract_strided_slice %25 {offsets = [0, 0, 6, 0], sizes = [8, 1, 1, 32], strides = [1, 1, 1, 1]} : vector<8x7x7x32xbf16> to vector<8x1x1x32xbf16>
    %45 = vector.shape_cast %44 : vector<8x1x1x32xbf16> to vector<8x32xbf16>
    %c0_13 = arith.constant 0 : index
    %c192 = arith.constant 192 : index
    %46 = vector.load %arg11[%c0_13, %c192] : memref<8x1568xbf16, #tpu.memory_space<vmem>>, vector<8x32xbf16>
    tpu.vector_store %arg11[%c0_13, %c192], %45 {strides = array<i32>} : memref<8x1568xbf16, #tpu.memory_space<vmem>>, vector<8x32xbf16>,
    %47 = vector.extract_strided_slice %25 {offsets = [0, 1, 0, 0], sizes = [8, 1, 1, 32], strides = [1, 1, 1, 1]} : vector<8x7x7x32xbf16> to vector<8x1x1x32xbf16>
    %48 = vector.shape_cast %47 : vector<8x1x1x32xbf16> to vector<8x32xbf16>
    %c0_14 = arith.constant 0 : index
    %c224 = arith.constant 224 : index
    %49 = vector.load %arg11[%c0_14, %c224] : memref<8x1568xbf16, #tpu.memory_space<vmem>>, vector<8x32xbf16>
    tpu.vector_store %arg11[%c0_14, %c224], %48 {strides = array<i32>} : memref<8x1568xbf16, #tpu.memory_space<vmem>>, vector<8x32xbf16>,
    %50 = vector.extract_strided_slice %25 {offsets = [0, 1, 1, 0], sizes = [8, 1, 1, 32], strides = [1, 1, 1, 1]} : vector<8x7x7x32xbf16> to vector<8x1x1x32xbf16>
    %51 = vector.shape_cast %50 : vector<8x1x1x32xbf16> to vector<8x32xbf16>
    %c0_15 = arith.constant 0 : index
    %c256 = arith.constant 256 : index
    %52 = vector.load %arg11[%c0_15, %c256] : memref<8x1568xbf16, #tpu.memory_space<vmem>>, vector<8x32xbf16>
    tpu.vector_store %arg11[%c0_15, %c256], %51 {strides = array<i32>} : memref<8x1568xbf16, #tpu.memory_space<vmem>>, vector<8x32xbf16>,
    %53 = vector.extract_strided_slice %25 {offsets = [0, 1, 2, 0], sizes = [8, 1, 1, 32], strides = [1, 1, 1, 1]} : vector<8x7x7x32xbf16> to vector<8x1x1x32xbf16>
    %54 = vector.shape_cast %53 : vector<8x1x1x32xbf16> to vector<8x32xbf16>
    %c0_16 = arith.constant 0 : index
    %c288 = arith.constant 288 : index
    %55 = vector.load %arg11[%c0_16, %c288] : memref<8x1568xbf16, #tpu.memory_space<vmem>>, vector<8x32xbf16>
    tpu.vector_store %arg11[%c0_16, %c288], %54 {strides = array<i32>} : memref<8x1568xbf16, #tpu.memory_space<vmem>>, vector<8x32xbf16>,
    %56 = vector.extract_strided_slice %25 {offsets = [0, 1, 3, 0], sizes = [8, 1, 1, 32], strides = [1, 1, 1, 1]} : vector<8x7x7x32xbf16> to vector<8x1x1x32xbf16>
    %57 = vector.shape_cast %56 : vector<8x1x1x32xbf16> to vector<8x32xbf16>
    %c0_17 = arith.constant 0 : index
    %c320 = arith.constant 320 : index
    %58 = vector.load %arg11[%c0_17, %c320] : memref<8x1568xbf16, #tpu.memory_space<vmem>>, vector<8x32xbf16>
    tpu.vector_store %arg11[%c0_17, %c320], %57 {strides = array<i32>} : memref<8x1568xbf16, #tpu.memory_space<vmem>>, vector<8x32xbf16>,
    %59 = vector.extract_strided_slice %25 {offsets = [0, 1, 4, 0], sizes = [8, 1, 1, 32], strides = [1, 1, 1, 1]} : vector<8x7x7x32xbf16> to vector<8x1x1x32xbf16>
    %60 = vector.shape_cast %59 : vector<8x1x1x32xbf16> to vector<8x32xbf16>
    %c0_18 = arith.constant 0 : index
    %c352 = arith.constant 352 : index
    %61 = vector.load %arg11[%c0_18, %c352] : memref<8x1568xbf16, #tpu.memory_space<vmem>>, vector<8x32xbf16>
    tpu.vector_store %arg11[%c0_18, %c352], %60 {strides = array<i32>} : memref<8x1568xbf16, #tpu.memory_space<vmem>>, vector<8x32xbf16>,
    %62 = vector.extract_strided_slice %25 {offsets = [0, 1, 5, 0], sizes = [8, 1, 1, 32], strides = [1, 1, 1, 1]} : vector<8x7x7x32xbf16> to vector<8x1x1x32xbf16>
    %63 = vector.shape_cast %62 : vector<8x1x1x32xbf16> to vector<8x32xbf16>
    %c0_19 = arith.constant 0 : index
    %c384 = arith.constant 384 : index
    %64 = vector.load %arg11[%c0_19, %c384] : memref<8x1568xbf16, #tpu.memory_space<vmem>>, vector<8x32xbf16>
    tpu.vector_store %arg11[%c0_19, %c384], %63 {strides = array<i32>} : memref<8x1568xbf16, #tpu.memory_space<vmem>>, vector<8x32xbf16>,
    %65 = vector.extract_strided_slice %25 {offsets = [0, 1, 6, 0], sizes = [8, 1, 1, 32], strides = [1, 1, 1, 1]} : vector<8x7x7x32xbf16> to vector<8x1x1x32xbf16>
    %66 = vector.shape_cast %65 : vector<8x1x1x32xbf16> to vector<8x32xbf16>
    %c0_20 = arith.constant 0 : index
    %c416 = arith.constant 416 : index
    %67 = vector.load %arg11[%c0_20, %c416] : memref<8x1568xbf16, #tpu.memory_space<vmem>>, vector<8x32xbf16>
    tpu.vector_store %arg11[%c0_20, %c416], %66 {strides = array<i32>} : memref<8x1568xbf16, #tpu.memory_space<vmem>>, vector<8x32xbf16>,
    %68 = vector.extract_strided_slice %25 {offsets = [0, 2, 0, 0], sizes = [8, 1, 1, 32], strides = [1, 1, 1, 1]} : vector<8x7x7x32xbf16> to vector<8x1x1x32xbf16>
    %69 = vector.shape_cast %68 : vector<8x1x1x32xbf16> to vector<8x32xbf16>
    %c0_21 = arith.constant 0 : index
    %c448 = arith.constant 448 : index
    %70 = vector.load %arg11[%c0_21, %c448] : memref<8x1568xbf16, #tpu.memory_space<vmem>>, vector<8x32xbf16>
    tpu.vector_store %arg11[%c0_21, %c448], %69 {strides = array<i32>} : memref<8x1568xbf16, #tpu.memory_space<vmem>>, vector<8x32xbf16>,
    %71 = vector.extract_strided_slice %25 {offsets = [0, 2, 1, 0], sizes = [8, 1, 1, 32], strides = [1, 1, 1, 1]} : vector<8x7x7x32xbf16> to vector<8x1x1x32xbf16>
    %72 = vector.shape_cast %71 : vector<8x1x1x32xbf16> to vector<8x32xbf16>
    %c0_22 = arith.constant 0 : index
    %c480 = arith.constant 480 : index
    %73 = vector.load %arg11[%c0_22, %c480] : memref<8x1568xbf16, #tpu.memory_space<vmem>>, vector<8x32xbf16>
    tpu.vector_store %arg11[%c0_22, %c480], %72 {strides = array<i32>} : memref<8x1568xbf16, #tpu.memory_space<vmem>>, vector<8x32xbf16>,
    %74 = vector.extract_strided_slice %25 {offsets = [0, 2, 2, 0], sizes = [8, 1, 1, 32], strides = [1, 1, 1, 1]} : vector<8x7x7x32xbf16> to vector<8x1x1x32xbf16>
    %75 = vector.shape_cast %74 : vector<8x1x1x32xbf16> to vector<8x32xbf16>
    %c0_23 = arith.constant 0 : index
    %c512 = arith.constant 512 : index
    %76 = vector.load %arg11[%c0_23, %c512] : memref<8x1568xbf16, #tpu.memory_space<vmem>>, vector<8x32xbf16>
    tpu.vector_store %arg11[%c0_23, %c512], %75 {strides = array<i32>} : memref<8x1568xbf16, #tpu.memory_space<vmem>>, vector<8x32xbf16>,
    %77 = vector.extract_strided_slice %25 {offsets = [0, 2, 3, 0], sizes = [8, 1, 1, 32], strides = [1, 1, 1, 1]} : vector<8x7x7x32xbf16> to vector<8x1x1x32xbf16>
    %78 = vector.shape_cast %77 : vector<8x1x1x32xbf16> to vector<8x32xbf16>
    %c0_24 = arith.constant 0 : index
    %c544 = arith.constant 544 : index
    %79 = vector.load %arg11[%c0_24, %c544] : memref<8x1568xbf16, #tpu.memory_space<vmem>>, vector<8x32xbf16>
    tpu.vector_store %arg11[%c0_24, %c544], %78 {strides = array<i32>} : memref<8x1568xbf16, #tpu.memory_space<vmem>>, vector<8x32xbf16>,
    %80 = vector.extract_strided_slice %25 {offsets = [0, 2, 4, 0], sizes = [8, 1, 1, 32], strides = [1, 1, 1, 1]} : vector<8x7x7x32xbf16> to vector<8x1x1x32xbf16>
    %81 = vector.shape_cast %80 : vector<8x1x1x32xbf16> to vector<8x32xbf16>
    %c0_25 = arith.constant 0 : index
    %c576 = arith.constant 576 : index
    %82 = vector.load %arg11[%c0_25, %c576] : memref<8x1568xbf16, #tpu.memory_space<vmem>>, vector<8x32xbf16>
    tpu.vector_store %arg11[%c0_25, %c576], %81 {strides = array<i32>} : memref<8x1568xbf16, #tpu.memory_space<vmem>>, vector<8x32xbf16>,
    %83 = vector.extract_strided_slice %25 {offsets = [0, 2, 5, 0], sizes = [8, 1, 1, 32], strides = [1, 1, 1, 1]} : vector<8x7x7x32xbf16> to vector<8x1x1x32xbf16>
    %84 = vector.shape_cast %83 : vector<8x1x1x32xbf16> to vector<8x32xbf16>
    %c0_26 = arith.constant 0 : index
    %c608 = arith.constant 608 : index
    %85 = vector.load %arg11[%c0_26, %c608] : memref<8x1568xbf16, #tpu.memory_space<vmem>>, vector<8x32xbf16>
    tpu.vector_store %arg11[%c0_26, %c608], %84 {strides = array<i32>} : memref<8x1568xbf16, #tpu.memory_space<vmem>>, vector<8x32xbf16>,
    %86 = vector.extract_strided_slice %25 {offsets = [0, 2, 6, 0], sizes = [8, 1, 1, 32], strides = [1, 1, 1, 1]} : vector<8x7x7x32xbf16> to vector<8x1x1x32xbf16>
    %87 = vector.shape_cast %86 : vector<8x1x1x32xbf16> to vector<8x32xbf16>
    %c0_27 = arith.constant 0 : index
    %c640 = arith.constant 640 : index
    %88 = vector.load %arg11[%c0_27, %c640] : memref<8x1568xbf16, #tpu.memory_space<vmem>>, vector<8x32xbf16>
    tpu.vector_store %arg11[%c0_27, %c640], %87 {strides = array<i32>} : memref<8x1568xbf16, #tpu.memory_space<vmem>>, vector<8x32xbf16>,
    %89 = vector.extract_strided_slice %25 {offsets = [0, 3, 0, 0], sizes = [8, 1, 1, 32], strides = [1, 1, 1, 1]} : vector<8x7x7x32xbf16> to vector<8x1x1x32xbf16>
    %90 = vector.shape_cast %89 : vector<8x1x1x32xbf16> to vector<8x32xbf16>
    %c0_28 = arith.constant 0 : index
    %c672 = arith.constant 672 : index
    %91 = vector.load %arg11[%c0_28, %c672] : memref<8x1568xbf16, #tpu.memory_space<vmem>>, vector<8x32xbf16>
    tpu.vector_store %arg11[%c0_28, %c672], %90 {strides = array<i32>} : memref<8x1568xbf16, #tpu.memory_space<vmem>>, vector<8x32xbf16>,
    %92 = vector.extract_strided_slice %25 {offsets = [0, 3, 1, 0], sizes = [8, 1, 1, 32], strides = [1, 1, 1, 1]} : vector<8x7x7x32xbf16> to vector<8x1x1x32xbf16>
    %93 = vector.shape_cast %92 : vector<8x1x1x32xbf16> to vector<8x32xbf16>
    %c0_29 = arith.constant 0 : index
    %c704 = arith.constant 704 : index
    %94 = vector.load %arg11[%c0_29, %c704] : memref<8x1568xbf16, #tpu.memory_space<vmem>>, vector<8x32xbf16>
    tpu.vector_store %arg11[%c0_29, %c704], %93 {strides = array<i32>} : memref<8x1568xbf16, #tpu.memory_space<vmem>>, vector<8x32xbf16>,
    %95 = vector.extract_strided_slice %25 {offsets = [0, 3, 2, 0], sizes = [8, 1, 1, 32], strides = [1, 1, 1, 1]} : vector<8x7x7x32xbf16> to vector<8x1x1x32xbf16>
    %96 = vector.shape_cast %95 : vector<8x1x1x32xbf16> to vector<8x32xbf16>
    %c0_30 = arith.constant 0 : index
    %c736 = arith.constant 736 : index
    %97 = vector.load %arg11[%c0_30, %c736] : memref<8x1568xbf16, #tpu.memory_space<vmem>>, vector<8x32xbf16>
    tpu.vector_store %arg11[%c0_30, %c736], %96 {strides = array<i32>} : memref<8x1568xbf16, #tpu.memory_space<vmem>>, vector<8x32xbf16>,
    %98 = vector.extract_strided_slice %25 {offsets = [0, 3, 3, 0], sizes = [8, 1, 1, 32], strides = [1, 1, 1, 1]} : vector<8x7x7x32xbf16> to vector<8x1x1x32xbf16>
    %99 = vector.shape_cast %98 : vector<8x1x1x32xbf16> to vector<8x32xbf16>
    %c0_31 = arith.constant 0 : index
    %c768 = arith.constant 768 : index
    %100 = vector.load %arg11[%c0_31, %c768] : memref<8x1568xbf16, #tpu.memory_space<vmem>>, vector<8x32xbf16>
    tpu.vector_store %arg11[%c0_31, %c768], %99 {strides = array<i32>} : memref<8x1568xbf16, #tpu.memory_space<vmem>>, vector<8x32xbf16>,
    %101 = vector.extract_strided_slice %25 {offsets = [0, 3, 4, 0], sizes = [8, 1, 1, 32], strides = [1, 1, 1, 1]} : vector<8x7x7x32xbf16> to vector<8x1x1x32xbf16>
    %102 = vector.shape_cast %101 : vector<8x1x1x32xbf16> to vector<8x32xbf16>
    %c0_32 = arith.constant 0 : index
    %c800 = arith.constant 800 : index
    %103 = vector.load %arg11[%c0_32, %c800] : memref<8x1568xbf16, #tpu.memory_space<vmem>>, vector<8x32xbf16>
    tpu.vector_store %arg11[%c0_32, %c800], %102 {strides = array<i32>} : memref<8x1568xbf16, #tpu.memory_space<vmem>>, vector<8x32xbf16>,
    %104 = vector.extract_strided_slice %25 {offsets = [0, 3, 5, 0], sizes = [8, 1, 1, 32], strides = [1, 1, 1, 1]} : vector<8x7x7x32xbf16> to vector<8x1x1x32xbf16>
    %105 = vector.shape_cast %104 : vector<8x1x1x32xbf16> to vector<8x32xbf16>
    %c0_33 = arith.constant 0 : index
    %c832 = arith.constant 832 : index
    %106 = vector.load %arg11[%c0_33, %c832] : memref<8x1568xbf16, #tpu.memory_space<vmem>>, vector<8x32xbf16>
    tpu.vector_store %arg11[%c0_33, %c832], %105 {strides = array<i32>} : memref<8x1568xbf16, #tpu.memory_space<vmem>>, vector<8x32xbf16>,
    %107 = vector.extract_strided_slice %25 {offsets = [0, 3, 6, 0], sizes = [8, 1, 1, 32], strides = [1, 1, 1, 1]} : vector<8x7x7x32xbf16> to vector<8x1x1x32xbf16>
    %108 = vector.shape_cast %107 : vector<8x1x1x32xbf16> to vector<8x32xbf16>
    %c0_34 = arith.constant 0 : index
    %c864 = arith.constant 864 : index
    %109 = vector.load %arg11[%c0_34, %c864] : memref<8x1568xbf16, #tpu.memory_space<vmem>>, vector<8x32xbf16>
    tpu.vector_store %arg11[%c0_34, %c864], %108 {strides = array<i32>} : memref<8x1568xbf16, #tpu.memory_space<vmem>>, vector<8x32xbf16>,
    %110 = vector.extract_strided_slice %25 {offsets = [0, 4, 0, 0], sizes = [8, 1, 1, 32], strides = [1, 1, 1, 1]} : vector<8x7x7x32xbf16> to vector<8x1x1x32xbf16>
    %111 = vector.shape_cast %110 : vector<8x1x1x32xbf16> to vector<8x32xbf16>
    %c0_35 = arith.constant 0 : index
    %c896 = arith.constant 896 : index
    %112 = vector.load %arg11[%c0_35, %c896] : memref<8x1568xbf16, #tpu.memory_space<vmem>>, vector<8x32xbf16>
    tpu.vector_store %arg11[%c0_35, %c896], %111 {strides = array<i32>} : memref<8x1568xbf16, #tpu.memory_space<vmem>>, vector<8x32xbf16>,
    %113 = vector.extract_strided_slice %25 {offsets = [0, 4, 1, 0], sizes = [8, 1, 1, 32], strides = [1, 1, 1, 1]} : vector<8x7x7x32xbf16> to vector<8x1x1x32xbf16>
    %114 = vector.shape_cast %113 : vector<8x1x1x32xbf16> to vector<8x32xbf16>
    %c0_36 = arith.constant 0 : index
    %c928 = arith.constant 928 : index
    %115 = vector.load %arg11[%c0_36, %c928] : memref<8x1568xbf16, #tpu.memory_space<vmem>>, vector<8x32xbf16>
    tpu.vector_store %arg11[%c0_36, %c928], %114 {strides = array<i32>} : memref<8x1568xbf16, #tpu.memory_space<vmem>>, vector<8x32xbf16>,
    %116 = vector.extract_strided_slice %25 {offsets = [0, 4, 2, 0], sizes = [8, 1, 1, 32], strides = [1, 1, 1, 1]} : vector<8x7x7x32xbf16> to vector<8x1x1x32xbf16>
    %117 = vector.shape_cast %116 : vector<8x1x1x32xbf16> to vector<8x32xbf16>
    %c0_37 = arith.constant 0 : index
    %c960 = arith.constant 960 : index
    %118 = vector.load %arg11[%c0_37, %c960] : memref<8x1568xbf16, #tpu.memory_space<vmem>>, vector<8x32xbf16>
    tpu.vector_store %arg11[%c0_37, %c960], %117 {strides = array<i32>} : memref<8x1568xbf16, #tpu.memory_space<vmem>>, vector<8x32xbf16>,
    %119 = vector.extract_strided_slice %25 {offsets = [0, 4, 3, 0], sizes = [8, 1, 1, 32], strides = [1, 1, 1, 1]} : vector<8x7x7x32xbf16> to vector<8x1x1x32xbf16>
    %120 = vector.shape_cast %119 : vector<8x1x1x32xbf16> to vector<8x32xbf16>
    %c0_38 = arith.constant 0 : index
    %c992 = arith.constant 992 : index
    %121 = vector.load %arg11[%c0_38, %c992] : memref<8x1568xbf16, #tpu.memory_space<vmem>>, vector<8x32xbf16>
    tpu.vector_store %arg11[%c0_38, %c992], %120 {strides = array<i32>} : memref<8x1568xbf16, #tpu.memory_space<vmem>>, vector<8x32xbf16>,
    %122 = vector.extract_strided_slice %25 {offsets = [0, 4, 4, 0], sizes = [8, 1, 1, 32], strides = [1, 1, 1, 1]} : vector<8x7x7x32xbf16> to vector<8x1x1x32xbf16>
    %123 = vector.shape_cast %122 : vector<8x1x1x32xbf16> to vector<8x32xbf16>
    %c0_39 = arith.constant 0 : index
    %c1024 = arith.constant 1024 : index
    %124 = vector.load %arg11[%c0_39, %c1024] : memref<8x1568xbf16, #tpu.memory_space<vmem>>, vector<8x32xbf16>
    tpu.vector_store %arg11[%c0_39, %c1024], %123 {strides = array<i32>} : memref<8x1568xbf16, #tpu.memory_space<vmem>>, vector<8x32xbf16>,
    %125 = vector.extract_strided_slice %25 {offsets = [0, 4, 5, 0], sizes = [8, 1, 1, 32], strides = [1, 1, 1, 1]} : vector<8x7x7x32xbf16> to vector<8x1x1x32xbf16>
    %126 = vector.shape_cast %125 : vector<8x1x1x32xbf16> to vector<8x32xbf16>
    %c0_40 = arith.constant 0 : index
    %c1056 = arith.constant 1056 : index
    %127 = vector.load %arg11[%c0_40, %c1056] : memref<8x1568xbf16, #tpu.memory_space<vmem>>, vector<8x32xbf16>
    tpu.vector_store %arg11[%c0_40, %c1056], %126 {strides = array<i32>} : memref<8x1568xbf16, #tpu.memory_space<vmem>>, vector<8x32xbf16>,
    %128 = vector.extract_strided_slice %25 {offsets = [0, 4, 6, 0], sizes = [8, 1, 1, 32], strides = [1, 1, 1, 1]} : vector<8x7x7x32xbf16> to vector<8x1x1x32xbf16>
    %129 = vector.shape_cast %128 : vector<8x1x1x32xbf16> to vector<8x32xbf16>
    %c0_41 = arith.constant 0 : index
    %c1088 = arith.constant 1088 : index
    %130 = vector.load %arg11[%c0_41, %c1088] : memref<8x1568xbf16, #tpu.memory_space<vmem>>, vector<8x32xbf16>
    tpu.vector_store %arg11[%c0_41, %c1088], %129 {strides = array<i32>} : memref<8x1568xbf16, #tpu.memory_space<vmem>>, vector<8x32xbf16>,
    %131 = vector.extract_strided_slice %25 {offsets = [0, 5, 0, 0], sizes = [8, 1, 1, 32], strides = [1, 1, 1, 1]} : vector<8x7x7x32xbf16> to vector<8x1x1x32xbf16>
    %132 = vector.shape_cast %131 : vector<8x1x1x32xbf16> to vector<8x32xbf16>
    %c0_42 = arith.constant 0 : index
    %c1120 = arith.constant 1120 : index
    %133 = vector.load %arg11[%c0_42, %c1120] : memref<8x1568xbf16, #tpu.memory_space<vmem>>, vector<8x32xbf16>
    tpu.vector_store %arg11[%c0_42, %c1120], %132 {strides = array<i32>} : memref<8x1568xbf16, #tpu.memory_space<vmem>>, vector<8x32xbf16>,
    %134 = vector.extract_strided_slice %25 {offsets = [0, 5, 1, 0], sizes = [8, 1, 1, 32], strides = [1, 1, 1, 1]} : vector<8x7x7x32xbf16> to vector<8x1x1x32xbf16>
    %135 = vector.shape_cast %134 : vector<8x1x1x32xbf16> to vector<8x32xbf16>
    %c0_43 = arith.constant 0 : index
    %c1152 = arith.constant 1152 : index
    %136 = vector.load %arg11[%c0_43, %c1152] : memref<8x1568xbf16, #tpu.memory_space<vmem>>, vector<8x32xbf16>
    tpu.vector_store %arg11[%c0_43, %c1152], %135 {strides = array<i32>} : memref<8x1568xbf16, #tpu.memory_space<vmem>>, vector<8x32xbf16>,
    %137 = vector.extract_strided_slice %25 {offsets = [0, 5, 2, 0], sizes = [8, 1, 1, 32], strides = [1, 1, 1, 1]} : vector<8x7x7x32xbf16> to vector<8x1x1x32xbf16>
    %138 = vector.shape_cast %137 : vector<8x1x1x32xbf16> to vector<8x32xbf16>
    %c0_44 = arith.constant 0 : index
    %c1184 = arith.constant 1184 : index
    %139 = vector.load %arg11[%c0_44, %c1184] : memref<8x1568xbf16, #tpu.memory_space<vmem>>, vector<8x32xbf16>
    tpu.vector_store %arg11[%c0_44, %c1184], %138 {strides = array<i32>} : memref<8x1568xbf16, #tpu.memory_space<vmem>>, vector<8x32xbf16>,
    %140 = vector.extract_strided_slice %25 {offsets = [0, 5, 3, 0], sizes = [8, 1, 1, 32], strides = [1, 1, 1, 1]} : vector<8x7x7x32xbf16> to vector<8x1x1x32xbf16>
    %141 = vector.shape_cast %140 : vector<8x1x1x32xbf16> to vector<8x32xbf16>
    %c0_45 = arith.constant 0 : index
    %c1216 = arith.constant 1216 : index
    %142 = vector.load %arg11[%c0_45, %c1216] : memref<8x1568xbf16, #tpu.memory_space<vmem>>, vector<8x32xbf16>
    tpu.vector_store %arg11[%c0_45, %c1216], %141 {strides = array<i32>} : memref<8x1568xbf16, #tpu.memory_space<vmem>>, vector<8x32xbf16>,
    %143 = vector.extract_strided_slice %25 {offsets = [0, 5, 4, 0], sizes = [8, 1, 1, 32], strides = [1, 1, 1, 1]} : vector<8x7x7x32xbf16> to vector<8x1x1x32xbf16>
    %144 = vector.shape_cast %143 : vector<8x1x1x32xbf16> to vector<8x32xbf16>
    %c0_46 = arith.constant 0 : index
    %c1248 = arith.constant 1248 : index
    %145 = vector.load %arg11[%c0_46, %c1248] : memref<8x1568xbf16, #tpu.memory_space<vmem>>, vector<8x32xbf16>
    tpu.vector_store %arg11[%c0_46, %c1248], %144 {strides = array<i32>} : memref<8x1568xbf16, #tpu.memory_space<vmem>>, vector<8x32xbf16>,
    %146 = vector.extract_strided_slice %25 {offsets = [0, 5, 5, 0], sizes = [8, 1, 1, 32], strides = [1, 1, 1, 1]} : vector<8x7x7x32xbf16> to vector<8x1x1x32xbf16>
    %147 = vector.shape_cast %146 : vector<8x1x1x32xbf16> to vector<8x32xbf16>
    %c0_47 = arith.constant 0 : index
    %c1280 = arith.constant 1280 : index
    %148 = vector.load %arg11[%c0_47, %c1280] : memref<8x1568xbf16, #tpu.memory_space<vmem>>, vector<8x32xbf16>
    tpu.vector_store %arg11[%c0_47, %c1280], %147 {strides = array<i32>} : memref<8x1568xbf16, #tpu.memory_space<vmem>>, vector<8x32xbf16>,
    %149 = vector.extract_strided_slice %25 {offsets = [0, 5, 6, 0], sizes = [8, 1, 1, 32], strides = [1, 1, 1, 1]} : vector<8x7x7x32xbf16> to vector<8x1x1x32xbf16>
    %150 = vector.shape_cast %149 : vector<8x1x1x32xbf16> to vector<8x32xbf16>
    %c0_48 = arith.constant 0 : index
    %c1312 = arith.constant 1312 : index
    %151 = vector.load %arg11[%c0_48, %c1312] : memref<8x1568xbf16, #tpu.memory_space<vmem>>, vector<8x32xbf16>
    tpu.vector_store %arg11[%c0_48, %c1312], %150 {strides = array<i32>} : memref<8x1568xbf16, #tpu.memory_space<vmem>>, vector<8x32xbf16>,
    %152 = vector.extract_strided_slice %25 {offsets = [0, 6, 0, 0], sizes = [8, 1, 1, 32], strides = [1, 1, 1, 1]} : vector<8x7x7x32xbf16> to vector<8x1x1x32xbf16>
    %153 = vector.shape_cast %152 : vector<8x1x1x32xbf16> to vector<8x32xbf16>
    %c0_49 = arith.constant 0 : index
    %c1344 = arith.constant 1344 : index
    %154 = vector.load %arg11[%c0_49, %c1344] : memref<8x1568xbf16, #tpu.memory_space<vmem>>, vector<8x32xbf16>
    tpu.vector_store %arg11[%c0_49, %c1344], %153 {strides = array<i32>} : memref<8x1568xbf16, #tpu.memory_space<vmem>>, vector<8x32xbf16>,
    %155 = vector.extract_strided_slice %25 {offsets = [0, 6, 1, 0], sizes = [8, 1, 1, 32], strides = [1, 1, 1, 1]} : vector<8x7x7x32xbf16> to vector<8x1x1x32xbf16>
    %156 = vector.shape_cast %155 : vector<8x1x1x32xbf16> to vector<8x32xbf16>
    %c0_50 = arith.constant 0 : index
    %c1376 = arith.constant 1376 : index
    %157 = vector.load %arg11[%c0_50, %c1376] : memref<8x1568xbf16, #tpu.memory_space<vmem>>, vector<8x32xbf16>
    tpu.vector_store %arg11[%c0_50, %c1376], %156 {strides = array<i32>} : memref<8x1568xbf16, #tpu.memory_space<vmem>>, vector<8x32xbf16>,
    %158 = vector.extract_strided_slice %25 {offsets = [0, 6, 2, 0], sizes = [8, 1, 1, 32], strides = [1, 1, 1, 1]} : vector<8x7x7x32xbf16> to vector<8x1x1x32xbf16>
    %159 = vector.shape_cast %158 : vector<8x1x1x32xbf16> to vector<8x32xbf16>
    %c0_51 = arith.constant 0 : index
    %c1408 = arith.constant 1408 : index
    %160 = vector.load %arg11[%c0_51, %c1408] : memref<8x1568xbf16, #tpu.memory_space<vmem>>, vector<8x32xbf16>
    tpu.vector_store %arg11[%c0_51, %c1408], %159 {strides = array<i32>} : memref<8x1568xbf16, #tpu.memory_space<vmem>>, vector<8x32xbf16>,
    %161 = vector.extract_strided_slice %25 {offsets = [0, 6, 3, 0], sizes = [8, 1, 1, 32], strides = [1, 1, 1, 1]} : vector<8x7x7x32xbf16> to vector<8x1x1x32xbf16>
    %162 = vector.shape_cast %161 : vector<8x1x1x32xbf16> to vector<8x32xbf16>
    %c0_52 = arith.constant 0 : index
    %c1440 = arith.constant 1440 : index
    %163 = vector.load %arg11[%c0_52, %c1440] : memref<8x1568xbf16, #tpu.memory_space<vmem>>, vector<8x32xbf16>
    tpu.vector_store %arg11[%c0_52, %c1440], %162 {strides = array<i32>} : memref<8x1568xbf16, #tpu.memory_space<vmem>>, vector<8x32xbf16>,
    %164 = vector.extract_strided_slice %25 {offsets = [0, 6, 4, 0], sizes = [8, 1, 1, 32], strides = [1, 1, 1, 1]} : vector<8x7x7x32xbf16> to vector<8x1x1x32xbf16>
    %165 = vector.shape_cast %164 : vector<8x1x1x32xbf16> to vector<8x32xbf16>
    %c0_53 = arith.constant 0 : index
    %c1472 = arith.constant 1472 : index
    %166 = vector.load %arg11[%c0_53, %c1472] : memref<8x1568xbf16, #tpu.memory_space<vmem>>, vector<8x32xbf16>
    tpu.vector_store %arg11[%c0_53, %c1472], %165 {strides = array<i32>} : memref<8x1568xbf16, #tpu.memory_space<vmem>>, vector<8x32xbf16>,
    %167 = vector.extract_strided_slice %25 {offsets = [0, 6, 5, 0], sizes = [8, 1, 1, 32], strides = [1, 1, 1, 1]} : vector<8x7x7x32xbf16> to vector<8x1x1x32xbf16>
    %168 = vector.shape_cast %167 : vector<8x1x1x32xbf16> to vector<8x32xbf16>
    %c0_54 = arith.constant 0 : index
    %c1504 = arith.constant 1504 : index
    %169 = vector.load %arg11[%c0_54, %c1504] : memref<8x1568xbf16, #tpu.memory_space<vmem>>, vector<8x32xbf16>
    tpu.vector_store %arg11[%c0_54, %c1504], %168 {strides = array<i32>} : memref<8x1568xbf16, #tpu.memory_space<vmem>>, vector<8x32xbf16>,
    %170 = vector.extract_strided_slice %25 {offsets = [0, 6, 6, 0], sizes = [8, 1, 1, 32], strides = [1, 1, 1, 1]} : vector<8x7x7x32xbf16> to vector<8x1x1x32xbf16>
    %171 = vector.shape_cast %170 : vector<8x1x1x32xbf16> to vector<8x32xbf16>
    %c0_55 = arith.constant 0 : index
    %c1536 = arith.constant 1536 : index
    %172 = vector.load %arg11[%c0_55, %c1536] : memref<8x1568xbf16, #tpu.memory_space<vmem>>, vector<8x32xbf16>
    tpu.vector_store %arg11[%c0_55, %c1536], %171 {strides = array<i32>} : memref<8x1568xbf16, #tpu.memory_space<vmem>>, vector<8x32xbf16>,
    %c0_56 = arith.constant 0 : index
    %c0_57 = arith.constant 0 : index
    %173 = vector.load %arg11[%c0_56, %c0_57] : memref<8x1568xbf16, #tpu.memory_space<vmem>>, vector<8x1568xbf16>
    %c0_58 = arith.constant 0 : index
    %c0_59 = arith.constant 0 : index
    %174 = vector.load %arg4[%c0_58, %c0_59] : memref<1568x256xbf16, #tpu.memory_space<vmem>>, vector<1568x256xbf16>
    %cst_60 = arith.constant dense<0.000000e+00> : vector<8x256xf32>
    %175 = tpu.matmul %173, %174, %cst_60 {dimension_numbers = #tpu.dot_dimension_numbers<[1], [0], [0], [1], [0, 0, 1, 1], [], []>} : vector<8x1568xbf16>, vector<1568x256xbf16>, vector<8x256xf32> -> vector<8x256xf32>
    %c0_61 = arith.constant 0 : index
    %c0_62 = arith.constant 0 : index
    %176 = vector.load %arg5[%c0_61, %c0_62] : memref<1x256xf32, #tpu.memory_space<vmem>>, vector<1x256xf32>
    %177 = vector.broadcast %176 : vector<1x256xf32> to vector<8x256xf32>
    %178 = arith.addf %175, %177 : vector<8x256xf32>
    %cst_63 = arith.constant 0.000000e+00 : f32
    %179 = vector.broadcast %cst_63 : f32 to vector<8x256xf32>
    %180 = arith.maximumf %178, %179 : vector<8x256xf32>
    %181 = arith.truncf %180 : vector<8x256xf32> to vector<8x256xbf16>
    %c0_64 = arith.constant 0 : index
    %c0_65 = arith.constant 0 : index
    %182 = vector.load %arg6[%c0_64, %c0_65] : memref<256x128xbf16, #tpu.memory_space<vmem>>, vector<256x128xbf16>
    %cst_66 = arith.constant dense<0.000000e+00> : vector<8x128xf32>
    %183 = tpu.matmul %181, %182, %cst_66 {dimension_numbers = #tpu.dot_dimension_numbers<[1], [0], [0], [1], [0, 0, 1, 1], [], []>} : vector<8x256xbf16>, vector<256x128xbf16>, vector<8x128xf32> -> vector<8x128xf32>
    %c0_67 = arith.constant 0 : index
    %c0_68 = arith.constant 0 : index
    %184 = vector.load %arg7[%c0_67, %c0_68] : memref<1x128xf32, #tpu.memory_space<vmem>>, vector<1x128xf32>
    %185 = vector.broadcast %184 : vector<1x128xf32> to vector<8x128xf32>
    %186 = arith.addf %183, %185 : vector<8x128xf32>
    %cst_69 = arith.constant 0.000000e+00 : f32
    %187 = vector.broadcast %cst_69 : f32 to vector<8x128xf32>
    %188 = arith.maximumf %186, %187 : vector<8x128xf32>
    %189 = arith.truncf %188 : vector<8x128xf32> to vector<8x128xbf16>
    %c0_70 = arith.constant 0 : index
    %c0_71 = arith.constant 0 : index
    %190 = vector.load %arg8[%c0_70, %c0_71] : memref<128x128xbf16, #tpu.memory_space<vmem>>, vector<128x128xbf16>
    %cst_72 = arith.constant dense<0.000000e+00> : vector<8x128xf32>
    %191 = tpu.matmul %189, %190, %cst_72 {dimension_numbers = #tpu.dot_dimension_numbers<[1], [0], [0], [1], [0, 0, 1, 1], [], []>} : vector<8x128xbf16>, vector<128x128xbf16>, vector<8x128xf32> -> vector<8x128xf32>
    %c0_73 = arith.constant 0 : index
    %c0_74 = arith.constant 0 : index
    %192 = vector.load %arg9[%c0_73, %c0_74] : memref<1x128xf32, #tpu.memory_space<vmem>>, vector<1x128xf32>
    %193 = vector.broadcast %192 : vector<1x128xf32> to vector<8x128xf32>
    %194 = arith.addf %191, %193 : vector<8x128xf32>
    %c0_75 = arith.constant 0 : index
    %c0_76 = arith.constant 0 : index
    %195 = vector.load %arg10[%c0_75, %c0_76] : memref<8x128xf32, #tpu.memory_space<vmem>>, vector<8x128xf32>
    tpu.vector_store %arg10[%c0_75, %c0_76], %194 {strides = array<i32>} : memref<8x128xf32, #tpu.memory_space<vmem>>, vector<8x128xf32>,
    return
  }
  func.func @transform_0(%arg0: i32) -> (i32, i32) {
    %c0_i32 = arith.constant 0 : i32
    %c0_i32_0 = arith.constant 0 : i32
    return %arg0, %c0_i32 : i32, i32
  }
  func.func @transform_1(%arg0: i32) -> (i32, i32) {
    %c0_i32 = arith.constant 0 : i32
    %c0_i32_0 = arith.constant 0 : i32
    %c0_i32_1 = arith.constant 0 : i32
    return %c0_i32, %c0_i32_0 : i32, i32
  }
  func.func @transform_2(%arg0: i32) -> (i32, i32) {
    %c0_i32 = arith.constant 0 : i32
    %c0_i32_0 = arith.constant 0 : i32
    %c0_i32_1 = arith.constant 0 : i32
    return %c0_i32, %c0_i32_0 : i32, i32
  }
  func.func @transform_3(%arg0: i32) -> (i32, i32) {
    %c0_i32 = arith.constant 0 : i32
    %c0_i32_0 = arith.constant 0 : i32
    %c0_i32_1 = arith.constant 0 : i32
    return %c0_i32, %c0_i32_0 : i32, i32
  }
  func.func @transform_4(%arg0: i32) -> (i32, i32) {
    %c0_i32 = arith.constant 0 : i32
    %c0_i32_0 = arith.constant 0 : i32
    %c0_i32_1 = arith.constant 0 : i32
    return %c0_i32, %c0_i32_0 : i32, i32
  }
  func.func @transform_5(%arg0: i32) -> (i32, i32) {
    %c0_i32 = arith.constant 0 : i32
    %c0_i32_0 = arith.constant 0 : i32
    %c0_i32_1 = arith.constant 0 : i32
    return %c0_i32, %c0_i32_0 : i32, i32
  }
  func.func @transform_6(%arg0: i32) -> (i32, i32) {
    %c0_i32 = arith.constant 0 : i32
    %c0_i32_0 = arith.constant 0 : i32
    %c0_i32_1 = arith.constant 0 : i32
    return %c0_i32, %c0_i32_0 : i32, i32
  }
  func.func @transform_7(%arg0: i32) -> (i32, i32) {
    %c0_i32 = arith.constant 0 : i32
    %c0_i32_0 = arith.constant 0 : i32
    %c0_i32_1 = arith.constant 0 : i32
    return %c0_i32, %c0_i32_0 : i32, i32
  }
  func.func @transform_8(%arg0: i32) -> (i32, i32) {
    %c0_i32 = arith.constant 0 : i32
    %c0_i32_0 = arith.constant 0 : i32
    %c0_i32_1 = arith.constant 0 : i32
    return %c0_i32, %c0_i32_0 : i32, i32
  }
  func.func @transform_9(%arg0: i32) -> (i32, i32) {
    %c0_i32 = arith.constant 0 : i32
    %c0_i32_0 = arith.constant 0 : i32
    return %arg0, %c0_i32 : i32, i32
  }
}

</mosaic_0001>

<llo_original>
// kernel: simple_model_forward.1
$region0: #{simple_model_forward.1}
  #allocation0 [shape = 'u32[]', space=smem, size = 0x4, offset = 0x4, fixed_abs, tag = 'smem constant byte address 0x4 - core index']
  #allocation1 [shape = 'u32[144,128]{1,0:T(1,128)}', space=vmem, size = 0x12000, scoped, tag = 'internal scratch']
  #allocation2 [shape = 'bf16[8,1568]{1,0:T(8,128)(2,1)}', space=vmem, size = 0x6800, scoped, tag = 'scratch operand']
  %s0 = inlined_call_operand.vmem [shape: bf16[2048,128], index: 0, kind: input, shape index: {}]
  %s1 = inlined_call_operand.vmem [shape: bf16[128,32], index: 1, kind: input, shape index: {}]
  %s2 = inlined_call_operand.vmem [shape: f32[1,32], index: 2, kind: input, shape index: {}]
  %s3 = inlined_call_operand.vmem [shape: bf16[1568,256], index: 3, kind: input, shape index: {}]
  %s4 = inlined_call_operand.vmem [shape: f32[1,256], index: 4, kind: input, shape index: {}]
  %s5 = inlined_call_operand.vmem [shape: bf16[256,128], index: 5, kind: input, shape index: {}]
  %s6 = inlined_call_operand.vmem [shape: f32[1,128], index: 6, kind: input, shape index: {}]
  %s7 = inlined_call_operand.vmem [shape: bf16[128,128], index: 7, kind: input, shape index: {}]
  %s8 = inlined_call_operand.vmem [shape: f32[1,128], index: 8, kind: input, shape index: {}]
  %s9 = inlined_call_operand.vmem [shape: f32[8,128], index: 9, kind: output, shape index: {}]
  %s10 = sld [smem:[#allocation0]]
  $region46: #{simple_model_forward.1} parent=0
    _
  %s12 = ssub.s32 1, %s10
  %s13 = scalar_select 0, %s12, %s10
  // Predicated region
  $region2: #{simple_model_forward.1} parent=0 // pred_check
    _
  $region3: #{simple_model_forward.1} parent=0 // pred_check_branch
    %15 = sbr.rel (0) target = $region5
  $region4: #{simple_model_forward.1} parent=0 // pred_region
    _
  $region5: #{simple_model_forward.1} parent=0 // pred_fallthru
    _
  // Predicated region
  $region6: #{simple_model_forward.1} parent=0 // pred_check
    _
  $region7: #{simple_model_forward.1} parent=0 // pred_check_branch
    %17 = sbr.rel (0) target = $region9
  $region8: #{simple_model_forward.1} parent=0 // pred_region
    _
  $region9: #{simple_model_forward.1} parent=0 // pred_fallthru
    _
  // Predicated region
  $region10: #{simple_model_forward.1} parent=0 // pred_check
    _
  $region11: #{simple_model_forward.1} parent=0 // pred_check_branch
    %19 = sbr.rel (0) target = $region13
  $region12: #{simple_model_forward.1} parent=0 // pred_region
    _
  $region13: #{simple_model_forward.1} parent=0 // pred_fallthru
    _
  // Predicated region
  $region14: #{simple_model_forward.1} parent=0 // pred_check
    _
  $region15: #{simple_model_forward.1} parent=0 // pred_check_branch
    %21 = sbr.rel (0) target = $region17
  $region16: #{simple_model_forward.1} parent=0 // pred_region
    _
  $region17: #{simple_model_forward.1} parent=0 // pred_fallthru
    _
  // Predicated region
  $region18: #{simple_model_forward.1} parent=0 // pred_check
    _
  $region19: #{simple_model_forward.1} parent=0 // pred_check_branch
    %23 = sbr.rel (0) target = $region21
  $region20: #{simple_model_forward.1} parent=0 // pred_region
    _
  $region21: #{simple_model_forward.1} parent=0 // pred_fallthru
    _
  // Predicated region
  $region22: #{simple_model_forward.1} parent=0 // pred_check
    _
  $region23: #{simple_model_forward.1} parent=0 // pred_check_branch
    %25 = sbr.rel (0) target = $region25
  $region24: #{simple_model_forward.1} parent=0 // pred_region
    _
  $region25: #{simple_model_forward.1} parent=0 // pred_fallthru
    _
  // Predicated region
  $region26: #{simple_model_forward.1} parent=0 // pred_check
    _
  $region27: #{simple_model_forward.1} parent=0 // pred_check_branch
    %27 = sbr.rel (0) target = $region29
  $region28: #{simple_model_forward.1} parent=0 // pred_region
    _
  $region29: #{simple_model_forward.1} parent=0 // pred_fallthru
    _
  // Predicated region
  $region30: #{simple_model_forward.1} parent=0 // pred_check
    _
  $region31: #{simple_model_forward.1} parent=0 // pred_check_branch
    %29 = sbr.rel (0) target = $region33
  $region32: #{simple_model_forward.1} parent=0 // pred_region
    _
  $region33: #{simple_model_forward.1} parent=0 // pred_fallthru
    _
  // Predicated region
  $region34: #{simple_model_forward.1} parent=0 // pred_check
    _
  $region35: #{simple_model_forward.1} parent=0 // pred_check_branch
    %31 = sbr.rel (0) target = $region37
  $region36: #{simple_model_forward.1} parent=0 // pred_region
    _
  $region37: #{simple_model_forward.1} parent=0 // pred_fallthru
    _
  %v33 = vld [vmem:[%s0] sm:$0xf]
  %v34 = vld [vmem:[%s0 + $0x4] sm:$0xf]
  %v35 = vld [vmem:[%s0 + $0x8] sm:$0xf]
  %v36 = vld [vmem:[%s0 + $0xc] sm:$0xf]
  %v37 = vld [vmem:[%s0 + $0x10] sm:$0xf]
  %v38 = vld [vmem:[%s0 + $0x14] sm:$0xf]
  %v39 = vld [vmem:[%s0 + $0x18] sm:$0xf]
  %v40 = vld [vmem:[%s0 + $0x1c] sm:$0xf]
  %v41 = vld [vmem:[%s0 + $0x20] sm:$0xf]
  %v42 = vld [vmem:[%s0 + $0x24] sm:$0xf]
  %v43 = vld [vmem:[%s0 + $0x28] sm:$0xf]
  %v44 = vld [vmem:[%s0 + $0x2c] sm:$0xf]
  %v45 = vld [vmem:[%s0 + $0x30] sm:$0xf]
  %v46 = vld [vmem:[%s0 + $0x34] sm:$0xf]
  %v47 = vld [vmem:[%s0 + $0x38] sm:$0xf]
  %v48 = vld [vmem:[%s0 + $0x3c] sm:$0xf]
  %v49 = vld [vmem:[%s0 + $0x40] sm:$0xf]
  %v50 = vld [vmem:[%s0 + $0x44] sm:$0xf]
  %v51 = vld [vmem:[%s0 + $0x48] sm:$0xf]
  %v52 = vld [vmem:[%s0 + $0x4c] sm:$0xf]
  %v53 = vld [vmem:[%s0 + $0x50] sm:$0xf]
  %v54 = vld [vmem:[%s0 + $0x54] sm:$0xf]
  %v55 = vld [vmem:[%s0 + $0x58] sm:$0xf]
  %v56 = vld [vmem:[%s0 + $0x5c] sm:$0xf]
  %v57 = vld [vmem:[%s0 + $0x60] sm:$0xf]
  %v58 = vld [vmem:[%s0 + $0x64] sm:$0xf]
  %v59 = vld [vmem:[%s0 + $0x68] sm:$0xf]
  %v60 = vld [vmem:[%s0 + $0x6c] sm:$0xf]
  %v61 = vld [vmem:[%s0 + $0x70] sm:$0xf]
  %v62 = vld [vmem:[%s0 + $0x74] sm:$0xf]
  %v63 = vld [vmem:[%s0 + $0x78] sm:$0xf]
  %v64 = vld [vmem:[%s0 + $0x7c] sm:$0xf]
  %v65 = vld [vmem:[%s0 + $0x80] sm:$0xf]
  %v66 = vld [vmem:[%s0 + $0x84] sm:$0xf]
  %v67 = vld [vmem:[%s0 + $0x88] sm:$0xf]
  %v68 = vld [vmem:[%s0 + $0x8c] sm:$0xf]
  %v69 = vld [vmem:[%s0 + $0x90] sm:$0xf]
  %v70 = vld [vmem:[%s0 + $0x94] sm:$0xf]
  %v71 = vld [vmem:[%s0 + $0x98] sm:$0xf]
  %v72 = vld [vmem:[%s0 + $0x9c] sm:$0xf]
  %v73 = vld [vmem:[%s0 + $0xa0] sm:$0xf]
  %v74 = vld [vmem:[%s0 + $0xa4] sm:$0xf]
  %v75 = vld [vmem:[%s0 + $0xa8] sm:$0xf]
  %v76 = vld [vmem:[%s0 + $0xac] sm:$0xf]
  %v77 = vld [vmem:[%s0 + $0xb0] sm:$0xf]
  %v78 = vld [vmem:[%s0 + $0xb4] sm:$0xf]
  %v79 = vld [vmem:[%s0 + $0xb8] sm:$0xf]
  %v80 = vld [vmem:[%s0 + $0xbc] sm:$0xf]
  %v81 = vld [vmem:[%s0 + $0xc0] sm:$0xf]
  %v82 = vld [vmem:[%s0 + $0xc4] sm:$0xf]
  %v83 = vld [vmem:[%s0 + $0xc8] sm:$0xf]
  %v84 = vld [vmem:[%s0 + $0xcc] sm:$0xf]
  %v85 = vld [vmem:[%s0 + $0xd0] sm:$0xf]
  %v86 = vld [vmem:[%s0 + $0xd4] sm:$0xf]
  %v87 = vld [vmem:[%s0 + $0xd8] sm:$0xf]
  %v88 = vld [vmem:[%s0 + $0xdc] sm:$0xf]
  %v89 = vld [vmem:[%s0 + $0xe0] sm:$0xf]
  %v90 = vld [vmem:[%s0 + $0xe4] sm:$0xf]
  %v91 = vld [vmem:[%s0 + $0xe8] sm:$0xf]
  %v92 = vld [vmem:[%s0 + $0xec] sm:$0xf]
  %v93 = vld [vmem:[%s0 + $0xf0] sm:$0xf]
  %v94 = vld [vmem:[%s0 + $0xf4] sm:$0xf]
  %v95 = vld [vmem:[%s0 + $0xf8] sm:$0xf]
  %v96 = vld [vmem:[%s0 + $0xfc] sm:$0xf]
  %v97 = vld [vmem:[%s0 + $0x100] sm:$0xf]
  %v98 = vld [vmem:[%s0 + $0x104] sm:$0xf]
  %v99 = vld [vmem:[%s0 + $0x108] sm:$0xf]
  %v100 = vld [vmem:[%s0 + $0x10c] sm:$0xf]
  %v101 = vld [vmem:[%s0 + $0x110] sm:$0xf]
  %v102 = vld [vmem:[%s0 + $0x114] sm:$0xf]
  %v103 = vld [vmem:[%s0 + $0x118] sm:$0xf]
  %v104 = vld [vmem:[%s0 + $0x11c] sm:$0xf]
  %v105 = vld [vmem:[%s0 + $0x120] sm:$0xf]
  %v106 = vld [vmem:[%s0 + $0x124] sm:$0xf]
  %v107 = vld [vmem:[%s0 + $0x128] sm:$0xf]
  %v108 = vld [vmem:[%s0 + $0x12c] sm:$0xf]
  %v109 = vld [vmem:[%s0 + $0x130] sm:$0xf]
  %v110 = vld [vmem:[%s0 + $0x134] sm:$0xf]
  %v111 = vld [vmem:[%s0 + $0x138] sm:$0xf]
  %v112 = vld [vmem:[%s0 + $0x13c] sm:$0xf]
  %v113 = vld [vmem:[%s0 + $0x140] sm:$0xf]
  %v114 = vld [vmem:[%s0 + $0x144] sm:$0xf]
  %v115 = vld [vmem:[%s0 + $0x148] sm:$0xf]
  %v116 = vld [vmem:[%s0 + $0x14c] sm:$0xf]
  %v117 = vld [vmem:[%s0 + $0x150] sm:$0xf]
  %v118 = vld [vmem:[%s0 + $0x154] sm:$0xf]
  %v119 = vld [vmem:[%s0 + $0x158] sm:$0xf]
  %v120 = vld [vmem:[%s0 + $0x15c] sm:$0xf]
  %v121 = vld [vmem:[%s0 + $0x160] sm:$0xf]
  %v122 = vld [vmem:[%s0 + $0x164] sm:$0xf]
  %v123 = vld [vmem:[%s0 + $0x168] sm:$0xf]
  %v124 = vld [vmem:[%s0 + $0x16c] sm:$0xf]
  %v125 = vld [vmem:[%s0 + $0x170] sm:$0xf]
  %v126 = vld [vmem:[%s0 + $0x174] sm:$0xf]
  %v127 = vld [vmem:[%s0 + $0x178] sm:$0xf]
  %v128 = vld [vmem:[%s0 + $0x17c] sm:$0xf]
  %v129 = vld [vmem:[%s0 + $0x180] sm:$0xf]
  %v130 = vld [vmem:[%s0 + $0x184] sm:$0xf]
  %v131 = vld [vmem:[%s0 + $0x188] sm:$0xf]
  %v132 = vld [vmem:[%s0 + $0x18c] sm:$0xf]
  %v133 = vld [vmem:[%s0 + $0x190] sm:$0xf]
  %v134 = vld [vmem:[%s0 + $0x194] sm:$0xf]
  %v135 = vld [vmem:[%s0 + $0x198] sm:$0xf]
  %v136 = vld [vmem:[%s0 + $0x19c] sm:$0xf]
  %v137 = vld [vmem:[%s0 + $0x1a0] sm:$0xf]
  %v138 = vld [vmem:[%s0 + $0x1a4] sm:$0xf]
  %v139 = vld [vmem:[%s0 + $0x1a8] sm:$0xf]
  %v140 = vld [vmem:[%s0 + $0x1ac] sm:$0xf]
  %v141 = vld [vmem:[%s0 + $0x1b0] sm:$0xf]
  %v142 = vld [vmem:[%s0 + $0x1b4] sm:$0xf]
  %v143 = vld [vmem:[%s0 + $0x1b8] sm:$0xf]
  %v144 = vld [vmem:[%s0 + $0x1bc] sm:$0xf]
  %v145 = vld [vmem:[%s0 + $0x1c0] sm:$0xf]
  %v146 = vld [vmem:[%s0 + $0x1c4] sm:$0xf]
  %v147 = vld [vmem:[%s0 + $0x1c8] sm:$0xf]
  %v148 = vld [vmem:[%s0 + $0x1cc] sm:$0xf]
  %v149 = vld [vmem:[%s0 + $0x1d0] sm:$0xf]
  %v150 = vld [vmem:[%s0 + $0x1d4] sm:$0xf]
  %v151 = vld [vmem:[%s0 + $0x1d8] sm:$0xf]
  %v152 = vld [vmem:[%s0 + $0x1dc] sm:$0xf]
  %v153 = vld [vmem:[%s0 + $0x1e0] sm:$0xf]
  %v154 = vld [vmem:[%s0 + $0x1e4] sm:$0xf]
  %v155 = vld [vmem:[%s0 + $0x1e8] sm:$0xf]
  %v156 = vld [vmem:[%s0 + $0x1ec] sm:$0xf]
  %v157 = vld [vmem:[%s0 + $0x1f0] sm:$0xf]
  %v158 = vld [vmem:[%s0 + $0x1f4] sm:$0xf]
  %v159 = vld [vmem:[%s0 + $0x1f8] sm:$0xf]
  %v160 = vld [vmem:[%s0 + $0x1fc] sm:$0xf]
  %v161 = vld [vmem:[%s0 + $0x200] sm:$0xf]
  %v162 = vld [vmem:[%s0 + $0x204] sm:$0xf]
  %v163 = vld [vmem:[%s0 + $0x208] sm:$0xf]
  %v164 = vld [vmem:[%s0 + $0x20c] sm:$0xf]
  %v165 = vld [vmem:[%s0 + $0x210] sm:$0xf]
  %v166 = vld [vmem:[%s0 + $0x214] sm:$0xf]
  %v167 = vld [vmem:[%s0 + $0x218] sm:$0xf]
  %v168 = vld [vmem:[%s0 + $0x21c] sm:$0xf]
  %v169 = vld [vmem:[%s0 + $0x220] sm:$0xf]
  %v170 = vld [vmem:[%s0 + $0x224] sm:$0xf]
  %v171 = vld [vmem:[%s0 + $0x228] sm:$0xf]
  %v172 = vld [vmem:[%s0 + $0x22c] sm:$0xf]
  %v173 = vld [vmem:[%s0 + $0x230] sm:$0xf]
  %v174 = vld [vmem:[%s0 + $0x234] sm:$0xf]
  %v175 = vld [vmem:[%s0 + $0x238] sm:$0xf]
  %v176 = vld [vmem:[%s0 + $0x23c] sm:$0xf]
  %v177 = vld [vmem:[%s0 + $0x240] sm:$0xf]
  %v178 = vld [vmem:[%s0 + $0x244] sm:$0xf]
  %v179 = vld [vmem:[%s0 + $0x248] sm:$0xf]
  %v180 = vld [vmem:[%s0 + $0x24c] sm:$0xf]
  %v181 = vld [vmem:[%s0 + $0x250] sm:$0xf]
  %v182 = vld [vmem:[%s0 + $0x254] sm:$0xf]
  %v183 = vld [vmem:[%s0 + $0x258] sm:$0xf]
  %v184 = vld [vmem:[%s0 + $0x25c] sm:$0xf]
  %v185 = vld [vmem:[%s0 + $0x260] sm:$0xf]
  %v186 = vld [vmem:[%s0 + $0x264] sm:$0xf]
  %v187 = vld [vmem:[%s0 + $0x268] sm:$0xf]
  %v188 = vld [vmem:[%s0 + $0x26c] sm:$0xf]
  %v189 = vld [vmem:[%s0 + $0x270] sm:$0xf]
  %v190 = vld [vmem:[%s0 + $0x274] sm:$0xf]
  %v191 = vld [vmem:[%s0 + $0x278] sm:$0xf]
  %v192 = vld [vmem:[%s0 + $0x27c] sm:$0xf]
  %v193 = vld [vmem:[%s0 + $0x280] sm:$0xf]
  %v194 = vld [vmem:[%s0 + $0x284] sm:$0xf]
  %v195 = vld [vmem:[%s0 + $0x288] sm:$0xf]
  %v196 = vld [vmem:[%s0 + $0x28c] sm:$0xf]
  %v197 = vld [vmem:[%s0 + $0x290] sm:$0xf]
  %v198 = vld [vmem:[%s0 + $0x294] sm:$0xf]
  %v199 = vld [vmem:[%s0 + $0x298] sm:$0xf]
  %v200 = vld [vmem:[%s0 + $0x29c] sm:$0xf]
  %v201 = vld [vmem:[%s0 + $0x2a0] sm:$0xf]
  %v202 = vld [vmem:[%s0 + $0x2a4] sm:$0xf]
  %v203 = vld [vmem:[%s0 + $0x2a8] sm:$0xf]
  %v204 = vld [vmem:[%s0 + $0x2ac] sm:$0xf]
  %v205 = vld [vmem:[%s0 + $0x2b0] sm:$0xf]
  %v206 = vld [vmem:[%s0 + $0x2b4] sm:$0xf]
  %v207 = vld [vmem:[%s0 + $0x2b8] sm:$0xf]
  %v208 = vld [vmem:[%s0 + $0x2bc] sm:$0xf]
  %v209 = vld [vmem:[%s0 + $0x2c0] sm:$0xf]
  %v210 = vld [vmem:[%s0 + $0x2c4] sm:$0xf]
  %v211 = vld [vmem:[%s0 + $0x2c8] sm:$0xf]
  %v212 = vld [vmem:[%s0 + $0x2cc] sm:$0xf]
  %v213 = vld [vmem:[%s0 + $0x2d0] sm:$0xf]
  %v214 = vld [vmem:[%s0 + $0x2d4] sm:$0xf]
  %v215 = vld [vmem:[%s0 + $0x2d8] sm:$0xf]
  %v216 = vld [vmem:[%s0 + $0x2dc] sm:$0xf]
  %v217 = vld [vmem:[%s0 + $0x2e0] sm:$0xf]
  %v218 = vld [vmem:[%s0 + $0x2e4] sm:$0xf]
  %v219 = vld [vmem:[%s0 + $0x2e8] sm:$0xf]
  %v220 = vld [vmem:[%s0 + $0x2ec] sm:$0xf]
  %v221 = vld [vmem:[%s0 + $0x2f0] sm:$0xf]
  %v222 = vld [vmem:[%s0 + $0x2f4] sm:$0xf]
  %v223 = vld [vmem:[%s0 + $0x2f8] sm:$0xf]
  %v224 = vld [vmem:[%s0 + $0x2fc] sm:$0xf]
  %v225 = vld [vmem:[%s0 + $0x300] sm:$0xf]
  %v226 = vld [vmem:[%s0 + $0x304] sm:$0xf]
  %v227 = vld [vmem:[%s0 + $0x308] sm:$0xf]
  %v228 = vld [vmem:[%s0 + $0x30c] sm:$0xf]
  %v229 = vld [vmem:[%s0 + $0x310] sm:$0xf]
  %v230 = vld [vmem:[%s0 + $0x314] sm:$0xf]
  %v231 = vld [vmem:[%s0 + $0x318] sm:$0xf]
  %v232 = vld [vmem:[%s0 + $0x31c] sm:$0xf]
  %v233 = vld [vmem:[%s0 + $0x320] sm:$0xf]
  %v234 = vld [vmem:[%s0 + $0x324] sm:$0xf]
  %v235 = vld [vmem:[%s0 + $0x328] sm:$0xf]
  %v236 = vld [vmem:[%s0 + $0x32c] sm:$0xf]
  %v237 = vld [vmem:[%s0 + $0x330] sm:$0xf]
  %v238 = vld [vmem:[%s0 + $0x334] sm:$0xf]
  %v239 = vld [vmem:[%s0 + $0x338] sm:$0xf]
  %v240 = vld [vmem:[%s0 + $0x33c] sm:$0xf]
  %v241 = vld [vmem:[%s0 + $0x340] sm:$0xf]
  %v242 = vld [vmem:[%s0 + $0x344] sm:$0xf]
  %v243 = vld [vmem:[%s0 + $0x348] sm:$0xf]
  %v244 = vld [vmem:[%s0 + $0x34c] sm:$0xf]
  %v245 = vld [vmem:[%s0 + $0x350] sm:$0xf]
  %v246 = vld [vmem:[%s0 + $0x354] sm:$0xf]
  %v247 = vld [vmem:[%s0 + $0x358] sm:$0xf]
  %v248 = vld [vmem:[%s0 + $0x35c] sm:$0xf]
  %v249 = vld [vmem:[%s0 + $0x360] sm:$0xf]
  %v250 = vld [vmem:[%s0 + $0x364] sm:$0xf]
  %v251 = vld [vmem:[%s0 + $0x368] sm:$0xf]
  %v252 = vld [vmem:[%s0 + $0x36c] sm:$0xf]
  %v253 = vld [vmem:[%s0 + $0x370] sm:$0xf]
  %v254 = vld [vmem:[%s0 + $0x374] sm:$0xf]
  %v255 = vld [vmem:[%s0 + $0x378] sm:$0xf]
  %v256 = vld [vmem:[%s0 + $0x37c] sm:$0xf]
  %v257 = vld [vmem:[%s0 + $0x380] sm:$0xf]
  %v258 = vld [vmem:[%s0 + $0x384] sm:$0xf]
  %v259 = vld [vmem:[%s0 + $0x388] sm:$0xf]
  %v260 = vld [vmem:[%s0 + $0x38c] sm:$0xf]
  %v261 = vld [vmem:[%s0 + $0x390] sm:$0xf]
  %v262 = vld [vmem:[%s0 + $0x394] sm:$0xf]
  %v263 = vld [vmem:[%s0 + $0x398] sm:$0xf]
  %v264 = vld [vmem:[%s0 + $0x39c] sm:$0xf]
  %v265 = vld [vmem:[%s0 + $0x3a0] sm:$0xf]
  %v266 = vld [vmem:[%s0 + $0x3a4] sm:$0xf]
  %v267 = vld [vmem:[%s0 + $0x3a8] sm:$0xf]
  %v268 = vld [vmem:[%s0 + $0x3ac] sm:$0xf]
  %v269 = vld [vmem:[%s0 + $0x3b0] sm:$0xf]
  %v270 = vld [vmem:[%s0 + $0x3b4] sm:$0xf]
  %v271 = vld [vmem:[%s0 + $0x3b8] sm:$0xf]
  %v272 = vld [vmem:[%s0 + $0x3bc] sm:$0xf]
  %v273 = vld [vmem:[%s0 + $0x3c0] sm:$0xf]
  %v274 = vld [vmem:[%s0 + $0x3c4] sm:$0xf]
  %v275 = vld [vmem:[%s0 + $0x3c8] sm:$0xf]
  %v276 = vld [vmem:[%s0 + $0x3cc] sm:$0xf]
  %v277 = vld [vmem:[%s0 + $0x3d0] sm:$0xf]
  %v278 = vld [vmem:[%s0 + $0x3d4] sm:$0xf]
  %v279 = vld [vmem:[%s0 + $0x3d8] sm:$0xf]
  %v280 = vld [vmem:[%s0 + $0x3dc] sm:$0xf]
  %v281 = vld [vmem:[%s0 + $0x3e0] sm:$0xf]
  %v282 = vld [vmem:[%s0 + $0x3e4] sm:$0xf]
  %v283 = vld [vmem:[%s0 + $0x3e8] sm:$0xf]
  %v284 = vld [vmem:[%s0 + $0x3ec] sm:$0xf]
  %v285 = vld [vmem:[%s0 + $0x3f0] sm:$0xf]
  %v286 = vld [vmem:[%s0 + $0x3f4] sm:$0xf]
  %v287 = vld [vmem:[%s0 + $0x3f8] sm:$0xf]
  %v288 = vld [vmem:[%s0 + $0x3fc] sm:$0xf]
  %v289 = vld [vmem:[%s1] sm:$0xf]
  %v290 = vld [vmem:[%s1 + $0x4] sm:$0xf]
  %v291 = vld [vmem:[%s1 + $0x8] sm:$0xf]
  %v292 = vld [vmem:[%s1 + $0xc] sm:$0xf]
  %v293 = vld [vmem:[%s1 + $0x10] sm:$0xf]
  %v294 = vld [vmem:[%s1 + $0x14] sm:$0xf]
  %v295 = vld [vmem:[%s1 + $0x18] sm:$0xf]
  %v296 = vld [vmem:[%s1 + $0x1c] sm:$0xf]
  %v297 = vld [vmem:[%s1 + $0x20] sm:$0xf]
  %v298 = vld [vmem:[%s1 + $0x24] sm:$0xf]
  %v299 = vld [vmem:[%s1 + $0x28] sm:$0xf]
  %v300 = vld [vmem:[%s1 + $0x2c] sm:$0xf]
  %v301 = vld [vmem:[%s1 + $0x30] sm:$0xf]
  %v302 = vld [vmem:[%s1 + $0x34] sm:$0xf]
  %v303 = vld [vmem:[%s1 + $0x38] sm:$0xf]
  %v304 = vld [vmem:[%s1 + $0x3c] sm:$0xf]
  %v305 = vld [vmem:[%s2] sm:$0x1]
  %v307 = vlaneseq
  %v308 = vshrl.u32 %v307, 7
  %v309 = vsub.s32 0, %v308
  %v310 = vrot.slane %v305, %v309
  %v568 = vunpack.c.l.b16 %v33
  %v569 = vunpack.c.l.b16 %v34
  %v570 = vunpack.c.l.b16 %v35
  %v571 = vunpack.c.l.b16 %v36
  %v572 = vunpack.c.l.b16 %v37
  %v573 = vunpack.c.l.b16 %v38
  %v574 = vunpack.c.l.b16 %v39
  %v575 = vunpack.c.l.b16 %v40
  %v576 = vunpack.c.l.b16 %v41
  %v577 = vunpack.c.l.b16 %v42
  %v578 = vunpack.c.l.b16 %v43
  %v579 = vunpack.c.l.b16 %v44
  %v580 = vunpack.c.l.b16 %v45
  %v581 = vunpack.c.l.b16 %v46
  %v582 = vunpack.c.l.b16 %v47
  %v583 = vunpack.c.l.b16 %v48
  %v584 = vunpack.c.l.b16 %v49
  %v585 = vunpack.c.l.b16 %v50
  %v586 = vunpack.c.l.b16 %v51
  %v587 = vunpack.c.l.b16 %v52
  %v588 = vunpack.c.l.b16 %v53
  %v589 = vunpack.c.l.b16 %v54
  %v590 = vunpack.c.l.b16 %v55
  %v591 = vunpack.c.l.b16 %v56
  %v592 = vunpack.c.l.b16 %v57
  %v593 = vunpack.c.l.b16 %v58
  %v594 = vunpack.c.l.b16 %v59
  %v595 = vunpack.c.l.b16 %v60
  %v596 = vunpack.c.l.b16 %v61
  %v597 = vunpack.c.l.b16 %v62
  %v598 = vunpack.c.l.b16 %v63
  %v599 = vunpack.c.l.b16 %v64
  %v600 = vunpack.c.l.b16 %v65
  %v601 = vunpack.c.l.b16 %v66
  %v602 = vunpack.c.l.b16 %v67
  %v603 = vunpack.c.l.b16 %v68
  %v604 = vunpack.c.l.b16 %v69
  %v605 = vunpack.c.l.b16 %v70
  %v606 = vunpack.c.l.b16 %v71
  %v607 = vunpack.c.l.b16 %v72
  %v608 = vunpack.c.l.b16 %v73
  %v609 = vunpack.c.l.b16 %v74
  %v610 = vunpack.c.l.b16 %v75
  %v611 = vunpack.c.l.b16 %v76
  %v612 = vunpack.c.l.b16 %v77
  %v613 = vunpack.c.l.b16 %v78
  %v614 = vunpack.c.l.b16 %v79
  %v615 = vunpack.c.l.b16 %v80
  %v616 = vunpack.c.l.b16 %v81
  %v617 = vunpack.c.l.b16 %v82
  %v618 = vunpack.c.l.b16 %v83
  %v619 = vunpack.c.l.b16 %v84
  %v620 = vunpack.c.l.b16 %v85
  %v621 = vunpack.c.l.b16 %v86
  %v622 = vunpack.c.l.b16 %v87
  %v623 = vunpack.c.l.b16 %v88
  %v624 = vunpack.c.l.b16 %v89
  %v625 = vunpack.c.l.b16 %v90
  %v626 = vunpack.c.l.b16 %v91
  %v627 = vunpack.c.l.b16 %v92
  %v628 = vunpack.c.l.b16 %v93
  %v629 = vunpack.c.l.b16 %v94
  %v630 = vunpack.c.l.b16 %v95
  %v631 = vunpack.c.l.b16 %v96
  %v632 = vunpack.c.l.b16 %v97
  %v633 = vunpack.c.l.b16 %v98
  %v634 = vunpack.c.l.b16 %v99
  %v635 = vunpack.c.l.b16 %v100
  %v636 = vunpack.c.l.b16 %v101
  %v637 = vunpack.c.l.b16 %v102
  %v638 = vunpack.c.l.b16 %v103
  %v639 = vunpack.c.l.b16 %v104
  %v640 = vunpack.c.l.b16 %v105
  %v641 = vunpack.c.l.b16 %v106
  %v642 = vunpack.c.l.b16 %v107
  %v643 = vunpack.c.l.b16 %v108
  %v644 = vunpack.c.l.b16 %v109
  %v645 = vunpack.c.l.b16 %v110
  %v646 = vunpack.c.l.b16 %v111
  %v647 = vunpack.c.l.b16 %v112
  %v648 = vunpack.c.l.b16 %v113
  %v649 = vunpack.c.l.b16 %v114
  %v650 = vunpack.c.l.b16 %v115
  %v651 = vunpack.c.l.b16 %v116
  %v652 = vunpack.c.l.b16 %v117
  %v653 = vunpack.c.l.b16 %v118
  %v654 = vunpack.c.l.b16 %v119
  %v655 = vunpack.c.l.b16 %v120
  %v656 = vunpack.c.l.b16 %v121
  %v657 = vunpack.c.l.b16 %v122
  %v658 = vunpack.c.l.b16 %v123
  %v659 = vunpack.c.l.b16 %v124
  %v660 = vunpack.c.l.b16 %v125
  %v661 = vunpack.c.l.b16 %v126
  %v662 = vunpack.c.l.b16 %v127
  %v663 = vunpack.c.l.b16 %v128
  %v664 = vunpack.c.l.b16 %v129
  %v665 = vunpack.c.l.b16 %v130
  %v666 = vunpack.c.l.b16 %v131
  %v667 = vunpack.c.l.b16 %v132
  %v668 = vunpack.c.l.b16 %v133
  %v669 = vunpack.c.l.b16 %v134
  %v670 = vunpack.c.l.b16 %v135
  %v671 = vunpack.c.l.b16 %v136
  %v672 = vunpack.c.l.b16 %v137
  %v673 = vunpack.c.l.b16 %v138
  %v674 = vunpack.c.l.b16 %v139
  %v675 = vunpack.c.l.b16 %v140
  %v676 = vunpack.c.l.b16 %v141
  %v677 = vunpack.c.l.b16 %v142
  %v678 = vunpack.c.l.b16 %v143
  %v679 = vunpack.c.l.b16 %v144
  %v680 = vunpack.c.l.b16 %v145
  %v681 = vunpack.c.l.b16 %v146
  %v682 = vunpack.c.l.b16 %v147
  %v683 = vunpack.c.l.b16 %v148
  %v684 = vunpack.c.l.b16 %v149
  %v685 = vunpack.c.l.b16 %v150
  %v686 = vunpack.c.l.b16 %v151
  %v687 = vunpack.c.l.b16 %v152
  %v688 = vunpack.c.l.b16 %v153
  %v689 = vunpack.c.l.b16 %v154
  %v690 = vunpack.c.l.b16 %v155
  %v691 = vunpack.c.l.b16 %v156
  %v692 = vunpack.c.l.b16 %v157
  %v693 = vunpack.c.l.b16 %v158
  %v694 = vunpack.c.l.b16 %v159
  %v695 = vunpack.c.l.b16 %v160
  %v696 = vunpack.c.l.b16 %v161
  %v697 = vunpack.c.l.b16 %v162
  %v698 = vunpack.c.l.b16 %v163
  %v699 = vunpack.c.l.b16 %v164
  %v700 = vunpack.c.l.b16 %v165
  %v701 = vunpack.c.l.b16 %v166
  %v702 = vunpack.c.l.b16 %v167
  %v703 = vunpack.c.l.b16 %v168
  %v704 = vunpack.c.l.b16 %v169
  %v705 = vunpack.c.l.b16 %v170
  %v706 = vunpack.c.l.b16 %v171
  %v707 = vunpack.c.l.b16 %v172
  %v708 = vunpack.c.l.b16 %v173
  %v709 = vunpack.c.l.b16 %v174
  %v710 = vunpack.c.l.b16 %v175
  %v711 = vunpack.c.l.b16 %v176
  %v712 = vunpack.c.l.b16 %v177
  %v713 = vunpack.c.l.b16 %v178
  %v714 = vunpack.c.l.b16 %v179
  %v715 = vunpack.c.l.b16 %v180
  %v716 = vunpack.c.l.b16 %v181
  %v717 = vunpack.c.l.b16 %v182
  %v718 = vunpack.c.l.b16 %v183
  %v719 = vunpack.c.l.b16 %v184
  %v720 = vunpack.c.l.b16 %v185
  %v721 = vunpack.c.l.b16 %v186
  %v722 = vunpack.c.l.b16 %v187
  %v723 = vunpack.c.l.b16 %v188
  %v724 = vunpack.c.l.b16 %v189
  %v725 = vunpack.c.l.b16 %v190
  %v726 = vunpack.c.l.b16 %v191
  %v727 = vunpack.c.l.b16 %v192
  %v728 = vunpack.c.l.b16 %v193
  %v729 = vunpack.c.l.b16 %v194
  %v730 = vunpack.c.l.b16 %v195
  %v731 = vunpack.c.l.b16 %v196
  %v732 = vunpack.c.l.b16 %v197
  %v733 = vunpack.c.l.b16 %v198
  %v734 = vunpack.c.l.b16 %v199
  %v735 = vunpack.c.l.b16 %v200
  %v736 = vunpack.c.l.b16 %v201
  %v737 = vunpack.c.l.b16 %v202
  %v738 = vunpack.c.l.b16 %v203
  %v739 = vunpack.c.l.b16 %v204
  %v740 = vunpack.c.l.b16 %v205
  %v741 = vunpack.c.l.b16 %v206
  %v742 = vunpack.c.l.b16 %v207
  %v743 = vunpack.c.l.b16 %v208
  %v744 = vunpack.c.l.b16 %v209
  %v745 = vunpack.c.l.b16 %v210
  %v746 = vunpack.c.l.b16 %v211
  %v747 = vunpack.c.l.b16 %v212
  %v748 = vunpack.c.l.b16 %v213
  %v749 = vunpack.c.l.b16 %v214
  %v750 = vunpack.c.l.b16 %v215
  %v751 = vunpack.c.l.b16 %v216
  %v752 = vunpack.c.l.b16 %v217
  %v753 = vunpack.c.l.b16 %v218
  %v754 = vunpack.c.l.b16 %v219
  %v755 = vunpack.c.l.b16 %v220
  %v756 = vunpack.c.l.b16 %v221
  %v757 = vunpack.c.l.b16 %v222
  %v758 = vunpack.c.l.b16 %v223
  %v759 = vunpack.c.l.b16 %v224
  %v760 = vunpack.c.l.b16 %v225
  %v761 = vunpack.c.l.b16 %v226
  %v762 = vunpack.c.l.b16 %v227
  %v763 = vunpack.c.l.b16 %v228
  %v764 = vunpack.c.l.b16 %v229
  %v765 = vunpack.c.l.b16 %v230
  %v766 = vunpack.c.l.b16 %v231
  %v767 = vunpack.c.l.b16 %v232
  %v768 = vunpack.c.l.b16 %v233
  %v769 = vunpack.c.l.b16 %v234
  %v770 = vunpack.c.l.b16 %v235
  %v771 = vunpack.c.l.b16 %v236
  %v772 = vunpack.c.l.b16 %v237
  %v773 = vunpack.c.l.b16 %v238
  %v774 = vunpack.c.l.b16 %v239
  %v775 = vunpack.c.l.b16 %v240
  %v776 = vunpack.c.l.b16 %v241
  %v777 = vunpack.c.l.b16 %v242
  %v778 = vunpack.c.l.b16 %v243
  %v779 = vunpack.c.l.b16 %v244
  %v780 = vunpack.c.l.b16 %v245
  %v781 = vunpack.c.l.b16 %v246
  %v782 = vunpack.c.l.b16 %v247
  %v783 = vunpack.c.l.b16 %v248
  %v784 = vunpack.c.l.b16 %v249
  %v785 = vunpack.c.l.b16 %v250
  %v786 = vunpack.c.l.b16 %v251
  %v787 = vunpack.c.l.b16 %v252
  %v788 = vunpack.c.l.b16 %v253
  %v789 = vunpack.c.l.b16 %v254
  %v790 = vunpack.c.l.b16 %v255
  %v791 = vunpack.c.l.b16 %v256
  %v792 = vunpack.c.l.b16 %v257
  %v793 = vunpack.c.l.b16 %v258
  %v794 = vunpack.c.l.b16 %v259
  %v795 = vunpack.c.l.b16 %v260
  %v796 = vunpack.c.l.b16 %v261
  %v797 = vunpack.c.l.b16 %v262
  %v798 = vunpack.c.l.b16 %v263
  %v799 = vunpack.c.l.b16 %v264
  %v800 = vunpack.c.l.b16 %v265
  %v801 = vunpack.c.l.b16 %v266
  %v802 = vunpack.c.l.b16 %v267
  %v803 = vunpack.c.l.b16 %v268
  %v804 = vunpack.c.l.b16 %v269
  %v805 = vunpack.c.l.b16 %v270
  %v806 = vunpack.c.l.b16 %v271
  %v807 = vunpack.c.l.b16 %v272
  %v808 = vunpack.c.l.b16 %v273
  %v809 = vunpack.c.l.b16 %v274
  %v810 = vunpack.c.l.b16 %v275
  %v811 = vunpack.c.l.b16 %v276
  %v812 = vunpack.c.l.b16 %v277
  %v813 = vunpack.c.l.b16 %v278
  %v814 = vunpack.c.l.b16 %v279
  %v815 = vunpack.c.l.b16 %v280
  %v816 = vunpack.c.l.b16 %v281
  %v817 = vunpack.c.l.b16 %v282
  %v818 = vunpack.c.l.b16 %v283
  %v819 = vunpack.c.l.b16 %v284
  %v820 = vunpack.c.l.b16 %v285
  %v821 = vunpack.c.l.b16 %v286
  %v822 = vunpack.c.l.b16 %v287
  %v823 = vunpack.c.l.b16 %v288
  %v824 = vpack.c.b16 %v569, %v568
  %v825 = vpack.c.b16 %v571, %v570
  %v826 = vpack.c.b16 %v573, %v572
  %v827 = vpack.c.b16 %v575, %v574
  %v828 = vpack.c.b16 %v577, %v576
  %v829 = vpack.c.b16 %v579, %v578
  %v830 = vpack.c.b16 %v581, %v580
  %v831 = vpack.c.b16 %v583, %v582
  %v832 = vpack.c.b16 %v585, %v584
  %v833 = vpack.c.b16 %v587, %v586
  %v834 = vpack.c.b16 %v589, %v588
  %v835 = vpack.c.b16 %v591, %v590
  %v836 = vpack.c.b16 %v593, %v592
  %v837 = vpack.c.b16 %v595, %v594
  %v838 = vpack.c.b16 %v597, %v596
  %v839 = vpack.c.b16 %v599, %v598
  %v840 = vpack.c.b16 %v601, %v600
  %v841 = vpack.c.b16 %v603, %v602
  %v842 = vpack.c.b16 %v605, %v604
  %v843 = vpack.c.b16 %v607, %v606
  %v844 = vpack.c.b16 %v609, %v608
  %v845 = vpack.c.b16 %v611, %v610
  %v846 = vpack.c.b16 %v613, %v612
  %v847 = vpack.c.b16 %v615, %v614
  %v848 = vpack.c.b16 %v617, %v616
  %v849 = vpack.c.b16 %v619, %v618
  %v850 = vpack.c.b16 %v621, %v620
  %v851 = vpack.c.b16 %v623, %v622
  %v852 = vpack.c.b16 %v625, %v624
  %v853 = vpack.c.b16 %v627, %v626
  %v854 = vpack.c.b16 %v629, %v628
  %v855 = vpack.c.b16 %v631, %v630
  %v856 = vpack.c.b16 %v633, %v632
  %v857 = vpack.c.b16 %v635, %v634
  %v858 = vpack.c.b16 %v637, %v636
  %v859 = vpack.c.b16 %v639, %v638
  %v860 = vpack.c.b16 %v641, %v640
  %v861 = vpack.c.b16 %v643, %v642
  %v862 = vpack.c.b16 %v645, %v644
  %v863 = vpack.c.b16 %v647, %v646
  %v864 = vpack.c.b16 %v649, %v648
  %v865 = vpack.c.b16 %v651, %v650
  %v866 = vpack.c.b16 %v653, %v652
  %v867 = vpack.c.b16 %v655, %v654
  %v868 = vpack.c.b16 %v657, %v656
  %v869 = vpack.c.b16 %v659, %v658
  %v870 = vpack.c.b16 %v661, %v660
  %v871 = vpack.c.b16 %v663, %v662
  %v872 = vpack.c.b16 %v665, %v664
  %v873 = vpack.c.b16 %v667, %v666
  %v874 = vpack.c.b16 %v669, %v668
  %v875 = vpack.c.b16 %v671, %v670
  %v876 = vpack.c.b16 %v673, %v672
  %v877 = vpack.c.b16 %v675, %v674
  %v878 = vpack.c.b16 %v677, %v676
  %v879 = vpack.c.b16 %v679, %v678
  %v880 = vpack.c.b16 %v681, %v680
  %v881 = vpack.c.b16 %v683, %v682
  %v882 = vpack.c.b16 %v685, %v684
  %v883 = vpack.c.b16 %v687, %v686
  %v884 = vpack.c.b16 %v689, %v688
  %v885 = vpack.c.b16 %v691, %v690
  %v886 = vpack.c.b16 %v693, %v692
  %v887 = vpack.c.b16 %v695, %v694
  %v888 = vpack.c.b16 %v697, %v696
  %v889 = vpack.c.b16 %v699, %v698
  %v890 = vpack.c.b16 %v701, %v700
  %v891 = vpack.c.b16 %v703, %v702
  %v892 = vpack.c.b16 %v705, %v704
  %v893 = vpack.c.b16 %v707, %v706
  %v894 = vpack.c.b16 %v709, %v708
  %v895 = vpack.c.b16 %v711, %v710
  %v896 = vpack.c.b16 %v713, %v712
  %v897 = vpack.c.b16 %v715, %v714
  %v898 = vpack.c.b16 %v717, %v716
  %v899 = vpack.c.b16 %v719, %v718
  %v900 = vpack.c.b16 %v721, %v720
  %v901 = vpack.c.b16 %v723, %v722
  %v902 = vpack.c.b16 %v725, %v724
  %v903 = vpack.c.b16 %v727, %v726
  %v904 = vpack.c.b16 %v729, %v728
  %v905 = vpack.c.b16 %v731, %v730
  %v906 = vpack.c.b16 %v733, %v732
  %v907 = vpack.c.b16 %v735, %v734
  %v908 = vpack.c.b16 %v737, %v736
  %v909 = vpack.c.b16 %v739, %v738
  %v910 = vpack.c.b16 %v741, %v740
  %v911 = vpack.c.b16 %v743, %v742
  %v912 = vpack.c.b16 %v745, %v744
  %v913 = vpack.c.b16 %v747, %v746
  %v914 = vpack.c.b16 %v749, %v748
  %v915 = vpack.c.b16 %v751, %v750
  %v916 = vpack.c.b16 %v753, %v752
  %v917 = vpack.c.b16 %v755, %v754
  %v918 = vpack.c.b16 %v757, %v756
  %v919 = vpack.c.b16 %v759, %v758
  %v920 = vpack.c.b16 %v761, %v760
  %v921 = vpack.c.b16 %v763, %v762
  %v922 = vpack.c.b16 %v765, %v764
  %v923 = vpack.c.b16 %v767, %v766
  %v924 = vpack.c.b16 %v769, %v768
  %v925 = vpack.c.b16 %v771, %v770
  %v926 = vpack.c.b16 %v773, %v772
  %v927 = vpack.c.b16 %v775, %v774
  %v928 = vpack.c.b16 %v777, %v776
  %v929 = vpack.c.b16 %v779, %v778
  %v930 = vpack.c.b16 %v781, %v780
  %v931 = vpack.c.b16 %v783, %v782
  %v932 = vpack.c.b16 %v785, %v784
  %v933 = vpack.c.b16 %v787, %v786
  %v934 = vpack.c.b16 %v789, %v788
  %v935 = vpack.c.b16 %v791, %v790
  %v936 = vpack.c.b16 %v793, %v792
  %v937 = vpack.c.b16 %v795, %v794
  %v938 = vpack.c.b16 %v797, %v796
  %v939 = vpack.c.b16 %v799, %v798
  %v940 = vpack.c.b16 %v801, %v800
  %v941 = vpack.c.b16 %v803, %v802
  %v942 = vpack.c.b16 %v805, %v804
  %v943 = vpack.c.b16 %v807, %v806
  %v944 = vpack.c.b16 %v809, %v808
  %v945 = vpack.c.b16 %v811, %v810
  %v946 = vpack.c.b16 %v813, %v812
  %v947 = vpack.c.b16 %v815, %v814
  %v948 = vpack.c.b16 %v817, %v816
  %v949 = vpack.c.b16 %v819, %v818
  %v950 = vpack.c.b16 %v821, %v820
  %v951 = vpack.c.b16 %v823, %v822
  %v1096 = vunpack.c.l.b16 %v289
  %v1097 = vunpack.c.l.b16 %v290
  %v1098 = vunpack.c.l.b16 %v291
  %v1099 = vunpack.c.l.b16 %v292
  %v1100 = vunpack.c.l.b16 %v293
  %v1101 = vunpack.c.l.b16 %v294
  %v1102 = vunpack.c.l.b16 %v295
  %v1103 = vunpack.c.l.b16 %v296
  %v1104 = vunpack.c.l.b16 %v297
  %v1105 = vunpack.c.l.b16 %v298
  %v1106 = vunpack.c.l.b16 %v299
  %v1107 = vunpack.c.l.b16 %v300
  %v1108 = vunpack.c.l.b16 %v301
  %v1109 = vunpack.c.l.b16 %v302
  %v1110 = vunpack.c.l.b16 %v303
  %v1111 = vunpack.c.l.b16 %v304
  %v1112 = vpack.c.b16 %v1097, %v1096
  %v1113 = vpack.c.b16 %v1099, %v1098
  %v1114 = vpack.c.b16 %v1101, %v1100
  %v1115 = vpack.c.b16 %v1103, %v1102
  %v1116 = vpack.c.b16 %v1105, %v1104
  %v1117 = vpack.c.b16 %v1107, %v1106
  %v1118 = vpack.c.b16 %v1109, %v1108
  %v1119 = vpack.c.b16 %v1111, %v1110
  %1128 = vmatprep.subr.bf16.mxu0 0
  %1129 = vmatpush1.bf16.msra.mxu0 %v1119
  %1130 = vmatprep.subr.bf16.mxu0 0
  %1131 = vmatpush1.bf16.msra.mxu0 %v1118
  %1132 = vmatprep.subr.bf16.mxu0 0
  %1133 = vmatpush1.bf16.msra.mxu0 %v1117
  %1134 = vmatprep.subr.bf16.mxu0 0
  %1135 = vmatpush1.bf16.msra.mxu0 %v1116
  %1136 = vmatprep.subr.bf16.mxu0 0
  %1137 = vmatpush1.bf16.msra.mxu0 %v1115
  %1138 = vmatprep.subr.bf16.mxu0 0
  %1139 = vmatpush1.bf16.msra.mxu0 %v1114
  %1140 = vmatprep.subr.bf16.mxu0 0
  %1141 = vmatpush1.bf16.msra.mxu0 %v1113
  %1142 = vmatprep.subr.bf16.mxu0 0
  %1143 = vmatpush1.bf16.msra.mxu0 %v1112
  %1144 = vmatprep.subr.bf16.mxu0 0
  %1145 = vmatpush2.bf16.msra.mxu0 0
  %1146 = vmatprep.subr.bf16.mxu0 0
  %1147 = vmatpush2.bf16.msra.mxu0 0
  %1148 = vmatprep.subr.bf16.mxu0 0
  %1149 = vmatpush2.bf16.msra.mxu0 0
  %1150 = vmatprep.subr.bf16.mxu0 0
  %1151 = vmatpush2.bf16.msra.mxu0 0
  %1152 = vmatprep.subr.bf16.mxu0 0
  %1153 = vmatpush2.bf16.msra.mxu0 0
  %1154 = vmatprep.subr.bf16.mxu0 0
  %1155 = vmatpush2.bf16.msra.mxu0 0
  %1156 = vmatprep.subr.bf16.mxu0 0
  %1157 = vmatpush2.bf16.msra.mxu0 0
  %1158 = vmatprep.subr.bf16.mxu0 0
  %1159 = vmatpush2.bf16.msra.mxu0 0
  %1160 = vmatprep.mubr.bf16.mxu0 0
  %1161 = vmatmul.mubr.bf16.gmra.mxu0 %v824
  %v1162 = vpop.f32.mrf.mxu0
  %v1163 = vadd.f32 %v310, %v1162
  %v1164 = vpop.f32.mrf.mxu0
  %v1165 = vpop.f32.mrf.mxu0
  %v1166 = vadd.f32 %v310, %v1165
  %v1167 = vpop.f32.mrf.mxu0
  %1168 = vmatprep.mubr.bf16.mxu0 0
  %1169 = vmatmul.mubr.bf16.gmra.mxu0 %v825
  %v1170 = vpop.f32.mrf.mxu0
  %v1171 = vadd.f32 %v310, %v1170
  %v1172 = vpop.f32.mrf.mxu0
  %v1173 = vpop.f32.mrf.mxu0
  %v1174 = vadd.f32 %v310, %v1173
  %v1175 = vpop.f32.mrf.mxu0
  %1176 = vmatprep.mubr.bf16.mxu0 0
  %1177 = vmatmul.mubr.bf16.gmra.mxu0 %v826
  %v1178 = vpop.f32.mrf.mxu0
  %v1179 = vadd.f32 %v310, %v1178
  %v1180 = vpop.f32.mrf.mxu0
  %v1181 = vpop.f32.mrf.mxu0
  %v1182 = vadd.f32 %v310, %v1181
  %v1183 = vpop.f32.mrf.mxu0
  %1184 = vmatprep.mubr.bf16.mxu0 0
  %1185 = vmatmul.mubr.bf16.gmra.mxu0 %v827
  %v1186 = vpop.f32.mrf.mxu0
  %v1187 = vadd.f32 %v310, %v1186
  %v1188 = vpop.f32.mrf.mxu0
  %v1189 = vpop.f32.mrf.mxu0
  %v1190 = vadd.f32 %v310, %v1189
  %v1191 = vpop.f32.mrf.mxu0
  %1192 = vmatprep.mubr.bf16.mxu0 0
  %1193 = vmatmul.mubr.bf16.gmra.mxu0 %v828
  %v1194 = vpop.f32.mrf.mxu0
  %v1195 = vadd.f32 %v310, %v1194
  %v1196 = vpop.f32.mrf.mxu0
  %v1197 = vpop.f32.mrf.mxu0
  %v1198 = vadd.f32 %v310, %v1197
  %v1199 = vpop.f32.mrf.mxu0
  %1200 = vmatprep.mubr.bf16.mxu0 0
  %1201 = vmatmul.mubr.bf16.gmra.mxu0 %v829
  %v1202 = vpop.f32.mrf.mxu0
  %v1203 = vadd.f32 %v310, %v1202
  %v1204 = vpop.f32.mrf.mxu0
  %v1205 = vpop.f32.mrf.mxu0
  %v1206 = vadd.f32 %v310, %v1205
  %v1207 = vpop.f32.mrf.mxu0
  %1208 = vmatprep.mubr.bf16.mxu0 0
  %1209 = vmatmul.mubr.bf16.gmra.mxu0 %v830
  %v1210 = vpop.f32.mrf.mxu0
  %v1211 = vadd.f32 %v310, %v1210
  %v1212 = vpop.f32.mrf.mxu0
  %v1213 = vpop.f32.mrf.mxu0
  %v1214 = vadd.f32 %v310, %v1213
  %v1215 = vpop.f32.mrf.mxu0
  %1216 = vmatprep.mubr.bf16.mxu0 0
  %1217 = vmatmul.mubr.bf16.gmra.mxu0 %v831
  %v1218 = vpop.f32.mrf.mxu0
  %v1219 = vadd.f32 %v310, %v1218
  %v1220 = vpop.f32.mrf.mxu0
  %v1221 = vpop.f32.mrf.mxu0
  %v1222 = vadd.f32 %v310, %v1221
  %v1223 = vpop.f32.mrf.mxu0
  %1224 = vmatprep.mubr.bf16.mxu0 0
  %1225 = vmatmul.mubr.bf16.gmra.mxu0 %v832
  %v1226 = vpop.f32.mrf.mxu0
  %v1227 = vadd.f32 %v310, %v1226
  %v1228 = vpop.f32.mrf.mxu0
  %v1229 = vpop.f32.mrf.mxu0
  %v1230 = vadd.f32 %v310, %v1229
  %v1231 = vpop.f32.mrf.mxu0
  %1232 = vmatprep.mubr.bf16.mxu0 0
  %1233 = vmatmul.mubr.bf16.gmra.mxu0 %v833
  %v1234 = vpop.f32.mrf.mxu0
  %v1235 = vadd.f32 %v310, %v1234
  %v1236 = vpop.f32.mrf.mxu0
  %v1237 = vpop.f32.mrf.mxu0
  %v1238 = vadd.f32 %v310, %v1237
  %v1239 = vpop.f32.mrf.mxu0
  %1240 = vmatprep.mubr.bf16.mxu0 0
  %1241 = vmatmul.mubr.bf16.gmra.mxu0 %v834
  %v1242 = vpop.f32.mrf.mxu0
  %v1243 = vadd.f32 %v310, %v1242
  %v1244 = vpop.f32.mrf.mxu0
  %v1245 = vpop.f32.mrf.mxu0
  %v1246 = vadd.f32 %v310, %v1245
  %v1247 = vpop.f32.mrf.mxu0
  %1248 = vmatprep.mubr.bf16.mxu0 0
  %1249 = vmatmul.mubr.bf16.gmra.mxu0 %v835
  %v1250 = vpop.f32.mrf.mxu0
  %v1251 = vadd.f32 %v310, %v1250
  %v1252 = vpop.f32.mrf.mxu0
  %v1253 = vpop.f32.mrf.mxu0
  %v1254 = vadd.f32 %v310, %v1253
  %v1255 = vpop.f32.mrf.mxu0
  %1256 = vmatprep.mubr.bf16.mxu0 0
  %1257 = vmatmul.mubr.bf16.gmra.mxu0 %v836
  %v1258 = vpop.f32.mrf.mxu0
  %v1259 = vadd.f32 %v310, %v1258
  %v1260 = vpop.f32.mrf.mxu0
  %v1261 = vpop.f32.mrf.mxu0
  %v1262 = vadd.f32 %v310, %v1261
  %v1263 = vpop.f32.mrf.mxu0
  %1264 = vmatprep.mubr.bf16.mxu0 0
  %1265 = vmatmul.mubr.bf16.gmra.mxu0 %v837
  %v1266 = vpop.f32.mrf.mxu0
  %v1267 = vadd.f32 %v310, %v1266
  %v1268 = vpop.f32.mrf.mxu0
  %v1269 = vpop.f32.mrf.mxu0
  %v1270 = vadd.f32 %v310, %v1269
  %v1271 = vpop.f32.mrf.mxu0
  %1272 = vmatprep.mubr.bf16.mxu0 0
  %1273 = vmatmul.mubr.bf16.gmra.mxu0 %v838
  %v1274 = vpop.f32.mrf.mxu0
  %v1275 = vadd.f32 %v310, %v1274
  %v1276 = vpop.f32.mrf.mxu0
  %v1277 = vpop.f32.mrf.mxu0
  %v1278 = vadd.f32 %v310, %v1277
  %v1279 = vpop.f32.mrf.mxu0
  %1280 = vmatprep.mubr.bf16.mxu0 0
  %1281 = vmatmul.mubr.bf16.gmra.mxu0 %v839
  %v1282 = vpop.f32.mrf.mxu0
  %v1283 = vpop.f32.mrf.mxu0
  %v1284 = vpop.f32.mrf.mxu0
  %v1285 = vpop.f32.mrf.mxu0
  %1286 = vmatprep.mubr.bf16.mxu0 0
  %1287 = vmatmul.mubr.bf16.gmra.mxu0 %v840
  %v1288 = vpop.f32.mrf.mxu0
  %v1289 = vadd.f32 %v310, %v1288
  %v1290 = vpop.f32.mrf.mxu0
  %v1291 = vpop.f32.mrf.mxu0
  %v1292 = vadd.f32 %v310, %v1291
  %v1293 = vpop.f32.mrf.mxu0
  %1294 = vmatprep.mubr.bf16.mxu0 0
  %1295 = vmatmul.mubr.bf16.gmra.mxu0 %v841
  %v1296 = vpop.f32.mrf.mxu0
  %v1297 = vadd.f32 %v310, %v1296
  %v1298 = vpop.f32.mrf.mxu0
  %v1299 = vpop.f32.mrf.mxu0
  %v1300 = vadd.f32 %v310, %v1299
  %v1301 = vpop.f32.mrf.mxu0
  %1302 = vmatprep.mubr.bf16.mxu0 0
  %1303 = vmatmul.mubr.bf16.gmra.mxu0 %v842
  %v1304 = vpop.f32.mrf.mxu0
  %v1305 = vadd.f32 %v310, %v1304
  %v1306 = vpop.f32.mrf.mxu0
  %v1307 = vpop.f32.mrf.mxu0
  %v1308 = vadd.f32 %v310, %v1307
  %v1309 = vpop.f32.mrf.mxu0
  %1310 = vmatprep.mubr.bf16.mxu0 0
  %1311 = vmatmul.mubr.bf16.gmra.mxu0 %v843
  %v1312 = vpop.f32.mrf.mxu0
  %v1313 = vadd.f32 %v310, %v1312
  %v1314 = vpop.f32.mrf.mxu0
  %v1315 = vpop.f32.mrf.mxu0
  %v1316 = vadd.f32 %v310, %v1315
  %v1317 = vpop.f32.mrf.mxu0
  %1318 = vmatprep.mubr.bf16.mxu0 0
  %1319 = vmatmul.mubr.bf16.gmra.mxu0 %v844
  %v1320 = vpop.f32.mrf.mxu0
  %v1321 = vadd.f32 %v310, %v1320
  %v1322 = vpop.f32.mrf.mxu0
  %v1323 = vpop.f32.mrf.mxu0
  %v1324 = vadd.f32 %v310, %v1323
  %v1325 = vpop.f32.mrf.mxu0
  %1326 = vmatprep.mubr.bf16.mxu0 0
  %1327 = vmatmul.mubr.bf16.gmra.mxu0 %v845
  %v1328 = vpop.f32.mrf.mxu0
  %v1329 = vadd.f32 %v310, %v1328
  %v1330 = vpop.f32.mrf.mxu0
  %v1331 = vpop.f32.mrf.mxu0
  %v1332 = vadd.f32 %v310, %v1331
  %v1333 = vpop.f32.mrf.mxu0
  %1334 = vmatprep.mubr.bf16.mxu0 0
  %1335 = vmatmul.mubr.bf16.gmra.mxu0 %v846
  %v1336 = vpop.f32.mrf.mxu0
  %v1337 = vadd.f32 %v310, %v1336
  %v1338 = vpop.f32.mrf.mxu0
  %v1339 = vpop.f32.mrf.mxu0
  %v1340 = vadd.f32 %v310, %v1339
  %v1341 = vpop.f32.mrf.mxu0
  %1342 = vmatprep.mubr.bf16.mxu0 0
  %1343 = vmatmul.mubr.bf16.gmra.mxu0 %v847
  %v1344 = vpop.f32.mrf.mxu0
  %v1345 = vadd.f32 %v310, %v1344
  %v1346 = vpop.f32.mrf.mxu0
  %v1347 = vpop.f32.mrf.mxu0
  %v1348 = vadd.f32 %v310, %v1347
  %v1349 = vpop.f32.mrf.mxu0
  %1350 = vmatprep.mubr.bf16.mxu0 0
  %1351 = vmatmul.mubr.bf16.gmra.mxu0 %v848
  %v1352 = vpop.f32.mrf.mxu0
  %v1353 = vadd.f32 %v310, %v1352
  %v1354 = vpop.f32.mrf.mxu0
  %v1355 = vpop.f32.mrf.mxu0
  %v1356 = vadd.f32 %v310, %v1355
  %v1357 = vpop.f32.mrf.mxu0
  %1358 = vmatprep.mubr.bf16.mxu0 0
  %1359 = vmatmul.mubr.bf16.gmra.mxu0 %v849
  %v1360 = vpop.f32.mrf.mxu0
  %v1361 = vadd.f32 %v310, %v1360
  %v1362 = vpop.f32.mrf.mxu0
  %v1363 = vpop.f32.mrf.mxu0
  %v1364 = vadd.f32 %v310, %v1363
  %v1365 = vpop.f32.mrf.mxu0
  %1366 = vmatprep.mubr.bf16.mxu0 0
  %1367 = vmatmul.mubr.bf16.gmra.mxu0 %v850
  %v1368 = vpop.f32.mrf.mxu0
  %v1369 = vadd.f32 %v310, %v1368
  %v1370 = vpop.f32.mrf.mxu0
  %v1371 = vpop.f32.mrf.mxu0
  %v1372 = vadd.f32 %v310, %v1371
  %v1373 = vpop.f32.mrf.mxu0
  %1374 = vmatprep.mubr.bf16.mxu0 0
  %1375 = vmatmul.mubr.bf16.gmra.mxu0 %v851
  %v1376 = vpop.f32.mrf.mxu0
  %v1377 = vadd.f32 %v310, %v1376
  %v1378 = vpop.f32.mrf.mxu0
  %v1379 = vpop.f32.mrf.mxu0
  %v1380 = vadd.f32 %v310, %v1379
  %v1381 = vpop.f32.mrf.mxu0
  %1382 = vmatprep.mubr.bf16.mxu0 0
  %1383 = vmatmul.mubr.bf16.gmra.mxu0 %v852
  %v1384 = vpop.f32.mrf.mxu0
  %v1385 = vadd.f32 %v310, %v1384
  %v1386 = vpop.f32.mrf.mxu0
  %v1387 = vpop.f32.mrf.mxu0
  %v1388 = vadd.f32 %v310, %v1387
  %v1389 = vpop.f32.mrf.mxu0
  %1390 = vmatprep.mubr.bf16.mxu0 0
  %1391 = vmatmul.mubr.bf16.gmra.mxu0 %v853
  %v1392 = vpop.f32.mrf.mxu0
  %v1393 = vadd.f32 %v310, %v1392
  %v1394 = vpop.f32.mrf.mxu0
  %v1395 = vpop.f32.mrf.mxu0
  %v1396 = vadd.f32 %v310, %v1395
  %v1397 = vpop.f32.mrf.mxu0
  %1398 = vmatprep.mubr.bf16.mxu0 0
  %1399 = vmatmul.mubr.bf16.gmra.mxu0 %v854
  %v1400 = vpop.f32.mrf.mxu0
  %v1401 = vadd.f32 %v310, %v1400
  %v1402 = vpop.f32.mrf.mxu0
  %v1403 = vpop.f32.mrf.mxu0
  %v1404 = vadd.f32 %v310, %v1403
  %v1405 = vpop.f32.mrf.mxu0
  %1406 = vmatprep.mubr.bf16.mxu0 0
  %1407 = vmatmul.mubr.bf16.gmra.mxu0 %v855
  %v1408 = vpop.f32.mrf.mxu0
  %v1409 = vpop.f32.mrf.mxu0
  %v1410 = vpop.f32.mrf.mxu0
  %v1411 = vpop.f32.mrf.mxu0
  %1412 = vmatprep.mubr.bf16.mxu0 0
  %1413 = vmatmul.mubr.bf16.gmra.mxu0 %v856
  %v1414 = vpop.f32.mrf.mxu0
  %v1415 = vadd.f32 %v310, %v1414
  %v1416 = vpop.f32.mrf.mxu0
  %v1417 = vpop.f32.mrf.mxu0
  %v1418 = vadd.f32 %v310, %v1417
  %v1419 = vpop.f32.mrf.mxu0
  %1420 = vmatprep.mubr.bf16.mxu0 0
  %1421 = vmatmul.mubr.bf16.gmra.mxu0 %v857
  %v1422 = vpop.f32.mrf.mxu0
  %v1423 = vadd.f32 %v310, %v1422
  %v1424 = vpop.f32.mrf.mxu0
  %v1425 = vpop.f32.mrf.mxu0
  %v1426 = vadd.f32 %v310, %v1425
  %v1427 = vpop.f32.mrf.mxu0
  %1428 = vmatprep.mubr.bf16.mxu0 0
  %1429 = vmatmul.mubr.bf16.gmra.mxu0 %v858
  %v1430 = vpop.f32.mrf.mxu0
  %v1431 = vadd.f32 %v310, %v1430
  %v1432 = vpop.f32.mrf.mxu0
  %v1433 = vpop.f32.mrf.mxu0
  %v1434 = vadd.f32 %v310, %v1433
  %v1435 = vpop.f32.mrf.mxu0
  %1436 = vmatprep.mubr.bf16.mxu0 0
  %1437 = vmatmul.mubr.bf16.gmra.mxu0 %v859
  %v1438 = vpop.f32.mrf.mxu0
  %v1439 = vadd.f32 %v310, %v1438
  %v1440 = vpop.f32.mrf.mxu0
  %v1441 = vpop.f32.mrf.mxu0
  %v1442 = vadd.f32 %v310, %v1441
  %v1443 = vpop.f32.mrf.mxu0
  %1444 = vmatprep.mubr.bf16.mxu0 0
  %1445 = vmatmul.mubr.bf16.gmra.mxu0 %v860
  %v1446 = vpop.f32.mrf.mxu0
  %v1447 = vadd.f32 %v310, %v1446
  %v1448 = vpop.f32.mrf.mxu0
  %v1449 = vpop.f32.mrf.mxu0
  %v1450 = vadd.f32 %v310, %v1449
  %v1451 = vpop.f32.mrf.mxu0
  %1452 = vmatprep.mubr.bf16.mxu0 0
  %1453 = vmatmul.mubr.bf16.gmra.mxu0 %v861
  %v1454 = vpop.f32.mrf.mxu0
  %v1455 = vadd.f32 %v310, %v1454
  %v1456 = vpop.f32.mrf.mxu0
  %v1457 = vpop.f32.mrf.mxu0
  %v1458 = vadd.f32 %v310, %v1457
  %v1459 = vpop.f32.mrf.mxu0
  %1460 = vmatprep.mubr.bf16.mxu0 0
  %1461 = vmatmul.mubr.bf16.gmra.mxu0 %v862
  %v1462 = vpop.f32.mrf.mxu0
  %v1463 = vadd.f32 %v310, %v1462
  %v1464 = vpop.f32.mrf.mxu0
  %v1465 = vpop.f32.mrf.mxu0
  %v1466 = vadd.f32 %v310, %v1465
  %v1467 = vpop.f32.mrf.mxu0
  %1468 = vmatprep.mubr.bf16.mxu0 0
  %1469 = vmatmul.mubr.bf16.gmra.mxu0 %v863
  %v1470 = vpop.f32.mrf.mxu0
  %v1471 = vadd.f32 %v310, %v1470
  %v1472 = vpop.f32.mrf.mxu0
  %v1473 = vpop.f32.mrf.mxu0
  %v1474 = vadd.f32 %v310, %v1473
  %v1475 = vpop.f32.mrf.mxu0
  %1476 = vmatprep.mubr.bf16.mxu0 0
  %1477 = vmatmul.mubr.bf16.gmra.mxu0 %v864
  %v1478 = vpop.f32.mrf.mxu0
  %v1479 = vadd.f32 %v310, %v1478
  %v1480 = vpop.f32.mrf.mxu0
  %v1481 = vpop.f32.mrf.mxu0
  %v1482 = vadd.f32 %v310, %v1481
  %v1483 = vpop.f32.mrf.mxu0
  %1484 = vmatprep.mubr.bf16.mxu0 0
  %1485 = vmatmul.mubr.bf16.gmra.mxu0 %v865
  %v1486 = vpop.f32.mrf.mxu0
  %v1487 = vadd.f32 %v310, %v1486
  %v1488 = vpop.f32.mrf.mxu0
  %v1489 = vpop.f32.mrf.mxu0
  %v1490 = vadd.f32 %v310, %v1489
  %v1491 = vpop.f32.mrf.mxu0
  %1492 = vmatprep.mubr.bf16.mxu0 0
  %1493 = vmatmul.mubr.bf16.gmra.mxu0 %v866
  %v1494 = vpop.f32.mrf.mxu0
  %v1495 = vadd.f32 %v310, %v1494
  %v1496 = vpop.f32.mrf.mxu0
  %v1497 = vpop.f32.mrf.mxu0
  %v1498 = vadd.f32 %v310, %v1497
  %v1499 = vpop.f32.mrf.mxu0
  %1500 = vmatprep.mubr.bf16.mxu0 0
  %1501 = vmatmul.mubr.bf16.gmra.mxu0 %v867
  %v1502 = vpop.f32.mrf.mxu0
  %v1503 = vadd.f32 %v310, %v1502
  %v1504 = vpop.f32.mrf.mxu0
  %v1505 = vpop.f32.mrf.mxu0
  %v1506 = vadd.f32 %v310, %v1505
  %v1507 = vpop.f32.mrf.mxu0
  %1508 = vmatprep.mubr.bf16.mxu0 0
  %1509 = vmatmul.mubr.bf16.gmra.mxu0 %v868
  %v1510 = vpop.f32.mrf.mxu0
  %v1511 = vadd.f32 %v310, %v1510
  %v1512 = vpop.f32.mrf.mxu0
  %v1513 = vpop.f32.mrf.mxu0
  %v1514 = vadd.f32 %v310, %v1513
  %v1515 = vpop.f32.mrf.mxu0
  %1516 = vmatprep.mubr.bf16.mxu0 0
  %1517 = vmatmul.mubr.bf16.gmra.mxu0 %v869
  %v1518 = vpop.f32.mrf.mxu0
  %v1519 = vadd.f32 %v310, %v1518
  %v1520 = vpop.f32.mrf.mxu0
  %v1521 = vpop.f32.mrf.mxu0
  %v1522 = vadd.f32 %v310, %v1521
  %v1523 = vpop.f32.mrf.mxu0
  %1524 = vmatprep.mubr.bf16.mxu0 0
  %1525 = vmatmul.mubr.bf16.gmra.mxu0 %v870
  %v1526 = vpop.f32.mrf.mxu0
  %v1527 = vadd.f32 %v310, %v1526
  %v1528 = vpop.f32.mrf.mxu0
  %v1529 = vpop.f32.mrf.mxu0
  %v1530 = vadd.f32 %v310, %v1529
  %v1531 = vpop.f32.mrf.mxu0
  %1532 = vmatprep.mubr.bf16.mxu0 0
  %1533 = vmatmul.mubr.bf16.gmra.mxu0 %v871
  %v1534 = vpop.f32.mrf.mxu0
  %v1535 = vpop.f32.mrf.mxu0
  %v1536 = vpop.f32.mrf.mxu0
  %v1537 = vpop.f32.mrf.mxu0
  %1538 = vmatprep.mubr.bf16.mxu0 0
  %1539 = vmatmul.mubr.bf16.gmra.mxu0 %v872
  %v1540 = vpop.f32.mrf.mxu0
  %v1541 = vadd.f32 %v310, %v1540
  %v1542 = vpop.f32.mrf.mxu0
  %v1543 = vpop.f32.mrf.mxu0
  %v1544 = vadd.f32 %v310, %v1543
  %v1545 = vpop.f32.mrf.mxu0
  %1546 = vmatprep.mubr.bf16.mxu0 0
  %1547 = vmatmul.mubr.bf16.gmra.mxu0 %v873
  %v1548 = vpop.f32.mrf.mxu0
  %v1549 = vadd.f32 %v310, %v1548
  %v1550 = vpop.f32.mrf.mxu0
  %v1551 = vpop.f32.mrf.mxu0
  %v1552 = vadd.f32 %v310, %v1551
  %v1553 = vpop.f32.mrf.mxu0
  %1554 = vmatprep.mubr.bf16.mxu0 0
  %1555 = vmatmul.mubr.bf16.gmra.mxu0 %v874
  %v1556 = vpop.f32.mrf.mxu0
  %v1557 = vadd.f32 %v310, %v1556
  %v1558 = vpop.f32.mrf.mxu0
  %v1559 = vpop.f32.mrf.mxu0
  %v1560 = vadd.f32 %v310, %v1559
  %v1561 = vpop.f32.mrf.mxu0
  %1562 = vmatprep.mubr.bf16.mxu0 0
  %1563 = vmatmul.mubr.bf16.gmra.mxu0 %v875
  %v1564 = vpop.f32.mrf.mxu0
  %v1565 = vadd.f32 %v310, %v1564
  %v1566 = vpop.f32.mrf.mxu0
  %v1567 = vpop.f32.mrf.mxu0
  %v1568 = vadd.f32 %v310, %v1567
  %v1569 = vpop.f32.mrf.mxu0
  %1570 = vmatprep.mubr.bf16.mxu0 0
  %1571 = vmatmul.mubr.bf16.gmra.mxu0 %v876
  %v1572 = vpop.f32.mrf.mxu0
  %v1573 = vadd.f32 %v310, %v1572
  %v1574 = vpop.f32.mrf.mxu0
  %v1575 = vpop.f32.mrf.mxu0
  %v1576 = vadd.f32 %v310, %v1575
  %v1577 = vpop.f32.mrf.mxu0
  %1578 = vmatprep.mubr.bf16.mxu0 0
  %1579 = vmatmul.mubr.bf16.gmra.mxu0 %v877
  %v1580 = vpop.f32.mrf.mxu0
  %v1581 = vadd.f32 %v310, %v1580
  %v1582 = vpop.f32.mrf.mxu0
  %v1583 = vpop.f32.mrf.mxu0
  %v1584 = vadd.f32 %v310, %v1583
  %v1585 = vpop.f32.mrf.mxu0
  %1586 = vmatprep.mubr.bf16.mxu0 0
  %1587 = vmatmul.mubr.bf16.gmra.mxu0 %v878
  %v1588 = vpop.f32.mrf.mxu0
  %v1589 = vadd.f32 %v310, %v1588
  %v1590 = vpop.f32.mrf.mxu0
  %v1591 = vpop.f32.mrf.mxu0
  %v1592 = vadd.f32 %v310, %v1591
  %v1593 = vpop.f32.mrf.mxu0
  %1594 = vmatprep.mubr.bf16.mxu0 0
  %1595 = vmatmul.mubr.bf16.gmra.mxu0 %v879
  %v1596 = vpop.f32.mrf.mxu0
  %v1597 = vadd.f32 %v310, %v1596
  %v1598 = vpop.f32.mrf.mxu0
  %v1599 = vpop.f32.mrf.mxu0
  %v1600 = vadd.f32 %v310, %v1599
  %v1601 = vpop.f32.mrf.mxu0
  %1602 = vmatprep.mubr.bf16.mxu0 0
  %1603 = vmatmul.mubr.bf16.gmra.mxu0 %v880
  %v1604 = vpop.f32.mrf.mxu0
  %v1605 = vadd.f32 %v310, %v1604
  %v1606 = vpop.f32.mrf.mxu0
  %v1607 = vpop.f32.mrf.mxu0
  %v1608 = vadd.f32 %v310, %v1607
  %v1609 = vpop.f32.mrf.mxu0
  %1610 = vmatprep.mubr.bf16.mxu0 0
  %1611 = vmatmul.mubr.bf16.gmra.mxu0 %v881
  %v1612 = vpop.f32.mrf.mxu0
  %v1613 = vadd.f32 %v310, %v1612
  %v1614 = vpop.f32.mrf.mxu0
  %v1615 = vpop.f32.mrf.mxu0
  %v1616 = vadd.f32 %v310, %v1615
  %v1617 = vpop.f32.mrf.mxu0
  %1618 = vmatprep.mubr.bf16.mxu0 0
  %1619 = vmatmul.mubr.bf16.gmra.mxu0 %v882
  %v1620 = vpop.f32.mrf.mxu0
  %v1621 = vadd.f32 %v310, %v1620
  %v1622 = vpop.f32.mrf.mxu0
  %v1623 = vpop.f32.mrf.mxu0
  %v1624 = vadd.f32 %v310, %v1623
  %v1625 = vpop.f32.mrf.mxu0
  %1626 = vmatprep.mubr.bf16.mxu0 0
  %1627 = vmatmul.mubr.bf16.gmra.mxu0 %v883
  %v1628 = vpop.f32.mrf.mxu0
  %v1629 = vadd.f32 %v310, %v1628
  %v1630 = vpop.f32.mrf.mxu0
  %v1631 = vpop.f32.mrf.mxu0
  %v1632 = vadd.f32 %v310, %v1631
  %v1633 = vpop.f32.mrf.mxu0
  %1634 = vmatprep.mubr.bf16.mxu0 0
  %1635 = vmatmul.mubr.bf16.gmra.mxu0 %v884
  %v1636 = vpop.f32.mrf.mxu0
  %v1637 = vadd.f32 %v310, %v1636
  %v1638 = vpop.f32.mrf.mxu0
  %v1639 = vpop.f32.mrf.mxu0
  %v1640 = vadd.f32 %v310, %v1639
  %v1641 = vpop.f32.mrf.mxu0
  %1642 = vmatprep.mubr.bf16.mxu0 0
  %1643 = vmatmul.mubr.bf16.gmra.mxu0 %v885
  %v1644 = vpop.f32.mrf.mxu0
  %v1645 = vadd.f32 %v310, %v1644
  %v1646 = vpop.f32.mrf.mxu0
  %v1647 = vpop.f32.mrf.mxu0
  %v1648 = vadd.f32 %v310, %v1647
  %v1649 = vpop.f32.mrf.mxu0
  %1650 = vmatprep.mubr.bf16.mxu0 0
  %1651 = vmatmul.mubr.bf16.gmra.mxu0 %v886
  %v1652 = vpop.f32.mrf.mxu0
  %v1653 = vadd.f32 %v310, %v1652
  %v1654 = vpop.f32.mrf.mxu0
  %v1655 = vpop.f32.mrf.mxu0
  %v1656 = vadd.f32 %v310, %v1655
  %v1657 = vpop.f32.mrf.mxu0
  %1658 = vmatprep.mubr.bf16.mxu0 0
  %1659 = vmatmul.mubr.bf16.gmra.mxu0 %v887
  %v1660 = vpop.f32.mrf.mxu0
  %v1661 = vpop.f32.mrf.mxu0
  %v1662 = vpop.f32.mrf.mxu0
  %v1663 = vpop.f32.mrf.mxu0
  %1664 = vmatprep.mubr.bf16.mxu0 0
  %1665 = vmatmul.mubr.bf16.gmra.mxu0 %v888
  %v1666 = vpop.f32.mrf.mxu0
  %v1667 = vadd.f32 %v310, %v1666
  %v1668 = vpop.f32.mrf.mxu0
  %v1669 = vpop.f32.mrf.mxu0
  %v1670 = vadd.f32 %v310, %v1669
  %v1671 = vpop.f32.mrf.mxu0
  %1672 = vmatprep.mubr.bf16.mxu0 0
  %1673 = vmatmul.mubr.bf16.gmra.mxu0 %v889
  %v1674 = vpop.f32.mrf.mxu0
  %v1675 = vadd.f32 %v310, %v1674
  %v1676 = vpop.f32.mrf.mxu0
  %v1677 = vpop.f32.mrf.mxu0
  %v1678 = vadd.f32 %v310, %v1677
  %v1679 = vpop.f32.mrf.mxu0
  %1680 = vmatprep.mubr.bf16.mxu0 0
  %1681 = vmatmul.mubr.bf16.gmra.mxu0 %v890
  %v1682 = vpop.f32.mrf.mxu0
  %v1683 = vadd.f32 %v310, %v1682
  %v1684 = vpop.f32.mrf.mxu0
  %v1685 = vpop.f32.mrf.mxu0
  %v1686 = vadd.f32 %v310, %v1685
  %v1687 = vpop.f32.mrf.mxu0
  %1688 = vmatprep.mubr.bf16.mxu0 0
  %1689 = vmatmul.mubr.bf16.gmra.mxu0 %v891
  %v1690 = vpop.f32.mrf.mxu0
  %v1691 = vadd.f32 %v310, %v1690
  %v1692 = vpop.f32.mrf.mxu0
  %v1693 = vpop.f32.mrf.mxu0
  %v1694 = vadd.f32 %v310, %v1693
  %v1695 = vpop.f32.mrf.mxu0
  %1696 = vmatprep.mubr.bf16.mxu0 0
  %1697 = vmatmul.mubr.bf16.gmra.mxu0 %v892
  %v1698 = vpop.f32.mrf.mxu0
  %v1699 = vadd.f32 %v310, %v1698
  %v1700 = vpop.f32.mrf.mxu0
  %v1701 = vpop.f32.mrf.mxu0
  %v1702 = vadd.f32 %v310, %v1701
  %v1703 = vpop.f32.mrf.mxu0
  %1704 = vmatprep.mubr.bf16.mxu0 0
  %1705 = vmatmul.mubr.bf16.gmra.mxu0 %v893
  %v1706 = vpop.f32.mrf.mxu0
  %v1707 = vadd.f32 %v310, %v1706
  %v1708 = vpop.f32.mrf.mxu0
  %v1709 = vpop.f32.mrf.mxu0
  %v1710 = vadd.f32 %v310, %v1709
  %v1711 = vpop.f32.mrf.mxu0
  %1712 = vmatprep.mubr.bf16.mxu0 0
  %1713 = vmatmul.mubr.bf16.gmra.mxu0 %v894
  %v1714 = vpop.f32.mrf.mxu0
  %v1715 = vadd.f32 %v310, %v1714
  %v1716 = vpop.f32.mrf.mxu0
  %v1717 = vpop.f32.mrf.mxu0
  %v1718 = vadd.f32 %v310, %v1717
  %v1719 = vpop.f32.mrf.mxu0
  %1720 = vmatprep.mubr.bf16.mxu0 0
  %1721 = vmatmul.mubr.bf16.gmra.mxu0 %v895
  %v1722 = vpop.f32.mrf.mxu0
  %v1723 = vadd.f32 %v310, %v1722
  %v1724 = vpop.f32.mrf.mxu0
  %v1725 = vpop.f32.mrf.mxu0
  %v1726 = vadd.f32 %v310, %v1725
  %v1727 = vpop.f32.mrf.mxu0
  %1728 = vmatprep.mubr.bf16.mxu0 0
  %1729 = vmatmul.mubr.bf16.gmra.mxu0 %v896
  %v1730 = vpop.f32.mrf.mxu0
  %v1731 = vadd.f32 %v310, %v1730
  %v1732 = vpop.f32.mrf.mxu0
  %v1733 = vpop.f32.mrf.mxu0
  %v1734 = vadd.f32 %v310, %v1733
  %v1735 = vpop.f32.mrf.mxu0
  %1736 = vmatprep.mubr.bf16.mxu0 0
  %1737 = vmatmul.mubr.bf16.gmra.mxu0 %v897
  %v1738 = vpop.f32.mrf.mxu0
  %v1739 = vadd.f32 %v310, %v1738
  %v1740 = vpop.f32.mrf.mxu0
  %v1741 = vpop.f32.mrf.mxu0
  %v1742 = vadd.f32 %v310, %v1741
  %v1743 = vpop.f32.mrf.mxu0
  %1744 = vmatprep.mubr.bf16.mxu0 0
  %1745 = vmatmul.mubr.bf16.gmra.mxu0 %v898
  %v1746 = vpop.f32.mrf.mxu0
  %v1747 = vadd.f32 %v310, %v1746
  %v1748 = vpop.f32.mrf.mxu0
  %v1749 = vpop.f32.mrf.mxu0
  %v1750 = vadd.f32 %v310, %v1749
  %v1751 = vpop.f32.mrf.mxu0
  %1752 = vmatprep.mubr.bf16.mxu0 0
  %1753 = vmatmul.mubr.bf16.gmra.mxu0 %v899
  %v1754 = vpop.f32.mrf.mxu0
  %v1755 = vadd.f32 %v310, %v1754
  %v1756 = vpop.f32.mrf.mxu0
  %v1757 = vpop.f32.mrf.mxu0
  %v1758 = vadd.f32 %v310, %v1757
  %v1759 = vpop.f32.mrf.mxu0
  %1760 = vmatprep.mubr.bf16.mxu0 0
  %1761 = vmatmul.mubr.bf16.gmra.mxu0 %v900
  %v1762 = vpop.f32.mrf.mxu0
  %v1763 = vadd.f32 %v310, %v1762
  %v1764 = vpop.f32.mrf.mxu0
  %v1765 = vpop.f32.mrf.mxu0
  %v1766 = vadd.f32 %v310, %v1765
  %v1767 = vpop.f32.mrf.mxu0
  %1768 = vmatprep.mubr.bf16.mxu0 0
  %1769 = vmatmul.mubr.bf16.gmra.mxu0 %v901
  %v1770 = vpop.f32.mrf.mxu0
  %v1771 = vadd.f32 %v310, %v1770
  %v1772 = vpop.f32.mrf.mxu0
  %v1773 = vpop.f32.mrf.mxu0
  %v1774 = vadd.f32 %v310, %v1773
  %v1775 = vpop.f32.mrf.mxu0
  %1776 = vmatprep.mubr.bf16.mxu0 0
  %1777 = vmatmul.mubr.bf16.gmra.mxu0 %v902
  %v1778 = vpop.f32.mrf.mxu0
  %v1779 = vadd.f32 %v310, %v1778
  %v1780 = vpop.f32.mrf.mxu0
  %v1781 = vpop.f32.mrf.mxu0
  %v1782 = vadd.f32 %v310, %v1781
  %v1783 = vpop.f32.mrf.mxu0
  %1784 = vmatprep.mubr.bf16.mxu0 0
  %1785 = vmatmul.mubr.bf16.gmra.mxu0 %v903
  %v1786 = vpop.f32.mrf.mxu0
  %v1787 = vpop.f32.mrf.mxu0
  %v1788 = vpop.f32.mrf.mxu0
  %v1789 = vpop.f32.mrf.mxu0
  %1790 = vmatprep.mubr.bf16.mxu0 0
  %1791 = vmatmul.mubr.bf16.gmra.mxu0 %v904
  %v1792 = vpop.f32.mrf.mxu0
  %v1793 = vadd.f32 %v310, %v1792
  %v1794 = vpop.f32.mrf.mxu0
  %v1795 = vpop.f32.mrf.mxu0
  %v1796 = vadd.f32 %v310, %v1795
  %v1797 = vpop.f32.mrf.mxu0
  %1798 = vmatprep.mubr.bf16.mxu0 0
  %1799 = vmatmul.mubr.bf16.gmra.mxu0 %v905
  %v1800 = vpop.f32.mrf.mxu0
  %v1801 = vadd.f32 %v310, %v1800
  %v1802 = vpop.f32.mrf.mxu0
  %v1803 = vpop.f32.mrf.mxu0
  %v1804 = vadd.f32 %v310, %v1803
  %v1805 = vpop.f32.mrf.mxu0
  %1806 = vmatprep.mubr.bf16.mxu0 0
  %1807 = vmatmul.mubr.bf16.gmra.mxu0 %v906
  %v1808 = vpop.f32.mrf.mxu0
  %v1809 = vadd.f32 %v310, %v1808
  %v1810 = vpop.f32.mrf.mxu0
  %v1811 = vpop.f32.mrf.mxu0
  %v1812 = vadd.f32 %v310, %v1811
  %v1813 = vpop.f32.mrf.mxu0
  %1814 = vmatprep.mubr.bf16.mxu0 0
  %1815 = vmatmul.mubr.bf16.gmra.mxu0 %v907
  %v1816 = vpop.f32.mrf.mxu0
  %v1817 = vadd.f32 %v310, %v1816
  %v1818 = vpop.f32.mrf.mxu0
  %v1819 = vpop.f32.mrf.mxu0
  %v1820 = vadd.f32 %v310, %v1819
  %v1821 = vpop.f32.mrf.mxu0
  %1822 = vmatprep.mubr.bf16.mxu0 0
  %1823 = vmatmul.mubr.bf16.gmra.mxu0 %v908
  %v1824 = vpop.f32.mrf.mxu0
  %v1825 = vadd.f32 %v310, %v1824
  %v1826 = vpop.f32.mrf.mxu0
  %v1827 = vpop.f32.mrf.mxu0
  %v1828 = vadd.f32 %v310, %v1827
  %v1829 = vpop.f32.mrf.mxu0
  %1830 = vmatprep.mubr.bf16.mxu0 0
  %1831 = vmatmul.mubr.bf16.gmra.mxu0 %v909
  %v1832 = vpop.f32.mrf.mxu0
  %v1833 = vadd.f32 %v310, %v1832
  %v1834 = vpop.f32.mrf.mxu0
  %v1835 = vpop.f32.mrf.mxu0
  %v1836 = vadd.f32 %v310, %v1835
  %v1837 = vpop.f32.mrf.mxu0
  %1838 = vmatprep.mubr.bf16.mxu0 0
  %1839 = vmatmul.mubr.bf16.gmra.mxu0 %v910
  %v1840 = vpop.f32.mrf.mxu0
  %v1841 = vadd.f32 %v310, %v1840
  %v1842 = vpop.f32.mrf.mxu0
  %v1843 = vpop.f32.mrf.mxu0
  %v1844 = vadd.f32 %v310, %v1843
  %v1845 = vpop.f32.mrf.mxu0
  %1846 = vmatprep.mubr.bf16.mxu0 0
  %1847 = vmatmul.mubr.bf16.gmra.mxu0 %v911
  %v1848 = vpop.f32.mrf.mxu0
  %v1849 = vadd.f32 %v310, %v1848
  %v1850 = vpop.f32.mrf.mxu0
  %v1851 = vpop.f32.mrf.mxu0
  %v1852 = vadd.f32 %v310, %v1851
  %v1853 = vpop.f32.mrf.mxu0
  %1854 = vmatprep.mubr.bf16.mxu0 0
  %1855 = vmatmul.mubr.bf16.gmra.mxu0 %v912
  %v1856 = vpop.f32.mrf.mxu0
  %v1857 = vadd.f32 %v310, %v1856
  %v1858 = vpop.f32.mrf.mxu0
  %v1859 = vpop.f32.mrf.mxu0
  %v1860 = vadd.f32 %v310, %v1859
  %v1861 = vpop.f32.mrf.mxu0
  %1862 = vmatprep.mubr.bf16.mxu0 0
  %1863 = vmatmul.mubr.bf16.gmra.mxu0 %v913
  %v1864 = vpop.f32.mrf.mxu0
  %v1865 = vadd.f32 %v310, %v1864
  %v1866 = vpop.f32.mrf.mxu0
  %v1867 = vpop.f32.mrf.mxu0
  %v1868 = vadd.f32 %v310, %v1867
  %v1869 = vpop.f32.mrf.mxu0
  %1870 = vmatprep.mubr.bf16.mxu0 0
  %1871 = vmatmul.mubr.bf16.gmra.mxu0 %v914
  %v1872 = vpop.f32.mrf.mxu0
  %v1873 = vadd.f32 %v310, %v1872
  %v1874 = vpop.f32.mrf.mxu0
  %v1875 = vpop.f32.mrf.mxu0
  %v1876 = vadd.f32 %v310, %v1875
  %v1877 = vpop.f32.mrf.mxu0
  %1878 = vmatprep.mubr.bf16.mxu0 0
  %1879 = vmatmul.mubr.bf16.gmra.mxu0 %v915
  %v1880 = vpop.f32.mrf.mxu0
  %v1881 = vadd.f32 %v310, %v1880
  %v1882 = vpop.f32.mrf.mxu0
  %v1883 = vpop.f32.mrf.mxu0
  %v1884 = vadd.f32 %v310, %v1883
  %v1885 = vpop.f32.mrf.mxu0
  %1886 = vmatprep.mubr.bf16.mxu0 0
  %1887 = vmatmul.mubr.bf16.gmra.mxu0 %v916
  %v1888 = vpop.f32.mrf.mxu0
  %v1889 = vadd.f32 %v310, %v1888
  %v1890 = vpop.f32.mrf.mxu0
  %v1891 = vpop.f32.mrf.mxu0
  %v1892 = vadd.f32 %v310, %v1891
  %v1893 = vpop.f32.mrf.mxu0
  %1894 = vmatprep.mubr.bf16.mxu0 0
  %1895 = vmatmul.mubr.bf16.gmra.mxu0 %v917
  %v1896 = vpop.f32.mrf.mxu0
  %v1897 = vadd.f32 %v310, %v1896
  %v1898 = vpop.f32.mrf.mxu0
  %v1899 = vpop.f32.mrf.mxu0
  %v1900 = vadd.f32 %v310, %v1899
  %v1901 = vpop.f32.mrf.mxu0
  %1902 = vmatprep.mubr.bf16.mxu0 0
  %1903 = vmatmul.mubr.bf16.gmra.mxu0 %v918
  %v1904 = vpop.f32.mrf.mxu0
  %v1905 = vadd.f32 %v310, %v1904
  %v1906 = vpop.f32.mrf.mxu0
  %v1907 = vpop.f32.mrf.mxu0
  %v1908 = vadd.f32 %v310, %v1907
  %v1909 = vpop.f32.mrf.mxu0
  %1910 = vmatprep.mubr.bf16.mxu0 0
  %1911 = vmatmul.mubr.bf16.gmra.mxu0 %v919
  %v1912 = vpop.f32.mrf.mxu0
  %v1913 = vpop.f32.mrf.mxu0
  %v1914 = vpop.f32.mrf.mxu0
  %v1915 = vpop.f32.mrf.mxu0
  %1916 = vmatprep.mubr.bf16.mxu0 0
  %1917 = vmatmul.mubr.bf16.gmra.mxu0 %v920
  %v1918 = vpop.f32.mrf.mxu0
  %v1919 = vadd.f32 %v310, %v1918
  %v1920 = vpop.f32.mrf.mxu0
  %v1921 = vpop.f32.mrf.mxu0
  %v1922 = vadd.f32 %v310, %v1921
  %v1923 = vpop.f32.mrf.mxu0
  %1924 = vmatprep.mubr.bf16.mxu0 0
  %1925 = vmatmul.mubr.bf16.gmra.mxu0 %v921
  %v1926 = vpop.f32.mrf.mxu0
  %v1927 = vadd.f32 %v310, %v1926
  %v1928 = vpop.f32.mrf.mxu0
  %v1929 = vpop.f32.mrf.mxu0
  %v1930 = vadd.f32 %v310, %v1929
  %v1931 = vpop.f32.mrf.mxu0
  %1932 = vmatprep.mubr.bf16.mxu0 0
  %1933 = vmatmul.mubr.bf16.gmra.mxu0 %v922
  %v1934 = vpop.f32.mrf.mxu0
  %v1935 = vadd.f32 %v310, %v1934
  %v1936 = vpop.f32.mrf.mxu0
  %v1937 = vpop.f32.mrf.mxu0
  %v1938 = vadd.f32 %v310, %v1937
  %v1939 = vpop.f32.mrf.mxu0
  %1940 = vmatprep.mubr.bf16.mxu0 0
  %1941 = vmatmul.mubr.bf16.gmra.mxu0 %v923
  %v1942 = vpop.f32.mrf.mxu0
  %v1943 = vadd.f32 %v310, %v1942
  %v1944 = vpop.f32.mrf.mxu0
  %v1945 = vpop.f32.mrf.mxu0
  %v1946 = vadd.f32 %v310, %v1945
  %v1947 = vpop.f32.mrf.mxu0
  %1948 = vmatprep.mubr.bf16.mxu0 0
  %1949 = vmatmul.mubr.bf16.gmra.mxu0 %v924
  %v1950 = vpop.f32.mrf.mxu0
  %v1951 = vadd.f32 %v310, %v1950
  %v1952 = vpop.f32.mrf.mxu0
  %v1953 = vpop.f32.mrf.mxu0
  %v1954 = vadd.f32 %v310, %v1953
  %v1955 = vpop.f32.mrf.mxu0
  %1956 = vmatprep.mubr.bf16.mxu0 0
  %1957 = vmatmul.mubr.bf16.gmra.mxu0 %v925
  %v1958 = vpop.f32.mrf.mxu0
  %v1959 = vadd.f32 %v310, %v1958
  %v1960 = vpop.f32.mrf.mxu0
  %v1961 = vpop.f32.mrf.mxu0
  %v1962 = vadd.f32 %v310, %v1961
  %v1963 = vpop.f32.mrf.mxu0
  %1964 = vmatprep.mubr.bf16.mxu0 0
  %1965 = vmatmul.mubr.bf16.gmra.mxu0 %v926
  %v1966 = vpop.f32.mrf.mxu0
  %v1967 = vadd.f32 %v310, %v1966
  %v1968 = vpop.f32.mrf.mxu0
  %v1969 = vpop.f32.mrf.mxu0
  %v1970 = vadd.f32 %v310, %v1969
  %v1971 = vpop.f32.mrf.mxu0
  %1972 = vmatprep.mubr.bf16.mxu0 0
  %1973 = vmatmul.mubr.bf16.gmra.mxu0 %v927
  %v1974 = vpop.f32.mrf.mxu0
  %v1975 = vadd.f32 %v310, %v1974
  %v1976 = vpop.f32.mrf.mxu0
  %v1977 = vpop.f32.mrf.mxu0
  %v1978 = vadd.f32 %v310, %v1977
  %v1979 = vpop.f32.mrf.mxu0
  %1980 = vmatprep.mubr.bf16.mxu0 0
  %1981 = vmatmul.mubr.bf16.gmra.mxu0 %v928
  %v1982 = vpop.f32.mrf.mxu0
  %v1983 = vadd.f32 %v310, %v1982
  %v1984 = vpop.f32.mrf.mxu0
  %v1985 = vpop.f32.mrf.mxu0
  %v1986 = vadd.f32 %v310, %v1985
  %v1987 = vpop.f32.mrf.mxu0
  %1988 = vmatprep.mubr.bf16.mxu0 0
  %1989 = vmatmul.mubr.bf16.gmra.mxu0 %v929
  %v1990 = vpop.f32.mrf.mxu0
  %v1991 = vadd.f32 %v310, %v1990
  %v1992 = vpop.f32.mrf.mxu0
  %v1993 = vpop.f32.mrf.mxu0
  %v1994 = vadd.f32 %v310, %v1993
  %v1995 = vpop.f32.mrf.mxu0
  %1996 = vmatprep.mubr.bf16.mxu0 0
  %1997 = vmatmul.mubr.bf16.gmra.mxu0 %v930
  %v1998 = vpop.f32.mrf.mxu0
  %v1999 = vadd.f32 %v310, %v1998
  %v2000 = vpop.f32.mrf.mxu0
  %v2001 = vpop.f32.mrf.mxu0
  %v2002 = vadd.f32 %v310, %v2001
  %v2003 = vpop.f32.mrf.mxu0
  %2004 = vmatprep.mubr.bf16.mxu0 0
  %2005 = vmatmul.mubr.bf16.gmra.mxu0 %v931
  %v2006 = vpop.f32.mrf.mxu0
  %v2007 = vadd.f32 %v310, %v2006
  %v2008 = vpop.f32.mrf.mxu0
  %v2009 = vpop.f32.mrf.mxu0
  %v2010 = vadd.f32 %v310, %v2009
  %v2011 = vpop.f32.mrf.mxu0
  %2012 = vmatprep.mubr.bf16.mxu0 0
  %2013 = vmatmul.mubr.bf16.gmra.mxu0 %v932
  %v2014 = vpop.f32.mrf.mxu0
  %v2015 = vadd.f32 %v310, %v2014
  %v2016 = vpop.f32.mrf.mxu0
  %v2017 = vpop.f32.mrf.mxu0
  %v2018 = vadd.f32 %v310, %v2017
  %v2019 = vpop.f32.mrf.mxu0
  %2020 = vmatprep.mubr.bf16.mxu0 0
  %2021 = vmatmul.mubr.bf16.gmra.mxu0 %v933
  %v2022 = vpop.f32.mrf.mxu0
  %v2023 = vadd.f32 %v310, %v2022
  %v2024 = vpop.f32.mrf.mxu0
  %v2025 = vpop.f32.mrf.mxu0
  %v2026 = vadd.f32 %v310, %v2025
  %v2027 = vpop.f32.mrf.mxu0
  %2028 = vmatprep.mubr.bf16.mxu0 0
  %2029 = vmatmul.mubr.bf16.gmra.mxu0 %v934
  %v2030 = vpop.f32.mrf.mxu0
  %v2031 = vadd.f32 %v310, %v2030
  %v2032 = vpop.f32.mrf.mxu0
  %v2033 = vpop.f32.mrf.mxu0
  %v2034 = vadd.f32 %v310, %v2033
  %v2035 = vpop.f32.mrf.mxu0
  %2036 = vmatprep.mubr.bf16.mxu0 0
  %2037 = vmatmul.mubr.bf16.gmra.mxu0 %v935
  %v2038 = vpop.f32.mrf.mxu0
  %v2039 = vpop.f32.mrf.mxu0
  %v2040 = vpop.f32.mrf.mxu0
  %v2041 = vpop.f32.mrf.mxu0
  %2042 = vmatprep.mubr.bf16.mxu0 0
  %2043 = vmatmul.mubr.bf16.gmra.mxu0 %v936
  %v2044 = vpop.f32.mrf.mxu0
  %v2045 = vadd.f32 %v310, %v2044
  %v2046 = vpop.f32.mrf.mxu0
  %v2047 = vpop.f32.mrf.mxu0
  %v2048 = vadd.f32 %v310, %v2047
  %v2049 = vpop.f32.mrf.mxu0
  %2050 = vmatprep.mubr.bf16.mxu0 0
  %2051 = vmatmul.mubr.bf16.gmra.mxu0 %v937
  %v2052 = vpop.f32.mrf.mxu0
  %v2053 = vadd.f32 %v310, %v2052
  %v2054 = vpop.f32.mrf.mxu0
  %v2055 = vpop.f32.mrf.mxu0
  %v2056 = vadd.f32 %v310, %v2055
  %v2057 = vpop.f32.mrf.mxu0
  %2058 = vmatprep.mubr.bf16.mxu0 0
  %2059 = vmatmul.mubr.bf16.gmra.mxu0 %v938
  %v2060 = vpop.f32.mrf.mxu0
  %v2061 = vadd.f32 %v310, %v2060
  %v2062 = vpop.f32.mrf.mxu0
  %v2063 = vpop.f32.mrf.mxu0
  %v2064 = vadd.f32 %v310, %v2063
  %v2065 = vpop.f32.mrf.mxu0
  %2066 = vmatprep.mubr.bf16.mxu0 0
  %2067 = vmatmul.mubr.bf16.gmra.mxu0 %v939
  %v2068 = vpop.f32.mrf.mxu0
  %v2069 = vadd.f32 %v310, %v2068
  %v2070 = vpop.f32.mrf.mxu0
  %v2071 = vpop.f32.mrf.mxu0
  %v2072 = vadd.f32 %v310, %v2071
  %v2073 = vpop.f32.mrf.mxu0
  %2074 = vmatprep.mubr.bf16.mxu0 0
  %2075 = vmatmul.mubr.bf16.gmra.mxu0 %v940
  %v2076 = vpop.f32.mrf.mxu0
  %v2077 = vadd.f32 %v310, %v2076
  %v2078 = vpop.f32.mrf.mxu0
  %v2079 = vpop.f32.mrf.mxu0
  %v2080 = vadd.f32 %v310, %v2079
  %v2081 = vpop.f32.mrf.mxu0
  %2082 = vmatprep.mubr.bf16.mxu0 0
  %2083 = vmatmul.mubr.bf16.gmra.mxu0 %v941
  %v2084 = vpop.f32.mrf.mxu0
  %v2085 = vadd.f32 %v310, %v2084
  %v2086 = vpop.f32.mrf.mxu0
  %v2087 = vpop.f32.mrf.mxu0
  %v2088 = vadd.f32 %v310, %v2087
  %v2089 = vpop.f32.mrf.mxu0
  %2090 = vmatprep.mubr.bf16.mxu0 0
  %2091 = vmatmul.mubr.bf16.gmra.mxu0 %v942
  %v2092 = vpop.f32.mrf.mxu0
  %v2093 = vadd.f32 %v310, %v2092
  %v2094 = vpop.f32.mrf.mxu0
  %v2095 = vpop.f32.mrf.mxu0
  %v2096 = vadd.f32 %v310, %v2095
  %v2097 = vpop.f32.mrf.mxu0
  %2098 = vmatprep.mubr.bf16.mxu0 0
  %2099 = vmatmul.mubr.bf16.gmra.mxu0 %v943
  %v2100 = vpop.f32.mrf.mxu0
  %v2101 = vadd.f32 %v310, %v2100
  %v2102 = vpop.f32.mrf.mxu0
  %v2103 = vpop.f32.mrf.mxu0
  %v2104 = vadd.f32 %v310, %v2103
  %v2105 = vpop.f32.mrf.mxu0
  %2106 = vmatprep.mubr.bf16.mxu0 0
  %2107 = vmatmul.mubr.bf16.gmra.mxu0 %v944
  %v2108 = vpop.f32.mrf.mxu0
  %v2109 = vadd.f32 %v310, %v2108
  %v2110 = vpop.f32.mrf.mxu0
  %v2111 = vpop.f32.mrf.mxu0
  %v2112 = vadd.f32 %v310, %v2111
  %v2113 = vpop.f32.mrf.mxu0
  %2114 = vmatprep.mubr.bf16.mxu0 0
  %2115 = vmatmul.mubr.bf16.gmra.mxu0 %v945
  %v2116 = vpop.f32.mrf.mxu0
  %v2117 = vadd.f32 %v310, %v2116
  %v2118 = vpop.f32.mrf.mxu0
  %v2119 = vpop.f32.mrf.mxu0
  %v2120 = vadd.f32 %v310, %v2119
  %v2121 = vpop.f32.mrf.mxu0
  %2122 = vmatprep.mubr.bf16.mxu0 0
  %2123 = vmatmul.mubr.bf16.gmra.mxu0 %v946
  %v2124 = vpop.f32.mrf.mxu0
  %v2125 = vadd.f32 %v310, %v2124
  %v2126 = vpop.f32.mrf.mxu0
  %v2127 = vpop.f32.mrf.mxu0
  %v2128 = vadd.f32 %v310, %v2127
  %v2129 = vpop.f32.mrf.mxu0
  %2130 = vmatprep.mubr.bf16.mxu0 0
  %2131 = vmatmul.mubr.bf16.gmra.mxu0 %v947
  %v2132 = vpop.f32.mrf.mxu0
  %v2133 = vadd.f32 %v310, %v2132
  %v2134 = vpop.f32.mrf.mxu0
  %v2135 = vpop.f32.mrf.mxu0
  %v2136 = vadd.f32 %v310, %v2135
  %v2137 = vpop.f32.mrf.mxu0
  %2138 = vmatprep.mubr.bf16.mxu0 0
  %2139 = vmatmul.mubr.bf16.gmra.mxu0 %v948
  %v2140 = vpop.f32.mrf.mxu0
  %v2141 = vadd.f32 %v310, %v2140
  %v2142 = vpop.f32.mrf.mxu0
  %v2143 = vpop.f32.mrf.mxu0
  %v2144 = vadd.f32 %v310, %v2143
  %v2145 = vpop.f32.mrf.mxu0
  %2146 = vmatprep.mubr.bf16.mxu0 0
  %2147 = vmatmul.mubr.bf16.gmra.mxu0 %v949
  %v2148 = vpop.f32.mrf.mxu0
  %v2149 = vadd.f32 %v310, %v2148
  %v2150 = vpop.f32.mrf.mxu0
  %v2151 = vpop.f32.mrf.mxu0
  %v2152 = vadd.f32 %v310, %v2151
  %v2153 = vpop.f32.mrf.mxu0
  %2154 = vmatprep.mubr.bf16.mxu0 0
  %2155 = vmatmul.mubr.bf16.gmra.mxu0 %v950
  %v2156 = vpop.f32.mrf.mxu0
  %v2157 = vadd.f32 %v310, %v2156
  %v2158 = vpop.f32.mrf.mxu0
  %v2159 = vpop.f32.mrf.mxu0
  %v2160 = vadd.f32 %v310, %v2159
  %v2161 = vpop.f32.mrf.mxu0
  %2162 = vmatprep.mubr.bf16.mxu0 0
  %2163 = vmatmul.mubr.bf16.gmra.mxu0 %v951
  %v2164 = vpop.f32.mrf.mxu0
  %v2165 = vpop.f32.mrf.mxu0
  %v2166 = vpop.f32.mrf.mxu0
  %v2167 = vpop.f32.mrf.mxu0
  %2168 = vdwg.mxu0
  %v2169 = vmax.f32 %v1163, 0.0
  %v2170 = vmax.f32 %v1166, 0.0
  %v2171 = vmax.f32 %v1171, 0.0
  %v2172 = vmax.f32 %v1174, 0.0
  %v2173 = vmax.f32 %v1179, 0.0
  %v2174 = vmax.f32 %v1182, 0.0
  %v2175 = vmax.f32 %v1187, 0.0
  %v2176 = vmax.f32 %v1190, 0.0
  %v2177 = vmax.f32 %v1195, 0.0
  %v2178 = vmax.f32 %v1198, 0.0
  %v2179 = vmax.f32 %v1203, 0.0
  %v2180 = vmax.f32 %v1206, 0.0
  %v2181 = vmax.f32 %v1211, 0.0
  %v2182 = vmax.f32 %v1214, 0.0
  %v2183 = vmax.f32 %v1219, 0.0
  %v2184 = vmax.f32 %v1222, 0.0
  %v2185 = vmax.f32 %v1227, 0.0
  %v2186 = vmax.f32 %v1230, 0.0
  %v2187 = vmax.f32 %v1235, 0.0
  %v2188 = vmax.f32 %v1238, 0.0
  %v2189 = vmax.f32 %v1243, 0.0
  %v2190 = vmax.f32 %v1246, 0.0
  %v2191 = vmax.f32 %v1251, 0.0
  %v2192 = vmax.f32 %v1254, 0.0
  %v2193 = vmax.f32 %v1259, 0.0
  %v2194 = vmax.f32 %v1262, 0.0
  %v2195 = vmax.f32 %v1267, 0.0
  %v2196 = vmax.f32 %v1270, 0.0
  %v2197 = vmax.f32 %v1275, 0.0
  %v2198 = vmax.f32 %v1278, 0.0
  %v2199 = vmax.f32 %v1289, 0.0
  %v2200 = vmax.f32 %v1292, 0.0
  %v2201 = vmax.f32 %v1297, 0.0
  %v2202 = vmax.f32 %v1300, 0.0
  %v2203 = vmax.f32 %v1305, 0.0
  %v2204 = vmax.f32 %v1308, 0.0
  %v2205 = vmax.f32 %v1313, 0.0
  %v2206 = vmax.f32 %v1316, 0.0
  %v2207 = vmax.f32 %v1321, 0.0
  %v2208 = vmax.f32 %v1324, 0.0
  %v2209 = vmax.f32 %v1329, 0.0
  %v2210 = vmax.f32 %v1332, 0.0
  %v2211 = vmax.f32 %v1337, 0.0
  %v2212 = vmax.f32 %v1340, 0.0
  %v2213 = vmax.f32 %v1345, 0.0
  %v2214 = vmax.f32 %v1348, 0.0
  %v2215 = vmax.f32 %v1353, 0.0
  %v2216 = vmax.f32 %v1356, 0.0
  %v2217 = vmax.f32 %v1361, 0.0
  %v2218 = vmax.f32 %v1364, 0.0
  %v2219 = vmax.f32 %v1369, 0.0
  %v2220 = vmax.f32 %v1372, 0.0
  %v2221 = vmax.f32 %v1377, 0.0
  %v2222 = vmax.f32 %v1380, 0.0
  %v2223 = vmax.f32 %v1385, 0.0
  %v2224 = vmax.f32 %v1388, 0.0
  %v2225 = vmax.f32 %v1393, 0.0
  %v2226 = vmax.f32 %v1396, 0.0
  %v2227 = vmax.f32 %v1401, 0.0
  %v2228 = vmax.f32 %v1404, 0.0
  %v2229 = vmax.f32 %v1415, 0.0
  %v2230 = vmax.f32 %v1418, 0.0
  %v2231 = vmax.f32 %v1423, 0.0
  %v2232 = vmax.f32 %v1426, 0.0
  %v2233 = vmax.f32 %v1431, 0.0
  %v2234 = vmax.f32 %v1434, 0.0
  %v2235 = vmax.f32 %v1439, 0.0
  %v2236 = vmax.f32 %v1442, 0.0
  %v2237 = vmax.f32 %v1447, 0.0
  %v2238 = vmax.f32 %v1450, 0.0
  %v2239 = vmax.f32 %v1455, 0.0
  %v2240 = vmax.f32 %v1458, 0.0
  %v2241 = vmax.f32 %v1463, 0.0
  %v2242 = vmax.f32 %v1466, 0.0
  %v2243 = vmax.f32 %v1471, 0.0
  %v2244 = vmax.f32 %v1474, 0.0
  %v2245 = vmax.f32 %v1479, 0.0
  %v2246 = vmax.f32 %v1482, 0.0
  %v2247 = vmax.f32 %v1487, 0.0
  %v2248 = vmax.f32 %v1490, 0.0
  %v2249 = vmax.f32 %v1495, 0.0
  %v2250 = vmax.f32 %v1498, 0.0
  %v2251 = vmax.f32 %v1503, 0.0
  %v2252 = vmax.f32 %v1506, 0.0
  %v2253 = vmax.f32 %v1511, 0.0
  %v2254 = vmax.f32 %v1514, 0.0
  %v2255 = vmax.f32 %v1519, 0.0
  %v2256 = vmax.f32 %v1522, 0.0
  %v2257 = vmax.f32 %v1527, 0.0
  %v2258 = vmax.f32 %v1530, 0.0
  %v2259 = vmax.f32 %v1541, 0.0
  %v2260 = vmax.f32 %v1544, 0.0
  %v2261 = vmax.f32 %v1549, 0.0
  %v2262 = vmax.f32 %v1552, 0.0
  %v2263 = vmax.f32 %v1557, 0.0
  %v2264 = vmax.f32 %v1560, 0.0
  %v2265 = vmax.f32 %v1565, 0.0
  %v2266 = vmax.f32 %v1568, 0.0
  %v2267 = vmax.f32 %v1573, 0.0
  %v2268 = vmax.f32 %v1576, 0.0
  %v2269 = vmax.f32 %v1581, 0.0
  %v2270 = vmax.f32 %v1584, 0.0
  %v2271 = vmax.f32 %v1589, 0.0
  %v2272 = vmax.f32 %v1592, 0.0
  %v2273 = vmax.f32 %v1597, 0.0
  %v2274 = vmax.f32 %v1600, 0.0
  %v2275 = vmax.f32 %v1605, 0.0
  %v2276 = vmax.f32 %v1608, 0.0
  %v2277 = vmax.f32 %v1613, 0.0
  %v2278 = vmax.f32 %v1616, 0.0
  %v2279 = vmax.f32 %v1621, 0.0
  %v2280 = vmax.f32 %v1624, 0.0
  %v2281 = vmax.f32 %v1629, 0.0
  %v2282 = vmax.f32 %v1632, 0.0
  %v2283 = vmax.f32 %v1637, 0.0
  %v2284 = vmax.f32 %v1640, 0.0
  %v2285 = vmax.f32 %v1645, 0.0
  %v2286 = vmax.f32 %v1648, 0.0
  %v2287 = vmax.f32 %v1653, 0.0
  %v2288 = vmax.f32 %v1656, 0.0
  %v2289 = vmax.f32 %v1667, 0.0
  %v2290 = vmax.f32 %v1670, 0.0
  %v2291 = vmax.f32 %v1675, 0.0
  %v2292 = vmax.f32 %v1678, 0.0
  %v2293 = vmax.f32 %v1683, 0.0
  %v2294 = vmax.f32 %v1686, 0.0
  %v2295 = vmax.f32 %v1691, 0.0
  %v2296 = vmax.f32 %v1694, 0.0
  %v2297 = vmax.f32 %v1699, 0.0
  %v2298 = vmax.f32 %v1702, 0.0
  %v2299 = vmax.f32 %v1707, 0.0
  %v2300 = vmax.f32 %v1710, 0.0
  %v2301 = vmax.f32 %v1715, 0.0
  %v2302 = vmax.f32 %v1718, 0.0
  %v2303 = vmax.f32 %v1723, 0.0
  %v2304 = vmax.f32 %v1726, 0.0
  %v2305 = vmax.f32 %v1731, 0.0
  %v2306 = vmax.f32 %v1734, 0.0
  %v2307 = vmax.f32 %v1739, 0.0
  %v2308 = vmax.f32 %v1742, 0.0
  %v2309 = vmax.f32 %v1747, 0.0
  %v2310 = vmax.f32 %v1750, 0.0
  %v2311 = vmax.f32 %v1755, 0.0
  %v2312 = vmax.f32 %v1758, 0.0
  %v2313 = vmax.f32 %v1763, 0.0
  %v2314 = vmax.f32 %v1766, 0.0
  %v2315 = vmax.f32 %v1771, 0.0
  %v2316 = vmax.f32 %v1774, 0.0
  %v2317 = vmax.f32 %v1779, 0.0
  %v2318 = vmax.f32 %v1782, 0.0
  %v2319 = vmax.f32 %v1793, 0.0
  %v2320 = vmax.f32 %v1796, 0.0
  %v2321 = vmax.f32 %v1801, 0.0
  %v2322 = vmax.f32 %v1804, 0.0
  %v2323 = vmax.f32 %v1809, 0.0
  %v2324 = vmax.f32 %v1812, 0.0
  %v2325 = vmax.f32 %v1817, 0.0
  %v2326 = vmax.f32 %v1820, 0.0
  %v2327 = vmax.f32 %v1825, 0.0
  %v2328 = vmax.f32 %v1828, 0.0
  %v2329 = vmax.f32 %v1833, 0.0
  %v2330 = vmax.f32 %v1836, 0.0
  %v2331 = vmax.f32 %v1841, 0.0
  %v2332 = vmax.f32 %v1844, 0.0
  %v2333 = vmax.f32 %v1849, 0.0
  %v2334 = vmax.f32 %v1852, 0.0
  %v2335 = vmax.f32 %v1857, 0.0
  %v2336 = vmax.f32 %v1860, 0.0
  %v2337 = vmax.f32 %v1865, 0.0
  %v2338 = vmax.f32 %v1868, 0.0
  %v2339 = vmax.f32 %v1873, 0.0
  %v2340 = vmax.f32 %v1876, 0.0
  %v2341 = vmax.f32 %v1881, 0.0
  %v2342 = vmax.f32 %v1884, 0.0
  %v2343 = vmax.f32 %v1889, 0.0
  %v2344 = vmax.f32 %v1892, 0.0
  %v2345 = vmax.f32 %v1897, 0.0
  %v2346 = vmax.f32 %v1900, 0.0
  %v2347 = vmax.f32 %v1905, 0.0
  %v2348 = vmax.f32 %v1908, 0.0
  %v2349 = vmax.f32 %v1919, 0.0
  %v2350 = vmax.f32 %v1922, 0.0
  %v2351 = vmax.f32 %v1927, 0.0
  %v2352 = vmax.f32 %v1930, 0.0
  %v2353 = vmax.f32 %v1935, 0.0
  %v2354 = vmax.f32 %v1938, 0.0
  %v2355 = vmax.f32 %v1943, 0.0
  %v2356 = vmax.f32 %v1946, 0.0
  %v2357 = vmax.f32 %v1951, 0.0
  %v2358 = vmax.f32 %v1954, 0.0
  %v2359 = vmax.f32 %v1959, 0.0
  %v2360 = vmax.f32 %v1962, 0.0
  %v2361 = vmax.f32 %v1967, 0.0
  %v2362 = vmax.f32 %v1970, 0.0
  %v2363 = vmax.f32 %v1975, 0.0
  %v2364 = vmax.f32 %v1978, 0.0
  %v2365 = vmax.f32 %v1983, 0.0
  %v2366 = vmax.f32 %v1986, 0.0
  %v2367 = vmax.f32 %v1991, 0.0
  %v2368 = vmax.f32 %v1994, 0.0
  %v2369 = vmax.f32 %v1999, 0.0
  %v2370 = vmax.f32 %v2002, 0.0
  %v2371 = vmax.f32 %v2007, 0.0
  %v2372 = vmax.f32 %v2010, 0.0
  %v2373 = vmax.f32 %v2015, 0.0
  %v2374 = vmax.f32 %v2018, 0.0
  %v2375 = vmax.f32 %v2023, 0.0
  %v2376 = vmax.f32 %v2026, 0.0
  %v2377 = vmax.f32 %v2031, 0.0
  %v2378 = vmax.f32 %v2034, 0.0
  %v2379 = vmax.f32 %v2045, 0.0
  %v2380 = vmax.f32 %v2048, 0.0
  %v2381 = vmax.f32 %v2053, 0.0
  %v2382 = vmax.f32 %v2056, 0.0
  %v2383 = vmax.f32 %v2061, 0.0
  %v2384 = vmax.f32 %v2064, 0.0
  %v2385 = vmax.f32 %v2069, 0.0
  %v2386 = vmax.f32 %v2072, 0.0
  %v2387 = vmax.f32 %v2077, 0.0
  %v2388 = vmax.f32 %v2080, 0.0
  %v2389 = vmax.f32 %v2085, 0.0
  %v2390 = vmax.f32 %v2088, 0.0
  %v2391 = vmax.f32 %v2093, 0.0
  %v2392 = vmax.f32 %v2096, 0.0
  %v2393 = vmax.f32 %v2101, 0.0
  %v2394 = vmax.f32 %v2104, 0.0
  %v2395 = vmax.f32 %v2109, 0.0
  %v2396 = vmax.f32 %v2112, 0.0
  %v2397 = vmax.f32 %v2117, 0.0
  %v2398 = vmax.f32 %v2120, 0.0
  %v2399 = vmax.f32 %v2125, 0.0
  %v2400 = vmax.f32 %v2128, 0.0
  %v2401 = vmax.f32 %v2133, 0.0
  %v2402 = vmax.f32 %v2136, 0.0
  %v2403 = vmax.f32 %v2141, 0.0
  %v2404 = vmax.f32 %v2144, 0.0
  %v2405 = vmax.f32 %v2149, 0.0
  %v2406 = vmax.f32 %v2152, 0.0
  %v2407 = vmax.f32 %v2157, 0.0
  %v2408 = vmax.f32 %v2160, 0.0
  %v2409 = vpack.c.bf16 %v2170, %v2169
  %v2410 = vpack.c.bf16 %v2172, %v2171
  %v2411 = vpack.c.bf16 %v2174, %v2173
  %v2412 = vpack.c.bf16 %v2176, %v2175
  %v2413 = vpack.c.bf16 %v2178, %v2177
  %v2414 = vpack.c.bf16 %v2180, %v2179
  %v2415 = vpack.c.bf16 %v2182, %v2181
  %v2416 = vpack.c.bf16 %v2184, %v2183
  %v2417 = vpack.c.bf16 %v2186, %v2185
  %v2418 = vpack.c.bf16 %v2188, %v2187
  %v2419 = vpack.c.bf16 %v2190, %v2189
  %v2420 = vpack.c.bf16 %v2192, %v2191
  %v2421 = vpack.c.bf16 %v2194, %v2193
  %v2422 = vpack.c.bf16 %v2196, %v2195
  %v2423 = vpack.c.bf16 %v2198, %v2197
  %v2424 = vpack.c.bf16 %v2200, %v2199
  %v2425 = vpack.c.bf16 %v2202, %v2201
  %v2426 = vpack.c.bf16 %v2204, %v2203
  %v2427 = vpack.c.bf16 %v2206, %v2205
  %v2428 = vpack.c.bf16 %v2208, %v2207
  %v2429 = vpack.c.bf16 %v2210, %v2209
  %v2430 = vpack.c.bf16 %v2212, %v2211
  %v2431 = vpack.c.bf16 %v2214, %v2213
  %v2432 = vpack.c.bf16 %v2216, %v2215
  %v2433 = vpack.c.bf16 %v2218, %v2217
  %v2434 = vpack.c.bf16 %v2220, %v2219
  %v2435 = vpack.c.bf16 %v2222, %v2221
  %v2436 = vpack.c.bf16 %v2224, %v2223
  %v2437 = vpack.c.bf16 %v2226, %v2225
  %v2438 = vpack.c.bf16 %v2228, %v2227
  %v2439 = vpack.c.bf16 %v2230, %v2229
  %v2440 = vpack.c.bf16 %v2232, %v2231
  %v2441 = vpack.c.bf16 %v2234, %v2233
  %v2442 = vpack.c.bf16 %v2236, %v2235
  %v2443 = vpack.c.bf16 %v2238, %v2237
  %v2444 = vpack.c.bf16 %v2240, %v2239
  %v2445 = vpack.c.bf16 %v2242, %v2241
  %v2446 = vpack.c.bf16 %v2244, %v2243
  %v2447 = vpack.c.bf16 %v2246, %v2245
  %v2448 = vpack.c.bf16 %v2248, %v2247
  %v2449 = vpack.c.bf16 %v2250, %v2249
  %v2450 = vpack.c.bf16 %v2252, %v2251
  %v2451 = vpack.c.bf16 %v2254, %v2253
  %v2452 = vpack.c.bf16 %v2256, %v2255
  %v2453 = vpack.c.bf16 %v2258, %v2257
  %v2454 = vpack.c.bf16 %v2260, %v2259
  %v2455 = vpack.c.bf16 %v2262, %v2261
  %v2456 = vpack.c.bf16 %v2264, %v2263
  %v2457 = vpack.c.bf16 %v2266, %v2265
  %v2458 = vpack.c.bf16 %v2268, %v2267
  %v2459 = vpack.c.bf16 %v2270, %v2269
  %v2460 = vpack.c.bf16 %v2272, %v2271
  %v2461 = vpack.c.bf16 %v2274, %v2273
  %v2462 = vpack.c.bf16 %v2276, %v2275
  %v2463 = vpack.c.bf16 %v2278, %v2277
  %v2464 = vpack.c.bf16 %v2280, %v2279
  %v2465 = vpack.c.bf16 %v2282, %v2281
  %v2466 = vpack.c.bf16 %v2284, %v2283
  %v2467 = vpack.c.bf16 %v2286, %v2285
  %v2468 = vpack.c.bf16 %v2288, %v2287
  %v2469 = vpack.c.bf16 %v2290, %v2289
  %v2470 = vpack.c.bf16 %v2292, %v2291
  %v2471 = vpack.c.bf16 %v2294, %v2293
  %v2472 = vpack.c.bf16 %v2296, %v2295
  %v2473 = vpack.c.bf16 %v2298, %v2297
  %v2474 = vpack.c.bf16 %v2300, %v2299
  %v2475 = vpack.c.bf16 %v2302, %v2301
  %v2476 = vpack.c.bf16 %v2304, %v2303
  %v2477 = vpack.c.bf16 %v2306, %v2305
  %v2478 = vpack.c.bf16 %v2308, %v2307
  %v2479 = vpack.c.bf16 %v2310, %v2309
  %v2480 = vpack.c.bf16 %v2312, %v2311
  %v2481 = vpack.c.bf16 %v2314, %v2313
  %v2482 = vpack.c.bf16 %v2316, %v2315
  %v2483 = vpack.c.bf16 %v2318, %v2317
  %v2484 = vpack.c.bf16 %v2320, %v2319
  %v2485 = vpack.c.bf16 %v2322, %v2321
  %v2486 = vpack.c.bf16 %v2324, %v2323
  %v2487 = vpack.c.bf16 %v2326, %v2325
  %v2488 = vpack.c.bf16 %v2328, %v2327
  %v2489 = vpack.c.bf16 %v2330, %v2329
  %v2490 = vpack.c.bf16 %v2332, %v2331
  %v2491 = vpack.c.bf16 %v2334, %v2333
  %v2492 = vpack.c.bf16 %v2336, %v2335
  %v2493 = vpack.c.bf16 %v2338, %v2337
  %v2494 = vpack.c.bf16 %v2340, %v2339
  %v2495 = vpack.c.bf16 %v2342, %v2341
  %v2496 = vpack.c.bf16 %v2344, %v2343
  %v2497 = vpack.c.bf16 %v2346, %v2345
  %v2498 = vpack.c.bf16 %v2348, %v2347
  %v2499 = vpack.c.bf16 %v2350, %v2349
  %v2500 = vpack.c.bf16 %v2352, %v2351
  %v2501 = vpack.c.bf16 %v2354, %v2353
  %v2502 = vpack.c.bf16 %v2356, %v2355
  %v2503 = vpack.c.bf16 %v2358, %v2357
  %v2504 = vpack.c.bf16 %v2360, %v2359
  %v2505 = vpack.c.bf16 %v2362, %v2361
  %v2506 = vpack.c.bf16 %v2364, %v2363
  %v2507 = vpack.c.bf16 %v2366, %v2365
  %v2508 = vpack.c.bf16 %v2368, %v2367
  %v2509 = vpack.c.bf16 %v2370, %v2369
  %v2510 = vpack.c.bf16 %v2372, %v2371
  %v2511 = vpack.c.bf16 %v2374, %v2373
  %v2512 = vpack.c.bf16 %v2376, %v2375
  %v2513 = vpack.c.bf16 %v2378, %v2377
  %v2514 = vpack.c.bf16 %v2380, %v2379
  %v2515 = vpack.c.bf16 %v2382, %v2381
  %v2516 = vpack.c.bf16 %v2384, %v2383
  %v2517 = vpack.c.bf16 %v2386, %v2385
  %v2518 = vpack.c.bf16 %v2388, %v2387
  %v2519 = vpack.c.bf16 %v2390, %v2389
  %v2520 = vpack.c.bf16 %v2392, %v2391
  %v2521 = vpack.c.bf16 %v2394, %v2393
  %v2522 = vpack.c.bf16 %v2396, %v2395
  %v2523 = vpack.c.bf16 %v2398, %v2397
  %v2524 = vpack.c.bf16 %v2400, %v2399
  %v2525 = vpack.c.bf16 %v2402, %v2401
  %v2526 = vpack.c.bf16 %v2404, %v2403
  %v2527 = vpack.c.bf16 %v2406, %v2405
  %v2528 = vpack.c.bf16 %v2408, %v2407
  %v2529 = vmax.bf16 %v2409, %v2410
  %v2530 = vmax.bf16 %v2411, %v2412
  %v2531 = vmax.bf16 %v2413, %v2414
  %v2532 = vmax.bf16 %v2415, %v2416
  %v2533 = vmax.bf16 %v2417, %v2418
  %v2534 = vmax.bf16 %v2419, %v2420
  %v2535 = vmax.bf16 %v2421, %v2422
  %v2536 = vmax.bf16 %v2424, %v2425
  %v2537 = vmax.bf16 %v2426, %v2427
  %v2538 = vmax.bf16 %v2428, %v2429
  %v2539 = vmax.bf16 %v2430, %v2431
  %v2540 = vmax.bf16 %v2432, %v2433
  %v2541 = vmax.bf16 %v2434, %v2435
  %v2542 = vmax.bf16 %v2436, %v2437
  %v2543 = vmax.bf16 %v2439, %v2440
  %v2544 = vmax.bf16 %v2441, %v2442
  %v2545 = vmax.bf16 %v2443, %v2444
  %v2546 = vmax.bf16 %v2445, %v2446
  %v2547 = vmax.bf16 %v2447, %v2448
  %v2548 = vmax.bf16 %v2449, %v2450
  %v2549 = vmax.bf16 %v2451, %v2452
  %v2550 = vmax.bf16 %v2454, %v2455
  %v2551 = vmax.bf16 %v2456, %v2457
  %v2552 = vmax.bf16 %v2458, %v2459
  %v2553 = vmax.bf16 %v2460, %v2461
  %v2554 = vmax.bf16 %v2462, %v2463
  %v2555 = vmax.bf16 %v2464, %v2465
  %v2556 = vmax.bf16 %v2466, %v2467
  %v2557 = vmax.bf16 %v2469, %v2470
  %v2558 = vmax.bf16 %v2471, %v2472
  %v2559 = vmax.bf16 %v2473, %v2474
  %v2560 = vmax.bf16 %v2475, %v2476
  %v2561 = vmax.bf16 %v2477, %v2478
  %v2562 = vmax.bf16 %v2479, %v2480
  %v2563 = vmax.bf16 %v2481, %v2482
  %v2564 = vmax.bf16 %v2484, %v2485
  %v2565 = vmax.bf16 %v2486, %v2487
  %v2566 = vmax.bf16 %v2488, %v2489
  %v2567 = vmax.bf16 %v2490, %v2491
  %v2568 = vmax.bf16 %v2492, %v2493
  %v2569 = vmax.bf16 %v2494, %v2495
  %v2570 = vmax.bf16 %v2496, %v2497
  %v2571 = vmax.bf16 %v2499, %v2500
  %v2572 = vmax.bf16 %v2501, %v2502
  %v2573 = vmax.bf16 %v2503, %v2504
  %v2574 = vmax.bf16 %v2505, %v2506
  %v2575 = vmax.bf16 %v2507, %v2508
  %v2576 = vmax.bf16 %v2509, %v2510
  %v2577 = vmax.bf16 %v2511, %v2512
  %v2578 = vmax.bf16 %v2514, %v2515
  %v2579 = vmax.bf16 %v2516, %v2517
  %v2580 = vmax.bf16 %v2518, %v2519
  %v2581 = vmax.bf16 %v2520, %v2521
  %v2582 = vmax.bf16 %v2522, %v2523
  %v2583 = vmax.bf16 %v2524, %v2525
  %v2584 = vmax.bf16 %v2526, %v2527
  %v2585 = vmax.bf16 %v2529, %v2411
  %v2586 = vmax.bf16 %v2530, %v2413
  %v2587 = vmax.bf16 %v2531, %v2415
  %v2588 = vmax.bf16 %v2532, %v2417
  %v2589 = vmax.bf16 %v2533, %v2419
  %v2590 = vmax.bf16 %v2534, %v2421
  %v2591 = vmax.bf16 %v2535, %v2423
  %v2592 = vmax.bf16 %v2536, %v2426
  %v2593 = vmax.bf16 %v2537, %v2428
  %v2594 = vmax.bf16 %v2538, %v2430
  %v2595 = vmax.bf16 %v2539, %v2432
  %v2596 = vmax.bf16 %v2540, %v2434
  %v2597 = vmax.bf16 %v2541, %v2436
  %v2598 = vmax.bf16 %v2542, %v2438
  %v2599 = vmax.bf16 %v2543, %v2441
  %v2600 = vmax.bf16 %v2544, %v2443
  %v2601 = vmax.bf16 %v2545, %v2445
  %v2602 = vmax.bf16 %v2546, %v2447
  %v2603 = vmax.bf16 %v2547, %v2449
  %v2604 = vmax.bf16 %v2548, %v2451
  %v2605 = vmax.bf16 %v2549, %v2453
  %v2606 = vmax.bf16 %v2550, %v2456
  %v2607 = vmax.bf16 %v2551, %v2458
  %v2608 = vmax.bf16 %v2552, %v2460
  %v2609 = vmax.bf16 %v2553, %v2462
  %v2610 = vmax.bf16 %v2554, %v2464
  %v2611 = vmax.bf16 %v2555, %v2466
  %v2612 = vmax.bf16 %v2556, %v2468
  %v2613 = vmax.bf16 %v2557, %v2471
  %v2614 = vmax.bf16 %v2558, %v2473
  %v2615 = vmax.bf16 %v2559, %v2475
  %v2616 = vmax.bf16 %v2560, %v2477
  %v2617 = vmax.bf16 %v2561, %v2479
  %v2618 = vmax.bf16 %v2562, %v2481
  %v2619 = vmax.bf16 %v2563, %v2483
  %v2620 = vmax.bf16 %v2564, %v2486
  %v2621 = vmax.bf16 %v2565, %v2488
  %v2622 = vmax.bf16 %v2566, %v2490
  %v2623 = vmax.bf16 %v2567, %v2492
  %v2624 = vmax.bf16 %v2568, %v2494
  %v2625 = vmax.bf16 %v2569, %v2496
  %v2626 = vmax.bf16 %v2570, %v2498
  %v2627 = vmax.bf16 %v2571, %v2501
  %v2628 = vmax.bf16 %v2572, %v2503
  %v2629 = vmax.bf16 %v2573, %v2505
  %v2630 = vmax.bf16 %v2574, %v2507
  %v2631 = vmax.bf16 %v2575, %v2509
  %v2632 = vmax.bf16 %v2576, %v2511
  %v2633 = vmax.bf16 %v2577, %v2513
  %v2634 = vmax.bf16 %v2578, %v2516
  %v2635 = vmax.bf16 %v2579, %v2518
  %v2636 = vmax.bf16 %v2580, %v2520
  %v2637 = vmax.bf16 %v2581, %v2522
  %v2638 = vmax.bf16 %v2582, %v2524
  %v2639 = vmax.bf16 %v2583, %v2526
  %v2640 = vmax.bf16 %v2584, %v2528
  %v2642 = vshrl.u32 %v2585, 16
  %v2644 = vshll.u32 %v2585, 16
  %v2646 = vrot.slane %v2644, 1
  %v2647 = vor.u32 %v2642, %v2646
  %v2649 = vshrl.u32 %v2586, 16
  %v2651 = vshll.u32 %v2586, 16
  %v2653 = vrot.slane %v2651, 1
  %v2654 = vor.u32 %v2649, %v2653
  %v2656 = vshrl.u32 %v2587, 16
  %v2658 = vshll.u32 %v2587, 16
  %v2660 = vrot.slane %v2658, 1
  %v2661 = vor.u32 %v2656, %v2660
  %v2663 = vshrl.u32 %v2588, 16
  %v2665 = vshll.u32 %v2588, 16
  %v2667 = vrot.slane %v2665, 1
  %v2668 = vor.u32 %v2663, %v2667
  %v2670 = vshrl.u32 %v2589, 16
  %v2672 = vshll.u32 %v2589, 16
  %v2674 = vrot.slane %v2672, 1
  %v2675 = vor.u32 %v2670, %v2674
  %v2677 = vshrl.u32 %v2590, 16
  %v2679 = vshll.u32 %v2590, 16
  %v2681 = vrot.slane %v2679, 1
  %v2682 = vor.u32 %v2677, %v2681
  %v2684 = vshrl.u32 %v2591, 16
  %v2686 = vshll.u32 %v2591, 16
  %v2688 = vrot.slane %v2686, 1
  %v2689 = vor.u32 %v2684, %v2688
  %v2691 = vshrl.u32 %v2592, 16
  %v2693 = vshll.u32 %v2592, 16
  %v2695 = vrot.slane %v2693, 1
  %v2696 = vor.u32 %v2691, %v2695
  %v2698 = vshrl.u32 %v2593, 16
  %v2700 = vshll.u32 %v2593, 16
  %v2702 = vrot.slane %v2700, 1
  %v2703 = vor.u32 %v2698, %v2702
  %v2705 = vshrl.u32 %v2594, 16
  %v2707 = vshll.u32 %v2594, 16
  %v2709 = vrot.slane %v2707, 1
  %v2710 = vor.u32 %v2705, %v2709
  %v2712 = vshrl.u32 %v2595, 16
  %v2714 = vshll.u32 %v2595, 16
  %v2716 = vrot.slane %v2714, 1
  %v2717 = vor.u32 %v2712, %v2716
  %v2719 = vshrl.u32 %v2596, 16
  %v2721 = vshll.u32 %v2596, 16
  %v2723 = vrot.slane %v2721, 1
  %v2724 = vor.u32 %v2719, %v2723
  %v2726 = vshrl.u32 %v2597, 16
  %v2728 = vshll.u32 %v2597, 16
  %v2730 = vrot.slane %v2728, 1
  %v2731 = vor.u32 %v2726, %v2730
  %v2733 = vshrl.u32 %v2598, 16
  %v2735 = vshll.u32 %v2598, 16
  %v2737 = vrot.slane %v2735, 1
  %v2738 = vor.u32 %v2733, %v2737
  %v2740 = vshrl.u32 %v2599, 16
  %v2742 = vshll.u32 %v2599, 16
  %v2744 = vrot.slane %v2742, 1
  %v2745 = vor.u32 %v2740, %v2744
  %v2747 = vshrl.u32 %v2600, 16
  %v2749 = vshll.u32 %v2600, 16
  %v2751 = vrot.slane %v2749, 1
  %v2752 = vor.u32 %v2747, %v2751
  %v2754 = vshrl.u32 %v2601, 16
  %v2756 = vshll.u32 %v2601, 16
  %v2758 = vrot.slane %v2756, 1
  %v2759 = vor.u32 %v2754, %v2758
  %v2761 = vshrl.u32 %v2602, 16
  %v2763 = vshll.u32 %v2602, 16
  %v2765 = vrot.slane %v2763, 1
  %v2766 = vor.u32 %v2761, %v2765
  %v2768 = vshrl.u32 %v2603, 16
  %v2770 = vshll.u32 %v2603, 16
  %v2772 = vrot.slane %v2770, 1
  %v2773 = vor.u32 %v2768, %v2772
  %v2775 = vshrl.u32 %v2604, 16
  %v2777 = vshll.u32 %v2604, 16
  %v2779 = vrot.slane %v2777, 1
  %v2780 = vor.u32 %v2775, %v2779
  %v2782 = vshrl.u32 %v2605, 16
  %v2784 = vshll.u32 %v2605, 16
  %v2786 = vrot.slane %v2784, 1
  %v2787 = vor.u32 %v2782, %v2786
  %v2789 = vshrl.u32 %v2606, 16
  %v2791 = vshll.u32 %v2606, 16
  %v2793 = vrot.slane %v2791, 1
  %v2794 = vor.u32 %v2789, %v2793
  %v2796 = vshrl.u32 %v2607, 16
  %v2798 = vshll.u32 %v2607, 16
  %v2800 = vrot.slane %v2798, 1
  %v2801 = vor.u32 %v2796, %v2800
  %v2803 = vshrl.u32 %v2608, 16
  %v2805 = vshll.u32 %v2608, 16
  %v2807 = vrot.slane %v2805, 1
  %v2808 = vor.u32 %v2803, %v2807
  %v2810 = vshrl.u32 %v2609, 16
  %v2812 = vshll.u32 %v2609, 16
  %v2814 = vrot.slane %v2812, 1
  %v2815 = vor.u32 %v2810, %v2814
  %v2817 = vshrl.u32 %v2610, 16
  %v2819 = vshll.u32 %v2610, 16
  %v2821 = vrot.slane %v2819, 1
  %v2822 = vor.u32 %v2817, %v2821
  %v2824 = vshrl.u32 %v2611, 16
  %v2826 = vshll.u32 %v2611, 16
  %v2828 = vrot.slane %v2826, 1
  %v2829 = vor.u32 %v2824, %v2828
  %v2831 = vshrl.u32 %v2612, 16
  %v2833 = vshll.u32 %v2612, 16
  %v2835 = vrot.slane %v2833, 1
  %v2836 = vor.u32 %v2831, %v2835
  %v2838 = vshrl.u32 %v2613, 16
  %v2840 = vshll.u32 %v2613, 16
  %v2842 = vrot.slane %v2840, 1
  %v2843 = vor.u32 %v2838, %v2842
  %v2845 = vshrl.u32 %v2614, 16
  %v2847 = vshll.u32 %v2614, 16
  %v2849 = vrot.slane %v2847, 1
  %v2850 = vor.u32 %v2845, %v2849
  %v2852 = vshrl.u32 %v2615, 16
  %v2854 = vshll.u32 %v2615, 16
  %v2856 = vrot.slane %v2854, 1
  %v2857 = vor.u32 %v2852, %v2856
  %v2859 = vshrl.u32 %v2616, 16
  %v2861 = vshll.u32 %v2616, 16
  %v2863 = vrot.slane %v2861, 1
  %v2864 = vor.u32 %v2859, %v2863
  %v2866 = vshrl.u32 %v2617, 16
  %v2868 = vshll.u32 %v2617, 16
  %v2870 = vrot.slane %v2868, 1
  %v2871 = vor.u32 %v2866, %v2870
  %v2873 = vshrl.u32 %v2618, 16
  %v2875 = vshll.u32 %v2618, 16
  %v2877 = vrot.slane %v2875, 1
  %v2878 = vor.u32 %v2873, %v2877
  %v2880 = vshrl.u32 %v2619, 16
  %v2882 = vshll.u32 %v2619, 16
  %v2884 = vrot.slane %v2882, 1
  %v2885 = vor.u32 %v2880, %v2884
  %v2887 = vshrl.u32 %v2620, 16
  %v2889 = vshll.u32 %v2620, 16
  %v2891 = vrot.slane %v2889, 1
  %v2892 = vor.u32 %v2887, %v2891
  %v2894 = vshrl.u32 %v2621, 16
  %v2896 = vshll.u32 %v2621, 16
  %v2898 = vrot.slane %v2896, 1
  %v2899 = vor.u32 %v2894, %v2898
  %v2901 = vshrl.u32 %v2622, 16
  %v2903 = vshll.u32 %v2622, 16
  %v2905 = vrot.slane %v2903, 1
  %v2906 = vor.u32 %v2901, %v2905
  %v2908 = vshrl.u32 %v2623, 16
  %v2910 = vshll.u32 %v2623, 16
  %v2912 = vrot.slane %v2910, 1
  %v2913 = vor.u32 %v2908, %v2912
  %v2915 = vshrl.u32 %v2624, 16
  %v2917 = vshll.u32 %v2624, 16
  %v2919 = vrot.slane %v2917, 1
  %v2920 = vor.u32 %v2915, %v2919
  %v2922 = vshrl.u32 %v2625, 16
  %v2924 = vshll.u32 %v2625, 16
  %v2926 = vrot.slane %v2924, 1
  %v2927 = vor.u32 %v2922, %v2926
  %v2929 = vshrl.u32 %v2626, 16
  %v2931 = vshll.u32 %v2626, 16
  %v2933 = vrot.slane %v2931, 1
  %v2934 = vor.u32 %v2929, %v2933
  %v2936 = vshrl.u32 %v2627, 16
  %v2938 = vshll.u32 %v2627, 16
  %v2940 = vrot.slane %v2938, 1
  %v2941 = vor.u32 %v2936, %v2940
  %v2943 = vshrl.u32 %v2628, 16
  %v2945 = vshll.u32 %v2628, 16
  %v2947 = vrot.slane %v2945, 1
  %v2948 = vor.u32 %v2943, %v2947
  %v2950 = vshrl.u32 %v2629, 16
  %v2952 = vshll.u32 %v2629, 16
  %v2954 = vrot.slane %v2952, 1
  %v2955 = vor.u32 %v2950, %v2954
  %v2957 = vshrl.u32 %v2630, 16
  %v2959 = vshll.u32 %v2630, 16
  %v2961 = vrot.slane %v2959, 1
  %v2962 = vor.u32 %v2957, %v2961
  %v2964 = vshrl.u32 %v2631, 16
  %v2966 = vshll.u32 %v2631, 16
  %v2968 = vrot.slane %v2966, 1
  %v2969 = vor.u32 %v2964, %v2968
  %v2971 = vshrl.u32 %v2632, 16
  %v2973 = vshll.u32 %v2632, 16
  %v2975 = vrot.slane %v2973, 1
  %v2976 = vor.u32 %v2971, %v2975
  %v2978 = vshrl.u32 %v2633, 16
  %v2980 = vshll.u32 %v2633, 16
  %v2982 = vrot.slane %v2980, 1
  %v2983 = vor.u32 %v2978, %v2982
  %v2985 = vshrl.u32 %v2634, 16
  %v2987 = vshll.u32 %v2634, 16
  %v2989 = vrot.slane %v2987, 1
  %v2990 = vor.u32 %v2985, %v2989
  %v2992 = vshrl.u32 %v2635, 16
  %v2994 = vshll.u32 %v2635, 16
  %v2996 = vrot.slane %v2994, 1
  %v2997 = vor.u32 %v2992, %v2996
  %v2999 = vshrl.u32 %v2636, 16
  %v3001 = vshll.u32 %v2636, 16
  %v3003 = vrot.slane %v3001, 1
  %v3004 = vor.u32 %v2999, %v3003
  %v3006 = vshrl.u32 %v2637, 16
  %v3008 = vshll.u32 %v2637, 16
  %v3010 = vrot.slane %v3008, 1
  %v3011 = vor.u32 %v3006, %v3010
  %v3013 = vshrl.u32 %v2638, 16
  %v3015 = vshll.u32 %v2638, 16
  %v3017 = vrot.slane %v3015, 1
  %v3018 = vor.u32 %v3013, %v3017
  %v3020 = vshrl.u32 %v2639, 16
  %v3022 = vshll.u32 %v2639, 16
  %v3024 = vrot.slane %v3022, 1
  %v3025 = vor.u32 %v3020, %v3024
  %v3027 = vshrl.u32 %v2640, 16
  %v3029 = vshll.u32 %v2640, 16
  %v3031 = vrot.slane %v3029, 1
  %v3032 = vor.u32 %v3027, %v3031
  %v3089 = vmax.bf16 %v2585, %v2647
  %v3090 = vmax.bf16 %v2586, %v2654
  %v3091 = vmax.bf16 %v2587, %v2661
  %v3092 = vmax.bf16 %v2588, %v2668
  %v3093 = vmax.bf16 %v2589, %v2675
  %v3094 = vmax.bf16 %v2590, %v2682
  %v3095 = vmax.bf16 %v2591, %v2689
  %v3096 = vmax.bf16 %v2592, %v2696
  %v3097 = vmax.bf16 %v2593, %v2703
  %v3098 = vmax.bf16 %v2594, %v2710
  %v3099 = vmax.bf16 %v2595, %v2717
  %v3100 = vmax.bf16 %v2596, %v2724
  %v3101 = vmax.bf16 %v2597, %v2731
  %v3102 = vmax.bf16 %v2598, %v2738
  %v3103 = vmax.bf16 %v2599, %v2745
  %v3104 = vmax.bf16 %v2600, %v2752
  %v3105 = vmax.bf16 %v2601, %v2759
  %v3106 = vmax.bf16 %v2602, %v2766
  %v3107 = vmax.bf16 %v2603, %v2773
  %v3108 = vmax.bf16 %v2604, %v2780
  %v3109 = vmax.bf16 %v2605, %v2787
  %v3110 = vmax.bf16 %v2606, %v2794
  %v3111 = vmax.bf16 %v2607, %v2801
  %v3112 = vmax.bf16 %v2608, %v2808
  %v3113 = vmax.bf16 %v2609, %v2815
  %v3114 = vmax.bf16 %v2610, %v2822
  %v3115 = vmax.bf16 %v2611, %v2829
  %v3116 = vmax.bf16 %v2612, %v2836
  %v3117 = vmax.bf16 %v2613, %v2843
  %v3118 = vmax.bf16 %v2614, %v2850
  %v3119 = vmax.bf16 %v2615, %v2857
  %v3120 = vmax.bf16 %v2616, %v2864
  %v3121 = vmax.bf16 %v2617, %v2871
  %v3122 = vmax.bf16 %v2618, %v2878
  %v3123 = vmax.bf16 %v2619, %v2885
  %v3124 = vmax.bf16 %v2620, %v2892
  %v3125 = vmax.bf16 %v2621, %v2899
  %v3126 = vmax.bf16 %v2622, %v2906
  %v3127 = vmax.bf16 %v2623, %v2913
  %v3128 = vmax.bf16 %v2624, %v2920
  %v3129 = vmax.bf16 %v2625, %v2927
  %v3130 = vmax.bf16 %v2626, %v2934
  %v3131 = vmax.bf16 %v2627, %v2941
  %v3132 = vmax.bf16 %v2628, %v2948
  %v3133 = vmax.bf16 %v2629, %v2955
  %v3134 = vmax.bf16 %v2630, %v2962
  %v3135 = vmax.bf16 %v2631, %v2969
  %v3136 = vmax.bf16 %v2632, %v2976
  %v3137 = vmax.bf16 %v2633, %v2983
  %v3138 = vmax.bf16 %v2634, %v2990
  %v3139 = vmax.bf16 %v2635, %v2997
  %v3140 = vmax.bf16 %v2636, %v3004
  %v3141 = vmax.bf16 %v2637, %v3011
  %v3142 = vmax.bf16 %v2638, %v3018
  %v3143 = vmax.bf16 %v2639, %v3025
  %v3144 = vmax.bf16 %v2640, %v3032
  %v3201 = vrot.slane %v2585, 1
  %v3202 = vrot.slane %v2586, 1
  %v3203 = vrot.slane %v2587, 1
  %v3204 = vrot.slane %v2588, 1
  %v3205 = vrot.slane %v2589, 1
  %v3206 = vrot.slane %v2590, 1
  %v3207 = vrot.slane %v2591, 1
  %v3208 = vrot.slane %v2592, 1
  %v3209 = vrot.slane %v2593, 1
  %v3210 = vrot.slane %v2594, 1
  %v3211 = vrot.slane %v2595, 1
  %v3212 = vrot.slane %v2596, 1
  %v3213 = vrot.slane %v2597, 1
  %v3214 = vrot.slane %v2598, 1
  %v3215 = vrot.slane %v2599, 1
  %v3216 = vrot.slane %v2600, 1
  %v3217 = vrot.slane %v2601, 1
  %v3218 = vrot.slane %v2602, 1
  %v3219 = vrot.slane %v2603, 1
  %v3220 = vrot.slane %v2604, 1
  %v3221 = vrot.slane %v2605, 1
  %v3222 = vrot.slane %v2606, 1
  %v3223 = vrot.slane %v2607, 1
  %v3224 = vrot.slane %v2608, 1
  %v3225 = vrot.slane %v2609, 1
  %v3226 = vrot.slane %v2610, 1
  %v3227 = vrot.slane %v2611, 1
  %v3228 = vrot.slane %v2612, 1
  %v3229 = vrot.slane %v2613, 1
  %v3230 = vrot.slane %v2614, 1
  %v3231 = vrot.slane %v2615, 1
  %v3232 = vrot.slane %v2616, 1
  %v3233 = vrot.slane %v2617, 1
  %v3234 = vrot.slane %v2618, 1
  %v3235 = vrot.slane %v2619, 1
  %v3236 = vrot.slane %v2620, 1
  %v3237 = vrot.slane %v2621, 1
  %v3238 = vrot.slane %v2622, 1
  %v3239 = vrot.slane %v2623, 1
  %v3240 = vrot.slane %v2624, 1
  %v3241 = vrot.slane %v2625, 1
  %v3242 = vrot.slane %v2626, 1
  %v3243 = vrot.slane %v2627, 1
  %v3244 = vrot.slane %v2628, 1
  %v3245 = vrot.slane %v2629, 1
  %v3246 = vrot.slane %v2630, 1
  %v3247 = vrot.slane %v2631, 1
  %v3248 = vrot.slane %v2632, 1
  %v3249 = vrot.slane %v2633, 1
  %v3250 = vrot.slane %v2634, 1
  %v3251 = vrot.slane %v2635, 1
  %v3252 = vrot.slane %v2636, 1
  %v3253 = vrot.slane %v2637, 1
  %v3254 = vrot.slane %v2638, 1
  %v3255 = vrot.slane %v2639, 1
  %v3256 = vrot.slane %v2640, 1
  %v3313 = vmax.bf16 %v3089, %v3201
  %v3314 = vmax.bf16 %v3090, %v3202
  %v3315 = vmax.bf16 %v3091, %v3203
  %v3316 = vmax.bf16 %v3092, %v3204
  %v3317 = vmax.bf16 %v3093, %v3205
  %v3318 = vmax.bf16 %v3094, %v3206
  %v3319 = vmax.bf16 %v3095, %v3207
  %v3320 = vmax.bf16 %v3096, %v3208
  %v3321 = vmax.bf16 %v3097, %v3209
  %v3322 = vmax.bf16 %v3098, %v3210
  %v3323 = vmax.bf16 %v3099, %v3211
  %v3324 = vmax.bf16 %v3100, %v3212
  %v3325 = vmax.bf16 %v3101, %v3213
  %v3326 = vmax.bf16 %v3102, %v3214
  %v3327 = vmax.bf16 %v3103, %v3215
  %v3328 = vmax.bf16 %v3104, %v3216
  %v3329 = vmax.bf16 %v3105, %v3217
  %v3330 = vmax.bf16 %v3106, %v3218
  %v3331 = vmax.bf16 %v3107, %v3219
  %v3332 = vmax.bf16 %v3108, %v3220
  %v3333 = vmax.bf16 %v3109, %v3221
  %v3334 = vmax.bf16 %v3110, %v3222
  %v3335 = vmax.bf16 %v3111, %v3223
  %v3336 = vmax.bf16 %v3112, %v3224
  %v3337 = vmax.bf16 %v3113, %v3225
  %v3338 = vmax.bf16 %v3114, %v3226
  %v3339 = vmax.bf16 %v3115, %v3227
  %v3340 = vmax.bf16 %v3116, %v3228
  %v3341 = vmax.bf16 %v3117, %v3229
  %v3342 = vmax.bf16 %v3118, %v3230
  %v3343 = vmax.bf16 %v3119, %v3231
  %v3344 = vmax.bf16 %v3120, %v3232
  %v3345 = vmax.bf16 %v3121, %v3233
  %v3346 = vmax.bf16 %v3122, %v3234
  %v3347 = vmax.bf16 %v3123, %v3235
  %v3348 = vmax.bf16 %v3124, %v3236
  %v3349 = vmax.bf16 %v3125, %v3237
  %v3350 = vmax.bf16 %v3126, %v3238
  %v3351 = vmax.bf16 %v3127, %v3239
  %v3352 = vmax.bf16 %v3128, %v3240
  %v3353 = vmax.bf16 %v3129, %v3241
  %v3354 = vmax.bf16 %v3130, %v3242
  %v3355 = vmax.bf16 %v3131, %v3243
  %v3356 = vmax.bf16 %v3132, %v3244
  %v3357 = vmax.bf16 %v3133, %v3245
  %v3358 = vmax.bf16 %v3134, %v3246
  %v3359 = vmax.bf16 %v3135, %v3247
  %v3360 = vmax.bf16 %v3136, %v3248
  %v3361 = vmax.bf16 %v3137, %v3249
  %v3362 = vmax.bf16 %v3138, %v3250
  %v3363 = vmax.bf16 %v3139, %v3251
  %v3364 = vmax.bf16 %v3140, %v3252
  %v3365 = vmax.bf16 %v3141, %v3253
  %v3366 = vmax.bf16 %v3142, %v3254
  %v3367 = vmax.bf16 %v3143, %v3255
  %v3368 = vmax.bf16 %v3144, %v3256
  %v3425 = vcombine.high %v3313, %v3313
  %v3427 = vunpack.c.l.s4 1966171168
  %v3428 = vunpack.c.0.s8 %v3427
  %v3429 = vlaneseq
  %v3430 = vshrl.u32 %v3429, 7
  %v3431 = vsub.s32 %v3428, %v3430
  %v3432 = vrot.slane %v3313, %v3431
  %v3434 = vunpack.c.l.s4 1966171168
  %v3435 = vunpack.c.0.s8 %v3434
  %v3436 = vlaneseq
  %v3437 = vshrl.u32 %v3436, 7
  %v3438 = vsub.s32 %v3435, %v3437
  %v3439 = vrot.slane %v3425, %v3438
  %v3440 = vcombine.high %v3432, %v3432
  %v3441 = vcombine.high %v3439, %v3439
  %v3443 = vunpack.c.l.s4 1966171168
  %v3444 = vunpack.c.0.s8 %v3443
  %v3445 = vlaneseq
  %v3446 = vshrl.u32 %v3445, 7
  %v3447 = vsub.s32 %v3444, %v3446
  %v3448 = vrot.slane %v3432, %v3447
  %v3450 = vunpack.c.l.s4 1966171168
  %v3451 = vunpack.c.0.s8 %v3450
  %v3452 = vlaneseq
  %v3453 = vshrl.u32 %v3452, 7
  %v3454 = vsub.s32 %v3451, %v3453
  %v3455 = vrot.slane %v3439, %v3454
  %v3457 = vunpack.c.l.s4 1966171168
  %v3458 = vunpack.c.0.s8 %v3457
  %v3459 = vlaneseq
  %v3460 = vshrl.u32 %v3459, 7
  %v3461 = vsub.s32 %v3458, %v3460
  %v3462 = vrot.slane %v3440, %v3461
  %v3464 = vunpack.c.l.s4 1966171168
  %v3465 = vunpack.c.0.s8 %v3464
  %v3466 = vlaneseq
  %v3467 = vshrl.u32 %v3466, 7
  %v3468 = vsub.s32 %v3465, %v3467
  %v3469 = vrot.slane %v3441, %v3468
  %v3470 = vcombine.high %v3448, %v3448
  %v3471 = vcombine.high %v3455, %v3455
  %v3472 = vcombine.high %v3462, %v3462
  %v3473 = vcombine.high %v3314, %v3314
  %v3475 = vunpack.c.l.s4 1966171168
  %v3476 = vunpack.c.0.s8 %v3475
  %v3477 = vlaneseq
  %v3478 = vshrl.u32 %v3477, 7
  %v3479 = vsub.s32 %v3476, %v3478
  %v3480 = vrot.slane %v3314, %v3479
  %v3482 = vunpack.c.l.s4 1966171168
  %v3483 = vunpack.c.0.s8 %v3482
  %v3484 = vlaneseq
  %v3485 = vshrl.u32 %v3484, 7
  %v3486 = vsub.s32 %v3483, %v3485
  %v3487 = vrot.slane %v3473, %v3486
  %v3488 = vcombine.high %v3480, %v3480
  %v3489 = vcombine.high %v3487, %v3487
  %v3491 = vunpack.c.l.s4 1966171168
  %v3492 = vunpack.c.0.s8 %v3491
  %v3493 = vlaneseq
  %v3494 = vshrl.u32 %v3493, 7
  %v3495 = vsub.s32 %v3492, %v3494
  %v3496 = vrot.slane %v3480, %v3495
  %v3498 = vunpack.c.l.s4 1966171168
  %v3499 = vunpack.c.0.s8 %v3498
  %v3500 = vlaneseq
  %v3501 = vshrl.u32 %v3500, 7
  %v3502 = vsub.s32 %v3499, %v3501
  %v3503 = vrot.slane %v3487, %v3502
  %v3505 = vunpack.c.l.s4 1966171168
  %v3506 = vunpack.c.0.s8 %v3505
  %v3507 = vlaneseq
  %v3508 = vshrl.u32 %v3507, 7
  %v3509 = vsub.s32 %v3506, %v3508
  %v3510 = vrot.slane %v3488, %v3509
  %v3512 = vunpack.c.l.s4 1966171168
  %v3513 = vunpack.c.0.s8 %v3512
  %v3514 = vlaneseq
  %v3515 = vshrl.u32 %v3514, 7
  %v3516 = vsub.s32 %v3513, %v3515
  %v3517 = vrot.slane %v3489, %v3516
  %v3518 = vcombine.high %v3496, %v3496
  %v3519 = vcombine.high %v3503, %v3503
  %v3520 = vcombine.high %v3510, %v3510
  %v3521 = vcombine.high %v3315, %v3315
  %v3523 = vunpack.c.l.s4 1966171168
  %v3524 = vunpack.c.0.s8 %v3523
  %v3525 = vlaneseq
  %v3526 = vshrl.u32 %v3525, 7
  %v3527 = vsub.s32 %v3524, %v3526
  %v3528 = vrot.slane %v3315, %v3527
  %v3530 = vunpack.c.l.s4 1966171168
  %v3531 = vunpack.c.0.s8 %v3530
  %v3532 = vlaneseq
  %v3533 = vshrl.u32 %v3532, 7
  %v3534 = vsub.s32 %v3531, %v3533
  %v3535 = vrot.slane %v3521, %v3534
  %v3536 = vcombine.high %v3528, %v3528
  %v3537 = vcombine.high %v3535, %v3535
  %v3539 = vunpack.c.l.s4 1966171168
  %v3540 = vunpack.c.0.s8 %v3539
  %v3541 = vlaneseq
  %v3542 = vshrl.u32 %v3541, 7
  %v3543 = vsub.s32 %v3540, %v3542
  %v3544 = vrot.slane %v3528, %v3543
  %v3546 = vunpack.c.l.s4 1966171168
  %v3547 = vunpack.c.0.s8 %v3546
  %v3548 = vlaneseq
  %v3549 = vshrl.u32 %v3548, 7
  %v3550 = vsub.s32 %v3547, %v3549
  %v3551 = vrot.slane %v3535, %v3550
  %v3553 = vunpack.c.l.s4 1966171168
  %v3554 = vunpack.c.0.s8 %v3553
  %v3555 = vlaneseq
  %v3556 = vshrl.u32 %v3555, 7
  %v3557 = vsub.s32 %v3554, %v3556
  %v3558 = vrot.slane %v3536, %v3557
  %v3560 = vunpack.c.l.s4 1966171168
  %v3561 = vunpack.c.0.s8 %v3560
  %v3562 = vlaneseq
  %v3563 = vshrl.u32 %v3562, 7
  %v3564 = vsub.s32 %v3561, %v3563
  %v3565 = vrot.slane %v3537, %v3564
  %v3566 = vcombine.high %v3544, %v3544
  %v3567 = vcombine.high %v3551, %v3551
  %v3568 = vcombine.high %v3558, %v3558
  %v3569 = vcombine.high %v3316, %v3316
  %v3571 = vunpack.c.l.s4 1966171168
  %v3572 = vunpack.c.0.s8 %v3571
  %v3573 = vlaneseq
  %v3574 = vshrl.u32 %v3573, 7
  %v3575 = vsub.s32 %v3572, %v3574
  %v3576 = vrot.slane %v3316, %v3575
  %v3578 = vunpack.c.l.s4 1966171168
  %v3579 = vunpack.c.0.s8 %v3578
  %v3580 = vlaneseq
  %v3581 = vshrl.u32 %v3580, 7
  %v3582 = vsub.s32 %v3579, %v3581
  %v3583 = vrot.slane %v3569, %v3582
  %v3584 = vcombine.high %v3576, %v3576
  %v3585 = vcombine.high %v3583, %v3583
  %v3587 = vunpack.c.l.s4 1966171168
  %v3588 = vunpack.c.0.s8 %v3587
  %v3589 = vlaneseq
  %v3590 = vshrl.u32 %v3589, 7
  %v3591 = vsub.s32 %v3588, %v3590
  %v3592 = vrot.slane %v3576, %v3591
  %v3594 = vunpack.c.l.s4 1966171168
  %v3595 = vunpack.c.0.s8 %v3594
  %v3596 = vlaneseq
  %v3597 = vshrl.u32 %v3596, 7
  %v3598 = vsub.s32 %v3595, %v3597
  %v3599 = vrot.slane %v3583, %v3598
  %v3601 = vunpack.c.l.s4 1966171168
  %v3602 = vunpack.c.0.s8 %v3601
  %v3603 = vlaneseq
  %v3604 = vshrl.u32 %v3603, 7
  %v3605 = vsub.s32 %v3602, %v3604
  %v3606 = vrot.slane %v3584, %v3605
  %v3608 = vunpack.c.l.s4 1966171168
  %v3609 = vunpack.c.0.s8 %v3608
  %v3610 = vlaneseq
  %v3611 = vshrl.u32 %v3610, 7
  %v3612 = vsub.s32 %v3609, %v3611
  %v3613 = vrot.slane %v3585, %v3612
  %v3614 = vcombine.high %v3592, %v3592
  %v3615 = vcombine.high %v3599, %v3599
  %v3616 = vcombine.high %v3606, %v3606
  %v3617 = vcombine.high %v3317, %v3317
  %v3619 = vunpack.c.l.s4 1966171168
  %v3620 = vunpack.c.0.s8 %v3619
  %v3621 = vlaneseq
  %v3622 = vshrl.u32 %v3621, 7
  %v3623 = vsub.s32 %v3620, %v3622
  %v3624 = vrot.slane %v3317, %v3623
  %v3626 = vunpack.c.l.s4 1966171168
  %v3627 = vunpack.c.0.s8 %v3626
  %v3628 = vlaneseq
  %v3629 = vshrl.u32 %v3628, 7
  %v3630 = vsub.s32 %v3627, %v3629
  %v3631 = vrot.slane %v3617, %v3630
  %v3632 = vcombine.high %v3624, %v3624
  %v3633 = vcombine.high %v3631, %v3631
  %v3635 = vunpack.c.l.s4 1966171168
  %v3636 = vunpack.c.0.s8 %v3635
  %v3637 = vlaneseq
  %v3638 = vshrl.u32 %v3637, 7
  %v3639 = vsub.s32 %v3636, %v3638
  %v3640 = vrot.slane %v3624, %v3639
  %v3642 = vunpack.c.l.s4 1966171168
  %v3643 = vunpack.c.0.s8 %v3642
  %v3644 = vlaneseq
  %v3645 = vshrl.u32 %v3644, 7
  %v3646 = vsub.s32 %v3643, %v3645
  %v3647 = vrot.slane %v3631, %v3646
  %v3649 = vunpack.c.l.s4 1966171168
  %v3650 = vunpack.c.0.s8 %v3649
  %v3651 = vlaneseq
  %v3652 = vshrl.u32 %v3651, 7
  %v3653 = vsub.s32 %v3650, %v3652
  %v3654 = vrot.slane %v3632, %v3653
  %v3656 = vunpack.c.l.s4 1966171168
  %v3657 = vunpack.c.0.s8 %v3656
  %v3658 = vlaneseq
  %v3659 = vshrl.u32 %v3658, 7
  %v3660 = vsub.s32 %v3657, %v3659
  %v3661 = vrot.slane %v3633, %v3660
  %v3662 = vcombine.high %v3640, %v3640
  %v3663 = vcombine.high %v3647, %v3647
  %v3664 = vcombine.high %v3654, %v3654
  %v3665 = vcombine.high %v3318, %v3318
  %v3667 = vunpack.c.l.s4 1966171168
  %v3668 = vunpack.c.0.s8 %v3667
  %v3669 = vlaneseq
  %v3670 = vshrl.u32 %v3669, 7
  %v3671 = vsub.s32 %v3668, %v3670
  %v3672 = vrot.slane %v3318, %v3671
  %v3674 = vunpack.c.l.s4 1966171168
  %v3675 = vunpack.c.0.s8 %v3674
  %v3676 = vlaneseq
  %v3677 = vshrl.u32 %v3676, 7
  %v3678 = vsub.s32 %v3675, %v3677
  %v3679 = vrot.slane %v3665, %v3678
  %v3680 = vcombine.high %v3672, %v3672
  %v3681 = vcombine.high %v3679, %v3679
  %v3683 = vunpack.c.l.s4 1966171168
  %v3684 = vunpack.c.0.s8 %v3683
  %v3685 = vlaneseq
  %v3686 = vshrl.u32 %v3685, 7
  %v3687 = vsub.s32 %v3684, %v3686
  %v3688 = vrot.slane %v3672, %v3687
  %v3690 = vunpack.c.l.s4 1966171168
  %v3691 = vunpack.c.0.s8 %v3690
  %v3692 = vlaneseq
  %v3693 = vshrl.u32 %v3692, 7
  %v3694 = vsub.s32 %v3691, %v3693
  %v3695 = vrot.slane %v3679, %v3694
  %v3697 = vunpack.c.l.s4 1966171168
  %v3698 = vunpack.c.0.s8 %v3697
  %v3699 = vlaneseq
  %v3700 = vshrl.u32 %v3699, 7
  %v3701 = vsub.s32 %v3698, %v3700
  %v3702 = vrot.slane %v3680, %v3701
  %v3704 = vunpack.c.l.s4 1966171168
  %v3705 = vunpack.c.0.s8 %v3704
  %v3706 = vlaneseq
  %v3707 = vshrl.u32 %v3706, 7
  %v3708 = vsub.s32 %v3705, %v3707
  %v3709 = vrot.slane %v3681, %v3708
  %v3710 = vcombine.high %v3688, %v3688
  %v3711 = vcombine.high %v3695, %v3695
  %v3712 = vcombine.high %v3702, %v3702
  %v3713 = vcombine.high %v3319, %v3319
  %v3715 = vunpack.c.l.s4 1966171168
  %v3716 = vunpack.c.0.s8 %v3715
  %v3717 = vlaneseq
  %v3718 = vshrl.u32 %v3717, 7
  %v3719 = vsub.s32 %v3716, %v3718
  %v3720 = vrot.slane %v3319, %v3719
  %v3722 = vunpack.c.l.s4 1966171168
  %v3723 = vunpack.c.0.s8 %v3722
  %v3724 = vlaneseq
  %v3725 = vshrl.u32 %v3724, 7
  %v3726 = vsub.s32 %v3723, %v3725
  %v3727 = vrot.slane %v3713, %v3726
  %v3728 = vcombine.high %v3720, %v3720
  %v3729 = vcombine.high %v3727, %v3727
  %v3731 = vunpack.c.l.s4 1966171168
  %v3732 = vunpack.c.0.s8 %v3731
  %v3733 = vlaneseq
  %v3734 = vshrl.u32 %v3733, 7
  %v3735 = vsub.s32 %v3732, %v3734
  %v3736 = vrot.slane %v3720, %v3735
  %v3738 = vunpack.c.l.s4 1966171168
  %v3739 = vunpack.c.0.s8 %v3738
  %v3740 = vlaneseq
  %v3741 = vshrl.u32 %v3740, 7
  %v3742 = vsub.s32 %v3739, %v3741
  %v3743 = vrot.slane %v3727, %v3742
  %v3745 = vunpack.c.l.s4 1966171168
  %v3746 = vunpack.c.0.s8 %v3745
  %v3747 = vlaneseq
  %v3748 = vshrl.u32 %v3747, 7
  %v3749 = vsub.s32 %v3746, %v3748
  %v3750 = vrot.slane %v3728, %v3749
  %v3752 = vunpack.c.l.s4 1966171168
  %v3753 = vunpack.c.0.s8 %v3752
  %v3754 = vlaneseq
  %v3755 = vshrl.u32 %v3754, 7
  %v3756 = vsub.s32 %v3753, %v3755
  %v3757 = vrot.slane %v3729, %v3756
  %v3758 = vcombine.high %v3736, %v3736
  %v3759 = vcombine.high %v3743, %v3743
  %v3760 = vcombine.high %v3750, %v3750
  %v3761 = vcombine.high %v3320, %v3320
  %v3763 = vunpack.c.l.s4 1966171168
  %v3764 = vunpack.c.0.s8 %v3763
  %v3765 = vlaneseq
  %v3766 = vshrl.u32 %v3765, 7
  %v3767 = vsub.s32 %v3764, %v3766
  %v3768 = vrot.slane %v3320, %v3767
  %v3770 = vunpack.c.l.s4 1966171168
  %v3771 = vunpack.c.0.s8 %v3770
  %v3772 = vlaneseq
  %v3773 = vshrl.u32 %v3772, 7
  %v3774 = vsub.s32 %v3771, %v3773
  %v3775 = vrot.slane %v3761, %v3774
  %v3776 = vcombine.high %v3768, %v3768
  %v3777 = vcombine.high %v3775, %v3775
  %v3779 = vunpack.c.l.s4 1966171168
  %v3780 = vunpack.c.0.s8 %v3779
  %v3781 = vlaneseq
  %v3782 = vshrl.u32 %v3781, 7
  %v3783 = vsub.s32 %v3780, %v3782
  %v3784 = vrot.slane %v3768, %v3783
  %v3786 = vunpack.c.l.s4 1966171168
  %v3787 = vunpack.c.0.s8 %v3786
  %v3788 = vlaneseq
  %v3789 = vshrl.u32 %v3788, 7
  %v3790 = vsub.s32 %v3787, %v3789
  %v3791 = vrot.slane %v3775, %v3790
  %v3793 = vunpack.c.l.s4 1966171168
  %v3794 = vunpack.c.0.s8 %v3793
  %v3795 = vlaneseq
  %v3796 = vshrl.u32 %v3795, 7
  %v3797 = vsub.s32 %v3794, %v3796
  %v3798 = vrot.slane %v3776, %v3797
  %v3800 = vunpack.c.l.s4 1966171168
  %v3801 = vunpack.c.0.s8 %v3800
  %v3802 = vlaneseq
  %v3803 = vshrl.u32 %v3802, 7
  %v3804 = vsub.s32 %v3801, %v3803
  %v3805 = vrot.slane %v3777, %v3804
  %v3806 = vcombine.high %v3784, %v3784
  %v3807 = vcombine.high %v3791, %v3791
  %v3808 = vcombine.high %v3798, %v3798
  %v3809 = vcombine.high %v3321, %v3321
  %v3811 = vunpack.c.l.s4 1966171168
  %v3812 = vunpack.c.0.s8 %v3811
  %v3813 = vlaneseq
  %v3814 = vshrl.u32 %v3813, 7
  %v3815 = vsub.s32 %v3812, %v3814
  %v3816 = vrot.slane %v3321, %v3815
  %v3818 = vunpack.c.l.s4 1966171168
  %v3819 = vunpack.c.0.s8 %v3818
  %v3820 = vlaneseq
  %v3821 = vshrl.u32 %v3820, 7
  %v3822 = vsub.s32 %v3819, %v3821
  %v3823 = vrot.slane %v3809, %v3822
  %v3824 = vcombine.high %v3816, %v3816
  %v3825 = vcombine.high %v3823, %v3823
  %v3827 = vunpack.c.l.s4 1966171168
  %v3828 = vunpack.c.0.s8 %v3827
  %v3829 = vlaneseq
  %v3830 = vshrl.u32 %v3829, 7
  %v3831 = vsub.s32 %v3828, %v3830
  %v3832 = vrot.slane %v3816, %v3831
  %v3834 = vunpack.c.l.s4 1966171168
  %v3835 = vunpack.c.0.s8 %v3834
  %v3836 = vlaneseq
  %v3837 = vshrl.u32 %v3836, 7
  %v3838 = vsub.s32 %v3835, %v3837
  %v3839 = vrot.slane %v3823, %v3838
  %v3841 = vunpack.c.l.s4 1966171168
  %v3842 = vunpack.c.0.s8 %v3841
  %v3843 = vlaneseq
  %v3844 = vshrl.u32 %v3843, 7
  %v3845 = vsub.s32 %v3842, %v3844
  %v3846 = vrot.slane %v3824, %v3845
  %v3848 = vunpack.c.l.s4 1966171168
  %v3849 = vunpack.c.0.s8 %v3848
  %v3850 = vlaneseq
  %v3851 = vshrl.u32 %v3850, 7
  %v3852 = vsub.s32 %v3849, %v3851
  %v3853 = vrot.slane %v3825, %v3852
  %v3854 = vcombine.high %v3832, %v3832
  %v3855 = vcombine.high %v3839, %v3839
  %v3856 = vcombine.high %v3846, %v3846
  %v3857 = vcombine.high %v3322, %v3322
  %v3859 = vunpack.c.l.s4 1966171168
  %v3860 = vunpack.c.0.s8 %v3859
  %v3861 = vlaneseq
  %v3862 = vshrl.u32 %v3861, 7
  %v3863 = vsub.s32 %v3860, %v3862
  %v3864 = vrot.slane %v3322, %v3863
  %v3866 = vunpack.c.l.s4 1966171168
  %v3867 = vunpack.c.0.s8 %v3866
  %v3868 = vlaneseq
  %v3869 = vshrl.u32 %v3868, 7
  %v3870 = vsub.s32 %v3867, %v3869
  %v3871 = vrot.slane %v3857, %v3870
  %v3872 = vcombine.high %v3864, %v3864
  %v3873 = vcombine.high %v3871, %v3871
  %v3875 = vunpack.c.l.s4 1966171168
  %v3876 = vunpack.c.0.s8 %v3875
  %v3877 = vlaneseq
  %v3878 = vshrl.u32 %v3877, 7
  %v3879 = vsub.s32 %v3876, %v3878
  %v3880 = vrot.slane %v3864, %v3879
  %v3882 = vunpack.c.l.s4 1966171168
  %v3883 = vunpack.c.0.s8 %v3882
  %v3884 = vlaneseq
  %v3885 = vshrl.u32 %v3884, 7
  %v3886 = vsub.s32 %v3883, %v3885
  %v3887 = vrot.slane %v3871, %v3886
  %v3889 = vunpack.c.l.s4 1966171168
  %v3890 = vunpack.c.0.s8 %v3889
  %v3891 = vlaneseq
  %v3892 = vshrl.u32 %v3891, 7
  %v3893 = vsub.s32 %v3890, %v3892
  %v3894 = vrot.slane %v3872, %v3893
  %v3896 = vunpack.c.l.s4 1966171168
  %v3897 = vunpack.c.0.s8 %v3896
  %v3898 = vlaneseq
  %v3899 = vshrl.u32 %v3898, 7
  %v3900 = vsub.s32 %v3897, %v3899
  %v3901 = vrot.slane %v3873, %v3900
  %v3902 = vcombine.high %v3880, %v3880
  %v3903 = vcombine.high %v3887, %v3887
  %v3904 = vcombine.high %v3894, %v3894
  %v3905 = vcombine.high %v3323, %v3323
  %v3907 = vunpack.c.l.s4 1966171168
  %v3908 = vunpack.c.0.s8 %v3907
  %v3909 = vlaneseq
  %v3910 = vshrl.u32 %v3909, 7
  %v3911 = vsub.s32 %v3908, %v3910
  %v3912 = vrot.slane %v3323, %v3911
  %v3914 = vunpack.c.l.s4 1966171168
  %v3915 = vunpack.c.0.s8 %v3914
  %v3916 = vlaneseq
  %v3917 = vshrl.u32 %v3916, 7
  %v3918 = vsub.s32 %v3915, %v3917
  %v3919 = vrot.slane %v3905, %v3918
  %v3920 = vcombine.high %v3912, %v3912
  %v3921 = vcombine.high %v3919, %v3919
  %v3923 = vunpack.c.l.s4 1966171168
  %v3924 = vunpack.c.0.s8 %v3923
  %v3925 = vlaneseq
  %v3926 = vshrl.u32 %v3925, 7
  %v3927 = vsub.s32 %v3924, %v3926
  %v3928 = vrot.slane %v3912, %v3927
  %v3930 = vunpack.c.l.s4 1966171168
  %v3931 = vunpack.c.0.s8 %v3930
  %v3932 = vlaneseq
  %v3933 = vshrl.u32 %v3932, 7
  %v3934 = vsub.s32 %v3931, %v3933
  %v3935 = vrot.slane %v3919, %v3934
  %v3937 = vunpack.c.l.s4 1966171168
  %v3938 = vunpack.c.0.s8 %v3937
  %v3939 = vlaneseq
  %v3940 = vshrl.u32 %v3939, 7
  %v3941 = vsub.s32 %v3938, %v3940
  %v3942 = vrot.slane %v3920, %v3941
  %v3944 = vunpack.c.l.s4 1966171168
  %v3945 = vunpack.c.0.s8 %v3944
  %v3946 = vlaneseq
  %v3947 = vshrl.u32 %v3946, 7
  %v3948 = vsub.s32 %v3945, %v3947
  %v3949 = vrot.slane %v3921, %v3948
  %v3950 = vcombine.high %v3928, %v3928
  %v3951 = vcombine.high %v3935, %v3935
  %v3952 = vcombine.high %v3942, %v3942
  %v3953 = vcombine.high %v3324, %v3324
  %v3955 = vunpack.c.l.s4 1966171168
  %v3956 = vunpack.c.0.s8 %v3955
  %v3957 = vlaneseq
  %v3958 = vshrl.u32 %v3957, 7
  %v3959 = vsub.s32 %v3956, %v3958
  %v3960 = vrot.slane %v3324, %v3959
  %v3962 = vunpack.c.l.s4 1966171168
  %v3963 = vunpack.c.0.s8 %v3962
  %v3964 = vlaneseq
  %v3965 = vshrl.u32 %v3964, 7
  %v3966 = vsub.s32 %v3963, %v3965
  %v3967 = vrot.slane %v3953, %v3966
  %v3968 = vcombine.high %v3960, %v3960
  %v3969 = vcombine.high %v3967, %v3967
  %v3971 = vunpack.c.l.s4 1966171168
  %v3972 = vunpack.c.0.s8 %v3971
  %v3973 = vlaneseq
  %v3974 = vshrl.u32 %v3973, 7
  %v3975 = vsub.s32 %v3972, %v3974
  %v3976 = vrot.slane %v3960, %v3975
  %v3978 = vunpack.c.l.s4 1966171168
  %v3979 = vunpack.c.0.s8 %v3978
  %v3980 = vlaneseq
  %v3981 = vshrl.u32 %v3980, 7
  %v3982 = vsub.s32 %v3979, %v3981
  %v3983 = vrot.slane %v3967, %v3982
  %v3985 = vunpack.c.l.s4 1966171168
  %v3986 = vunpack.c.0.s8 %v3985
  %v3987 = vlaneseq
  %v3988 = vshrl.u32 %v3987, 7
  %v3989 = vsub.s32 %v3986, %v3988
  %v3990 = vrot.slane %v3968, %v3989
  %v3992 = vunpack.c.l.s4 1966171168
  %v3993 = vunpack.c.0.s8 %v3992
  %v3994 = vlaneseq
  %v3995 = vshrl.u32 %v3994, 7
  %v3996 = vsub.s32 %v3993, %v3995
  %v3997 = vrot.slane %v3969, %v3996
  %v3998 = vcombine.high %v3976, %v3976
  %v3999 = vcombine.high %v3983, %v3983
  %v4000 = vcombine.high %v3990, %v3990
  %v4001 = vcombine.high %v3325, %v3325
  %v4003 = vunpack.c.l.s4 1966171168
  %v4004 = vunpack.c.0.s8 %v4003
  %v4005 = vlaneseq
  %v4006 = vshrl.u32 %v4005, 7
  %v4007 = vsub.s32 %v4004, %v4006
  %v4008 = vrot.slane %v3325, %v4007
  %v4010 = vunpack.c.l.s4 1966171168
  %v4011 = vunpack.c.0.s8 %v4010
  %v4012 = vlaneseq
  %v4013 = vshrl.u32 %v4012, 7
  %v4014 = vsub.s32 %v4011, %v4013
  %v4015 = vrot.slane %v4001, %v4014
  %v4016 = vcombine.high %v4008, %v4008
  %v4017 = vcombine.high %v4015, %v4015
  %v4019 = vunpack.c.l.s4 1966171168
  %v4020 = vunpack.c.0.s8 %v4019
  %v4021 = vlaneseq
  %v4022 = vshrl.u32 %v4021, 7
  %v4023 = vsub.s32 %v4020, %v4022
  %v4024 = vrot.slane %v4008, %v4023
  %v4026 = vunpack.c.l.s4 1966171168
  %v4027 = vunpack.c.0.s8 %v4026
  %v4028 = vlaneseq
  %v4029 = vshrl.u32 %v4028, 7
  %v4030 = vsub.s32 %v4027, %v4029
  %v4031 = vrot.slane %v4015, %v4030
  %v4033 = vunpack.c.l.s4 1966171168
  %v4034 = vunpack.c.0.s8 %v4033
  %v4035 = vlaneseq
  %v4036 = vshrl.u32 %v4035, 7
  %v4037 = vsub.s32 %v4034, %v4036
  %v4038 = vrot.slane %v4016, %v4037
  %v4040 = vunpack.c.l.s4 1966171168
  %v4041 = vunpack.c.0.s8 %v4040
  %v4042 = vlaneseq
  %v4043 = vshrl.u32 %v4042, 7
  %v4044 = vsub.s32 %v4041, %v4043
  %v4045 = vrot.slane %v4017, %v4044
  %v4046 = vcombine.high %v4024, %v4024
  %v4047 = vcombine.high %v4031, %v4031
  %v4048 = vcombine.high %v4038, %v4038
  %v4049 = vcombine.high %v3326, %v3326
  %v4051 = vunpack.c.l.s4 1966171168
  %v4052 = vunpack.c.0.s8 %v4051
  %v4053 = vlaneseq
  %v4054 = vshrl.u32 %v4053, 7
  %v4055 = vsub.s32 %v4052, %v4054
  %v4056 = vrot.slane %v3326, %v4055
  %v4058 = vunpack.c.l.s4 1966171168
  %v4059 = vunpack.c.0.s8 %v4058
  %v4060 = vlaneseq
  %v4061 = vshrl.u32 %v4060, 7
  %v4062 = vsub.s32 %v4059, %v4061
  %v4063 = vrot.slane %v4049, %v4062
  %v4064 = vcombine.high %v4056, %v4056
  %v4065 = vcombine.high %v4063, %v4063
  %v4067 = vunpack.c.l.s4 1966171168
  %v4068 = vunpack.c.0.s8 %v4067
  %v4069 = vlaneseq
  %v4070 = vshrl.u32 %v4069, 7
  %v4071 = vsub.s32 %v4068, %v4070
  %v4072 = vrot.slane %v4056, %v4071
  %v4074 = vunpack.c.l.s4 1966171168
  %v4075 = vunpack.c.0.s8 %v4074
  %v4076 = vlaneseq
  %v4077 = vshrl.u32 %v4076, 7
  %v4078 = vsub.s32 %v4075, %v4077
  %v4079 = vrot.slane %v4063, %v4078
  %v4081 = vunpack.c.l.s4 1966171168
  %v4082 = vunpack.c.0.s8 %v4081
  %v4083 = vlaneseq
  %v4084 = vshrl.u32 %v4083, 7
  %v4085 = vsub.s32 %v4082, %v4084
  %v4086 = vrot.slane %v4064, %v4085
  %v4088 = vunpack.c.l.s4 1966171168
  %v4089 = vunpack.c.0.s8 %v4088
  %v4090 = vlaneseq
  %v4091 = vshrl.u32 %v4090, 7
  %v4092 = vsub.s32 %v4089, %v4091
  %v4093 = vrot.slane %v4065, %v4092
  %v4094 = vcombine.high %v4072, %v4072
  %v4095 = vcombine.high %v4079, %v4079
  %v4096 = vcombine.high %v4086, %v4086
  %v4097 = vcombine.high %v3327, %v3327
  %v4099 = vunpack.c.l.s4 1966171168
  %v4100 = vunpack.c.0.s8 %v4099
  %v4101 = vlaneseq
  %v4102 = vshrl.u32 %v4101, 7
  %v4103 = vsub.s32 %v4100, %v4102
  %v4104 = vrot.slane %v3327, %v4103
  %v4106 = vunpack.c.l.s4 1966171168
  %v4107 = vunpack.c.0.s8 %v4106
  %v4108 = vlaneseq
  %v4109 = vshrl.u32 %v4108, 7
  %v4110 = vsub.s32 %v4107, %v4109
  %v4111 = vrot.slane %v4097, %v4110
  %v4112 = vcombine.high %v4104, %v4104
  %v4113 = vcombine.high %v4111, %v4111
  %v4115 = vunpack.c.l.s4 1966171168
  %v4116 = vunpack.c.0.s8 %v4115
  %v4117 = vlaneseq
  %v4118 = vshrl.u32 %v4117, 7
  %v4119 = vsub.s32 %v4116, %v4118
  %v4120 = vrot.slane %v4104, %v4119
  %v4122 = vunpack.c.l.s4 1966171168
  %v4123 = vunpack.c.0.s8 %v4122
  %v4124 = vlaneseq
  %v4125 = vshrl.u32 %v4124, 7
  %v4126 = vsub.s32 %v4123, %v4125
  %v4127 = vrot.slane %v4111, %v4126
  %v4129 = vunpack.c.l.s4 1966171168
  %v4130 = vunpack.c.0.s8 %v4129
  %v4131 = vlaneseq
  %v4132 = vshrl.u32 %v4131, 7
  %v4133 = vsub.s32 %v4130, %v4132
  %v4134 = vrot.slane %v4112, %v4133
  %v4136 = vunpack.c.l.s4 1966171168
  %v4137 = vunpack.c.0.s8 %v4136
  %v4138 = vlaneseq
  %v4139 = vshrl.u32 %v4138, 7
  %v4140 = vsub.s32 %v4137, %v4139
  %v4141 = vrot.slane %v4113, %v4140
  %v4142 = vcombine.high %v4120, %v4120
  %v4143 = vcombine.high %v4127, %v4127
  %v4144 = vcombine.high %v4134, %v4134
  %v4145 = vcombine.high %v3328, %v3328
  %v4147 = vunpack.c.l.s4 1966171168
  %v4148 = vunpack.c.0.s8 %v4147
  %v4149 = vlaneseq
  %v4150 = vshrl.u32 %v4149, 7
  %v4151 = vsub.s32 %v4148, %v4150
  %v4152 = vrot.slane %v3328, %v4151
  %v4154 = vunpack.c.l.s4 1966171168
  %v4155 = vunpack.c.0.s8 %v4154
  %v4156 = vlaneseq
  %v4157 = vshrl.u32 %v4156, 7
  %v4158 = vsub.s32 %v4155, %v4157
  %v4159 = vrot.slane %v4145, %v4158
  %v4160 = vcombine.high %v4152, %v4152
  %v4161 = vcombine.high %v4159, %v4159
  %v4163 = vunpack.c.l.s4 1966171168
  %v4164 = vunpack.c.0.s8 %v4163
  %v4165 = vlaneseq
  %v4166 = vshrl.u32 %v4165, 7
  %v4167 = vsub.s32 %v4164, %v4166
  %v4168 = vrot.slane %v4152, %v4167
  %v4170 = vunpack.c.l.s4 1966171168
  %v4171 = vunpack.c.0.s8 %v4170
  %v4172 = vlaneseq
  %v4173 = vshrl.u32 %v4172, 7
  %v4174 = vsub.s32 %v4171, %v4173
  %v4175 = vrot.slane %v4159, %v4174
  %v4177 = vunpack.c.l.s4 1966171168
  %v4178 = vunpack.c.0.s8 %v4177
  %v4179 = vlaneseq
  %v4180 = vshrl.u32 %v4179, 7
  %v4181 = vsub.s32 %v4178, %v4180
  %v4182 = vrot.slane %v4160, %v4181
  %v4184 = vunpack.c.l.s4 1966171168
  %v4185 = vunpack.c.0.s8 %v4184
  %v4186 = vlaneseq
  %v4187 = vshrl.u32 %v4186, 7
  %v4188 = vsub.s32 %v4185, %v4187
  %v4189 = vrot.slane %v4161, %v4188
  %v4190 = vcombine.high %v4168, %v4168
  %v4191 = vcombine.high %v4175, %v4175
  %v4192 = vcombine.high %v4182, %v4182
  %v4193 = vcombine.high %v3329, %v3329
  %v4195 = vunpack.c.l.s4 1966171168
  %v4196 = vunpack.c.0.s8 %v4195
  %v4197 = vlaneseq
  %v4198 = vshrl.u32 %v4197, 7
  %v4199 = vsub.s32 %v4196, %v4198
  %v4200 = vrot.slane %v3329, %v4199
  %v4202 = vunpack.c.l.s4 1966171168
  %v4203 = vunpack.c.0.s8 %v4202
  %v4204 = vlaneseq
  %v4205 = vshrl.u32 %v4204, 7
  %v4206 = vsub.s32 %v4203, %v4205
  %v4207 = vrot.slane %v4193, %v4206
  %v4208 = vcombine.high %v4200, %v4200
  %v4209 = vcombine.high %v4207, %v4207
  %v4211 = vunpack.c.l.s4 1966171168
  %v4212 = vunpack.c.0.s8 %v4211
  %v4213 = vlaneseq
  %v4214 = vshrl.u32 %v4213, 7
  %v4215 = vsub.s32 %v4212, %v4214
  %v4216 = vrot.slane %v4200, %v4215
  %v4218 = vunpack.c.l.s4 1966171168
  %v4219 = vunpack.c.0.s8 %v4218
  %v4220 = vlaneseq
  %v4221 = vshrl.u32 %v4220, 7
  %v4222 = vsub.s32 %v4219, %v4221
  %v4223 = vrot.slane %v4207, %v4222
  %v4225 = vunpack.c.l.s4 1966171168
  %v4226 = vunpack.c.0.s8 %v4225
  %v4227 = vlaneseq
  %v4228 = vshrl.u32 %v4227, 7
  %v4229 = vsub.s32 %v4226, %v4228
  %v4230 = vrot.slane %v4208, %v4229
  %v4232 = vunpack.c.l.s4 1966171168
  %v4233 = vunpack.c.0.s8 %v4232
  %v4234 = vlaneseq
  %v4235 = vshrl.u32 %v4234, 7
  %v4236 = vsub.s32 %v4233, %v4235
  %v4237 = vrot.slane %v4209, %v4236
  %v4238 = vcombine.high %v4216, %v4216
  %v4239 = vcombine.high %v4223, %v4223
  %v4240 = vcombine.high %v4230, %v4230
  %v4241 = vcombine.high %v3330, %v3330
  %v4243 = vunpack.c.l.s4 1966171168
  %v4244 = vunpack.c.0.s8 %v4243
  %v4245 = vlaneseq
  %v4246 = vshrl.u32 %v4245, 7
  %v4247 = vsub.s32 %v4244, %v4246
  %v4248 = vrot.slane %v3330, %v4247
  %v4250 = vunpack.c.l.s4 1966171168
  %v4251 = vunpack.c.0.s8 %v4250
  %v4252 = vlaneseq
  %v4253 = vshrl.u32 %v4252, 7
  %v4254 = vsub.s32 %v4251, %v4253
  %v4255 = vrot.slane %v4241, %v4254
  %v4256 = vcombine.high %v4248, %v4248
  %v4257 = vcombine.high %v4255, %v4255
  %v4259 = vunpack.c.l.s4 1966171168
  %v4260 = vunpack.c.0.s8 %v4259
  %v4261 = vlaneseq
  %v4262 = vshrl.u32 %v4261, 7
  %v4263 = vsub.s32 %v4260, %v4262
  %v4264 = vrot.slane %v4248, %v4263
  %v4266 = vunpack.c.l.s4 1966171168
  %v4267 = vunpack.c.0.s8 %v4266
  %v4268 = vlaneseq
  %v4269 = vshrl.u32 %v4268, 7
  %v4270 = vsub.s32 %v4267, %v4269
  %v4271 = vrot.slane %v4255, %v4270
  %v4273 = vunpack.c.l.s4 1966171168
  %v4274 = vunpack.c.0.s8 %v4273
  %v4275 = vlaneseq
  %v4276 = vshrl.u32 %v4275, 7
  %v4277 = vsub.s32 %v4274, %v4276
  %v4278 = vrot.slane %v4256, %v4277
  %v4280 = vunpack.c.l.s4 1966171168
  %v4281 = vunpack.c.0.s8 %v4280
  %v4282 = vlaneseq
  %v4283 = vshrl.u32 %v4282, 7
  %v4284 = vsub.s32 %v4281, %v4283
  %v4285 = vrot.slane %v4257, %v4284
  %v4286 = vcombine.high %v4264, %v4264
  %v4287 = vcombine.high %v4271, %v4271
  %v4288 = vcombine.high %v4278, %v4278
  %v4289 = vcombine.high %v3331, %v3331
  %v4291 = vunpack.c.l.s4 1966171168
  %v4292 = vunpack.c.0.s8 %v4291
  %v4293 = vlaneseq
  %v4294 = vshrl.u32 %v4293, 7
  %v4295 = vsub.s32 %v4292, %v4294
  %v4296 = vrot.slane %v3331, %v4295
  %v4298 = vunpack.c.l.s4 1966171168
  %v4299 = vunpack.c.0.s8 %v4298
  %v4300 = vlaneseq
  %v4301 = vshrl.u32 %v4300, 7
  %v4302 = vsub.s32 %v4299, %v4301
  %v4303 = vrot.slane %v4289, %v4302
  %v4304 = vcombine.high %v4296, %v4296
  %v4305 = vcombine.high %v4303, %v4303
  %v4307 = vunpack.c.l.s4 1966171168
  %v4308 = vunpack.c.0.s8 %v4307
  %v4309 = vlaneseq
  %v4310 = vshrl.u32 %v4309, 7
  %v4311 = vsub.s32 %v4308, %v4310
  %v4312 = vrot.slane %v4296, %v4311
  %v4314 = vunpack.c.l.s4 1966171168
  %v4315 = vunpack.c.0.s8 %v4314
  %v4316 = vlaneseq
  %v4317 = vshrl.u32 %v4316, 7
  %v4318 = vsub.s32 %v4315, %v4317
  %v4319 = vrot.slane %v4303, %v4318
  %v4321 = vunpack.c.l.s4 1966171168
  %v4322 = vunpack.c.0.s8 %v4321
  %v4323 = vlaneseq
  %v4324 = vshrl.u32 %v4323, 7
  %v4325 = vsub.s32 %v4322, %v4324
  %v4326 = vrot.slane %v4304, %v4325
  %v4328 = vunpack.c.l.s4 1966171168
  %v4329 = vunpack.c.0.s8 %v4328
  %v4330 = vlaneseq
  %v4331 = vshrl.u32 %v4330, 7
  %v4332 = vsub.s32 %v4329, %v4331
  %v4333 = vrot.slane %v4305, %v4332
  %v4334 = vcombine.high %v4312, %v4312
  %v4335 = vcombine.high %v4319, %v4319
  %v4336 = vcombine.high %v4326, %v4326
  %v4337 = vcombine.high %v3332, %v3332
  %v4339 = vunpack.c.l.s4 1966171168
  %v4340 = vunpack.c.0.s8 %v4339
  %v4341 = vlaneseq
  %v4342 = vshrl.u32 %v4341, 7
  %v4343 = vsub.s32 %v4340, %v4342
  %v4344 = vrot.slane %v3332, %v4343
  %v4346 = vunpack.c.l.s4 1966171168
  %v4347 = vunpack.c.0.s8 %v4346
  %v4348 = vlaneseq
  %v4349 = vshrl.u32 %v4348, 7
  %v4350 = vsub.s32 %v4347, %v4349
  %v4351 = vrot.slane %v4337, %v4350
  %v4352 = vcombine.high %v4344, %v4344
  %v4353 = vcombine.high %v4351, %v4351
  %v4355 = vunpack.c.l.s4 1966171168
  %v4356 = vunpack.c.0.s8 %v4355
  %v4357 = vlaneseq
  %v4358 = vshrl.u32 %v4357, 7
  %v4359 = vsub.s32 %v4356, %v4358
  %v4360 = vrot.slane %v4344, %v4359
  %v4362 = vunpack.c.l.s4 1966171168
  %v4363 = vunpack.c.0.s8 %v4362
  %v4364 = vlaneseq
  %v4365 = vshrl.u32 %v4364, 7
  %v4366 = vsub.s32 %v4363, %v4365
  %v4367 = vrot.slane %v4351, %v4366
  %v4369 = vunpack.c.l.s4 1966171168
  %v4370 = vunpack.c.0.s8 %v4369
  %v4371 = vlaneseq
  %v4372 = vshrl.u32 %v4371, 7
  %v4373 = vsub.s32 %v4370, %v4372
  %v4374 = vrot.slane %v4352, %v4373
  %v4376 = vunpack.c.l.s4 1966171168
  %v4377 = vunpack.c.0.s8 %v4376
  %v4378 = vlaneseq
  %v4379 = vshrl.u32 %v4378, 7
  %v4380 = vsub.s32 %v4377, %v4379
  %v4381 = vrot.slane %v4353, %v4380
  %v4382 = vcombine.high %v4360, %v4360
  %v4383 = vcombine.high %v4367, %v4367
  %v4384 = vcombine.high %v4374, %v4374
  %v4385 = vcombine.high %v3333, %v3333
  %v4387 = vunpack.c.l.s4 1966171168
  %v4388 = vunpack.c.0.s8 %v4387
  %v4389 = vlaneseq
  %v4390 = vshrl.u32 %v4389, 7
  %v4391 = vsub.s32 %v4388, %v4390
  %v4392 = vrot.slane %v3333, %v4391
  %v4394 = vunpack.c.l.s4 1966171168
  %v4395 = vunpack.c.0.s8 %v4394
  %v4396 = vlaneseq
  %v4397 = vshrl.u32 %v4396, 7
  %v4398 = vsub.s32 %v4395, %v4397
  %v4399 = vrot.slane %v4385, %v4398
  %v4400 = vcombine.high %v4392, %v4392
  %v4401 = vcombine.high %v4399, %v4399
  %v4403 = vunpack.c.l.s4 1966171168
  %v4404 = vunpack.c.0.s8 %v4403
  %v4405 = vlaneseq
  %v4406 = vshrl.u32 %v4405, 7
  %v4407 = vsub.s32 %v4404, %v4406
  %v4408 = vrot.slane %v4392, %v4407
  %v4410 = vunpack.c.l.s4 1966171168
  %v4411 = vunpack.c.0.s8 %v4410
  %v4412 = vlaneseq
  %v4413 = vshrl.u32 %v4412, 7
  %v4414 = vsub.s32 %v4411, %v4413
  %v4415 = vrot.slane %v4399, %v4414
  %v4417 = vunpack.c.l.s4 1966171168
  %v4418 = vunpack.c.0.s8 %v4417
  %v4419 = vlaneseq
  %v4420 = vshrl.u32 %v4419, 7
  %v4421 = vsub.s32 %v4418, %v4420
  %v4422 = vrot.slane %v4400, %v4421
  %v4424 = vunpack.c.l.s4 1966171168
  %v4425 = vunpack.c.0.s8 %v4424
  %v4426 = vlaneseq
  %v4427 = vshrl.u32 %v4426, 7
  %v4428 = vsub.s32 %v4425, %v4427
  %v4429 = vrot.slane %v4401, %v4428
  %v4430 = vcombine.high %v4408, %v4408
  %v4431 = vcombine.high %v4415, %v4415
  %v4432 = vcombine.high %v4422, %v4422
  %v4433 = vcombine.high %v3334, %v3334
  %v4435 = vunpack.c.l.s4 1966171168
  %v4436 = vunpack.c.0.s8 %v4435
  %v4437 = vlaneseq
  %v4438 = vshrl.u32 %v4437, 7
  %v4439 = vsub.s32 %v4436, %v4438
  %v4440 = vrot.slane %v3334, %v4439
  %v4442 = vunpack.c.l.s4 1966171168
  %v4443 = vunpack.c.0.s8 %v4442
  %v4444 = vlaneseq
  %v4445 = vshrl.u32 %v4444, 7
  %v4446 = vsub.s32 %v4443, %v4445
  %v4447 = vrot.slane %v4433, %v4446
  %v4448 = vcombine.high %v4440, %v4440
  %v4449 = vcombine.high %v4447, %v4447
  %v4451 = vunpack.c.l.s4 1966171168
  %v4452 = vunpack.c.0.s8 %v4451
  %v4453 = vlaneseq
  %v4454 = vshrl.u32 %v4453, 7
  %v4455 = vsub.s32 %v4452, %v4454
  %v4456 = vrot.slane %v4440, %v4455
  %v4458 = vunpack.c.l.s4 1966171168
  %v4459 = vunpack.c.0.s8 %v4458
  %v4460 = vlaneseq
  %v4461 = vshrl.u32 %v4460, 7
  %v4462 = vsub.s32 %v4459, %v4461
  %v4463 = vrot.slane %v4447, %v4462
  %v4465 = vunpack.c.l.s4 1966171168
  %v4466 = vunpack.c.0.s8 %v4465
  %v4467 = vlaneseq
  %v4468 = vshrl.u32 %v4467, 7
  %v4469 = vsub.s32 %v4466, %v4468
  %v4470 = vrot.slane %v4448, %v4469
  %v4472 = vunpack.c.l.s4 1966171168
  %v4473 = vunpack.c.0.s8 %v4472
  %v4474 = vlaneseq
  %v4475 = vshrl.u32 %v4474, 7
  %v4476 = vsub.s32 %v4473, %v4475
  %v4477 = vrot.slane %v4449, %v4476
  %v4478 = vcombine.high %v4456, %v4456
  %v4479 = vcombine.high %v4463, %v4463
  %v4480 = vcombine.high %v4470, %v4470
  %v4481 = vcombine.high %v3335, %v3335
  %v4483 = vunpack.c.l.s4 1966171168
  %v4484 = vunpack.c.0.s8 %v4483
  %v4485 = vlaneseq
  %v4486 = vshrl.u32 %v4485, 7
  %v4487 = vsub.s32 %v4484, %v4486
  %v4488 = vrot.slane %v3335, %v4487
  %v4490 = vunpack.c.l.s4 1966171168
  %v4491 = vunpack.c.0.s8 %v4490
  %v4492 = vlaneseq
  %v4493 = vshrl.u32 %v4492, 7
  %v4494 = vsub.s32 %v4491, %v4493
  %v4495 = vrot.slane %v4481, %v4494
  %v4496 = vcombine.high %v4488, %v4488
  %v4497 = vcombine.high %v4495, %v4495
  %v4499 = vunpack.c.l.s4 1966171168
  %v4500 = vunpack.c.0.s8 %v4499
  %v4501 = vlaneseq
  %v4502 = vshrl.u32 %v4501, 7
  %v4503 = vsub.s32 %v4500, %v4502
  %v4504 = vrot.slane %v4488, %v4503
  %v4506 = vunpack.c.l.s4 1966171168
  %v4507 = vunpack.c.0.s8 %v4506
  %v4508 = vlaneseq
  %v4509 = vshrl.u32 %v4508, 7
  %v4510 = vsub.s32 %v4507, %v4509
  %v4511 = vrot.slane %v4495, %v4510
  %v4513 = vunpack.c.l.s4 1966171168
  %v4514 = vunpack.c.0.s8 %v4513
  %v4515 = vlaneseq
  %v4516 = vshrl.u32 %v4515, 7
  %v4517 = vsub.s32 %v4514, %v4516
  %v4518 = vrot.slane %v4496, %v4517
  %v4520 = vunpack.c.l.s4 1966171168
  %v4521 = vunpack.c.0.s8 %v4520
  %v4522 = vlaneseq
  %v4523 = vshrl.u32 %v4522, 7
  %v4524 = vsub.s32 %v4521, %v4523
  %v4525 = vrot.slane %v4497, %v4524
  %v4526 = vcombine.high %v4504, %v4504
  %v4527 = vcombine.high %v4511, %v4511
  %v4528 = vcombine.high %v4518, %v4518
  %v4529 = vcombine.high %v3336, %v3336
  %v4531 = vunpack.c.l.s4 1966171168
  %v4532 = vunpack.c.0.s8 %v4531
  %v4533 = vlaneseq
  %v4534 = vshrl.u32 %v4533, 7
  %v4535 = vsub.s32 %v4532, %v4534
  %v4536 = vrot.slane %v3336, %v4535
  %v4538 = vunpack.c.l.s4 1966171168
  %v4539 = vunpack.c.0.s8 %v4538
  %v4540 = vlaneseq
  %v4541 = vshrl.u32 %v4540, 7
  %v4542 = vsub.s32 %v4539, %v4541
  %v4543 = vrot.slane %v4529, %v4542
  %v4544 = vcombine.high %v4536, %v4536
  %v4545 = vcombine.high %v4543, %v4543
  %v4547 = vunpack.c.l.s4 1966171168
  %v4548 = vunpack.c.0.s8 %v4547
  %v4549 = vlaneseq
  %v4550 = vshrl.u32 %v4549, 7
  %v4551 = vsub.s32 %v4548, %v4550
  %v4552 = vrot.slane %v4536, %v4551
  %v4554 = vunpack.c.l.s4 1966171168
  %v4555 = vunpack.c.0.s8 %v4554
  %v4556 = vlaneseq
  %v4557 = vshrl.u32 %v4556, 7
  %v4558 = vsub.s32 %v4555, %v4557
  %v4559 = vrot.slane %v4543, %v4558
  %v4561 = vunpack.c.l.s4 1966171168
  %v4562 = vunpack.c.0.s8 %v4561
  %v4563 = vlaneseq
  %v4564 = vshrl.u32 %v4563, 7
  %v4565 = vsub.s32 %v4562, %v4564
  %v4566 = vrot.slane %v4544, %v4565
  %v4568 = vunpack.c.l.s4 1966171168
  %v4569 = vunpack.c.0.s8 %v4568
  %v4570 = vlaneseq
  %v4571 = vshrl.u32 %v4570, 7
  %v4572 = vsub.s32 %v4569, %v4571
  %v4573 = vrot.slane %v4545, %v4572
  %v4574 = vcombine.high %v4552, %v4552
  %v4575 = vcombine.high %v4559, %v4559
  %v4576 = vcombine.high %v4566, %v4566
  %v4577 = vcombine.high %v3337, %v3337
  %v4579 = vunpack.c.l.s4 1966171168
  %v4580 = vunpack.c.0.s8 %v4579
  %v4581 = vlaneseq
  %v4582 = vshrl.u32 %v4581, 7
  %v4583 = vsub.s32 %v4580, %v4582
  %v4584 = vrot.slane %v3337, %v4583
  %v4586 = vunpack.c.l.s4 1966171168
  %v4587 = vunpack.c.0.s8 %v4586
  %v4588 = vlaneseq
  %v4589 = vshrl.u32 %v4588, 7
  %v4590 = vsub.s32 %v4587, %v4589
  %v4591 = vrot.slane %v4577, %v4590
  %v4592 = vcombine.high %v4584, %v4584
  %v4593 = vcombine.high %v4591, %v4591
  %v4595 = vunpack.c.l.s4 1966171168
  %v4596 = vunpack.c.0.s8 %v4595
  %v4597 = vlaneseq
  %v4598 = vshrl.u32 %v4597, 7
  %v4599 = vsub.s32 %v4596, %v4598
  %v4600 = vrot.slane %v4584, %v4599
  %v4602 = vunpack.c.l.s4 1966171168
  %v4603 = vunpack.c.0.s8 %v4602
  %v4604 = vlaneseq
  %v4605 = vshrl.u32 %v4604, 7
  %v4606 = vsub.s32 %v4603, %v4605
  %v4607 = vrot.slane %v4591, %v4606
  %v4609 = vunpack.c.l.s4 1966171168
  %v4610 = vunpack.c.0.s8 %v4609
  %v4611 = vlaneseq
  %v4612 = vshrl.u32 %v4611, 7
  %v4613 = vsub.s32 %v4610, %v4612
  %v4614 = vrot.slane %v4592, %v4613
  %v4616 = vunpack.c.l.s4 1966171168
  %v4617 = vunpack.c.0.s8 %v4616
  %v4618 = vlaneseq
  %v4619 = vshrl.u32 %v4618, 7
  %v4620 = vsub.s32 %v4617, %v4619
  %v4621 = vrot.slane %v4593, %v4620
  %v4622 = vcombine.high %v4600, %v4600
  %v4623 = vcombine.high %v4607, %v4607
  %v4624 = vcombine.high %v4614, %v4614
  %v4625 = vcombine.high %v3338, %v3338
  %v4627 = vunpack.c.l.s4 1966171168
  %v4628 = vunpack.c.0.s8 %v4627
  %v4629 = vlaneseq
  %v4630 = vshrl.u32 %v4629, 7
  %v4631 = vsub.s32 %v4628, %v4630
  %v4632 = vrot.slane %v3338, %v4631
  %v4634 = vunpack.c.l.s4 1966171168
  %v4635 = vunpack.c.0.s8 %v4634
  %v4636 = vlaneseq
  %v4637 = vshrl.u32 %v4636, 7
  %v4638 = vsub.s32 %v4635, %v4637
  %v4639 = vrot.slane %v4625, %v4638
  %v4640 = vcombine.high %v4632, %v4632
  %v4641 = vcombine.high %v4639, %v4639
  %v4643 = vunpack.c.l.s4 1966171168
  %v4644 = vunpack.c.0.s8 %v4643
  %v4645 = vlaneseq
  %v4646 = vshrl.u32 %v4645, 7
  %v4647 = vsub.s32 %v4644, %v4646
  %v4648 = vrot.slane %v4632, %v4647
  %v4650 = vunpack.c.l.s4 1966171168
  %v4651 = vunpack.c.0.s8 %v4650
  %v4652 = vlaneseq
  %v4653 = vshrl.u32 %v4652, 7
  %v4654 = vsub.s32 %v4651, %v4653
  %v4655 = vrot.slane %v4639, %v4654
  %v4657 = vunpack.c.l.s4 1966171168
  %v4658 = vunpack.c.0.s8 %v4657
  %v4659 = vlaneseq
  %v4660 = vshrl.u32 %v4659, 7
  %v4661 = vsub.s32 %v4658, %v4660
  %v4662 = vrot.slane %v4640, %v4661
  %v4664 = vunpack.c.l.s4 1966171168
  %v4665 = vunpack.c.0.s8 %v4664
  %v4666 = vlaneseq
  %v4667 = vshrl.u32 %v4666, 7
  %v4668 = vsub.s32 %v4665, %v4667
  %v4669 = vrot.slane %v4641, %v4668
  %v4670 = vcombine.high %v4648, %v4648
  %v4671 = vcombine.high %v4655, %v4655
  %v4672 = vcombine.high %v4662, %v4662
  %v4673 = vcombine.high %v3339, %v3339
  %v4675 = vunpack.c.l.s4 1966171168
  %v4676 = vunpack.c.0.s8 %v4675
  %v4677 = vlaneseq
  %v4678 = vshrl.u32 %v4677, 7
  %v4679 = vsub.s32 %v4676, %v4678
  %v4680 = vrot.slane %v3339, %v4679
  %v4682 = vunpack.c.l.s4 1966171168
  %v4683 = vunpack.c.0.s8 %v4682
  %v4684 = vlaneseq
  %v4685 = vshrl.u32 %v4684, 7
  %v4686 = vsub.s32 %v4683, %v4685
  %v4687 = vrot.slane %v4673, %v4686
  %v4688 = vcombine.high %v4680, %v4680
  %v4689 = vcombine.high %v4687, %v4687
  %v4691 = vunpack.c.l.s4 1966171168
  %v4692 = vunpack.c.0.s8 %v4691
  %v4693 = vlaneseq
  %v4694 = vshrl.u32 %v4693, 7
  %v4695 = vsub.s32 %v4692, %v4694
  %v4696 = vrot.slane %v4680, %v4695
  %v4698 = vunpack.c.l.s4 1966171168
  %v4699 = vunpack.c.0.s8 %v4698
  %v4700 = vlaneseq
  %v4701 = vshrl.u32 %v4700, 7
  %v4702 = vsub.s32 %v4699, %v4701
  %v4703 = vrot.slane %v4687, %v4702
  %v4705 = vunpack.c.l.s4 1966171168
  %v4706 = vunpack.c.0.s8 %v4705
  %v4707 = vlaneseq
  %v4708 = vshrl.u32 %v4707, 7
  %v4709 = vsub.s32 %v4706, %v4708
  %v4710 = vrot.slane %v4688, %v4709
  %v4712 = vunpack.c.l.s4 1966171168
  %v4713 = vunpack.c.0.s8 %v4712
  %v4714 = vlaneseq
  %v4715 = vshrl.u32 %v4714, 7
  %v4716 = vsub.s32 %v4713, %v4715
  %v4717 = vrot.slane %v4689, %v4716
  %v4718 = vcombine.high %v4696, %v4696
  %v4719 = vcombine.high %v4703, %v4703
  %v4720 = vcombine.high %v4710, %v4710
  %v4721 = vcombine.high %v3340, %v3340
  %v4723 = vunpack.c.l.s4 1966171168
  %v4724 = vunpack.c.0.s8 %v4723
  %v4725 = vlaneseq
  %v4726 = vshrl.u32 %v4725, 7
  %v4727 = vsub.s32 %v4724, %v4726
  %v4728 = vrot.slane %v3340, %v4727
  %v4730 = vunpack.c.l.s4 1966171168
  %v4731 = vunpack.c.0.s8 %v4730
  %v4732 = vlaneseq
  %v4733 = vshrl.u32 %v4732, 7
  %v4734 = vsub.s32 %v4731, %v4733
  %v4735 = vrot.slane %v4721, %v4734
  %v4736 = vcombine.high %v4728, %v4728
  %v4737 = vcombine.high %v4735, %v4735
  %v4739 = vunpack.c.l.s4 1966171168
  %v4740 = vunpack.c.0.s8 %v4739
  %v4741 = vlaneseq
  %v4742 = vshrl.u32 %v4741, 7
  %v4743 = vsub.s32 %v4740, %v4742
  %v4744 = vrot.slane %v4728, %v4743
  %v4746 = vunpack.c.l.s4 1966171168
  %v4747 = vunpack.c.0.s8 %v4746
  %v4748 = vlaneseq
  %v4749 = vshrl.u32 %v4748, 7
  %v4750 = vsub.s32 %v4747, %v4749
  %v4751 = vrot.slane %v4735, %v4750
  %v4753 = vunpack.c.l.s4 1966171168
  %v4754 = vunpack.c.0.s8 %v4753
  %v4755 = vlaneseq
  %v4756 = vshrl.u32 %v4755, 7
  %v4757 = vsub.s32 %v4754, %v4756
  %v4758 = vrot.slane %v4736, %v4757
  %v4760 = vunpack.c.l.s4 1966171168
  %v4761 = vunpack.c.0.s8 %v4760
  %v4762 = vlaneseq
  %v4763 = vshrl.u32 %v4762, 7
  %v4764 = vsub.s32 %v4761, %v4763
  %v4765 = vrot.slane %v4737, %v4764
  %v4766 = vcombine.high %v4744, %v4744
  %v4767 = vcombine.high %v4751, %v4751
  %v4768 = vcombine.high %v4758, %v4758
  %v4769 = vcombine.high %v3341, %v3341
  %v4771 = vunpack.c.l.s4 1966171168
  %v4772 = vunpack.c.0.s8 %v4771
  %v4773 = vlaneseq
  %v4774 = vshrl.u32 %v4773, 7
  %v4775 = vsub.s32 %v4772, %v4774
  %v4776 = vrot.slane %v3341, %v4775
  %v4778 = vunpack.c.l.s4 1966171168
  %v4779 = vunpack.c.0.s8 %v4778
  %v4780 = vlaneseq
  %v4781 = vshrl.u32 %v4780, 7
  %v4782 = vsub.s32 %v4779, %v4781
  %v4783 = vrot.slane %v4769, %v4782
  %v4784 = vcombine.high %v4776, %v4776
  %v4785 = vcombine.high %v4783, %v4783
  %v4787 = vunpack.c.l.s4 1966171168
  %v4788 = vunpack.c.0.s8 %v4787
  %v4789 = vlaneseq
  %v4790 = vshrl.u32 %v4789, 7
  %v4791 = vsub.s32 %v4788, %v4790
  %v4792 = vrot.slane %v4776, %v4791
  %v4794 = vunpack.c.l.s4 1966171168
  %v4795 = vunpack.c.0.s8 %v4794
  %v4796 = vlaneseq
  %v4797 = vshrl.u32 %v4796, 7
  %v4798 = vsub.s32 %v4795, %v4797
  %v4799 = vrot.slane %v4783, %v4798
  %v4801 = vunpack.c.l.s4 1966171168
  %v4802 = vunpack.c.0.s8 %v4801
  %v4803 = vlaneseq
  %v4804 = vshrl.u32 %v4803, 7
  %v4805 = vsub.s32 %v4802, %v4804
  %v4806 = vrot.slane %v4784, %v4805
  %v4808 = vunpack.c.l.s4 1966171168
  %v4809 = vunpack.c.0.s8 %v4808
  %v4810 = vlaneseq
  %v4811 = vshrl.u32 %v4810, 7
  %v4812 = vsub.s32 %v4809, %v4811
  %v4813 = vrot.slane %v4785, %v4812
  %v4814 = vcombine.high %v4792, %v4792
  %v4815 = vcombine.high %v4799, %v4799
  %v4816 = vcombine.high %v4806, %v4806
  %v4817 = vcombine.high %v3342, %v3342
  %v4819 = vunpack.c.l.s4 1966171168
  %v4820 = vunpack.c.0.s8 %v4819
  %v4821 = vlaneseq
  %v4822 = vshrl.u32 %v4821, 7
  %v4823 = vsub.s32 %v4820, %v4822
  %v4824 = vrot.slane %v3342, %v4823
  %v4826 = vunpack.c.l.s4 1966171168
  %v4827 = vunpack.c.0.s8 %v4826
  %v4828 = vlaneseq
  %v4829 = vshrl.u32 %v4828, 7
  %v4830 = vsub.s32 %v4827, %v4829
  %v4831 = vrot.slane %v4817, %v4830
  %v4832 = vcombine.high %v4824, %v4824
  %v4833 = vcombine.high %v4831, %v4831
  %v4835 = vunpack.c.l.s4 1966171168
  %v4836 = vunpack.c.0.s8 %v4835
  %v4837 = vlaneseq
  %v4838 = vshrl.u32 %v4837, 7
  %v4839 = vsub.s32 %v4836, %v4838
  %v4840 = vrot.slane %v4824, %v4839
  %v4842 = vunpack.c.l.s4 1966171168
  %v4843 = vunpack.c.0.s8 %v4842
  %v4844 = vlaneseq
  %v4845 = vshrl.u32 %v4844, 7
  %v4846 = vsub.s32 %v4843, %v4845
  %v4847 = vrot.slane %v4831, %v4846
  %v4849 = vunpack.c.l.s4 1966171168
  %v4850 = vunpack.c.0.s8 %v4849
  %v4851 = vlaneseq
  %v4852 = vshrl.u32 %v4851, 7
  %v4853 = vsub.s32 %v4850, %v4852
  %v4854 = vrot.slane %v4832, %v4853
  %v4856 = vunpack.c.l.s4 1966171168
  %v4857 = vunpack.c.0.s8 %v4856
  %v4858 = vlaneseq
  %v4859 = vshrl.u32 %v4858, 7
  %v4860 = vsub.s32 %v4857, %v4859
  %v4861 = vrot.slane %v4833, %v4860
  %v4862 = vcombine.high %v4840, %v4840
  %v4863 = vcombine.high %v4847, %v4847
  %v4864 = vcombine.high %v4854, %v4854
  %v4865 = vcombine.high %v3343, %v3343
  %v4867 = vunpack.c.l.s4 1966171168
  %v4868 = vunpack.c.0.s8 %v4867
  %v4869 = vlaneseq
  %v4870 = vshrl.u32 %v4869, 7
  %v4871 = vsub.s32 %v4868, %v4870
  %v4872 = vrot.slane %v3343, %v4871
  %v4874 = vunpack.c.l.s4 1966171168
  %v4875 = vunpack.c.0.s8 %v4874
  %v4876 = vlaneseq
  %v4877 = vshrl.u32 %v4876, 7
  %v4878 = vsub.s32 %v4875, %v4877
  %v4879 = vrot.slane %v4865, %v4878
  %v4880 = vcombine.high %v4872, %v4872
  %v4881 = vcombine.high %v4879, %v4879
  %v4883 = vunpack.c.l.s4 1966171168
  %v4884 = vunpack.c.0.s8 %v4883
  %v4885 = vlaneseq
  %v4886 = vshrl.u32 %v4885, 7
  %v4887 = vsub.s32 %v4884, %v4886
  %v4888 = vrot.slane %v4872, %v4887
  %v4890 = vunpack.c.l.s4 1966171168
  %v4891 = vunpack.c.0.s8 %v4890
  %v4892 = vlaneseq
  %v4893 = vshrl.u32 %v4892, 7
  %v4894 = vsub.s32 %v4891, %v4893
  %v4895 = vrot.slane %v4879, %v4894
  %v4897 = vunpack.c.l.s4 1966171168
  %v4898 = vunpack.c.0.s8 %v4897
  %v4899 = vlaneseq
  %v4900 = vshrl.u32 %v4899, 7
  %v4901 = vsub.s32 %v4898, %v4900
  %v4902 = vrot.slane %v4880, %v4901
  %v4904 = vunpack.c.l.s4 1966171168
  %v4905 = vunpack.c.0.s8 %v4904
  %v4906 = vlaneseq
  %v4907 = vshrl.u32 %v4906, 7
  %v4908 = vsub.s32 %v4905, %v4907
  %v4909 = vrot.slane %v4881, %v4908
  %v4910 = vcombine.high %v4888, %v4888
  %v4911 = vcombine.high %v4895, %v4895
  %v4912 = vcombine.high %v4902, %v4902
  %v4913 = vcombine.high %v3344, %v3344
  %v4915 = vunpack.c.l.s4 1966171168
  %v4916 = vunpack.c.0.s8 %v4915
  %v4917 = vlaneseq
  %v4918 = vshrl.u32 %v4917, 7
  %v4919 = vsub.s32 %v4916, %v4918
  %v4920 = vrot.slane %v3344, %v4919
  %v4922 = vunpack.c.l.s4 1966171168
  %v4923 = vunpack.c.0.s8 %v4922
  %v4924 = vlaneseq
  %v4925 = vshrl.u32 %v4924, 7
  %v4926 = vsub.s32 %v4923, %v4925
  %v4927 = vrot.slane %v4913, %v4926
  %v4928 = vcombine.high %v4920, %v4920
  %v4929 = vcombine.high %v4927, %v4927
  %v4931 = vunpack.c.l.s4 1966171168
  %v4932 = vunpack.c.0.s8 %v4931
  %v4933 = vlaneseq
  %v4934 = vshrl.u32 %v4933, 7
  %v4935 = vsub.s32 %v4932, %v4934
  %v4936 = vrot.slane %v4920, %v4935
  %v4938 = vunpack.c.l.s4 1966171168
  %v4939 = vunpack.c.0.s8 %v4938
  %v4940 = vlaneseq
  %v4941 = vshrl.u32 %v4940, 7
  %v4942 = vsub.s32 %v4939, %v4941
  %v4943 = vrot.slane %v4927, %v4942
  %v4945 = vunpack.c.l.s4 1966171168
  %v4946 = vunpack.c.0.s8 %v4945
  %v4947 = vlaneseq
  %v4948 = vshrl.u32 %v4947, 7
  %v4949 = vsub.s32 %v4946, %v4948
  %v4950 = vrot.slane %v4928, %v4949
  %v4952 = vunpack.c.l.s4 1966171168
  %v4953 = vunpack.c.0.s8 %v4952
  %v4954 = vlaneseq
  %v4955 = vshrl.u32 %v4954, 7
  %v4956 = vsub.s32 %v4953, %v4955
  %v4957 = vrot.slane %v4929, %v4956
  %v4958 = vcombine.high %v4936, %v4936
  %v4959 = vcombine.high %v4943, %v4943
  %v4960 = vcombine.high %v4950, %v4950
  %v4961 = vcombine.high %v3345, %v3345
  %v4963 = vunpack.c.l.s4 1966171168
  %v4964 = vunpack.c.0.s8 %v4963
  %v4965 = vlaneseq
  %v4966 = vshrl.u32 %v4965, 7
  %v4967 = vsub.s32 %v4964, %v4966
  %v4968 = vrot.slane %v3345, %v4967
  %v4970 = vunpack.c.l.s4 1966171168
  %v4971 = vunpack.c.0.s8 %v4970
  %v4972 = vlaneseq
  %v4973 = vshrl.u32 %v4972, 7
  %v4974 = vsub.s32 %v4971, %v4973
  %v4975 = vrot.slane %v4961, %v4974
  %v4976 = vcombine.high %v4968, %v4968
  %v4977 = vcombine.high %v4975, %v4975
  %v4979 = vunpack.c.l.s4 1966171168
  %v4980 = vunpack.c.0.s8 %v4979
  %v4981 = vlaneseq
  %v4982 = vshrl.u32 %v4981, 7
  %v4983 = vsub.s32 %v4980, %v4982
  %v4984 = vrot.slane %v4968, %v4983
  %v4986 = vunpack.c.l.s4 1966171168
  %v4987 = vunpack.c.0.s8 %v4986
  %v4988 = vlaneseq
  %v4989 = vshrl.u32 %v4988, 7
  %v4990 = vsub.s32 %v4987, %v4989
  %v4991 = vrot.slane %v4975, %v4990
  %v4993 = vunpack.c.l.s4 1966171168
  %v4994 = vunpack.c.0.s8 %v4993
  %v4995 = vlaneseq
  %v4996 = vshrl.u32 %v4995, 7
  %v4997 = vsub.s32 %v4994, %v4996
  %v4998 = vrot.slane %v4976, %v4997
  %v5000 = vunpack.c.l.s4 1966171168
  %v5001 = vunpack.c.0.s8 %v5000
  %v5002 = vlaneseq
  %v5003 = vshrl.u32 %v5002, 7
  %v5004 = vsub.s32 %v5001, %v5003
  %v5005 = vrot.slane %v4977, %v5004
  %v5006 = vcombine.high %v4984, %v4984
  %v5007 = vcombine.high %v4991, %v4991
  %v5008 = vcombine.high %v4998, %v4998
  %v5009 = vcombine.high %v3346, %v3346
  %v5011 = vunpack.c.l.s4 1966171168
  %v5012 = vunpack.c.0.s8 %v5011
  %v5013 = vlaneseq
  %v5014 = vshrl.u32 %v5013, 7
  %v5015 = vsub.s32 %v5012, %v5014
  %v5016 = vrot.slane %v3346, %v5015
  %v5018 = vunpack.c.l.s4 1966171168
  %v5019 = vunpack.c.0.s8 %v5018
  %v5020 = vlaneseq
  %v5021 = vshrl.u32 %v5020, 7
  %v5022 = vsub.s32 %v5019, %v5021
  %v5023 = vrot.slane %v5009, %v5022
  %v5024 = vcombine.high %v5016, %v5016
  %v5025 = vcombine.high %v5023, %v5023
  %v5027 = vunpack.c.l.s4 1966171168
  %v5028 = vunpack.c.0.s8 %v5027
  %v5029 = vlaneseq
  %v5030 = vshrl.u32 %v5029, 7
  %v5031 = vsub.s32 %v5028, %v5030
  %v5032 = vrot.slane %v5016, %v5031
  %v5034 = vunpack.c.l.s4 1966171168
  %v5035 = vunpack.c.0.s8 %v5034
  %v5036 = vlaneseq
  %v5037 = vshrl.u32 %v5036, 7
  %v5038 = vsub.s32 %v5035, %v5037
  %v5039 = vrot.slane %v5023, %v5038
  %v5041 = vunpack.c.l.s4 1966171168
  %v5042 = vunpack.c.0.s8 %v5041
  %v5043 = vlaneseq
  %v5044 = vshrl.u32 %v5043, 7
  %v5045 = vsub.s32 %v5042, %v5044
  %v5046 = vrot.slane %v5024, %v5045
  %v5048 = vunpack.c.l.s4 1966171168
  %v5049 = vunpack.c.0.s8 %v5048
  %v5050 = vlaneseq
  %v5051 = vshrl.u32 %v5050, 7
  %v5052 = vsub.s32 %v5049, %v5051
  %v5053 = vrot.slane %v5025, %v5052
  %v5054 = vcombine.high %v5032, %v5032
  %v5055 = vcombine.high %v5039, %v5039
  %v5056 = vcombine.high %v5046, %v5046
  %v5057 = vcombine.high %v3347, %v3347
  %v5059 = vunpack.c.l.s4 1966171168
  %v5060 = vunpack.c.0.s8 %v5059
  %v5061 = vlaneseq
  %v5062 = vshrl.u32 %v5061, 7
  %v5063 = vsub.s32 %v5060, %v5062
  %v5064 = vrot.slane %v3347, %v5063
  %v5066 = vunpack.c.l.s4 1966171168
  %v5067 = vunpack.c.0.s8 %v5066
  %v5068 = vlaneseq
  %v5069 = vshrl.u32 %v5068, 7
  %v5070 = vsub.s32 %v5067, %v5069
  %v5071 = vrot.slane %v5057, %v5070
  %v5072 = vcombine.high %v5064, %v5064
  %v5073 = vcombine.high %v5071, %v5071
  %v5075 = vunpack.c.l.s4 1966171168
  %v5076 = vunpack.c.0.s8 %v5075
  %v5077 = vlaneseq
  %v5078 = vshrl.u32 %v5077, 7
  %v5079 = vsub.s32 %v5076, %v5078
  %v5080 = vrot.slane %v5064, %v5079
  %v5082 = vunpack.c.l.s4 1966171168
  %v5083 = vunpack.c.0.s8 %v5082
  %v5084 = vlaneseq
  %v5085 = vshrl.u32 %v5084, 7
  %v5086 = vsub.s32 %v5083, %v5085
  %v5087 = vrot.slane %v5071, %v5086
  %v5089 = vunpack.c.l.s4 1966171168
  %v5090 = vunpack.c.0.s8 %v5089
  %v5091 = vlaneseq
  %v5092 = vshrl.u32 %v5091, 7
  %v5093 = vsub.s32 %v5090, %v5092
  %v5094 = vrot.slane %v5072, %v5093
  %v5096 = vunpack.c.l.s4 1966171168
  %v5097 = vunpack.c.0.s8 %v5096
  %v5098 = vlaneseq
  %v5099 = vshrl.u32 %v5098, 7
  %v5100 = vsub.s32 %v5097, %v5099
  %v5101 = vrot.slane %v5073, %v5100
  %v5102 = vcombine.high %v5080, %v5080
  %v5103 = vcombine.high %v5087, %v5087
  %v5104 = vcombine.high %v5094, %v5094
  %v5105 = vcombine.high %v3348, %v3348
  %v5107 = vunpack.c.l.s4 1966171168
  %v5108 = vunpack.c.0.s8 %v5107
  %v5109 = vlaneseq
  %v5110 = vshrl.u32 %v5109, 7
  %v5111 = vsub.s32 %v5108, %v5110
  %v5112 = vrot.slane %v3348, %v5111
  %v5114 = vunpack.c.l.s4 1966171168
  %v5115 = vunpack.c.0.s8 %v5114
  %v5116 = vlaneseq
  %v5117 = vshrl.u32 %v5116, 7
  %v5118 = vsub.s32 %v5115, %v5117
  %v5119 = vrot.slane %v5105, %v5118
  %v5120 = vcombine.high %v5112, %v5112
  %v5121 = vcombine.high %v5119, %v5119
  %v5123 = vunpack.c.l.s4 1966171168
  %v5124 = vunpack.c.0.s8 %v5123
  %v5125 = vlaneseq
  %v5126 = vshrl.u32 %v5125, 7
  %v5127 = vsub.s32 %v5124, %v5126
  %v5128 = vrot.slane %v5112, %v5127
  %v5130 = vunpack.c.l.s4 1966171168
  %v5131 = vunpack.c.0.s8 %v5130
  %v5132 = vlaneseq
  %v5133 = vshrl.u32 %v5132, 7
  %v5134 = vsub.s32 %v5131, %v5133
  %v5135 = vrot.slane %v5119, %v5134
  %v5137 = vunpack.c.l.s4 1966171168
  %v5138 = vunpack.c.0.s8 %v5137
  %v5139 = vlaneseq
  %v5140 = vshrl.u32 %v5139, 7
  %v5141 = vsub.s32 %v5138, %v5140
  %v5142 = vrot.slane %v5120, %v5141
  %v5144 = vunpack.c.l.s4 1966171168
  %v5145 = vunpack.c.0.s8 %v5144
  %v5146 = vlaneseq
  %v5147 = vshrl.u32 %v5146, 7
  %v5148 = vsub.s32 %v5145, %v5147
  %v5149 = vrot.slane %v5121, %v5148
  %v5150 = vcombine.high %v5128, %v5128
  %v5151 = vcombine.high %v5135, %v5135
  %v5152 = vcombine.high %v5142, %v5142
  %v5153 = vcombine.high %v3349, %v3349
  %v5155 = vunpack.c.l.s4 1966171168
  %v5156 = vunpack.c.0.s8 %v5155
  %v5157 = vlaneseq
  %v5158 = vshrl.u32 %v5157, 7
  %v5159 = vsub.s32 %v5156, %v5158
  %v5160 = vrot.slane %v3349, %v5159
  %v5162 = vunpack.c.l.s4 1966171168
  %v5163 = vunpack.c.0.s8 %v5162
  %v5164 = vlaneseq
  %v5165 = vshrl.u32 %v5164, 7
  %v5166 = vsub.s32 %v5163, %v5165
  %v5167 = vrot.slane %v5153, %v5166
  %v5168 = vcombine.high %v5160, %v5160
  %v5169 = vcombine.high %v5167, %v5167
  %v5171 = vunpack.c.l.s4 1966171168
  %v5172 = vunpack.c.0.s8 %v5171
  %v5173 = vlaneseq
  %v5174 = vshrl.u32 %v5173, 7
  %v5175 = vsub.s32 %v5172, %v5174
  %v5176 = vrot.slane %v5160, %v5175
  %v5178 = vunpack.c.l.s4 1966171168
  %v5179 = vunpack.c.0.s8 %v5178
  %v5180 = vlaneseq
  %v5181 = vshrl.u32 %v5180, 7
  %v5182 = vsub.s32 %v5179, %v5181
  %v5183 = vrot.slane %v5167, %v5182
  %v5185 = vunpack.c.l.s4 1966171168
  %v5186 = vunpack.c.0.s8 %v5185
  %v5187 = vlaneseq
  %v5188 = vshrl.u32 %v5187, 7
  %v5189 = vsub.s32 %v5186, %v5188
  %v5190 = vrot.slane %v5168, %v5189
  %v5192 = vunpack.c.l.s4 1966171168
  %v5193 = vunpack.c.0.s8 %v5192
  %v5194 = vlaneseq
  %v5195 = vshrl.u32 %v5194, 7
  %v5196 = vsub.s32 %v5193, %v5195
  %v5197 = vrot.slane %v5169, %v5196
  %v5198 = vcombine.high %v5176, %v5176
  %v5199 = vcombine.high %v5183, %v5183
  %v5200 = vcombine.high %v5190, %v5190
  %v5201 = vcombine.high %v3350, %v3350
  %v5203 = vunpack.c.l.s4 1966171168
  %v5204 = vunpack.c.0.s8 %v5203
  %v5205 = vlaneseq
  %v5206 = vshrl.u32 %v5205, 7
  %v5207 = vsub.s32 %v5204, %v5206
  %v5208 = vrot.slane %v3350, %v5207
  %v5210 = vunpack.c.l.s4 1966171168
  %v5211 = vunpack.c.0.s8 %v5210
  %v5212 = vlaneseq
  %v5213 = vshrl.u32 %v5212, 7
  %v5214 = vsub.s32 %v5211, %v5213
  %v5215 = vrot.slane %v5201, %v5214
  %v5216 = vcombine.high %v5208, %v5208
  %v5217 = vcombine.high %v5215, %v5215
  %v5219 = vunpack.c.l.s4 1966171168
  %v5220 = vunpack.c.0.s8 %v5219
  %v5221 = vlaneseq
  %v5222 = vshrl.u32 %v5221, 7
  %v5223 = vsub.s32 %v5220, %v5222
  %v5224 = vrot.slane %v5208, %v5223
  %v5226 = vunpack.c.l.s4 1966171168
  %v5227 = vunpack.c.0.s8 %v5226
  %v5228 = vlaneseq
  %v5229 = vshrl.u32 %v5228, 7
  %v5230 = vsub.s32 %v5227, %v5229
  %v5231 = vrot.slane %v5215, %v5230
  %v5233 = vunpack.c.l.s4 1966171168
  %v5234 = vunpack.c.0.s8 %v5233
  %v5235 = vlaneseq
  %v5236 = vshrl.u32 %v5235, 7
  %v5237 = vsub.s32 %v5234, %v5236
  %v5238 = vrot.slane %v5216, %v5237
  %v5240 = vunpack.c.l.s4 1966171168
  %v5241 = vunpack.c.0.s8 %v5240
  %v5242 = vlaneseq
  %v5243 = vshrl.u32 %v5242, 7
  %v5244 = vsub.s32 %v5241, %v5243
  %v5245 = vrot.slane %v5217, %v5244
  %v5246 = vcombine.high %v5224, %v5224
  %v5247 = vcombine.high %v5231, %v5231
  %v5248 = vcombine.high %v5238, %v5238
  %v5249 = vcombine.high %v3351, %v3351
  %v5251 = vunpack.c.l.s4 1966171168
  %v5252 = vunpack.c.0.s8 %v5251
  %v5253 = vlaneseq
  %v5254 = vshrl.u32 %v5253, 7
  %v5255 = vsub.s32 %v5252, %v5254
  %v5256 = vrot.slane %v3351, %v5255
  %v5258 = vunpack.c.l.s4 1966171168
  %v5259 = vunpack.c.0.s8 %v5258
  %v5260 = vlaneseq
  %v5261 = vshrl.u32 %v5260, 7
  %v5262 = vsub.s32 %v5259, %v5261
  %v5263 = vrot.slane %v5249, %v5262
  %v5264 = vcombine.high %v5256, %v5256
  %v5265 = vcombine.high %v5263, %v5263
  %v5267 = vunpack.c.l.s4 1966171168
  %v5268 = vunpack.c.0.s8 %v5267
  %v5269 = vlaneseq
  %v5270 = vshrl.u32 %v5269, 7
  %v5271 = vsub.s32 %v5268, %v5270
  %v5272 = vrot.slane %v5256, %v5271
  %v5274 = vunpack.c.l.s4 1966171168
  %v5275 = vunpack.c.0.s8 %v5274
  %v5276 = vlaneseq
  %v5277 = vshrl.u32 %v5276, 7
  %v5278 = vsub.s32 %v5275, %v5277
  %v5279 = vrot.slane %v5263, %v5278
  %v5281 = vunpack.c.l.s4 1966171168
  %v5282 = vunpack.c.0.s8 %v5281
  %v5283 = vlaneseq
  %v5284 = vshrl.u32 %v5283, 7
  %v5285 = vsub.s32 %v5282, %v5284
  %v5286 = vrot.slane %v5264, %v5285
  %v5288 = vunpack.c.l.s4 1966171168
  %v5289 = vunpack.c.0.s8 %v5288
  %v5290 = vlaneseq
  %v5291 = vshrl.u32 %v5290, 7
  %v5292 = vsub.s32 %v5289, %v5291
  %v5293 = vrot.slane %v5265, %v5292
  %v5294 = vcombine.high %v5272, %v5272
  %v5295 = vcombine.high %v5279, %v5279
  %v5296 = vcombine.high %v5286, %v5286
  %v5297 = vcombine.high %v3352, %v3352
  %v5299 = vunpack.c.l.s4 1966171168
  %v5300 = vunpack.c.0.s8 %v5299
  %v5301 = vlaneseq
  %v5302 = vshrl.u32 %v5301, 7
  %v5303 = vsub.s32 %v5300, %v5302
  %v5304 = vrot.slane %v3352, %v5303
  %v5306 = vunpack.c.l.s4 1966171168
  %v5307 = vunpack.c.0.s8 %v5306
  %v5308 = vlaneseq
  %v5309 = vshrl.u32 %v5308, 7
  %v5310 = vsub.s32 %v5307, %v5309
  %v5311 = vrot.slane %v5297, %v5310
  %v5312 = vcombine.high %v5304, %v5304
  %v5313 = vcombine.high %v5311, %v5311
  %v5315 = vunpack.c.l.s4 1966171168
  %v5316 = vunpack.c.0.s8 %v5315
  %v5317 = vlaneseq
  %v5318 = vshrl.u32 %v5317, 7
  %v5319 = vsub.s32 %v5316, %v5318
  %v5320 = vrot.slane %v5304, %v5319
  %v5322 = vunpack.c.l.s4 1966171168
  %v5323 = vunpack.c.0.s8 %v5322
  %v5324 = vlaneseq
  %v5325 = vshrl.u32 %v5324, 7
  %v5326 = vsub.s32 %v5323, %v5325
  %v5327 = vrot.slane %v5311, %v5326
  %v5329 = vunpack.c.l.s4 1966171168
  %v5330 = vunpack.c.0.s8 %v5329
  %v5331 = vlaneseq
  %v5332 = vshrl.u32 %v5331, 7
  %v5333 = vsub.s32 %v5330, %v5332
  %v5334 = vrot.slane %v5312, %v5333
  %v5336 = vunpack.c.l.s4 1966171168
  %v5337 = vunpack.c.0.s8 %v5336
  %v5338 = vlaneseq
  %v5339 = vshrl.u32 %v5338, 7
  %v5340 = vsub.s32 %v5337, %v5339
  %v5341 = vrot.slane %v5313, %v5340
  %v5342 = vcombine.high %v5320, %v5320
  %v5343 = vcombine.high %v5327, %v5327
  %v5344 = vcombine.high %v5334, %v5334
  %v5345 = vcombine.high %v3353, %v3353
  %v5347 = vunpack.c.l.s4 1966171168
  %v5348 = vunpack.c.0.s8 %v5347
  %v5349 = vlaneseq
  %v5350 = vshrl.u32 %v5349, 7
  %v5351 = vsub.s32 %v5348, %v5350
  %v5352 = vrot.slane %v3353, %v5351
  %v5354 = vunpack.c.l.s4 1966171168
  %v5355 = vunpack.c.0.s8 %v5354
  %v5356 = vlaneseq
  %v5357 = vshrl.u32 %v5356, 7
  %v5358 = vsub.s32 %v5355, %v5357
  %v5359 = vrot.slane %v5345, %v5358
  %v5360 = vcombine.high %v5352, %v5352
  %v5361 = vcombine.high %v5359, %v5359
  %v5363 = vunpack.c.l.s4 1966171168
  %v5364 = vunpack.c.0.s8 %v5363
  %v5365 = vlaneseq
  %v5366 = vshrl.u32 %v5365, 7
  %v5367 = vsub.s32 %v5364, %v5366
  %v5368 = vrot.slane %v5352, %v5367
  %v5370 = vunpack.c.l.s4 1966171168
  %v5371 = vunpack.c.0.s8 %v5370
  %v5372 = vlaneseq
  %v5373 = vshrl.u32 %v5372, 7
  %v5374 = vsub.s32 %v5371, %v5373
  %v5375 = vrot.slane %v5359, %v5374
  %v5377 = vunpack.c.l.s4 1966171168
  %v5378 = vunpack.c.0.s8 %v5377
  %v5379 = vlaneseq
  %v5380 = vshrl.u32 %v5379, 7
  %v5381 = vsub.s32 %v5378, %v5380
  %v5382 = vrot.slane %v5360, %v5381
  %v5384 = vunpack.c.l.s4 1966171168
  %v5385 = vunpack.c.0.s8 %v5384
  %v5386 = vlaneseq
  %v5387 = vshrl.u32 %v5386, 7
  %v5388 = vsub.s32 %v5385, %v5387
  %v5389 = vrot.slane %v5361, %v5388
  %v5390 = vcombine.high %v5368, %v5368
  %v5391 = vcombine.high %v5375, %v5375
  %v5392 = vcombine.high %v5382, %v5382
  %v5393 = vcombine.high %v3354, %v3354
  %v5395 = vunpack.c.l.s4 1966171168
  %v5396 = vunpack.c.0.s8 %v5395
  %v5397 = vlaneseq
  %v5398 = vshrl.u32 %v5397, 7
  %v5399 = vsub.s32 %v5396, %v5398
  %v5400 = vrot.slane %v3354, %v5399
  %v5402 = vunpack.c.l.s4 1966171168
  %v5403 = vunpack.c.0.s8 %v5402
  %v5404 = vlaneseq
  %v5405 = vshrl.u32 %v5404, 7
  %v5406 = vsub.s32 %v5403, %v5405
  %v5407 = vrot.slane %v5393, %v5406
  %v5408 = vcombine.high %v5400, %v5400
  %v5409 = vcombine.high %v5407, %v5407
  %v5411 = vunpack.c.l.s4 1966171168
  %v5412 = vunpack.c.0.s8 %v5411
  %v5413 = vlaneseq
  %v5414 = vshrl.u32 %v5413, 7
  %v5415 = vsub.s32 %v5412, %v5414
  %v5416 = vrot.slane %v5400, %v5415
  %v5418 = vunpack.c.l.s4 1966171168
  %v5419 = vunpack.c.0.s8 %v5418
  %v5420 = vlaneseq
  %v5421 = vshrl.u32 %v5420, 7
  %v5422 = vsub.s32 %v5419, %v5421
  %v5423 = vrot.slane %v5407, %v5422
  %v5425 = vunpack.c.l.s4 1966171168
  %v5426 = vunpack.c.0.s8 %v5425
  %v5427 = vlaneseq
  %v5428 = vshrl.u32 %v5427, 7
  %v5429 = vsub.s32 %v5426, %v5428
  %v5430 = vrot.slane %v5408, %v5429
  %v5432 = vunpack.c.l.s4 1966171168
  %v5433 = vunpack.c.0.s8 %v5432
  %v5434 = vlaneseq
  %v5435 = vshrl.u32 %v5434, 7
  %v5436 = vsub.s32 %v5433, %v5435
  %v5437 = vrot.slane %v5409, %v5436
  %v5438 = vcombine.high %v5416, %v5416
  %v5439 = vcombine.high %v5423, %v5423
  %v5440 = vcombine.high %v5430, %v5430
  %v5441 = vcombine.high %v3355, %v3355
  %v5443 = vunpack.c.l.s4 1966171168
  %v5444 = vunpack.c.0.s8 %v5443
  %v5445 = vlaneseq
  %v5446 = vshrl.u32 %v5445, 7
  %v5447 = vsub.s32 %v5444, %v5446
  %v5448 = vrot.slane %v3355, %v5447
  %v5450 = vunpack.c.l.s4 1966171168
  %v5451 = vunpack.c.0.s8 %v5450
  %v5452 = vlaneseq
  %v5453 = vshrl.u32 %v5452, 7
  %v5454 = vsub.s32 %v5451, %v5453
  %v5455 = vrot.slane %v5441, %v5454
  %v5456 = vcombine.high %v5448, %v5448
  %v5457 = vcombine.high %v5455, %v5455
  %v5459 = vunpack.c.l.s4 1966171168
  %v5460 = vunpack.c.0.s8 %v5459
  %v5461 = vlaneseq
  %v5462 = vshrl.u32 %v5461, 7
  %v5463 = vsub.s32 %v5460, %v5462
  %v5464 = vrot.slane %v5448, %v5463
  %v5466 = vunpack.c.l.s4 1966171168
  %v5467 = vunpack.c.0.s8 %v5466
  %v5468 = vlaneseq
  %v5469 = vshrl.u32 %v5468, 7
  %v5470 = vsub.s32 %v5467, %v5469
  %v5471 = vrot.slane %v5455, %v5470
  %v5473 = vunpack.c.l.s4 1966171168
  %v5474 = vunpack.c.0.s8 %v5473
  %v5475 = vlaneseq
  %v5476 = vshrl.u32 %v5475, 7
  %v5477 = vsub.s32 %v5474, %v5476
  %v5478 = vrot.slane %v5456, %v5477
  %v5480 = vunpack.c.l.s4 1966171168
  %v5481 = vunpack.c.0.s8 %v5480
  %v5482 = vlaneseq
  %v5483 = vshrl.u32 %v5482, 7
  %v5484 = vsub.s32 %v5481, %v5483
  %v5485 = vrot.slane %v5457, %v5484
  %v5486 = vcombine.high %v5464, %v5464
  %v5487 = vcombine.high %v5471, %v5471
  %v5488 = vcombine.high %v5478, %v5478
  %v5489 = vcombine.high %v3356, %v3356
  %v5491 = vunpack.c.l.s4 1966171168
  %v5492 = vunpack.c.0.s8 %v5491
  %v5493 = vlaneseq
  %v5494 = vshrl.u32 %v5493, 7
  %v5495 = vsub.s32 %v5492, %v5494
  %v5496 = vrot.slane %v3356, %v5495
  %v5498 = vunpack.c.l.s4 1966171168
  %v5499 = vunpack.c.0.s8 %v5498
  %v5500 = vlaneseq
  %v5501 = vshrl.u32 %v5500, 7
  %v5502 = vsub.s32 %v5499, %v5501
  %v5503 = vrot.slane %v5489, %v5502
  %v5504 = vcombine.high %v5496, %v5496
  %v5505 = vcombine.high %v5503, %v5503
  %v5507 = vunpack.c.l.s4 1966171168
  %v5508 = vunpack.c.0.s8 %v5507
  %v5509 = vlaneseq
  %v5510 = vshrl.u32 %v5509, 7
  %v5511 = vsub.s32 %v5508, %v5510
  %v5512 = vrot.slane %v5496, %v5511
  %v5514 = vunpack.c.l.s4 1966171168
  %v5515 = vunpack.c.0.s8 %v5514
  %v5516 = vlaneseq
  %v5517 = vshrl.u32 %v5516, 7
  %v5518 = vsub.s32 %v5515, %v5517
  %v5519 = vrot.slane %v5503, %v5518
  %v5521 = vunpack.c.l.s4 1966171168
  %v5522 = vunpack.c.0.s8 %v5521
  %v5523 = vlaneseq
  %v5524 = vshrl.u32 %v5523, 7
  %v5525 = vsub.s32 %v5522, %v5524
  %v5526 = vrot.slane %v5504, %v5525
  %v5528 = vunpack.c.l.s4 1966171168
  %v5529 = vunpack.c.0.s8 %v5528
  %v5530 = vlaneseq
  %v5531 = vshrl.u32 %v5530, 7
  %v5532 = vsub.s32 %v5529, %v5531
  %v5533 = vrot.slane %v5505, %v5532
  %v5534 = vcombine.high %v5512, %v5512
  %v5535 = vcombine.high %v5519, %v5519
  %v5536 = vcombine.high %v5526, %v5526
  %v5537 = vcombine.high %v3357, %v3357
  %v5539 = vunpack.c.l.s4 1966171168
  %v5540 = vunpack.c.0.s8 %v5539
  %v5541 = vlaneseq
  %v5542 = vshrl.u32 %v5541, 7
  %v5543 = vsub.s32 %v5540, %v5542
  %v5544 = vrot.slane %v3357, %v5543
  %v5546 = vunpack.c.l.s4 1966171168
  %v5547 = vunpack.c.0.s8 %v5546
  %v5548 = vlaneseq
  %v5549 = vshrl.u32 %v5548, 7
  %v5550 = vsub.s32 %v5547, %v5549
  %v5551 = vrot.slane %v5537, %v5550
  %v5552 = vcombine.high %v5544, %v5544
  %v5553 = vcombine.high %v5551, %v5551
  %v5555 = vunpack.c.l.s4 1966171168
  %v5556 = vunpack.c.0.s8 %v5555
  %v5557 = vlaneseq
  %v5558 = vshrl.u32 %v5557, 7
  %v5559 = vsub.s32 %v5556, %v5558
  %v5560 = vrot.slane %v5544, %v5559
  %v5562 = vunpack.c.l.s4 1966171168
  %v5563 = vunpack.c.0.s8 %v5562
  %v5564 = vlaneseq
  %v5565 = vshrl.u32 %v5564, 7
  %v5566 = vsub.s32 %v5563, %v5565
  %v5567 = vrot.slane %v5551, %v5566
  %v5569 = vunpack.c.l.s4 1966171168
  %v5570 = vunpack.c.0.s8 %v5569
  %v5571 = vlaneseq
  %v5572 = vshrl.u32 %v5571, 7
  %v5573 = vsub.s32 %v5570, %v5572
  %v5574 = vrot.slane %v5552, %v5573
  %v5576 = vunpack.c.l.s4 1966171168
  %v5577 = vunpack.c.0.s8 %v5576
  %v5578 = vlaneseq
  %v5579 = vshrl.u32 %v5578, 7
  %v5580 = vsub.s32 %v5577, %v5579
  %v5581 = vrot.slane %v5553, %v5580
  %v5582 = vcombine.high %v5560, %v5560
  %v5583 = vcombine.high %v5567, %v5567
  %v5584 = vcombine.high %v5574, %v5574
  %v5585 = vcombine.high %v3358, %v3358
  %v5587 = vunpack.c.l.s4 1966171168
  %v5588 = vunpack.c.0.s8 %v5587
  %v5589 = vlaneseq
  %v5590 = vshrl.u32 %v5589, 7
  %v5591 = vsub.s32 %v5588, %v5590
  %v5592 = vrot.slane %v3358, %v5591
  %v5594 = vunpack.c.l.s4 1966171168
  %v5595 = vunpack.c.0.s8 %v5594
  %v5596 = vlaneseq
  %v5597 = vshrl.u32 %v5596, 7
  %v5598 = vsub.s32 %v5595, %v5597
  %v5599 = vrot.slane %v5585, %v5598
  %v5600 = vcombine.high %v5592, %v5592
  %v5601 = vcombine.high %v5599, %v5599
  %v5603 = vunpack.c.l.s4 1966171168
  %v5604 = vunpack.c.0.s8 %v5603
  %v5605 = vlaneseq
  %v5606 = vshrl.u32 %v5605, 7
  %v5607 = vsub.s32 %v5604, %v5606
  %v5608 = vrot.slane %v5592, %v5607
  %v5610 = vunpack.c.l.s4 1966171168
  %v5611 = vunpack.c.0.s8 %v5610
  %v5612 = vlaneseq
  %v5613 = vshrl.u32 %v5612, 7
  %v5614 = vsub.s32 %v5611, %v5613
  %v5615 = vrot.slane %v5599, %v5614
  %v5617 = vunpack.c.l.s4 1966171168
  %v5618 = vunpack.c.0.s8 %v5617
  %v5619 = vlaneseq
  %v5620 = vshrl.u32 %v5619, 7
  %v5621 = vsub.s32 %v5618, %v5620
  %v5622 = vrot.slane %v5600, %v5621
  %v5624 = vunpack.c.l.s4 1966171168
  %v5625 = vunpack.c.0.s8 %v5624
  %v5626 = vlaneseq
  %v5627 = vshrl.u32 %v5626, 7
  %v5628 = vsub.s32 %v5625, %v5627
  %v5629 = vrot.slane %v5601, %v5628
  %v5630 = vcombine.high %v5608, %v5608
  %v5631 = vcombine.high %v5615, %v5615
  %v5632 = vcombine.high %v5622, %v5622
  %v5633 = vcombine.high %v3359, %v3359
  %v5635 = vunpack.c.l.s4 1966171168
  %v5636 = vunpack.c.0.s8 %v5635
  %v5637 = vlaneseq
  %v5638 = vshrl.u32 %v5637, 7
  %v5639 = vsub.s32 %v5636, %v5638
  %v5640 = vrot.slane %v3359, %v5639
  %v5642 = vunpack.c.l.s4 1966171168
  %v5643 = vunpack.c.0.s8 %v5642
  %v5644 = vlaneseq
  %v5645 = vshrl.u32 %v5644, 7
  %v5646 = vsub.s32 %v5643, %v5645
  %v5647 = vrot.slane %v5633, %v5646
  %v5648 = vcombine.high %v5640, %v5640
  %v5649 = vcombine.high %v5647, %v5647
  %v5651 = vunpack.c.l.s4 1966171168
  %v5652 = vunpack.c.0.s8 %v5651
  %v5653 = vlaneseq
  %v5654 = vshrl.u32 %v5653, 7
  %v5655 = vsub.s32 %v5652, %v5654
  %v5656 = vrot.slane %v5640, %v5655
  %v5658 = vunpack.c.l.s4 1966171168
  %v5659 = vunpack.c.0.s8 %v5658
  %v5660 = vlaneseq
  %v5661 = vshrl.u32 %v5660, 7
  %v5662 = vsub.s32 %v5659, %v5661
  %v5663 = vrot.slane %v5647, %v5662
  %v5665 = vunpack.c.l.s4 1966171168
  %v5666 = vunpack.c.0.s8 %v5665
  %v5667 = vlaneseq
  %v5668 = vshrl.u32 %v5667, 7
  %v5669 = vsub.s32 %v5666, %v5668
  %v5670 = vrot.slane %v5648, %v5669
  %v5672 = vunpack.c.l.s4 1966171168
  %v5673 = vunpack.c.0.s8 %v5672
  %v5674 = vlaneseq
  %v5675 = vshrl.u32 %v5674, 7
  %v5676 = vsub.s32 %v5673, %v5675
  %v5677 = vrot.slane %v5649, %v5676
  %v5678 = vcombine.high %v5656, %v5656
  %v5679 = vcombine.high %v5663, %v5663
  %v5680 = vcombine.high %v5670, %v5670
  %v5681 = vcombine.high %v3360, %v3360
  %v5683 = vunpack.c.l.s4 1966171168
  %v5684 = vunpack.c.0.s8 %v5683
  %v5685 = vlaneseq
  %v5686 = vshrl.u32 %v5685, 7
  %v5687 = vsub.s32 %v5684, %v5686
  %v5688 = vrot.slane %v3360, %v5687
  %v5690 = vunpack.c.l.s4 1966171168
  %v5691 = vunpack.c.0.s8 %v5690
  %v5692 = vlaneseq
  %v5693 = vshrl.u32 %v5692, 7
  %v5694 = vsub.s32 %v5691, %v5693
  %v5695 = vrot.slane %v5681, %v5694
  %v5696 = vcombine.high %v5688, %v5688
  %v5697 = vcombine.high %v5695, %v5695
  %v5699 = vunpack.c.l.s4 1966171168
  %v5700 = vunpack.c.0.s8 %v5699
  %v5701 = vlaneseq
  %v5702 = vshrl.u32 %v5701, 7
  %v5703 = vsub.s32 %v5700, %v5702
  %v5704 = vrot.slane %v5688, %v5703
  %v5706 = vunpack.c.l.s4 1966171168
  %v5707 = vunpack.c.0.s8 %v5706
  %v5708 = vlaneseq
  %v5709 = vshrl.u32 %v5708, 7
  %v5710 = vsub.s32 %v5707, %v5709
  %v5711 = vrot.slane %v5695, %v5710
  %v5713 = vunpack.c.l.s4 1966171168
  %v5714 = vunpack.c.0.s8 %v5713
  %v5715 = vlaneseq
  %v5716 = vshrl.u32 %v5715, 7
  %v5717 = vsub.s32 %v5714, %v5716
  %v5718 = vrot.slane %v5696, %v5717
  %v5720 = vunpack.c.l.s4 1966171168
  %v5721 = vunpack.c.0.s8 %v5720
  %v5722 = vlaneseq
  %v5723 = vshrl.u32 %v5722, 7
  %v5724 = vsub.s32 %v5721, %v5723
  %v5725 = vrot.slane %v5697, %v5724
  %v5726 = vcombine.high %v5704, %v5704
  %v5727 = vcombine.high %v5711, %v5711
  %v5728 = vcombine.high %v5718, %v5718
  %v5729 = vcombine.high %v3361, %v3361
  %v5731 = vunpack.c.l.s4 1966171168
  %v5732 = vunpack.c.0.s8 %v5731
  %v5733 = vlaneseq
  %v5734 = vshrl.u32 %v5733, 7
  %v5735 = vsub.s32 %v5732, %v5734
  %v5736 = vrot.slane %v3361, %v5735
  %v5738 = vunpack.c.l.s4 1966171168
  %v5739 = vunpack.c.0.s8 %v5738
  %v5740 = vlaneseq
  %v5741 = vshrl.u32 %v5740, 7
  %v5742 = vsub.s32 %v5739, %v5741
  %v5743 = vrot.slane %v5729, %v5742
  %v5744 = vcombine.high %v5736, %v5736
  %v5745 = vcombine.high %v5743, %v5743
  %v5747 = vunpack.c.l.s4 1966171168
  %v5748 = vunpack.c.0.s8 %v5747
  %v5749 = vlaneseq
  %v5750 = vshrl.u32 %v5749, 7
  %v5751 = vsub.s32 %v5748, %v5750
  %v5752 = vrot.slane %v5736, %v5751
  %v5754 = vunpack.c.l.s4 1966171168
  %v5755 = vunpack.c.0.s8 %v5754
  %v5756 = vlaneseq
  %v5757 = vshrl.u32 %v5756, 7
  %v5758 = vsub.s32 %v5755, %v5757
  %v5759 = vrot.slane %v5743, %v5758
  %v5761 = vunpack.c.l.s4 1966171168
  %v5762 = vunpack.c.0.s8 %v5761
  %v5763 = vlaneseq
  %v5764 = vshrl.u32 %v5763, 7
  %v5765 = vsub.s32 %v5762, %v5764
  %v5766 = vrot.slane %v5744, %v5765
  %v5768 = vunpack.c.l.s4 1966171168
  %v5769 = vunpack.c.0.s8 %v5768
  %v5770 = vlaneseq
  %v5771 = vshrl.u32 %v5770, 7
  %v5772 = vsub.s32 %v5769, %v5771
  %v5773 = vrot.slane %v5745, %v5772
  %v5774 = vcombine.high %v5752, %v5752
  %v5775 = vcombine.high %v5759, %v5759
  %v5776 = vcombine.high %v5766, %v5766
  %v5777 = vcombine.high %v3362, %v3362
  %v5779 = vunpack.c.l.s4 1966171168
  %v5780 = vunpack.c.0.s8 %v5779
  %v5781 = vlaneseq
  %v5782 = vshrl.u32 %v5781, 7
  %v5783 = vsub.s32 %v5780, %v5782
  %v5784 = vrot.slane %v3362, %v5783
  %v5786 = vunpack.c.l.s4 1966171168
  %v5787 = vunpack.c.0.s8 %v5786
  %v5788 = vlaneseq
  %v5789 = vshrl.u32 %v5788, 7
  %v5790 = vsub.s32 %v5787, %v5789
  %v5791 = vrot.slane %v5777, %v5790
  %v5792 = vcombine.high %v5784, %v5784
  %v5793 = vcombine.high %v5791, %v5791
  %v5795 = vunpack.c.l.s4 1966171168
  %v5796 = vunpack.c.0.s8 %v5795
  %v5797 = vlaneseq
  %v5798 = vshrl.u32 %v5797, 7
  %v5799 = vsub.s32 %v5796, %v5798
  %v5800 = vrot.slane %v5784, %v5799
  %v5802 = vunpack.c.l.s4 1966171168
  %v5803 = vunpack.c.0.s8 %v5802
  %v5804 = vlaneseq
  %v5805 = vshrl.u32 %v5804, 7
  %v5806 = vsub.s32 %v5803, %v5805
  %v5807 = vrot.slane %v5791, %v5806
  %v5809 = vunpack.c.l.s4 1966171168
  %v5810 = vunpack.c.0.s8 %v5809
  %v5811 = vlaneseq
  %v5812 = vshrl.u32 %v5811, 7
  %v5813 = vsub.s32 %v5810, %v5812
  %v5814 = vrot.slane %v5792, %v5813
  %v5816 = vunpack.c.l.s4 1966171168
  %v5817 = vunpack.c.0.s8 %v5816
  %v5818 = vlaneseq
  %v5819 = vshrl.u32 %v5818, 7
  %v5820 = vsub.s32 %v5817, %v5819
  %v5821 = vrot.slane %v5793, %v5820
  %v5822 = vcombine.high %v5800, %v5800
  %v5823 = vcombine.high %v5807, %v5807
  %v5824 = vcombine.high %v5814, %v5814
  %v5825 = vcombine.high %v3363, %v3363
  %v5827 = vunpack.c.l.s4 1966171168
  %v5828 = vunpack.c.0.s8 %v5827
  %v5829 = vlaneseq
  %v5830 = vshrl.u32 %v5829, 7
  %v5831 = vsub.s32 %v5828, %v5830
  %v5832 = vrot.slane %v3363, %v5831
  %v5834 = vunpack.c.l.s4 1966171168
  %v5835 = vunpack.c.0.s8 %v5834
  %v5836 = vlaneseq
  %v5837 = vshrl.u32 %v5836, 7
  %v5838 = vsub.s32 %v5835, %v5837
  %v5839 = vrot.slane %v5825, %v5838
  %v5840 = vcombine.high %v5832, %v5832
  %v5841 = vcombine.high %v5839, %v5839
  %v5843 = vunpack.c.l.s4 1966171168
  %v5844 = vunpack.c.0.s8 %v5843
  %v5845 = vlaneseq
  %v5846 = vshrl.u32 %v5845, 7
  %v5847 = vsub.s32 %v5844, %v5846
  %v5848 = vrot.slane %v5832, %v5847
  %v5850 = vunpack.c.l.s4 1966171168
  %v5851 = vunpack.c.0.s8 %v5850
  %v5852 = vlaneseq
  %v5853 = vshrl.u32 %v5852, 7
  %v5854 = vsub.s32 %v5851, %v5853
  %v5855 = vrot.slane %v5839, %v5854
  %v5857 = vunpack.c.l.s4 1966171168
  %v5858 = vunpack.c.0.s8 %v5857
  %v5859 = vlaneseq
  %v5860 = vshrl.u32 %v5859, 7
  %v5861 = vsub.s32 %v5858, %v5860
  %v5862 = vrot.slane %v5840, %v5861
  %v5864 = vunpack.c.l.s4 1966171168
  %v5865 = vunpack.c.0.s8 %v5864
  %v5866 = vlaneseq
  %v5867 = vshrl.u32 %v5866, 7
  %v5868 = vsub.s32 %v5865, %v5867
  %v5869 = vrot.slane %v5841, %v5868
  %v5870 = vcombine.high %v5848, %v5848
  %v5871 = vcombine.high %v5855, %v5855
  %v5872 = vcombine.high %v5862, %v5862
  %v5873 = vcombine.high %v3364, %v3364
  %v5875 = vunpack.c.l.s4 1966171168
  %v5876 = vunpack.c.0.s8 %v5875
  %v5877 = vlaneseq
  %v5878 = vshrl.u32 %v5877, 7
  %v5879 = vsub.s32 %v5876, %v5878
  %v5880 = vrot.slane %v3364, %v5879
  %v5882 = vunpack.c.l.s4 1966171168
  %v5883 = vunpack.c.0.s8 %v5882
  %v5884 = vlaneseq
  %v5885 = vshrl.u32 %v5884, 7
  %v5886 = vsub.s32 %v5883, %v5885
  %v5887 = vrot.slane %v5873, %v5886
  %v5888 = vcombine.high %v5880, %v5880
  %v5889 = vcombine.high %v5887, %v5887
  %v5891 = vunpack.c.l.s4 1966171168
  %v5892 = vunpack.c.0.s8 %v5891
  %v5893 = vlaneseq
  %v5894 = vshrl.u32 %v5893, 7
  %v5895 = vsub.s32 %v5892, %v5894
  %v5896 = vrot.slane %v5880, %v5895
  %v5898 = vunpack.c.l.s4 1966171168
  %v5899 = vunpack.c.0.s8 %v5898
  %v5900 = vlaneseq
  %v5901 = vshrl.u32 %v5900, 7
  %v5902 = vsub.s32 %v5899, %v5901
  %v5903 = vrot.slane %v5887, %v5902
  %v5905 = vunpack.c.l.s4 1966171168
  %v5906 = vunpack.c.0.s8 %v5905
  %v5907 = vlaneseq
  %v5908 = vshrl.u32 %v5907, 7
  %v5909 = vsub.s32 %v5906, %v5908
  %v5910 = vrot.slane %v5888, %v5909
  %v5912 = vunpack.c.l.s4 1966171168
  %v5913 = vunpack.c.0.s8 %v5912
  %v5914 = vlaneseq
  %v5915 = vshrl.u32 %v5914, 7
  %v5916 = vsub.s32 %v5913, %v5915
  %v5917 = vrot.slane %v5889, %v5916
  %v5918 = vcombine.high %v5896, %v5896
  %v5919 = vcombine.high %v5903, %v5903
  %v5920 = vcombine.high %v5910, %v5910
  %v5921 = vcombine.high %v3365, %v3365
  %v5923 = vunpack.c.l.s4 1966171168
  %v5924 = vunpack.c.0.s8 %v5923
  %v5925 = vlaneseq
  %v5926 = vshrl.u32 %v5925, 7
  %v5927 = vsub.s32 %v5924, %v5926
  %v5928 = vrot.slane %v3365, %v5927
  %v5930 = vunpack.c.l.s4 1966171168
  %v5931 = vunpack.c.0.s8 %v5930
  %v5932 = vlaneseq
  %v5933 = vshrl.u32 %v5932, 7
  %v5934 = vsub.s32 %v5931, %v5933
  %v5935 = vrot.slane %v5921, %v5934
  %v5936 = vcombine.high %v5928, %v5928
  %v5937 = vcombine.high %v5935, %v5935
  %v5939 = vunpack.c.l.s4 1966171168
  %v5940 = vunpack.c.0.s8 %v5939
  %v5941 = vlaneseq
  %v5942 = vshrl.u32 %v5941, 7
  %v5943 = vsub.s32 %v5940, %v5942
  %v5944 = vrot.slane %v5928, %v5943
  %v5946 = vunpack.c.l.s4 1966171168
  %v5947 = vunpack.c.0.s8 %v5946
  %v5948 = vlaneseq
  %v5949 = vshrl.u32 %v5948, 7
  %v5950 = vsub.s32 %v5947, %v5949
  %v5951 = vrot.slane %v5935, %v5950
  %v5953 = vunpack.c.l.s4 1966171168
  %v5954 = vunpack.c.0.s8 %v5953
  %v5955 = vlaneseq
  %v5956 = vshrl.u32 %v5955, 7
  %v5957 = vsub.s32 %v5954, %v5956
  %v5958 = vrot.slane %v5936, %v5957
  %v5960 = vunpack.c.l.s4 1966171168
  %v5961 = vunpack.c.0.s8 %v5960
  %v5962 = vlaneseq
  %v5963 = vshrl.u32 %v5962, 7
  %v5964 = vsub.s32 %v5961, %v5963
  %v5965 = vrot.slane %v5937, %v5964
  %v5966 = vcombine.high %v5944, %v5944
  %v5967 = vcombine.high %v5951, %v5951
  %v5968 = vcombine.high %v5958, %v5958
  %v5969 = vcombine.high %v3366, %v3366
  %v5971 = vunpack.c.l.s4 1966171168
  %v5972 = vunpack.c.0.s8 %v5971
  %v5973 = vlaneseq
  %v5974 = vshrl.u32 %v5973, 7
  %v5975 = vsub.s32 %v5972, %v5974
  %v5976 = vrot.slane %v3366, %v5975
  %v5978 = vunpack.c.l.s4 1966171168
  %v5979 = vunpack.c.0.s8 %v5978
  %v5980 = vlaneseq
  %v5981 = vshrl.u32 %v5980, 7
  %v5982 = vsub.s32 %v5979, %v5981
  %v5983 = vrot.slane %v5969, %v5982
  %v5984 = vcombine.high %v5976, %v5976
  %v5985 = vcombine.high %v5983, %v5983
  %v5987 = vunpack.c.l.s4 1966171168
  %v5988 = vunpack.c.0.s8 %v5987
  %v5989 = vlaneseq
  %v5990 = vshrl.u32 %v5989, 7
  %v5991 = vsub.s32 %v5988, %v5990
  %v5992 = vrot.slane %v5976, %v5991
  %v5994 = vunpack.c.l.s4 1966171168
  %v5995 = vunpack.c.0.s8 %v5994
  %v5996 = vlaneseq
  %v5997 = vshrl.u32 %v5996, 7
  %v5998 = vsub.s32 %v5995, %v5997
  %v5999 = vrot.slane %v5983, %v5998
  %v6001 = vunpack.c.l.s4 1966171168
  %v6002 = vunpack.c.0.s8 %v6001
  %v6003 = vlaneseq
  %v6004 = vshrl.u32 %v6003, 7
  %v6005 = vsub.s32 %v6002, %v6004
  %v6006 = vrot.slane %v5984, %v6005
  %v6008 = vunpack.c.l.s4 1966171168
  %v6009 = vunpack.c.0.s8 %v6008
  %v6010 = vlaneseq
  %v6011 = vshrl.u32 %v6010, 7
  %v6012 = vsub.s32 %v6009, %v6011
  %v6013 = vrot.slane %v5985, %v6012
  %v6014 = vcombine.high %v5992, %v5992
  %v6015 = vcombine.high %v5999, %v5999
  %v6016 = vcombine.high %v6006, %v6006
  %v6017 = vcombine.high %v3367, %v3367
  %v6019 = vunpack.c.l.s4 1966171168
  %v6020 = vunpack.c.0.s8 %v6019
  %v6021 = vlaneseq
  %v6022 = vshrl.u32 %v6021, 7
  %v6023 = vsub.s32 %v6020, %v6022
  %v6024 = vrot.slane %v3367, %v6023
  %v6026 = vunpack.c.l.s4 1966171168
  %v6027 = vunpack.c.0.s8 %v6026
  %v6028 = vlaneseq
  %v6029 = vshrl.u32 %v6028, 7
  %v6030 = vsub.s32 %v6027, %v6029
  %v6031 = vrot.slane %v6017, %v6030
  %v6032 = vcombine.high %v6024, %v6024
  %v6033 = vcombine.high %v6031, %v6031
  %v6035 = vunpack.c.l.s4 1966171168
  %v6036 = vunpack.c.0.s8 %v6035
  %v6037 = vlaneseq
  %v6038 = vshrl.u32 %v6037, 7
  %v6039 = vsub.s32 %v6036, %v6038
  %v6040 = vrot.slane %v6024, %v6039
  %v6042 = vunpack.c.l.s4 1966171168
  %v6043 = vunpack.c.0.s8 %v6042
  %v6044 = vlaneseq
  %v6045 = vshrl.u32 %v6044, 7
  %v6046 = vsub.s32 %v6043, %v6045
  %v6047 = vrot.slane %v6031, %v6046
  %v6049 = vunpack.c.l.s4 1966171168
  %v6050 = vunpack.c.0.s8 %v6049
  %v6051 = vlaneseq
  %v6052 = vshrl.u32 %v6051, 7
  %v6053 = vsub.s32 %v6050, %v6052
  %v6054 = vrot.slane %v6032, %v6053
  %v6056 = vunpack.c.l.s4 1966171168
  %v6057 = vunpack.c.0.s8 %v6056
  %v6058 = vlaneseq
  %v6059 = vshrl.u32 %v6058, 7
  %v6060 = vsub.s32 %v6057, %v6059
  %v6061 = vrot.slane %v6033, %v6060
  %v6062 = vcombine.high %v6040, %v6040
  %v6063 = vcombine.high %v6047, %v6047
  %v6064 = vcombine.high %v6054, %v6054
  %v6065 = vcombine.high %v3368, %v3368
  %v6067 = vunpack.c.l.s4 1966171168
  %v6068 = vunpack.c.0.s8 %v6067
  %v6069 = vlaneseq
  %v6070 = vshrl.u32 %v6069, 7
  %v6071 = vsub.s32 %v6068, %v6070
  %v6072 = vrot.slane %v3368, %v6071
  %v6074 = vunpack.c.l.s4 1966171168
  %v6075 = vunpack.c.0.s8 %v6074
  %v6076 = vlaneseq
  %v6077 = vshrl.u32 %v6076, 7
  %v6078 = vsub.s32 %v6075, %v6077
  %v6079 = vrot.slane %v6065, %v6078
  %v6080 = vcombine.high %v6072, %v6072
  %v6081 = vcombine.high %v6079, %v6079
  %v6083 = vunpack.c.l.s4 1966171168
  %v6084 = vunpack.c.0.s8 %v6083
  %v6085 = vlaneseq
  %v6086 = vshrl.u32 %v6085, 7
  %v6087 = vsub.s32 %v6084, %v6086
  %v6088 = vrot.slane %v6072, %v6087
  %v6090 = vunpack.c.l.s4 1966171168
  %v6091 = vunpack.c.0.s8 %v6090
  %v6092 = vlaneseq
  %v6093 = vshrl.u32 %v6092, 7
  %v6094 = vsub.s32 %v6091, %v6093
  %v6095 = vrot.slane %v6079, %v6094
  %v6097 = vunpack.c.l.s4 1966171168
  %v6098 = vunpack.c.0.s8 %v6097
  %v6099 = vlaneseq
  %v6100 = vshrl.u32 %v6099, 7
  %v6101 = vsub.s32 %v6098, %v6100
  %v6102 = vrot.slane %v6080, %v6101
  %v6104 = vunpack.c.l.s4 1966171168
  %v6105 = vunpack.c.0.s8 %v6104
  %v6106 = vlaneseq
  %v6107 = vshrl.u32 %v6106, 7
  %v6108 = vsub.s32 %v6105, %v6107
  %v6109 = vrot.slane %v6081, %v6108
  %v6110 = vcombine.high %v6088, %v6088
  %v6111 = vcombine.high %v6095, %v6095
  %v6112 = vcombine.high %v6102, %v6102
  %v6114 = vunpack.c.l.s4 1935823168
  %v6115 = vunpack.c.0.s8 %v6114
  %v6116 = vlaneseq
  %v6117 = vshrl.u32 %v6116, 7
  %v6118 = vsub.s32 %v6115, %v6117
  %v6119 = vrot.slane %v3448, %v6118
  %v6121 = vunpack.c.l.s4 1935823168
  %v6122 = vunpack.c.0.s8 %v6121
  %v6123 = vlaneseq
  %v6124 = vshrl.u32 %v6123, 7
  %v6125 = vsub.s32 %v6122, %v6124
  %v6126 = vrot.slane %v6119, %v6125
  %v6128 = vunpack.c.l.s4 1935823168
  %v6129 = vunpack.c.0.s8 %v6128
  %v6130 = vlaneseq
  %v6131 = vshrl.u32 %v6130, 7
  %v6132 = vsub.s32 %v6129, %v6131
  %v6133 = vrot.slane %v3784, %v6132
  %v6135 = vunpack.c.l.s4 1935823168
  %v6136 = vunpack.c.0.s8 %v6135
  %v6137 = vlaneseq
  %v6138 = vshrl.u32 %v6137, 7
  %v6139 = vsub.s32 %v6136, %v6138
  %v6140 = vrot.slane %v6133, %v6139
  %v6142 = vunpack.c.l.s4 1935823168
  %v6143 = vunpack.c.0.s8 %v6142
  %v6144 = vlaneseq
  %v6145 = vshrl.u32 %v6144, 7
  %v6146 = vsub.s32 %v6143, %v6145
  %v6147 = vrot.slane %v4120, %v6146
  %v6149 = vunpack.c.l.s4 1935823168
  %v6150 = vunpack.c.0.s8 %v6149
  %v6151 = vlaneseq
  %v6152 = vshrl.u32 %v6151, 7
  %v6153 = vsub.s32 %v6150, %v6152
  %v6154 = vrot.slane %v6147, %v6153
  %v6156 = vunpack.c.l.s4 1935823168
  %v6157 = vunpack.c.0.s8 %v6156
  %v6158 = vlaneseq
  %v6159 = vshrl.u32 %v6158, 7
  %v6160 = vsub.s32 %v6157, %v6159
  %v6161 = vrot.slane %v4456, %v6160
  %v6163 = vunpack.c.l.s4 1935823168
  %v6164 = vunpack.c.0.s8 %v6163
  %v6165 = vlaneseq
  %v6166 = vshrl.u32 %v6165, 7
  %v6167 = vsub.s32 %v6164, %v6166
  %v6168 = vrot.slane %v6161, %v6167
  %v6170 = vunpack.c.l.s4 1935823168
  %v6171 = vunpack.c.0.s8 %v6170
  %v6172 = vlaneseq
  %v6173 = vshrl.u32 %v6172, 7
  %v6174 = vsub.s32 %v6171, %v6173
  %v6175 = vrot.slane %v4792, %v6174
  %v6177 = vunpack.c.l.s4 1935823168
  %v6178 = vunpack.c.0.s8 %v6177
  %v6179 = vlaneseq
  %v6180 = vshrl.u32 %v6179, 7
  %v6181 = vsub.s32 %v6178, %v6180
  %v6182 = vrot.slane %v6175, %v6181
  %v6184 = vunpack.c.l.s4 1935823168
  %v6185 = vunpack.c.0.s8 %v6184
  %v6186 = vlaneseq
  %v6187 = vshrl.u32 %v6186, 7
  %v6188 = vsub.s32 %v6185, %v6187
  %v6189 = vrot.slane %v5128, %v6188
  %v6191 = vunpack.c.l.s4 1935823168
  %v6192 = vunpack.c.0.s8 %v6191
  %v6193 = vlaneseq
  %v6194 = vshrl.u32 %v6193, 7
  %v6195 = vsub.s32 %v6192, %v6194
  %v6196 = vrot.slane %v6189, %v6195
  %v6198 = vunpack.c.l.s4 1935823168
  %v6199 = vunpack.c.0.s8 %v6198
  %v6200 = vlaneseq
  %v6201 = vshrl.u32 %v6200, 7
  %v6202 = vsub.s32 %v6199, %v6201
  %v6203 = vrot.slane %v5464, %v6202
  %v6205 = vunpack.c.l.s4 1935823168
  %v6206 = vunpack.c.0.s8 %v6205
  %v6207 = vlaneseq
  %v6208 = vshrl.u32 %v6207, 7
  %v6209 = vsub.s32 %v6206, %v6208
  %v6210 = vrot.slane %v6203, %v6209
  %v6212 = vunpack.c.l.s4 1935823168
  %v6213 = vunpack.c.0.s8 %v6212
  %v6214 = vlaneseq
  %v6215 = vshrl.u32 %v6214, 7
  %v6216 = vsub.s32 %v6213, %v6215
  %v6217 = vrot.slane %v5800, %v6216
  %v6219 = vunpack.c.l.s4 1935823168
  %v6220 = vunpack.c.0.s8 %v6219
  %v6221 = vlaneseq
  %v6222 = vshrl.u32 %v6221, 7
  %v6223 = vsub.s32 %v6220, %v6222
  %v6224 = vrot.slane %v6217, %v6223
  %v6225 = vunpack.c.l.b16 %v6126
  %v6226 = vunpack.c.l.b16 %v6140
  %v6227 = vunpack.c.l.b16 %v6154
  %v6228 = vunpack.c.l.b16 %v6168
  %v6229 = vunpack.c.l.b16 %v6182
  %v6230 = vunpack.c.l.b16 %v6196
  %v6231 = vunpack.c.l.b16 %v6210
  %v6232 = vunpack.c.l.b16 %v6224
  %v6233 = vrot.slane %v6226, 7
  %vm6234 = vcmask 1041409
  %v6235 = vsel %vm6234, %v6233, %v6225
  %v6236 = vrot.slane %v6227, 6
  %vm6237 = vcmask 1042434
  %v6238 = vsel %vm6237, %v6236, %v6235
  %v6239 = vrot.slane %v6228, 5
  %vm6240 = vcmask 1043459
  %v6241 = vsel %vm6240, %v6239, %v6238
  %v6242 = vrot.slane %v6229, 4
  %vm6243 = vcmask 1044484
  %v6244 = vsel %vm6243, %v6242, %v6241
  %v6245 = vrot.slane %v6230, 3
  %vm6246 = vcmask 1045509
  %v6247 = vsel %vm6246, %v6245, %v6244
  %v6248 = vrot.slane %v6231, 2
  %vm6249 = vcmask 1046534
  %v6250 = vsel %vm6249, %v6248, %v6247
  %v6251 = vrot.slane %v6232, 1
  %vm6252 = vcmask 1047559
  %v6253 = vsel %vm6252, %v6251, %v6250
  %v6254 = vpack.c.b16 %v6253, %v6253
  %vm6256 = vcmask 257024
  %6257 = vst.msk [vmem:[#allocation2] sm:$0xf] %vm6256, %v6254
  %v6259 = vunpack.c.l.s4 1935823168
  %v6260 = vunpack.c.0.s8 %v6259
  %v6261 = vlaneseq
  %v6262 = vshrl.u32 %v6261, 7
  %v6263 = vsub.s32 %v6260, %v6262
  %v6264 = vrot.slane %v3462, %v6263
  %v6266 = vunpack.c.l.s4 1935823168
  %v6267 = vunpack.c.0.s8 %v6266
  %v6268 = vlaneseq
  %v6269 = vshrl.u32 %v6268, 7
  %v6270 = vsub.s32 %v6267, %v6269
  %v6271 = vrot.slane %v6264, %v6270
  %v6273 = vunpack.c.l.s4 1935823168
  %v6274 = vunpack.c.0.s8 %v6273
  %v6275 = vlaneseq
  %v6276 = vshrl.u32 %v6275, 7
  %v6277 = vsub.s32 %v6274, %v6276
  %v6278 = vrot.slane %v3798, %v6277
  %v6280 = vunpack.c.l.s4 1935823168
  %v6281 = vunpack.c.0.s8 %v6280
  %v6282 = vlaneseq
  %v6283 = vshrl.u32 %v6282, 7
  %v6284 = vsub.s32 %v6281, %v6283
  %v6285 = vrot.slane %v6278, %v6284
  %v6287 = vunpack.c.l.s4 1935823168
  %v6288 = vunpack.c.0.s8 %v6287
  %v6289 = vlaneseq
  %v6290 = vshrl.u32 %v6289, 7
  %v6291 = vsub.s32 %v6288, %v6290
  %v6292 = vrot.slane %v4134, %v6291
  %v6294 = vunpack.c.l.s4 1935823168
  %v6295 = vunpack.c.0.s8 %v6294
  %v6296 = vlaneseq
  %v6297 = vshrl.u32 %v6296, 7
  %v6298 = vsub.s32 %v6295, %v6297
  %v6299 = vrot.slane %v6292, %v6298
  %v6301 = vunpack.c.l.s4 1935823168
  %v6302 = vunpack.c.0.s8 %v6301
  %v6303 = vlaneseq
  %v6304 = vshrl.u32 %v6303, 7
  %v6305 = vsub.s32 %v6302, %v6304
  %v6306 = vrot.slane %v4470, %v6305
  %v6308 = vunpack.c.l.s4 1935823168
  %v6309 = vunpack.c.0.s8 %v6308
  %v6310 = vlaneseq
  %v6311 = vshrl.u32 %v6310, 7
  %v6312 = vsub.s32 %v6309, %v6311
  %v6313 = vrot.slane %v6306, %v6312
  %v6315 = vunpack.c.l.s4 1935823168
  %v6316 = vunpack.c.0.s8 %v6315
  %v6317 = vlaneseq
  %v6318 = vshrl.u32 %v6317, 7
  %v6319 = vsub.s32 %v6316, %v6318
  %v6320 = vrot.slane %v4806, %v6319
  %v6322 = vunpack.c.l.s4 1935823168
  %v6323 = vunpack.c.0.s8 %v6322
  %v6324 = vlaneseq
  %v6325 = vshrl.u32 %v6324, 7
  %v6326 = vsub.s32 %v6323, %v6325
  %v6327 = vrot.slane %v6320, %v6326
  %v6329 = vunpack.c.l.s4 1935823168
  %v6330 = vunpack.c.0.s8 %v6329
  %v6331 = vlaneseq
  %v6332 = vshrl.u32 %v6331, 7
  %v6333 = vsub.s32 %v6330, %v6332
  %v6334 = vrot.slane %v5142, %v6333
  %v6336 = vunpack.c.l.s4 1935823168
  %v6337 = vunpack.c.0.s8 %v6336
  %v6338 = vlaneseq
  %v6339 = vshrl.u32 %v6338, 7
  %v6340 = vsub.s32 %v6337, %v6339
  %v6341 = vrot.slane %v6334, %v6340
  %v6343 = vunpack.c.l.s4 1935823168
  %v6344 = vunpack.c.0.s8 %v6343
  %v6345 = vlaneseq
  %v6346 = vshrl.u32 %v6345, 7
  %v6347 = vsub.s32 %v6344, %v6346
  %v6348 = vrot.slane %v5478, %v6347
  %v6350 = vunpack.c.l.s4 1935823168
  %v6351 = vunpack.c.0.s8 %v6350
  %v6352 = vlaneseq
  %v6353 = vshrl.u32 %v6352, 7
  %v6354 = vsub.s32 %v6351, %v6353
  %v6355 = vrot.slane %v6348, %v6354
  %v6357 = vunpack.c.l.s4 1935823168
  %v6358 = vunpack.c.0.s8 %v6357
  %v6359 = vlaneseq
  %v6360 = vshrl.u32 %v6359, 7
  %v6361 = vsub.s32 %v6358, %v6360
  %v6362 = vrot.slane %v5814, %v6361
  %v6364 = vunpack.c.l.s4 1935823168
  %v6365 = vunpack.c.0.s8 %v6364
  %v6366 = vlaneseq
  %v6367 = vshrl.u32 %v6366, 7
  %v6368 = vsub.s32 %v6365, %v6367
  %v6369 = vrot.slane %v6362, %v6368
  %v6370 = vunpack.c.l.b16 %v6271
  %v6371 = vunpack.c.l.b16 %v6285
  %v6372 = vunpack.c.l.b16 %v6299
  %v6373 = vunpack.c.l.b16 %v6313
  %v6374 = vunpack.c.l.b16 %v6327
  %v6375 = vunpack.c.l.b16 %v6341
  %v6376 = vunpack.c.l.b16 %v6355
  %v6377 = vunpack.c.l.b16 %v6369
  %v6378 = vrot.slane %v6371, 7
  %v6379 = vsel %vm6234, %v6378, %v6370
  %v6380 = vrot.slane %v6372, 6
  %v6381 = vsel %vm6237, %v6380, %v6379
  %v6382 = vrot.slane %v6373, 5
  %v6383 = vsel %vm6240, %v6382, %v6381
  %v6384 = vrot.slane %v6374, 4
  %v6385 = vsel %vm6243, %v6384, %v6383
  %v6386 = vrot.slane %v6375, 3
  %v6387 = vsel %vm6246, %v6386, %v6385
  %v6388 = vrot.slane %v6376, 2
  %v6389 = vsel %vm6249, %v6388, %v6387
  %v6390 = vrot.slane %v6377, 1
  %v6391 = vsel %vm6252, %v6390, %v6389
  %v6392 = vpack.c.b16 %v6391, %v6391
  %6393 = vrot.lane.b32.xlu0 %v6392, 32
  %v6394 = vpop.permute.xlu0 %6393
  %vm6396 = vcmask 519424
  %6397 = vst.msk [vmem:[#allocation2] sm:$0xf] %vm6396, %v6394
  %v6399 = vunpack.c.l.s4 1935823168
  %v6400 = vunpack.c.0.s8 %v6399
  %v6401 = vlaneseq
  %v6402 = vshrl.u32 %v6401, 7
  %v6403 = vsub.s32 %v6400, %v6402
  %v6404 = vrot.slane %v3470, %v6403
  %v6406 = vunpack.c.l.s4 1935823168
  %v6407 = vunpack.c.0.s8 %v6406
  %v6408 = vlaneseq
  %v6409 = vshrl.u32 %v6408, 7
  %v6410 = vsub.s32 %v6407, %v6409
  %v6411 = vrot.slane %v6404, %v6410
  %v6413 = vunpack.c.l.s4 1935823168
  %v6414 = vunpack.c.0.s8 %v6413
  %v6415 = vlaneseq
  %v6416 = vshrl.u32 %v6415, 7
  %v6417 = vsub.s32 %v6414, %v6416
  %v6418 = vrot.slane %v3806, %v6417
  %v6420 = vunpack.c.l.s4 1935823168
  %v6421 = vunpack.c.0.s8 %v6420
  %v6422 = vlaneseq
  %v6423 = vshrl.u32 %v6422, 7
  %v6424 = vsub.s32 %v6421, %v6423
  %v6425 = vrot.slane %v6418, %v6424
  %v6427 = vunpack.c.l.s4 1935823168
  %v6428 = vunpack.c.0.s8 %v6427
  %v6429 = vlaneseq
  %v6430 = vshrl.u32 %v6429, 7
  %v6431 = vsub.s32 %v6428, %v6430
  %v6432 = vrot.slane %v4142, %v6431
  %v6434 = vunpack.c.l.s4 1935823168
  %v6435 = vunpack.c.0.s8 %v6434
  %v6436 = vlaneseq
  %v6437 = vshrl.u32 %v6436, 7
  %v6438 = vsub.s32 %v6435, %v6437
  %v6439 = vrot.slane %v6432, %v6438
  %v6441 = vunpack.c.l.s4 1935823168
  %v6442 = vunpack.c.0.s8 %v6441
  %v6443 = vlaneseq
  %v6444 = vshrl.u32 %v6443, 7
  %v6445 = vsub.s32 %v6442, %v6444
  %v6446 = vrot.slane %v4478, %v6445
  %v6448 = vunpack.c.l.s4 1935823168
  %v6449 = vunpack.c.0.s8 %v6448
  %v6450 = vlaneseq
  %v6451 = vshrl.u32 %v6450, 7
  %v6452 = vsub.s32 %v6449, %v6451
  %v6453 = vrot.slane %v6446, %v6452
  %v6455 = vunpack.c.l.s4 1935823168
  %v6456 = vunpack.c.0.s8 %v6455
  %v6457 = vlaneseq
  %v6458 = vshrl.u32 %v6457, 7
  %v6459 = vsub.s32 %v6456, %v6458
  %v6460 = vrot.slane %v4814, %v6459
  %v6462 = vunpack.c.l.s4 1935823168
  %v6463 = vunpack.c.0.s8 %v6462
  %v6464 = vlaneseq
  %v6465 = vshrl.u32 %v6464, 7
  %v6466 = vsub.s32 %v6463, %v6465
  %v6467 = vrot.slane %v6460, %v6466
  %v6469 = vunpack.c.l.s4 1935823168
  %v6470 = vunpack.c.0.s8 %v6469
  %v6471 = vlaneseq
  %v6472 = vshrl.u32 %v6471, 7
  %v6473 = vsub.s32 %v6470, %v6472
  %v6474 = vrot.slane %v5150, %v6473
  %v6476 = vunpack.c.l.s4 1935823168
  %v6477 = vunpack.c.0.s8 %v6476
  %v6478 = vlaneseq
  %v6479 = vshrl.u32 %v6478, 7
  %v6480 = vsub.s32 %v6477, %v6479
  %v6481 = vrot.slane %v6474, %v6480
  %v6483 = vunpack.c.l.s4 1935823168
  %v6484 = vunpack.c.0.s8 %v6483
  %v6485 = vlaneseq
  %v6486 = vshrl.u32 %v6485, 7
  %v6487 = vsub.s32 %v6484, %v6486
  %v6488 = vrot.slane %v5486, %v6487
  %v6490 = vunpack.c.l.s4 1935823168
  %v6491 = vunpack.c.0.s8 %v6490
  %v6492 = vlaneseq
  %v6493 = vshrl.u32 %v6492, 7
  %v6494 = vsub.s32 %v6491, %v6493
  %v6495 = vrot.slane %v6488, %v6494
  %v6497 = vunpack.c.l.s4 1935823168
  %v6498 = vunpack.c.0.s8 %v6497
  %v6499 = vlaneseq
  %v6500 = vshrl.u32 %v6499, 7
  %v6501 = vsub.s32 %v6498, %v6500
  %v6502 = vrot.slane %v5822, %v6501
  %v6504 = vunpack.c.l.s4 1935823168
  %v6505 = vunpack.c.0.s8 %v6504
  %v6506 = vlaneseq
  %v6507 = vshrl.u32 %v6506, 7
  %v6508 = vsub.s32 %v6505, %v6507
  %v6509 = vrot.slane %v6502, %v6508
  %v6510 = vunpack.c.l.b16 %v6411
  %v6511 = vunpack.c.l.b16 %v6425
  %v6512 = vunpack.c.l.b16 %v6439
  %v6513 = vunpack.c.l.b16 %v6453
  %v6514 = vunpack.c.l.b16 %v6467
  %v6515 = vunpack.c.l.b16 %v6481
  %v6516 = vunpack.c.l.b16 %v6495
  %v6517 = vunpack.c.l.b16 %v6509
  %v6518 = vrot.slane %v6511, 7
  %v6519 = vsel %vm6234, %v6518, %v6510
  %v6520 = vrot.slane %v6512, 6
  %v6521 = vsel %vm6237, %v6520, %v6519
  %v6522 = vrot.slane %v6513, 5
  %v6523 = vsel %vm6240, %v6522, %v6521
  %v6524 = vrot.slane %v6514, 4
  %v6525 = vsel %vm6243, %v6524, %v6523
  %v6526 = vrot.slane %v6515, 3
  %v6527 = vsel %vm6246, %v6526, %v6525
  %v6528 = vrot.slane %v6516, 2
  %v6529 = vsel %vm6249, %v6528, %v6527
  %v6530 = vrot.slane %v6517, 1
  %v6531 = vsel %vm6252, %v6530, %v6529
  %v6532 = vpack.c.b16 %v6531, %v6531
  %6533 = vrot.lane.b32.xlu0 %v6532, 64
  %v6534 = vpop.permute.xlu0 %6533
  %vm6536 = vcmask 781824
  %6537 = vst.msk [vmem:[#allocation2] sm:$0xf] %vm6536, %v6534
  %v6539 = vunpack.c.l.s4 1935823168
  %v6540 = vunpack.c.0.s8 %v6539
  %v6541 = vlaneseq
  %v6542 = vshrl.u32 %v6541, 7
  %v6543 = vsub.s32 %v6540, %v6542
  %v6544 = vrot.slane %v3472, %v6543
  %v6546 = vunpack.c.l.s4 1935823168
  %v6547 = vunpack.c.0.s8 %v6546
  %v6548 = vlaneseq
  %v6549 = vshrl.u32 %v6548, 7
  %v6550 = vsub.s32 %v6547, %v6549
  %v6551 = vrot.slane %v6544, %v6550
  %v6553 = vunpack.c.l.s4 1935823168
  %v6554 = vunpack.c.0.s8 %v6553
  %v6555 = vlaneseq
  %v6556 = vshrl.u32 %v6555, 7
  %v6557 = vsub.s32 %v6554, %v6556
  %v6558 = vrot.slane %v3808, %v6557
  %v6560 = vunpack.c.l.s4 1935823168
  %v6561 = vunpack.c.0.s8 %v6560
  %v6562 = vlaneseq
  %v6563 = vshrl.u32 %v6562, 7
  %v6564 = vsub.s32 %v6561, %v6563
  %v6565 = vrot.slane %v6558, %v6564
  %v6567 = vunpack.c.l.s4 1935823168
  %v6568 = vunpack.c.0.s8 %v6567
  %v6569 = vlaneseq
  %v6570 = vshrl.u32 %v6569, 7
  %v6571 = vsub.s32 %v6568, %v6570
  %v6572 = vrot.slane %v4144, %v6571
  %v6574 = vunpack.c.l.s4 1935823168
  %v6575 = vunpack.c.0.s8 %v6574
  %v6576 = vlaneseq
  %v6577 = vshrl.u32 %v6576, 7
  %v6578 = vsub.s32 %v6575, %v6577
  %v6579 = vrot.slane %v6572, %v6578
  %v6581 = vunpack.c.l.s4 1935823168
  %v6582 = vunpack.c.0.s8 %v6581
  %v6583 = vlaneseq
  %v6584 = vshrl.u32 %v6583, 7
  %v6585 = vsub.s32 %v6582, %v6584
  %v6586 = vrot.slane %v4480, %v6585
  %v6588 = vunpack.c.l.s4 1935823168
  %v6589 = vunpack.c.0.s8 %v6588
  %v6590 = vlaneseq
  %v6591 = vshrl.u32 %v6590, 7
  %v6592 = vsub.s32 %v6589, %v6591
  %v6593 = vrot.slane %v6586, %v6592
  %v6595 = vunpack.c.l.s4 1935823168
  %v6596 = vunpack.c.0.s8 %v6595
  %v6597 = vlaneseq
  %v6598 = vshrl.u32 %v6597, 7
  %v6599 = vsub.s32 %v6596, %v6598
  %v6600 = vrot.slane %v4816, %v6599
  %v6602 = vunpack.c.l.s4 1935823168
  %v6603 = vunpack.c.0.s8 %v6602
  %v6604 = vlaneseq
  %v6605 = vshrl.u32 %v6604, 7
  %v6606 = vsub.s32 %v6603, %v6605
  %v6607 = vrot.slane %v6600, %v6606
  %v6609 = vunpack.c.l.s4 1935823168
  %v6610 = vunpack.c.0.s8 %v6609
  %v6611 = vlaneseq
  %v6612 = vshrl.u32 %v6611, 7
  %v6613 = vsub.s32 %v6610, %v6612
  %v6614 = vrot.slane %v5152, %v6613
  %v6616 = vunpack.c.l.s4 1935823168
  %v6617 = vunpack.c.0.s8 %v6616
  %v6618 = vlaneseq
  %v6619 = vshrl.u32 %v6618, 7
  %v6620 = vsub.s32 %v6617, %v6619
  %v6621 = vrot.slane %v6614, %v6620
  %v6623 = vunpack.c.l.s4 1935823168
  %v6624 = vunpack.c.0.s8 %v6623
  %v6625 = vlaneseq
  %v6626 = vshrl.u32 %v6625, 7
  %v6627 = vsub.s32 %v6624, %v6626
  %v6628 = vrot.slane %v5488, %v6627
  %v6630 = vunpack.c.l.s4 1935823168
  %v6631 = vunpack.c.0.s8 %v6630
  %v6632 = vlaneseq
  %v6633 = vshrl.u32 %v6632, 7
  %v6634 = vsub.s32 %v6631, %v6633
  %v6635 = vrot.slane %v6628, %v6634
  %v6637 = vunpack.c.l.s4 1935823168
  %v6638 = vunpack.c.0.s8 %v6637
  %v6639 = vlaneseq
  %v6640 = vshrl.u32 %v6639, 7
  %v6641 = vsub.s32 %v6638, %v6640
  %v6642 = vrot.slane %v5824, %v6641
  %v6644 = vunpack.c.l.s4 1935823168
  %v6645 = vunpack.c.0.s8 %v6644
  %v6646 = vlaneseq
  %v6647 = vshrl.u32 %v6646, 7
  %v6648 = vsub.s32 %v6645, %v6647
  %v6649 = vrot.slane %v6642, %v6648
  %v6650 = vunpack.c.l.b16 %v6551
  %v6651 = vunpack.c.l.b16 %v6565
  %v6652 = vunpack.c.l.b16 %v6579
  %v6653 = vunpack.c.l.b16 %v6593
  %v6654 = vunpack.c.l.b16 %v6607
  %v6655 = vunpack.c.l.b16 %v6621
  %v6656 = vunpack.c.l.b16 %v6635
  %v6657 = vunpack.c.l.b16 %v6649
  %v6658 = vrot.slane %v6651, 7
  %v6659 = vsel %vm6234, %v6658, %v6650
  %v6660 = vrot.slane %v6652, 6
  %v6661 = vsel %vm6237, %v6660, %v6659
  %v6662 = vrot.slane %v6653, 5
  %v6663 = vsel %vm6240, %v6662, %v6661
  %v6664 = vrot.slane %v6654, 4
  %v6665 = vsel %vm6243, %v6664, %v6663
  %v6666 = vrot.slane %v6655, 3
  %v6667 = vsel %vm6246, %v6666, %v6665
  %v6668 = vrot.slane %v6656, 2
  %v6669 = vsel %vm6249, %v6668, %v6667
  %v6670 = vrot.slane %v6657, 1
  %v6671 = vsel %vm6252, %v6670, %v6669
  %v6672 = vpack.c.b16 %v6671, %v6671
  %6673 = vrot.lane.b32.xlu0 %v6672, 96
  %v6674 = vpop.permute.xlu0 %6673
  %vm6676 = vcmask 1044224
  %6677 = vst.msk [vmem:[#allocation2] sm:$0xf] %vm6676, %v6674
  %v6679 = vunpack.c.l.s4 1935823168
  %v6680 = vunpack.c.0.s8 %v6679
  %v6681 = vlaneseq
  %v6682 = vshrl.u32 %v6681, 7
  %v6683 = vsub.s32 %v6680, %v6682
  %v6684 = vrot.slane %v3455, %v6683
  %v6686 = vunpack.c.l.s4 1935823168
  %v6687 = vunpack.c.0.s8 %v6686
  %v6688 = vlaneseq
  %v6689 = vshrl.u32 %v6688, 7
  %v6690 = vsub.s32 %v6687, %v6689
  %v6691 = vrot.slane %v6684, %v6690
  %v6693 = vunpack.c.l.s4 1935823168
  %v6694 = vunpack.c.0.s8 %v6693
  %v6695 = vlaneseq
  %v6696 = vshrl.u32 %v6695, 7
  %v6697 = vsub.s32 %v6694, %v6696
  %v6698 = vrot.slane %v3791, %v6697
  %v6700 = vunpack.c.l.s4 1935823168
  %v6701 = vunpack.c.0.s8 %v6700
  %v6702 = vlaneseq
  %v6703 = vshrl.u32 %v6702, 7
  %v6704 = vsub.s32 %v6701, %v6703
  %v6705 = vrot.slane %v6698, %v6704
  %v6707 = vunpack.c.l.s4 1935823168
  %v6708 = vunpack.c.0.s8 %v6707
  %v6709 = vlaneseq
  %v6710 = vshrl.u32 %v6709, 7
  %v6711 = vsub.s32 %v6708, %v6710
  %v6712 = vrot.slane %v4127, %v6711
  %v6714 = vunpack.c.l.s4 1935823168
  %v6715 = vunpack.c.0.s8 %v6714
  %v6716 = vlaneseq
  %v6717 = vshrl.u32 %v6716, 7
  %v6718 = vsub.s32 %v6715, %v6717
  %v6719 = vrot.slane %v6712, %v6718
  %v6721 = vunpack.c.l.s4 1935823168
  %v6722 = vunpack.c.0.s8 %v6721
  %v6723 = vlaneseq
  %v6724 = vshrl.u32 %v6723, 7
  %v6725 = vsub.s32 %v6722, %v6724
  %v6726 = vrot.slane %v4463, %v6725
  %v6728 = vunpack.c.l.s4 1935823168
  %v6729 = vunpack.c.0.s8 %v6728
  %v6730 = vlaneseq
  %v6731 = vshrl.u32 %v6730, 7
  %v6732 = vsub.s32 %v6729, %v6731
  %v6733 = vrot.slane %v6726, %v6732
  %v6735 = vunpack.c.l.s4 1935823168
  %v6736 = vunpack.c.0.s8 %v6735
  %v6737 = vlaneseq
  %v6738 = vshrl.u32 %v6737, 7
  %v6739 = vsub.s32 %v6736, %v6738
  %v6740 = vrot.slane %v4799, %v6739
  %v6742 = vunpack.c.l.s4 1935823168
  %v6743 = vunpack.c.0.s8 %v6742
  %v6744 = vlaneseq
  %v6745 = vshrl.u32 %v6744, 7
  %v6746 = vsub.s32 %v6743, %v6745
  %v6747 = vrot.slane %v6740, %v6746
  %v6749 = vunpack.c.l.s4 1935823168
  %v6750 = vunpack.c.0.s8 %v6749
  %v6751 = vlaneseq
  %v6752 = vshrl.u32 %v6751, 7
  %v6753 = vsub.s32 %v6750, %v6752
  %v6754 = vrot.slane %v5135, %v6753
  %v6756 = vunpack.c.l.s4 1935823168
  %v6757 = vunpack.c.0.s8 %v6756
  %v6758 = vlaneseq
  %v6759 = vshrl.u32 %v6758, 7
  %v6760 = vsub.s32 %v6757, %v6759
  %v6761 = vrot.slane %v6754, %v6760
  %v6763 = vunpack.c.l.s4 1935823168
  %v6764 = vunpack.c.0.s8 %v6763
  %v6765 = vlaneseq
  %v6766 = vshrl.u32 %v6765, 7
  %v6767 = vsub.s32 %v6764, %v6766
  %v6768 = vrot.slane %v5471, %v6767
  %v6770 = vunpack.c.l.s4 1935823168
  %v6771 = vunpack.c.0.s8 %v6770
  %v6772 = vlaneseq
  %v6773 = vshrl.u32 %v6772, 7
  %v6774 = vsub.s32 %v6771, %v6773
  %v6775 = vrot.slane %v6768, %v6774
  %v6777 = vunpack.c.l.s4 1935823168
  %v6778 = vunpack.c.0.s8 %v6777
  %v6779 = vlaneseq
  %v6780 = vshrl.u32 %v6779, 7
  %v6781 = vsub.s32 %v6778, %v6780
  %v6782 = vrot.slane %v5807, %v6781
  %v6784 = vunpack.c.l.s4 1935823168
  %v6785 = vunpack.c.0.s8 %v6784
  %v6786 = vlaneseq
  %v6787 = vshrl.u32 %v6786, 7
  %v6788 = vsub.s32 %v6785, %v6787
  %v6789 = vrot.slane %v6782, %v6788
  %v6790 = vunpack.c.l.b16 %v6691
  %v6791 = vunpack.c.l.b16 %v6705
  %v6792 = vunpack.c.l.b16 %v6719
  %v6793 = vunpack.c.l.b16 %v6733
  %v6794 = vunpack.c.l.b16 %v6747
  %v6795 = vunpack.c.l.b16 %v6761
  %v6796 = vunpack.c.l.b16 %v6775
  %v6797 = vunpack.c.l.b16 %v6789
  %v6798 = vrot.slane %v6791, 7
  %v6799 = vsel %vm6234, %v6798, %v6790
  %v6800 = vrot.slane %v6792, 6
  %v6801 = vsel %vm6237, %v6800, %v6799
  %v6802 = vrot.slane %v6793, 5
  %v6803 = vsel %vm6240, %v6802, %v6801
  %v6804 = vrot.slane %v6794, 4
  %v6805 = vsel %vm6243, %v6804, %v6803
  %v6806 = vrot.slane %v6795, 3
  %v6807 = vsel %vm6246, %v6806, %v6805
  %v6808 = vrot.slane %v6796, 2
  %v6809 = vsel %vm6249, %v6808, %v6807
  %v6810 = vrot.slane %v6797, 1
  %v6811 = vsel %vm6252, %v6810, %v6809
  %v6812 = vpack.c.b16 %v6811, %v6811
  %6814 = vst.msk [vmem:[#allocation2 + $0x4] sm:$0xf] %vm6256, %v6812
  %v6816 = vunpack.c.l.s4 1935823168
  %v6817 = vunpack.c.0.s8 %v6816
  %v6818 = vlaneseq
  %v6819 = vshrl.u32 %v6818, 7
  %v6820 = vsub.s32 %v6817, %v6819
  %v6821 = vrot.slane %v3469, %v6820
  %v6823 = vunpack.c.l.s4 1935823168
  %v6824 = vunpack.c.0.s8 %v6823
  %v6825 = vlaneseq
  %v6826 = vshrl.u32 %v6825, 7
  %v6827 = vsub.s32 %v6824, %v6826
  %v6828 = vrot.slane %v6821, %v6827
  %v6830 = vunpack.c.l.s4 1935823168
  %v6831 = vunpack.c.0.s8 %v6830
  %v6832 = vlaneseq
  %v6833 = vshrl.u32 %v6832, 7
  %v6834 = vsub.s32 %v6831, %v6833
  %v6835 = vrot.slane %v3805, %v6834
  %v6837 = vunpack.c.l.s4 1935823168
  %v6838 = vunpack.c.0.s8 %v6837
  %v6839 = vlaneseq
  %v6840 = vshrl.u32 %v6839, 7
  %v6841 = vsub.s32 %v6838, %v6840
  %v6842 = vrot.slane %v6835, %v6841
  %v6844 = vunpack.c.l.s4 1935823168
  %v6845 = vunpack.c.0.s8 %v6844
  %v6846 = vlaneseq
  %v6847 = vshrl.u32 %v6846, 7
  %v6848 = vsub.s32 %v6845, %v6847
  %v6849 = vrot.slane %v4141, %v6848
  %v6851 = vunpack.c.l.s4 1935823168
  %v6852 = vunpack.c.0.s8 %v6851
  %v6853 = vlaneseq
  %v6854 = vshrl.u32 %v6853, 7
  %v6855 = vsub.s32 %v6852, %v6854
  %v6856 = vrot.slane %v6849, %v6855
  %v6858 = vunpack.c.l.s4 1935823168
  %v6859 = vunpack.c.0.s8 %v6858
  %v6860 = vlaneseq
  %v6861 = vshrl.u32 %v6860, 7
  %v6862 = vsub.s32 %v6859, %v6861
  %v6863 = vrot.slane %v4477, %v6862
  %v6865 = vunpack.c.l.s4 1935823168
  %v6866 = vunpack.c.0.s8 %v6865
  %v6867 = vlaneseq
  %v6868 = vshrl.u32 %v6867, 7
  %v6869 = vsub.s32 %v6866, %v6868
  %v6870 = vrot.slane %v6863, %v6869
  %v6872 = vunpack.c.l.s4 1935823168
  %v6873 = vunpack.c.0.s8 %v6872
  %v6874 = vlaneseq
  %v6875 = vshrl.u32 %v6874, 7
  %v6876 = vsub.s32 %v6873, %v6875
  %v6877 = vrot.slane %v4813, %v6876
  %v6879 = vunpack.c.l.s4 1935823168
  %v6880 = vunpack.c.0.s8 %v6879
  %v6881 = vlaneseq
  %v6882 = vshrl.u32 %v6881, 7
  %v6883 = vsub.s32 %v6880, %v6882
  %v6884 = vrot.slane %v6877, %v6883
  %v6886 = vunpack.c.l.s4 1935823168
  %v6887 = vunpack.c.0.s8 %v6886
  %v6888 = vlaneseq
  %v6889 = vshrl.u32 %v6888, 7
  %v6890 = vsub.s32 %v6887, %v6889
  %v6891 = vrot.slane %v5149, %v6890
  %v6893 = vunpack.c.l.s4 1935823168
  %v6894 = vunpack.c.0.s8 %v6893
  %v6895 = vlaneseq
  %v6896 = vshrl.u32 %v6895, 7
  %v6897 = vsub.s32 %v6894, %v6896
  %v6898 = vrot.slane %v6891, %v6897
  %v6900 = vunpack.c.l.s4 1935823168
  %v6901 = vunpack.c.0.s8 %v6900
  %v6902 = vlaneseq
  %v6903 = vshrl.u32 %v6902, 7
  %v6904 = vsub.s32 %v6901, %v6903
  %v6905 = vrot.slane %v5485, %v6904
  %v6907 = vunpack.c.l.s4 1935823168
  %v6908 = vunpack.c.0.s8 %v6907
  %v6909 = vlaneseq
  %v6910 = vshrl.u32 %v6909, 7
  %v6911 = vsub.s32 %v6908, %v6910
  %v6912 = vrot.slane %v6905, %v6911
  %v6914 = vunpack.c.l.s4 1935823168
  %v6915 = vunpack.c.0.s8 %v6914
  %v6916 = vlaneseq
  %v6917 = vshrl.u32 %v6916, 7
  %v6918 = vsub.s32 %v6915, %v6917
  %v6919 = vrot.slane %v5821, %v6918
  %v6921 = vunpack.c.l.s4 1935823168
  %v6922 = vunpack.c.0.s8 %v6921
  %v6923 = vlaneseq
  %v6924 = vshrl.u32 %v6923, 7
  %v6925 = vsub.s32 %v6922, %v6924
  %v6926 = vrot.slane %v6919, %v6925
  %v6927 = vunpack.c.l.b16 %v6828
  %v6928 = vunpack.c.l.b16 %v6842
  %v6929 = vunpack.c.l.b16 %v6856
  %v6930 = vunpack.c.l.b16 %v6870
  %v6931 = vunpack.c.l.b16 %v6884
  %v6932 = vunpack.c.l.b16 %v6898
  %v6933 = vunpack.c.l.b16 %v6912
  %v6934 = vunpack.c.l.b16 %v6926
  %v6935 = vrot.slane %v6928, 7
  %v6936 = vsel %vm6234, %v6935, %v6927
  %v6937 = vrot.slane %v6929, 6
  %v6938 = vsel %vm6237, %v6937, %v6936
  %v6939 = vrot.slane %v6930, 5
  %v6940 = vsel %vm6240, %v6939, %v6938
  %v6941 = vrot.slane %v6931, 4
  %v6942 = vsel %vm6243, %v6941, %v6940
  %v6943 = vrot.slane %v6932, 3
  %v6944 = vsel %vm6246, %v6943, %v6942
  %v6945 = vrot.slane %v6933, 2
  %v6946 = vsel %vm6249, %v6945, %v6944
  %v6947 = vrot.slane %v6934, 1
  %v6948 = vsel %vm6252, %v6947, %v6946
  %v6949 = vpack.c.b16 %v6948, %v6948
  %6950 = vrot.lane.b32.xlu0 %v6949, 32
  %v6951 = vpop.permute.xlu0 %6950
  %6953 = vst.msk [vmem:[#allocation2 + $0x4] sm:$0xf] %vm6396, %v6951
  %v6955 = vunpack.c.l.s4 1935823168
  %v6956 = vunpack.c.0.s8 %v6955
  %v6957 = vlaneseq
  %v6958 = vshrl.u32 %v6957, 7
  %v6959 = vsub.s32 %v6956, %v6958
  %v6960 = vrot.slane %v3471, %v6959
  %v6962 = vunpack.c.l.s4 1935823168
  %v6963 = vunpack.c.0.s8 %v6962
  %v6964 = vlaneseq
  %v6965 = vshrl.u32 %v6964, 7
  %v6966 = vsub.s32 %v6963, %v6965
  %v6967 = vrot.slane %v6960, %v6966
  %v6969 = vunpack.c.l.s4 1935823168
  %v6970 = vunpack.c.0.s8 %v6969
  %v6971 = vlaneseq
  %v6972 = vshrl.u32 %v6971, 7
  %v6973 = vsub.s32 %v6970, %v6972
  %v6974 = vrot.slane %v3807, %v6973
  %v6976 = vunpack.c.l.s4 1935823168
  %v6977 = vunpack.c.0.s8 %v6976
  %v6978 = vlaneseq
  %v6979 = vshrl.u32 %v6978, 7
  %v6980 = vsub.s32 %v6977, %v6979
  %v6981 = vrot.slane %v6974, %v6980
  %v6983 = vunpack.c.l.s4 1935823168
  %v6984 = vunpack.c.0.s8 %v6983
  %v6985 = vlaneseq
  %v6986 = vshrl.u32 %v6985, 7
  %v6987 = vsub.s32 %v6984, %v6986
  %v6988 = vrot.slane %v4143, %v6987
  %v6990 = vunpack.c.l.s4 1935823168
  %v6991 = vunpack.c.0.s8 %v6990
  %v6992 = vlaneseq
  %v6993 = vshrl.u32 %v6992, 7
  %v6994 = vsub.s32 %v6991, %v6993
  %v6995 = vrot.slane %v6988, %v6994
  %v6997 = vunpack.c.l.s4 1935823168
  %v6998 = vunpack.c.0.s8 %v6997
  %v6999 = vlaneseq
  %v7000 = vshrl.u32 %v6999, 7
  %v7001 = vsub.s32 %v6998, %v7000
  %v7002 = vrot.slane %v4479, %v7001
  %v7004 = vunpack.c.l.s4 1935823168
  %v7005 = vunpack.c.0.s8 %v7004
  %v7006 = vlaneseq
  %v7007 = vshrl.u32 %v7006, 7
  %v7008 = vsub.s32 %v7005, %v7007
  %v7009 = vrot.slane %v7002, %v7008
  %v7011 = vunpack.c.l.s4 1935823168
  %v7012 = vunpack.c.0.s8 %v7011
  %v7013 = vlaneseq
  %v7014 = vshrl.u32 %v7013, 7
  %v7015 = vsub.s32 %v7012, %v7014
  %v7016 = vrot.slane %v4815, %v7015
  %v7018 = vunpack.c.l.s4 1935823168
  %v7019 = vunpack.c.0.s8 %v7018
  %v7020 = vlaneseq
  %v7021 = vshrl.u32 %v7020, 7
  %v7022 = vsub.s32 %v7019, %v7021
  %v7023 = vrot.slane %v7016, %v7022
  %v7025 = vunpack.c.l.s4 1935823168
  %v7026 = vunpack.c.0.s8 %v7025
  %v7027 = vlaneseq
  %v7028 = vshrl.u32 %v7027, 7
  %v7029 = vsub.s32 %v7026, %v7028
  %v7030 = vrot.slane %v5151, %v7029
  %v7032 = vunpack.c.l.s4 1935823168
  %v7033 = vunpack.c.0.s8 %v7032
  %v7034 = vlaneseq
  %v7035 = vshrl.u32 %v7034, 7
  %v7036 = vsub.s32 %v7033, %v7035
  %v7037 = vrot.slane %v7030, %v7036
  %v7039 = vunpack.c.l.s4 1935823168
  %v7040 = vunpack.c.0.s8 %v7039
  %v7041 = vlaneseq
  %v7042 = vshrl.u32 %v7041, 7
  %v7043 = vsub.s32 %v7040, %v7042
  %v7044 = vrot.slane %v5487, %v7043
  %v7046 = vunpack.c.l.s4 1935823168
  %v7047 = vunpack.c.0.s8 %v7046
  %v7048 = vlaneseq
  %v7049 = vshrl.u32 %v7048, 7
  %v7050 = vsub.s32 %v7047, %v7049
  %v7051 = vrot.slane %v7044, %v7050
  %v7053 = vunpack.c.l.s4 1935823168
  %v7054 = vunpack.c.0.s8 %v7053
  %v7055 = vlaneseq
  %v7056 = vshrl.u32 %v7055, 7
  %v7057 = vsub.s32 %v7054, %v7056
  %v7058 = vrot.slane %v5823, %v7057
  %v7060 = vunpack.c.l.s4 1935823168
  %v7061 = vunpack.c.0.s8 %v7060
  %v7062 = vlaneseq
  %v7063 = vshrl.u32 %v7062, 7
  %v7064 = vsub.s32 %v7061, %v7063
  %v7065 = vrot.slane %v7058, %v7064
  %v7066 = vunpack.c.l.b16 %v6967
  %v7067 = vunpack.c.l.b16 %v6981
  %v7068 = vunpack.c.l.b16 %v6995
  %v7069 = vunpack.c.l.b16 %v7009
  %v7070 = vunpack.c.l.b16 %v7023
  %v7071 = vunpack.c.l.b16 %v7037
  %v7072 = vunpack.c.l.b16 %v7051
  %v7073 = vunpack.c.l.b16 %v7065
  %v7074 = vrot.slane %v7067, 7
  %v7075 = vsel %vm6234, %v7074, %v7066
  %v7076 = vrot.slane %v7068, 6
  %v7077 = vsel %vm6237, %v7076, %v7075
  %v7078 = vrot.slane %v7069, 5
  %v7079 = vsel %vm6240, %v7078, %v7077
  %v7080 = vrot.slane %v7070, 4
  %v7081 = vsel %vm6243, %v7080, %v7079
  %v7082 = vrot.slane %v7071, 3
  %v7083 = vsel %vm6246, %v7082, %v7081
  %v7084 = vrot.slane %v7072, 2
  %v7085 = vsel %vm6249, %v7084, %v7083
  %v7086 = vrot.slane %v7073, 1
  %v7087 = vsel %vm6252, %v7086, %v7085
  %v7088 = vpack.c.b16 %v7087, %v7087
  %7089 = vrot.lane.b32.xlu0 %v7088, 64
  %v7090 = vpop.permute.xlu0 %7089
  %7092 = vst.msk [vmem:[#allocation2 + $0x4] sm:$0xf] %vm6536, %v7090
  %v7094 = vunpack.c.l.s4 1935823168
  %v7095 = vunpack.c.0.s8 %v7094
  %v7096 = vlaneseq
  %v7097 = vshrl.u32 %v7096, 7
  %v7098 = vsub.s32 %v7095, %v7097
  %v7099 = vrot.slane %v3496, %v7098
  %v7101 = vunpack.c.l.s4 1935823168
  %v7102 = vunpack.c.0.s8 %v7101
  %v7103 = vlaneseq
  %v7104 = vshrl.u32 %v7103, 7
  %v7105 = vsub.s32 %v7102, %v7104
  %v7106 = vrot.slane %v7099, %v7105
  %v7108 = vunpack.c.l.s4 1935823168
  %v7109 = vunpack.c.0.s8 %v7108
  %v7110 = vlaneseq
  %v7111 = vshrl.u32 %v7110, 7
  %v7112 = vsub.s32 %v7109, %v7111
  %v7113 = vrot.slane %v3832, %v7112
  %v7115 = vunpack.c.l.s4 1935823168
  %v7116 = vunpack.c.0.s8 %v7115
  %v7117 = vlaneseq
  %v7118 = vshrl.u32 %v7117, 7
  %v7119 = vsub.s32 %v7116, %v7118
  %v7120 = vrot.slane %v7113, %v7119
  %v7122 = vunpack.c.l.s4 1935823168
  %v7123 = vunpack.c.0.s8 %v7122
  %v7124 = vlaneseq
  %v7125 = vshrl.u32 %v7124, 7
  %v7126 = vsub.s32 %v7123, %v7125
  %v7127 = vrot.slane %v4168, %v7126
  %v7129 = vunpack.c.l.s4 1935823168
  %v7130 = vunpack.c.0.s8 %v7129
  %v7131 = vlaneseq
  %v7132 = vshrl.u32 %v7131, 7
  %v7133 = vsub.s32 %v7130, %v7132
  %v7134 = vrot.slane %v7127, %v7133
  %v7136 = vunpack.c.l.s4 1935823168
  %v7137 = vunpack.c.0.s8 %v7136
  %v7138 = vlaneseq
  %v7139 = vshrl.u32 %v7138, 7
  %v7140 = vsub.s32 %v7137, %v7139
  %v7141 = vrot.slane %v4504, %v7140
  %v7143 = vunpack.c.l.s4 1935823168
  %v7144 = vunpack.c.0.s8 %v7143
  %v7145 = vlaneseq
  %v7146 = vshrl.u32 %v7145, 7
  %v7147 = vsub.s32 %v7144, %v7146
  %v7148 = vrot.slane %v7141, %v7147
  %v7150 = vunpack.c.l.s4 1935823168
  %v7151 = vunpack.c.0.s8 %v7150
  %v7152 = vlaneseq
  %v7153 = vshrl.u32 %v7152, 7
  %v7154 = vsub.s32 %v7151, %v7153
  %v7155 = vrot.slane %v4840, %v7154
  %v7157 = vunpack.c.l.s4 1935823168
  %v7158 = vunpack.c.0.s8 %v7157
  %v7159 = vlaneseq
  %v7160 = vshrl.u32 %v7159, 7
  %v7161 = vsub.s32 %v7158, %v7160
  %v7162 = vrot.slane %v7155, %v7161
  %v7164 = vunpack.c.l.s4 1935823168
  %v7165 = vunpack.c.0.s8 %v7164
  %v7166 = vlaneseq
  %v7167 = vshrl.u32 %v7166, 7
  %v7168 = vsub.s32 %v7165, %v7167
  %v7169 = vrot.slane %v5176, %v7168
  %v7171 = vunpack.c.l.s4 1935823168
  %v7172 = vunpack.c.0.s8 %v7171
  %v7173 = vlaneseq
  %v7174 = vshrl.u32 %v7173, 7
  %v7175 = vsub.s32 %v7172, %v7174
  %v7176 = vrot.slane %v7169, %v7175
  %v7178 = vunpack.c.l.s4 1935823168
  %v7179 = vunpack.c.0.s8 %v7178
  %v7180 = vlaneseq
  %v7181 = vshrl.u32 %v7180, 7
  %v7182 = vsub.s32 %v7179, %v7181
  %v7183 = vrot.slane %v5512, %v7182
  %v7185 = vunpack.c.l.s4 1935823168
  %v7186 = vunpack.c.0.s8 %v7185
  %v7187 = vlaneseq
  %v7188 = vshrl.u32 %v7187, 7
  %v7189 = vsub.s32 %v7186, %v7188
  %v7190 = vrot.slane %v7183, %v7189
  %v7192 = vunpack.c.l.s4 1935823168
  %v7193 = vunpack.c.0.s8 %v7192
  %v7194 = vlaneseq
  %v7195 = vshrl.u32 %v7194, 7
  %v7196 = vsub.s32 %v7193, %v7195
  %v7197 = vrot.slane %v5848, %v7196
  %v7199 = vunpack.c.l.s4 1935823168
  %v7200 = vunpack.c.0.s8 %v7199
  %v7201 = vlaneseq
  %v7202 = vshrl.u32 %v7201, 7
  %v7203 = vsub.s32 %v7200, %v7202
  %v7204 = vrot.slane %v7197, %v7203
  %v7205 = vunpack.c.l.b16 %v7106
  %v7206 = vunpack.c.l.b16 %v7120
  %v7207 = vunpack.c.l.b16 %v7134
  %v7208 = vunpack.c.l.b16 %v7148
  %v7209 = vunpack.c.l.b16 %v7162
  %v7210 = vunpack.c.l.b16 %v7176
  %v7211 = vunpack.c.l.b16 %v7190
  %v7212 = vunpack.c.l.b16 %v7204
  %v7213 = vrot.slane %v7206, 7
  %v7214 = vsel %vm6234, %v7213, %v7205
  %v7215 = vrot.slane %v7207, 6
  %v7216 = vsel %vm6237, %v7215, %v7214
  %v7217 = vrot.slane %v7208, 5
  %v7218 = vsel %vm6240, %v7217, %v7216
  %v7219 = vrot.slane %v7209, 4
  %v7220 = vsel %vm6243, %v7219, %v7218
  %v7221 = vrot.slane %v7210, 3
  %v7222 = vsel %vm6246, %v7221, %v7220
  %v7223 = vrot.slane %v7211, 2
  %v7224 = vsel %vm6249, %v7223, %v7222
  %v7225 = vrot.slane %v7212, 1
  %v7226 = vsel %vm6252, %v7225, %v7224
  %v7227 = vpack.c.b16 %v7226, %v7226
  %7228 = vrot.lane.b32.xlu0 %v7227, 96
  %v7229 = vpop.permute.xlu0 %7228
  %7231 = vst.msk [vmem:[#allocation2 + $0x4] sm:$0xf] %vm6676, %v7229
  %v7233 = vunpack.c.l.s4 1935823168
  %v7234 = vunpack.c.0.s8 %v7233
  %v7235 = vlaneseq
  %v7236 = vshrl.u32 %v7235, 7
  %v7237 = vsub.s32 %v7234, %v7236
  %v7238 = vrot.slane %v3510, %v7237
  %v7240 = vunpack.c.l.s4 1935823168
  %v7241 = vunpack.c.0.s8 %v7240
  %v7242 = vlaneseq
  %v7243 = vshrl.u32 %v7242, 7
  %v7244 = vsub.s32 %v7241, %v7243
  %v7245 = vrot.slane %v7238, %v7244
  %v7247 = vunpack.c.l.s4 1935823168
  %v7248 = vunpack.c.0.s8 %v7247
  %v7249 = vlaneseq
  %v7250 = vshrl.u32 %v7249, 7
  %v7251 = vsub.s32 %v7248, %v7250
  %v7252 = vrot.slane %v3846, %v7251
  %v7254 = vunpack.c.l.s4 1935823168
  %v7255 = vunpack.c.0.s8 %v7254
  %v7256 = vlaneseq
  %v7257 = vshrl.u32 %v7256, 7
  %v7258 = vsub.s32 %v7255, %v7257
  %v7259 = vrot.slane %v7252, %v7258
  %v7261 = vunpack.c.l.s4 1935823168
  %v7262 = vunpack.c.0.s8 %v7261
  %v7263 = vlaneseq
  %v7264 = vshrl.u32 %v7263, 7
  %v7265 = vsub.s32 %v7262, %v7264
  %v7266 = vrot.slane %v4182, %v7265
  %v7268 = vunpack.c.l.s4 1935823168
  %v7269 = vunpack.c.0.s8 %v7268
  %v7270 = vlaneseq
  %v7271 = vshrl.u32 %v7270, 7
  %v7272 = vsub.s32 %v7269, %v7271
  %v7273 = vrot.slane %v7266, %v7272
  %v7275 = vunpack.c.l.s4 1935823168
  %v7276 = vunpack.c.0.s8 %v7275
  %v7277 = vlaneseq
  %v7278 = vshrl.u32 %v7277, 7
  %v7279 = vsub.s32 %v7276, %v7278
  %v7280 = vrot.slane %v4518, %v7279
  %v7282 = vunpack.c.l.s4 1935823168
  %v7283 = vunpack.c.0.s8 %v7282
  %v7284 = vlaneseq
  %v7285 = vshrl.u32 %v7284, 7
  %v7286 = vsub.s32 %v7283, %v7285
  %v7287 = vrot.slane %v7280, %v7286
  %v7289 = vunpack.c.l.s4 1935823168
  %v7290 = vunpack.c.0.s8 %v7289
  %v7291 = vlaneseq
  %v7292 = vshrl.u32 %v7291, 7
  %v7293 = vsub.s32 %v7290, %v7292
  %v7294 = vrot.slane %v4854, %v7293
  %v7296 = vunpack.c.l.s4 1935823168
  %v7297 = vunpack.c.0.s8 %v7296
  %v7298 = vlaneseq
  %v7299 = vshrl.u32 %v7298, 7
  %v7300 = vsub.s32 %v7297, %v7299
  %v7301 = vrot.slane %v7294, %v7300
  %v7303 = vunpack.c.l.s4 1935823168
  %v7304 = vunpack.c.0.s8 %v7303
  %v7305 = vlaneseq
  %v7306 = vshrl.u32 %v7305, 7
  %v7307 = vsub.s32 %v7304, %v7306
  %v7308 = vrot.slane %v5190, %v7307
  %v7310 = vunpack.c.l.s4 1935823168
  %v7311 = vunpack.c.0.s8 %v7310
  %v7312 = vlaneseq
  %v7313 = vshrl.u32 %v7312, 7
  %v7314 = vsub.s32 %v7311, %v7313
  %v7315 = vrot.slane %v7308, %v7314
  %v7317 = vunpack.c.l.s4 1935823168
  %v7318 = vunpack.c.0.s8 %v7317
  %v7319 = vlaneseq
  %v7320 = vshrl.u32 %v7319, 7
  %v7321 = vsub.s32 %v7318, %v7320
  %v7322 = vrot.slane %v5526, %v7321
  %v7324 = vunpack.c.l.s4 1935823168
  %v7325 = vunpack.c.0.s8 %v7324
  %v7326 = vlaneseq
  %v7327 = vshrl.u32 %v7326, 7
  %v7328 = vsub.s32 %v7325, %v7327
  %v7329 = vrot.slane %v7322, %v7328
  %v7331 = vunpack.c.l.s4 1935823168
  %v7332 = vunpack.c.0.s8 %v7331
  %v7333 = vlaneseq
  %v7334 = vshrl.u32 %v7333, 7
  %v7335 = vsub.s32 %v7332, %v7334
  %v7336 = vrot.slane %v5862, %v7335
  %v7338 = vunpack.c.l.s4 1935823168
  %v7339 = vunpack.c.0.s8 %v7338
  %v7340 = vlaneseq
  %v7341 = vshrl.u32 %v7340, 7
  %v7342 = vsub.s32 %v7339, %v7341
  %v7343 = vrot.slane %v7336, %v7342
  %v7344 = vunpack.c.l.b16 %v7245
  %v7345 = vunpack.c.l.b16 %v7259
  %v7346 = vunpack.c.l.b16 %v7273
  %v7347 = vunpack.c.l.b16 %v7287
  %v7348 = vunpack.c.l.b16 %v7301
  %v7349 = vunpack.c.l.b16 %v7315
  %v7350 = vunpack.c.l.b16 %v7329
  %v7351 = vunpack.c.l.b16 %v7343
  %v7352 = vrot.slane %v7345, 7
  %v7353 = vsel %vm6234, %v7352, %v7344
  %v7354 = vrot.slane %v7346, 6
  %v7355 = vsel %vm6237, %v7354, %v7353
  %v7356 = vrot.slane %v7347, 5
  %v7357 = vsel %vm6240, %v7356, %v7355
  %v7358 = vrot.slane %v7348, 4
  %v7359 = vsel %vm6243, %v7358, %v7357
  %v7360 = vrot.slane %v7349, 3
  %v7361 = vsel %vm6246, %v7360, %v7359
  %v7362 = vrot.slane %v7350, 2
  %v7363 = vsel %vm6249, %v7362, %v7361
  %v7364 = vrot.slane %v7351, 1
  %v7365 = vsel %vm6252, %v7364, %v7363
  %v7366 = vpack.c.b16 %v7365, %v7365
  %7368 = vst.msk [vmem:[#allocation2 + $0x8] sm:$0xf] %vm6256, %v7366
  %v7370 = vunpack.c.l.s4 1935823168
  %v7371 = vunpack.c.0.s8 %v7370
  %v7372 = vlaneseq
  %v7373 = vshrl.u32 %v7372, 7
  %v7374 = vsub.s32 %v7371, %v7373
  %v7375 = vrot.slane %v3518, %v7374
  %v7377 = vunpack.c.l.s4 1935823168
  %v7378 = vunpack.c.0.s8 %v7377
  %v7379 = vlaneseq
  %v7380 = vshrl.u32 %v7379, 7
  %v7381 = vsub.s32 %v7378, %v7380
  %v7382 = vrot.slane %v7375, %v7381
  %v7384 = vunpack.c.l.s4 1935823168
  %v7385 = vunpack.c.0.s8 %v7384
  %v7386 = vlaneseq
  %v7387 = vshrl.u32 %v7386, 7
  %v7388 = vsub.s32 %v7385, %v7387
  %v7389 = vrot.slane %v3854, %v7388
  %v7391 = vunpack.c.l.s4 1935823168
  %v7392 = vunpack.c.0.s8 %v7391
  %v7393 = vlaneseq
  %v7394 = vshrl.u32 %v7393, 7
  %v7395 = vsub.s32 %v7392, %v7394
  %v7396 = vrot.slane %v7389, %v7395
  %v7398 = vunpack.c.l.s4 1935823168
  %v7399 = vunpack.c.0.s8 %v7398
  %v7400 = vlaneseq
  %v7401 = vshrl.u32 %v7400, 7
  %v7402 = vsub.s32 %v7399, %v7401
  %v7403 = vrot.slane %v4190, %v7402
  %v7405 = vunpack.c.l.s4 1935823168
  %v7406 = vunpack.c.0.s8 %v7405
  %v7407 = vlaneseq
  %v7408 = vshrl.u32 %v7407, 7
  %v7409 = vsub.s32 %v7406, %v7408
  %v7410 = vrot.slane %v7403, %v7409
  %v7412 = vunpack.c.l.s4 1935823168
  %v7413 = vunpack.c.0.s8 %v7412
  %v7414 = vlaneseq
  %v7415 = vshrl.u32 %v7414, 7
  %v7416 = vsub.s32 %v7413, %v7415
  %v7417 = vrot.slane %v4526, %v7416
  %v7419 = vunpack.c.l.s4 1935823168
  %v7420 = vunpack.c.0.s8 %v7419
  %v7421 = vlaneseq
  %v7422 = vshrl.u32 %v7421, 7
  %v7423 = vsub.s32 %v7420, %v7422
  %v7424 = vrot.slane %v7417, %v7423
  %v7426 = vunpack.c.l.s4 1935823168
  %v7427 = vunpack.c.0.s8 %v7426
  %v7428 = vlaneseq
  %v7429 = vshrl.u32 %v7428, 7
  %v7430 = vsub.s32 %v7427, %v7429
  %v7431 = vrot.slane %v4862, %v7430
  %v7433 = vunpack.c.l.s4 1935823168
  %v7434 = vunpack.c.0.s8 %v7433
  %v7435 = vlaneseq
  %v7436 = vshrl.u32 %v7435, 7
  %v7437 = vsub.s32 %v7434, %v7436
  %v7438 = vrot.slane %v7431, %v7437
  %v7440 = vunpack.c.l.s4 1935823168
  %v7441 = vunpack.c.0.s8 %v7440
  %v7442 = vlaneseq
  %v7443 = vshrl.u32 %v7442, 7
  %v7444 = vsub.s32 %v7441, %v7443
  %v7445 = vrot.slane %v5198, %v7444
  %v7447 = vunpack.c.l.s4 1935823168
  %v7448 = vunpack.c.0.s8 %v7447
  %v7449 = vlaneseq
  %v7450 = vshrl.u32 %v7449, 7
  %v7451 = vsub.s32 %v7448, %v7450
  %v7452 = vrot.slane %v7445, %v7451
  %v7454 = vunpack.c.l.s4 1935823168
  %v7455 = vunpack.c.0.s8 %v7454
  %v7456 = vlaneseq
  %v7457 = vshrl.u32 %v7456, 7
  %v7458 = vsub.s32 %v7455, %v7457
  %v7459 = vrot.slane %v5534, %v7458
  %v7461 = vunpack.c.l.s4 1935823168
  %v7462 = vunpack.c.0.s8 %v7461
  %v7463 = vlaneseq
  %v7464 = vshrl.u32 %v7463, 7
  %v7465 = vsub.s32 %v7462, %v7464
  %v7466 = vrot.slane %v7459, %v7465
  %v7468 = vunpack.c.l.s4 1935823168
  %v7469 = vunpack.c.0.s8 %v7468
  %v7470 = vlaneseq
  %v7471 = vshrl.u32 %v7470, 7
  %v7472 = vsub.s32 %v7469, %v7471
  %v7473 = vrot.slane %v5870, %v7472
  %v7475 = vunpack.c.l.s4 1935823168
  %v7476 = vunpack.c.0.s8 %v7475
  %v7477 = vlaneseq
  %v7478 = vshrl.u32 %v7477, 7
  %v7479 = vsub.s32 %v7476, %v7478
  %v7480 = vrot.slane %v7473, %v7479
  %v7481 = vunpack.c.l.b16 %v7382
  %v7482 = vunpack.c.l.b16 %v7396
  %v7483 = vunpack.c.l.b16 %v7410
  %v7484 = vunpack.c.l.b16 %v7424
  %v7485 = vunpack.c.l.b16 %v7438
  %v7486 = vunpack.c.l.b16 %v7452
  %v7487 = vunpack.c.l.b16 %v7466
  %v7488 = vunpack.c.l.b16 %v7480
  %v7489 = vrot.slane %v7482, 7
  %v7490 = vsel %vm6234, %v7489, %v7481
  %v7491 = vrot.slane %v7483, 6
  %v7492 = vsel %vm6237, %v7491, %v7490
  %v7493 = vrot.slane %v7484, 5
  %v7494 = vsel %vm6240, %v7493, %v7492
  %v7495 = vrot.slane %v7485, 4
  %v7496 = vsel %vm6243, %v7495, %v7494
  %v7497 = vrot.slane %v7486, 3
  %v7498 = vsel %vm6246, %v7497, %v7496
  %v7499 = vrot.slane %v7487, 2
  %v7500 = vsel %vm6249, %v7499, %v7498
  %v7501 = vrot.slane %v7488, 1
  %v7502 = vsel %vm6252, %v7501, %v7500
  %v7503 = vpack.c.b16 %v7502, %v7502
  %7504 = vrot.lane.b32.xlu0 %v7503, 32
  %v7505 = vpop.permute.xlu0 %7504
  %7507 = vst.msk [vmem:[#allocation2 + $0x8] sm:$0xf] %vm6396, %v7505
  %v7509 = vunpack.c.l.s4 1935823168
  %v7510 = vunpack.c.0.s8 %v7509
  %v7511 = vlaneseq
  %v7512 = vshrl.u32 %v7511, 7
  %v7513 = vsub.s32 %v7510, %v7512
  %v7514 = vrot.slane %v3520, %v7513
  %v7516 = vunpack.c.l.s4 1935823168
  %v7517 = vunpack.c.0.s8 %v7516
  %v7518 = vlaneseq
  %v7519 = vshrl.u32 %v7518, 7
  %v7520 = vsub.s32 %v7517, %v7519
  %v7521 = vrot.slane %v7514, %v7520
  %v7523 = vunpack.c.l.s4 1935823168
  %v7524 = vunpack.c.0.s8 %v7523
  %v7525 = vlaneseq
  %v7526 = vshrl.u32 %v7525, 7
  %v7527 = vsub.s32 %v7524, %v7526
  %v7528 = vrot.slane %v3856, %v7527
  %v7530 = vunpack.c.l.s4 1935823168
  %v7531 = vunpack.c.0.s8 %v7530
  %v7532 = vlaneseq
  %v7533 = vshrl.u32 %v7532, 7
  %v7534 = vsub.s32 %v7531, %v7533
  %v7535 = vrot.slane %v7528, %v7534
  %v7537 = vunpack.c.l.s4 1935823168
  %v7538 = vunpack.c.0.s8 %v7537
  %v7539 = vlaneseq
  %v7540 = vshrl.u32 %v7539, 7
  %v7541 = vsub.s32 %v7538, %v7540
  %v7542 = vrot.slane %v4192, %v7541
  %v7544 = vunpack.c.l.s4 1935823168
  %v7545 = vunpack.c.0.s8 %v7544
  %v7546 = vlaneseq
  %v7547 = vshrl.u32 %v7546, 7
  %v7548 = vsub.s32 %v7545, %v7547
  %v7549 = vrot.slane %v7542, %v7548
  %v7551 = vunpack.c.l.s4 1935823168
  %v7552 = vunpack.c.0.s8 %v7551
  %v7553 = vlaneseq
  %v7554 = vshrl.u32 %v7553, 7
  %v7555 = vsub.s32 %v7552, %v7554
  %v7556 = vrot.slane %v4528, %v7555
  %v7558 = vunpack.c.l.s4 1935823168
  %v7559 = vunpack.c.0.s8 %v7558
  %v7560 = vlaneseq
  %v7561 = vshrl.u32 %v7560, 7
  %v7562 = vsub.s32 %v7559, %v7561
  %v7563 = vrot.slane %v7556, %v7562
  %v7565 = vunpack.c.l.s4 1935823168
  %v7566 = vunpack.c.0.s8 %v7565
  %v7567 = vlaneseq
  %v7568 = vshrl.u32 %v7567, 7
  %v7569 = vsub.s32 %v7566, %v7568
  %v7570 = vrot.slane %v4864, %v7569
  %v7572 = vunpack.c.l.s4 1935823168
  %v7573 = vunpack.c.0.s8 %v7572
  %v7574 = vlaneseq
  %v7575 = vshrl.u32 %v7574, 7
  %v7576 = vsub.s32 %v7573, %v7575
  %v7577 = vrot.slane %v7570, %v7576
  %v7579 = vunpack.c.l.s4 1935823168
  %v7580 = vunpack.c.0.s8 %v7579
  %v7581 = vlaneseq
  %v7582 = vshrl.u32 %v7581, 7
  %v7583 = vsub.s32 %v7580, %v7582
  %v7584 = vrot.slane %v5200, %v7583
  %v7586 = vunpack.c.l.s4 1935823168
  %v7587 = vunpack.c.0.s8 %v7586
  %v7588 = vlaneseq
  %v7589 = vshrl.u32 %v7588, 7
  %v7590 = vsub.s32 %v7587, %v7589
  %v7591 = vrot.slane %v7584, %v7590
  %v7593 = vunpack.c.l.s4 1935823168
  %v7594 = vunpack.c.0.s8 %v7593
  %v7595 = vlaneseq
  %v7596 = vshrl.u32 %v7595, 7
  %v7597 = vsub.s32 %v7594, %v7596
  %v7598 = vrot.slane %v5536, %v7597
  %v7600 = vunpack.c.l.s4 1935823168
  %v7601 = vunpack.c.0.s8 %v7600
  %v7602 = vlaneseq
  %v7603 = vshrl.u32 %v7602, 7
  %v7604 = vsub.s32 %v7601, %v7603
  %v7605 = vrot.slane %v7598, %v7604
  %v7607 = vunpack.c.l.s4 1935823168
  %v7608 = vunpack.c.0.s8 %v7607
  %v7609 = vlaneseq
  %v7610 = vshrl.u32 %v7609, 7
  %v7611 = vsub.s32 %v7608, %v7610
  %v7612 = vrot.slane %v5872, %v7611
  %v7614 = vunpack.c.l.s4 1935823168
  %v7615 = vunpack.c.0.s8 %v7614
  %v7616 = vlaneseq
  %v7617 = vshrl.u32 %v7616, 7
  %v7618 = vsub.s32 %v7615, %v7617
  %v7619 = vrot.slane %v7612, %v7618
  %v7620 = vunpack.c.l.b16 %v7521
  %v7621 = vunpack.c.l.b16 %v7535
  %v7622 = vunpack.c.l.b16 %v7549
  %v7623 = vunpack.c.l.b16 %v7563
  %v7624 = vunpack.c.l.b16 %v7577
  %v7625 = vunpack.c.l.b16 %v7591
  %v7626 = vunpack.c.l.b16 %v7605
  %v7627 = vunpack.c.l.b16 %v7619
  %v7628 = vrot.slane %v7621, 7
  %v7629 = vsel %vm6234, %v7628, %v7620
  %v7630 = vrot.slane %v7622, 6
  %v7631 = vsel %vm6237, %v7630, %v7629
  %v7632 = vrot.slane %v7623, 5
  %v7633 = vsel %vm6240, %v7632, %v7631
  %v7634 = vrot.slane %v7624, 4
  %v7635 = vsel %vm6243, %v7634, %v7633
  %v7636 = vrot.slane %v7625, 3
  %v7637 = vsel %vm6246, %v7636, %v7635
  %v7638 = vrot.slane %v7626, 2
  %v7639 = vsel %vm6249, %v7638, %v7637
  %v7640 = vrot.slane %v7627, 1
  %v7641 = vsel %vm6252, %v7640, %v7639
  %v7642 = vpack.c.b16 %v7641, %v7641
  %7643 = vrot.lane.b32.xlu0 %v7642, 64
  %v7644 = vpop.permute.xlu0 %7643
  %7646 = vst.msk [vmem:[#allocation2 + $0x8] sm:$0xf] %vm6536, %v7644
  %v7648 = vunpack.c.l.s4 1935823168
  %v7649 = vunpack.c.0.s8 %v7648
  %v7650 = vlaneseq
  %v7651 = vshrl.u32 %v7650, 7
  %v7652 = vsub.s32 %v7649, %v7651
  %v7653 = vrot.slane %v3503, %v7652
  %v7655 = vunpack.c.l.s4 1935823168
  %v7656 = vunpack.c.0.s8 %v7655
  %v7657 = vlaneseq
  %v7658 = vshrl.u32 %v7657, 7
  %v7659 = vsub.s32 %v7656, %v7658
  %v7660 = vrot.slane %v7653, %v7659
  %v7662 = vunpack.c.l.s4 1935823168
  %v7663 = vunpack.c.0.s8 %v7662
  %v7664 = vlaneseq
  %v7665 = vshrl.u32 %v7664, 7
  %v7666 = vsub.s32 %v7663, %v7665
  %v7667 = vrot.slane %v3839, %v7666
  %v7669 = vunpack.c.l.s4 1935823168
  %v7670 = vunpack.c.0.s8 %v7669
  %v7671 = vlaneseq
  %v7672 = vshrl.u32 %v7671, 7
  %v7673 = vsub.s32 %v7670, %v7672
  %v7674 = vrot.slane %v7667, %v7673
  %v7676 = vunpack.c.l.s4 1935823168
  %v7677 = vunpack.c.0.s8 %v7676
  %v7678 = vlaneseq
  %v7679 = vshrl.u32 %v7678, 7
  %v7680 = vsub.s32 %v7677, %v7679
  %v7681 = vrot.slane %v4175, %v7680
  %v7683 = vunpack.c.l.s4 1935823168
  %v7684 = vunpack.c.0.s8 %v7683
  %v7685 = vlaneseq
  %v7686 = vshrl.u32 %v7685, 7
  %v7687 = vsub.s32 %v7684, %v7686
  %v7688 = vrot.slane %v7681, %v7687
  %v7690 = vunpack.c.l.s4 1935823168
  %v7691 = vunpack.c.0.s8 %v7690
  %v7692 = vlaneseq
  %v7693 = vshrl.u32 %v7692, 7
  %v7694 = vsub.s32 %v7691, %v7693
  %v7695 = vrot.slane %v4511, %v7694
  %v7697 = vunpack.c.l.s4 1935823168
  %v7698 = vunpack.c.0.s8 %v7697
  %v7699 = vlaneseq
  %v7700 = vshrl.u32 %v7699, 7
  %v7701 = vsub.s32 %v7698, %v7700
  %v7702 = vrot.slane %v7695, %v7701
  %v7704 = vunpack.c.l.s4 1935823168
  %v7705 = vunpack.c.0.s8 %v7704
  %v7706 = vlaneseq
  %v7707 = vshrl.u32 %v7706, 7
  %v7708 = vsub.s32 %v7705, %v7707
  %v7709 = vrot.slane %v4847, %v7708
  %v7711 = vunpack.c.l.s4 1935823168
  %v7712 = vunpack.c.0.s8 %v7711
  %v7713 = vlaneseq
  %v7714 = vshrl.u32 %v7713, 7
  %v7715 = vsub.s32 %v7712, %v7714
  %v7716 = vrot.slane %v7709, %v7715
  %v7718 = vunpack.c.l.s4 1935823168
  %v7719 = vunpack.c.0.s8 %v7718
  %v7720 = vlaneseq
  %v7721 = vshrl.u32 %v7720, 7
  %v7722 = vsub.s32 %v7719, %v7721
  %v7723 = vrot.slane %v5183, %v7722
  %v7725 = vunpack.c.l.s4 1935823168
  %v7726 = vunpack.c.0.s8 %v7725
  %v7727 = vlaneseq
  %v7728 = vshrl.u32 %v7727, 7
  %v7729 = vsub.s32 %v7726, %v7728
  %v7730 = vrot.slane %v7723, %v7729
  %v7732 = vunpack.c.l.s4 1935823168
  %v7733 = vunpack.c.0.s8 %v7732
  %v7734 = vlaneseq
  %v7735 = vshrl.u32 %v7734, 7
  %v7736 = vsub.s32 %v7733, %v7735
  %v7737 = vrot.slane %v5519, %v7736
  %v7739 = vunpack.c.l.s4 1935823168
  %v7740 = vunpack.c.0.s8 %v7739
  %v7741 = vlaneseq
  %v7742 = vshrl.u32 %v7741, 7
  %v7743 = vsub.s32 %v7740, %v7742
  %v7744 = vrot.slane %v7737, %v7743
  %v7746 = vunpack.c.l.s4 1935823168
  %v7747 = vunpack.c.0.s8 %v7746
  %v7748 = vlaneseq
  %v7749 = vshrl.u32 %v7748, 7
  %v7750 = vsub.s32 %v7747, %v7749
  %v7751 = vrot.slane %v5855, %v7750
  %v7753 = vunpack.c.l.s4 1935823168
  %v7754 = vunpack.c.0.s8 %v7753
  %v7755 = vlaneseq
  %v7756 = vshrl.u32 %v7755, 7
  %v7757 = vsub.s32 %v7754, %v7756
  %v7758 = vrot.slane %v7751, %v7757
  %v7759 = vunpack.c.l.b16 %v7660
  %v7760 = vunpack.c.l.b16 %v7674
  %v7761 = vunpack.c.l.b16 %v7688
  %v7762 = vunpack.c.l.b16 %v7702
  %v7763 = vunpack.c.l.b16 %v7716
  %v7764 = vunpack.c.l.b16 %v7730
  %v7765 = vunpack.c.l.b16 %v7744
  %v7766 = vunpack.c.l.b16 %v7758
  %v7767 = vrot.slane %v7760, 7
  %v7768 = vsel %vm6234, %v7767, %v7759
  %v7769 = vrot.slane %v7761, 6
  %v7770 = vsel %vm6237, %v7769, %v7768
  %v7771 = vrot.slane %v7762, 5
  %v7772 = vsel %vm6240, %v7771, %v7770
  %v7773 = vrot.slane %v7763, 4
  %v7774 = vsel %vm6243, %v7773, %v7772
  %v7775 = vrot.slane %v7764, 3
  %v7776 = vsel %vm6246, %v7775, %v7774
  %v7777 = vrot.slane %v7765, 2
  %v7778 = vsel %vm6249, %v7777, %v7776
  %v7779 = vrot.slane %v7766, 1
  %v7780 = vsel %vm6252, %v7779, %v7778
  %v7781 = vpack.c.b16 %v7780, %v7780
  %7782 = vrot.lane.b32.xlu0 %v7781, 96
  %v7783 = vpop.permute.xlu0 %7782
  %7785 = vst.msk [vmem:[#allocation2 + $0x8] sm:$0xf] %vm6676, %v7783
  %v7787 = vunpack.c.l.s4 1935823168
  %v7788 = vunpack.c.0.s8 %v7787
  %v7789 = vlaneseq
  %v7790 = vshrl.u32 %v7789, 7
  %v7791 = vsub.s32 %v7788, %v7790
  %v7792 = vrot.slane %v3517, %v7791
  %v7794 = vunpack.c.l.s4 1935823168
  %v7795 = vunpack.c.0.s8 %v7794
  %v7796 = vlaneseq
  %v7797 = vshrl.u32 %v7796, 7
  %v7798 = vsub.s32 %v7795, %v7797
  %v7799 = vrot.slane %v7792, %v7798
  %v7801 = vunpack.c.l.s4 1935823168
  %v7802 = vunpack.c.0.s8 %v7801
  %v7803 = vlaneseq
  %v7804 = vshrl.u32 %v7803, 7
  %v7805 = vsub.s32 %v7802, %v7804
  %v7806 = vrot.slane %v3853, %v7805
  %v7808 = vunpack.c.l.s4 1935823168
  %v7809 = vunpack.c.0.s8 %v7808
  %v7810 = vlaneseq
  %v7811 = vshrl.u32 %v7810, 7
  %v7812 = vsub.s32 %v7809, %v7811
  %v7813 = vrot.slane %v7806, %v7812
  %v7815 = vunpack.c.l.s4 1935823168
  %v7816 = vunpack.c.0.s8 %v7815
  %v7817 = vlaneseq
  %v7818 = vshrl.u32 %v7817, 7
  %v7819 = vsub.s32 %v7816, %v7818
  %v7820 = vrot.slane %v4189, %v7819
  %v7822 = vunpack.c.l.s4 1935823168
  %v7823 = vunpack.c.0.s8 %v7822
  %v7824 = vlaneseq
  %v7825 = vshrl.u32 %v7824, 7
  %v7826 = vsub.s32 %v7823, %v7825
  %v7827 = vrot.slane %v7820, %v7826
  %v7829 = vunpack.c.l.s4 1935823168
  %v7830 = vunpack.c.0.s8 %v7829
  %v7831 = vlaneseq
  %v7832 = vshrl.u32 %v7831, 7
  %v7833 = vsub.s32 %v7830, %v7832
  %v7834 = vrot.slane %v4525, %v7833
  %v7836 = vunpack.c.l.s4 1935823168
  %v7837 = vunpack.c.0.s8 %v7836
  %v7838 = vlaneseq
  %v7839 = vshrl.u32 %v7838, 7
  %v7840 = vsub.s32 %v7837, %v7839
  %v7841 = vrot.slane %v7834, %v7840
  %v7843 = vunpack.c.l.s4 1935823168
  %v7844 = vunpack.c.0.s8 %v7843
  %v7845 = vlaneseq
  %v7846 = vshrl.u32 %v7845, 7
  %v7847 = vsub.s32 %v7844, %v7846
  %v7848 = vrot.slane %v4861, %v7847
  %v7850 = vunpack.c.l.s4 1935823168
  %v7851 = vunpack.c.0.s8 %v7850
  %v7852 = vlaneseq
  %v7853 = vshrl.u32 %v7852, 7
  %v7854 = vsub.s32 %v7851, %v7853
  %v7855 = vrot.slane %v7848, %v7854
  %v7857 = vunpack.c.l.s4 1935823168
  %v7858 = vunpack.c.0.s8 %v7857
  %v7859 = vlaneseq
  %v7860 = vshrl.u32 %v7859, 7
  %v7861 = vsub.s32 %v7858, %v7860
  %v7862 = vrot.slane %v5197, %v7861
  %v7864 = vunpack.c.l.s4 1935823168
  %v7865 = vunpack.c.0.s8 %v7864
  %v7866 = vlaneseq
  %v7867 = vshrl.u32 %v7866, 7
  %v7868 = vsub.s32 %v7865, %v7867
  %v7869 = vrot.slane %v7862, %v7868
  %v7871 = vunpack.c.l.s4 1935823168
  %v7872 = vunpack.c.0.s8 %v7871
  %v7873 = vlaneseq
  %v7874 = vshrl.u32 %v7873, 7
  %v7875 = vsub.s32 %v7872, %v7874
  %v7876 = vrot.slane %v5533, %v7875
  %v7878 = vunpack.c.l.s4 1935823168
  %v7879 = vunpack.c.0.s8 %v7878
  %v7880 = vlaneseq
  %v7881 = vshrl.u32 %v7880, 7
  %v7882 = vsub.s32 %v7879, %v7881
  %v7883 = vrot.slane %v7876, %v7882
  %v7885 = vunpack.c.l.s4 1935823168
  %v7886 = vunpack.c.0.s8 %v7885
  %v7887 = vlaneseq
  %v7888 = vshrl.u32 %v7887, 7
  %v7889 = vsub.s32 %v7886, %v7888
  %v7890 = vrot.slane %v5869, %v7889
  %v7892 = vunpack.c.l.s4 1935823168
  %v7893 = vunpack.c.0.s8 %v7892
  %v7894 = vlaneseq
  %v7895 = vshrl.u32 %v7894, 7
  %v7896 = vsub.s32 %v7893, %v7895
  %v7897 = vrot.slane %v7890, %v7896
  %v7898 = vunpack.c.l.b16 %v7799
  %v7899 = vunpack.c.l.b16 %v7813
  %v7900 = vunpack.c.l.b16 %v7827
  %v7901 = vunpack.c.l.b16 %v7841
  %v7902 = vunpack.c.l.b16 %v7855
  %v7903 = vunpack.c.l.b16 %v7869
  %v7904 = vunpack.c.l.b16 %v7883
  %v7905 = vunpack.c.l.b16 %v7897
  %v7906 = vrot.slane %v7899, 7
  %v7907 = vsel %vm6234, %v7906, %v7898
  %v7908 = vrot.slane %v7900, 6
  %v7909 = vsel %vm6237, %v7908, %v7907
  %v7910 = vrot.slane %v7901, 5
  %v7911 = vsel %vm6240, %v7910, %v7909
  %v7912 = vrot.slane %v7902, 4
  %v7913 = vsel %vm6243, %v7912, %v7911
  %v7914 = vrot.slane %v7903, 3
  %v7915 = vsel %vm6246, %v7914, %v7913
  %v7916 = vrot.slane %v7904, 2
  %v7917 = vsel %vm6249, %v7916, %v7915
  %v7918 = vrot.slane %v7905, 1
  %v7919 = vsel %vm6252, %v7918, %v7917
  %v7920 = vpack.c.b16 %v7919, %v7919
  %7922 = vst.msk [vmem:[#allocation2 + $0xc] sm:$0xf] %vm6256, %v7920
  %v7924 = vunpack.c.l.s4 1935823168
  %v7925 = vunpack.c.0.s8 %v7924
  %v7926 = vlaneseq
  %v7927 = vshrl.u32 %v7926, 7
  %v7928 = vsub.s32 %v7925, %v7927
  %v7929 = vrot.slane %v3519, %v7928
  %v7931 = vunpack.c.l.s4 1935823168
  %v7932 = vunpack.c.0.s8 %v7931
  %v7933 = vlaneseq
  %v7934 = vshrl.u32 %v7933, 7
  %v7935 = vsub.s32 %v7932, %v7934
  %v7936 = vrot.slane %v7929, %v7935
  %v7938 = vunpack.c.l.s4 1935823168
  %v7939 = vunpack.c.0.s8 %v7938
  %v7940 = vlaneseq
  %v7941 = vshrl.u32 %v7940, 7
  %v7942 = vsub.s32 %v7939, %v7941
  %v7943 = vrot.slane %v3855, %v7942
  %v7945 = vunpack.c.l.s4 1935823168
  %v7946 = vunpack.c.0.s8 %v7945
  %v7947 = vlaneseq
  %v7948 = vshrl.u32 %v7947, 7
  %v7949 = vsub.s32 %v7946, %v7948
  %v7950 = vrot.slane %v7943, %v7949
  %v7952 = vunpack.c.l.s4 1935823168
  %v7953 = vunpack.c.0.s8 %v7952
  %v7954 = vlaneseq
  %v7955 = vshrl.u32 %v7954, 7
  %v7956 = vsub.s32 %v7953, %v7955
  %v7957 = vrot.slane %v4191, %v7956
  %v7959 = vunpack.c.l.s4 1935823168
  %v7960 = vunpack.c.0.s8 %v7959
  %v7961 = vlaneseq
  %v7962 = vshrl.u32 %v7961, 7
  %v7963 = vsub.s32 %v7960, %v7962
  %v7964 = vrot.slane %v7957, %v7963
  %v7966 = vunpack.c.l.s4 1935823168
  %v7967 = vunpack.c.0.s8 %v7966
  %v7968 = vlaneseq
  %v7969 = vshrl.u32 %v7968, 7
  %v7970 = vsub.s32 %v7967, %v7969
  %v7971 = vrot.slane %v4527, %v7970
  %v7973 = vunpack.c.l.s4 1935823168
  %v7974 = vunpack.c.0.s8 %v7973
  %v7975 = vlaneseq
  %v7976 = vshrl.u32 %v7975, 7
  %v7977 = vsub.s32 %v7974, %v7976
  %v7978 = vrot.slane %v7971, %v7977
  %v7980 = vunpack.c.l.s4 1935823168
  %v7981 = vunpack.c.0.s8 %v7980
  %v7982 = vlaneseq
  %v7983 = vshrl.u32 %v7982, 7
  %v7984 = vsub.s32 %v7981, %v7983
  %v7985 = vrot.slane %v4863, %v7984
  %v7987 = vunpack.c.l.s4 1935823168
  %v7988 = vunpack.c.0.s8 %v7987
  %v7989 = vlaneseq
  %v7990 = vshrl.u32 %v7989, 7
  %v7991 = vsub.s32 %v7988, %v7990
  %v7992 = vrot.slane %v7985, %v7991
  %v7994 = vunpack.c.l.s4 1935823168
  %v7995 = vunpack.c.0.s8 %v7994
  %v7996 = vlaneseq
  %v7997 = vshrl.u32 %v7996, 7
  %v7998 = vsub.s32 %v7995, %v7997
  %v7999 = vrot.slane %v5199, %v7998
  %v8001 = vunpack.c.l.s4 1935823168
  %v8002 = vunpack.c.0.s8 %v8001
  %v8003 = vlaneseq
  %v8004 = vshrl.u32 %v8003, 7
  %v8005 = vsub.s32 %v8002, %v8004
  %v8006 = vrot.slane %v7999, %v8005
  %v8008 = vunpack.c.l.s4 1935823168
  %v8009 = vunpack.c.0.s8 %v8008
  %v8010 = vlaneseq
  %v8011 = vshrl.u32 %v8010, 7
  %v8012 = vsub.s32 %v8009, %v8011
  %v8013 = vrot.slane %v5535, %v8012
  %v8015 = vunpack.c.l.s4 1935823168
  %v8016 = vunpack.c.0.s8 %v8015
  %v8017 = vlaneseq
  %v8018 = vshrl.u32 %v8017, 7
  %v8019 = vsub.s32 %v8016, %v8018
  %v8020 = vrot.slane %v8013, %v8019
  %v8022 = vunpack.c.l.s4 1935823168
  %v8023 = vunpack.c.0.s8 %v8022
  %v8024 = vlaneseq
  %v8025 = vshrl.u32 %v8024, 7
  %v8026 = vsub.s32 %v8023, %v8025
  %v8027 = vrot.slane %v5871, %v8026
  %v8029 = vunpack.c.l.s4 1935823168
  %v8030 = vunpack.c.0.s8 %v8029
  %v8031 = vlaneseq
  %v8032 = vshrl.u32 %v8031, 7
  %v8033 = vsub.s32 %v8030, %v8032
  %v8034 = vrot.slane %v8027, %v8033
  %v8035 = vunpack.c.l.b16 %v7936
  %v8036 = vunpack.c.l.b16 %v7950
  %v8037 = vunpack.c.l.b16 %v7964
  %v8038 = vunpack.c.l.b16 %v7978
  %v8039 = vunpack.c.l.b16 %v7992
  %v8040 = vunpack.c.l.b16 %v8006
  %v8041 = vunpack.c.l.b16 %v8020
  %v8042 = vunpack.c.l.b16 %v8034
  %v8043 = vrot.slane %v8036, 7
  %v8044 = vsel %vm6234, %v8043, %v8035
  %v8045 = vrot.slane %v8037, 6
  %v8046 = vsel %vm6237, %v8045, %v8044
  %v8047 = vrot.slane %v8038, 5
  %v8048 = vsel %vm6240, %v8047, %v8046
  %v8049 = vrot.slane %v8039, 4
  %v8050 = vsel %vm6243, %v8049, %v8048
  %v8051 = vrot.slane %v8040, 3
  %v8052 = vsel %vm6246, %v8051, %v8050
  %v8053 = vrot.slane %v8041, 2
  %v8054 = vsel %vm6249, %v8053, %v8052
  %v8055 = vrot.slane %v8042, 1
  %v8056 = vsel %vm6252, %v8055, %v8054
  %v8057 = vpack.c.b16 %v8056, %v8056
  %8058 = vrot.lane.b32.xlu0 %v8057, 32
  %v8059 = vpop.permute.xlu0 %8058
  %8061 = vst.msk [vmem:[#allocation2 + $0xc] sm:$0xf] %vm6396, %v8059
  %v8063 = vunpack.c.l.s4 1935823168
  %v8064 = vunpack.c.0.s8 %v8063
  %v8065 = vlaneseq
  %v8066 = vshrl.u32 %v8065, 7
  %v8067 = vsub.s32 %v8064, %v8066
  %v8068 = vrot.slane %v3544, %v8067
  %v8070 = vunpack.c.l.s4 1935823168
  %v8071 = vunpack.c.0.s8 %v8070
  %v8072 = vlaneseq
  %v8073 = vshrl.u32 %v8072, 7
  %v8074 = vsub.s32 %v8071, %v8073
  %v8075 = vrot.slane %v8068, %v8074
  %v8077 = vunpack.c.l.s4 1935823168
  %v8078 = vunpack.c.0.s8 %v8077
  %v8079 = vlaneseq
  %v8080 = vshrl.u32 %v8079, 7
  %v8081 = vsub.s32 %v8078, %v8080
  %v8082 = vrot.slane %v3880, %v8081
  %v8084 = vunpack.c.l.s4 1935823168
  %v8085 = vunpack.c.0.s8 %v8084
  %v8086 = vlaneseq
  %v8087 = vshrl.u32 %v8086, 7
  %v8088 = vsub.s32 %v8085, %v8087
  %v8089 = vrot.slane %v8082, %v8088
  %v8091 = vunpack.c.l.s4 1935823168
  %v8092 = vunpack.c.0.s8 %v8091
  %v8093 = vlaneseq
  %v8094 = vshrl.u32 %v8093, 7
  %v8095 = vsub.s32 %v8092, %v8094
  %v8096 = vrot.slane %v4216, %v8095
  %v8098 = vunpack.c.l.s4 1935823168
  %v8099 = vunpack.c.0.s8 %v8098
  %v8100 = vlaneseq
  %v8101 = vshrl.u32 %v8100, 7
  %v8102 = vsub.s32 %v8099, %v8101
  %v8103 = vrot.slane %v8096, %v8102
  %v8105 = vunpack.c.l.s4 1935823168
  %v8106 = vunpack.c.0.s8 %v8105
  %v8107 = vlaneseq
  %v8108 = vshrl.u32 %v8107, 7
  %v8109 = vsub.s32 %v8106, %v8108
  %v8110 = vrot.slane %v4552, %v8109
  %v8112 = vunpack.c.l.s4 1935823168
  %v8113 = vunpack.c.0.s8 %v8112
  %v8114 = vlaneseq
  %v8115 = vshrl.u32 %v8114, 7
  %v8116 = vsub.s32 %v8113, %v8115
  %v8117 = vrot.slane %v8110, %v8116
  %v8119 = vunpack.c.l.s4 1935823168
  %v8120 = vunpack.c.0.s8 %v8119
  %v8121 = vlaneseq
  %v8122 = vshrl.u32 %v8121, 7
  %v8123 = vsub.s32 %v8120, %v8122
  %v8124 = vrot.slane %v4888, %v8123
  %v8126 = vunpack.c.l.s4 1935823168
  %v8127 = vunpack.c.0.s8 %v8126
  %v8128 = vlaneseq
  %v8129 = vshrl.u32 %v8128, 7
  %v8130 = vsub.s32 %v8127, %v8129
  %v8131 = vrot.slane %v8124, %v8130
  %v8133 = vunpack.c.l.s4 1935823168
  %v8134 = vunpack.c.0.s8 %v8133
  %v8135 = vlaneseq
  %v8136 = vshrl.u32 %v8135, 7
  %v8137 = vsub.s32 %v8134, %v8136
  %v8138 = vrot.slane %v5224, %v8137
  %v8140 = vunpack.c.l.s4 1935823168
  %v8141 = vunpack.c.0.s8 %v8140
  %v8142 = vlaneseq
  %v8143 = vshrl.u32 %v8142, 7
  %v8144 = vsub.s32 %v8141, %v8143
  %v8145 = vrot.slane %v8138, %v8144
  %v8147 = vunpack.c.l.s4 1935823168
  %v8148 = vunpack.c.0.s8 %v8147
  %v8149 = vlaneseq
  %v8150 = vshrl.u32 %v8149, 7
  %v8151 = vsub.s32 %v8148, %v8150
  %v8152 = vrot.slane %v5560, %v8151
  %v8154 = vunpack.c.l.s4 1935823168
  %v8155 = vunpack.c.0.s8 %v8154
  %v8156 = vlaneseq
  %v8157 = vshrl.u32 %v8156, 7
  %v8158 = vsub.s32 %v8155, %v8157
  %v8159 = vrot.slane %v8152, %v8158
  %v8161 = vunpack.c.l.s4 1935823168
  %v8162 = vunpack.c.0.s8 %v8161
  %v8163 = vlaneseq
  %v8164 = vshrl.u32 %v8163, 7
  %v8165 = vsub.s32 %v8162, %v8164
  %v8166 = vrot.slane %v5896, %v8165
  %v8168 = vunpack.c.l.s4 1935823168
  %v8169 = vunpack.c.0.s8 %v8168
  %v8170 = vlaneseq
  %v8171 = vshrl.u32 %v8170, 7
  %v8172 = vsub.s32 %v8169, %v8171
  %v8173 = vrot.slane %v8166, %v8172
  %v8174 = vunpack.c.l.b16 %v8075
  %v8175 = vunpack.c.l.b16 %v8089
  %v8176 = vunpack.c.l.b16 %v8103
  %v8177 = vunpack.c.l.b16 %v8117
  %v8178 = vunpack.c.l.b16 %v8131
  %v8179 = vunpack.c.l.b16 %v8145
  %v8180 = vunpack.c.l.b16 %v8159
  %v8181 = vunpack.c.l.b16 %v8173
  %v8182 = vrot.slane %v8175, 7
  %v8183 = vsel %vm6234, %v8182, %v8174
  %v8184 = vrot.slane %v8176, 6
  %v8185 = vsel %vm6237, %v8184, %v8183
  %v8186 = vrot.slane %v8177, 5
  %v8187 = vsel %vm6240, %v8186, %v8185
  %v8188 = vrot.slane %v8178, 4
  %v8189 = vsel %vm6243, %v8188, %v8187
  %v8190 = vrot.slane %v8179, 3
  %v8191 = vsel %vm6246, %v8190, %v8189
  %v8192 = vrot.slane %v8180, 2
  %v8193 = vsel %vm6249, %v8192, %v8191
  %v8194 = vrot.slane %v8181, 1
  %v8195 = vsel %vm6252, %v8194, %v8193
  %v8196 = vpack.c.b16 %v8195, %v8195
  %8197 = vrot.lane.b32.xlu0 %v8196, 64
  %v8198 = vpop.permute.xlu0 %8197
  %8200 = vst.msk [vmem:[#allocation2 + $0xc] sm:$0xf] %vm6536, %v8198
  %v8202 = vunpack.c.l.s4 1935823168
  %v8203 = vunpack.c.0.s8 %v8202
  %v8204 = vlaneseq
  %v8205 = vshrl.u32 %v8204, 7
  %v8206 = vsub.s32 %v8203, %v8205
  %v8207 = vrot.slane %v3558, %v8206
  %v8209 = vunpack.c.l.s4 1935823168
  %v8210 = vunpack.c.0.s8 %v8209
  %v8211 = vlaneseq
  %v8212 = vshrl.u32 %v8211, 7
  %v8213 = vsub.s32 %v8210, %v8212
  %v8214 = vrot.slane %v8207, %v8213
  %v8216 = vunpack.c.l.s4 1935823168
  %v8217 = vunpack.c.0.s8 %v8216
  %v8218 = vlaneseq
  %v8219 = vshrl.u32 %v8218, 7
  %v8220 = vsub.s32 %v8217, %v8219
  %v8221 = vrot.slane %v3894, %v8220
  %v8223 = vunpack.c.l.s4 1935823168
  %v8224 = vunpack.c.0.s8 %v8223
  %v8225 = vlaneseq
  %v8226 = vshrl.u32 %v8225, 7
  %v8227 = vsub.s32 %v8224, %v8226
  %v8228 = vrot.slane %v8221, %v8227
  %v8230 = vunpack.c.l.s4 1935823168
  %v8231 = vunpack.c.0.s8 %v8230
  %v8232 = vlaneseq
  %v8233 = vshrl.u32 %v8232, 7
  %v8234 = vsub.s32 %v8231, %v8233
  %v8235 = vrot.slane %v4230, %v8234
  %v8237 = vunpack.c.l.s4 1935823168
  %v8238 = vunpack.c.0.s8 %v8237
  %v8239 = vlaneseq
  %v8240 = vshrl.u32 %v8239, 7
  %v8241 = vsub.s32 %v8238, %v8240
  %v8242 = vrot.slane %v8235, %v8241
  %v8244 = vunpack.c.l.s4 1935823168
  %v8245 = vunpack.c.0.s8 %v8244
  %v8246 = vlaneseq
  %v8247 = vshrl.u32 %v8246, 7
  %v8248 = vsub.s32 %v8245, %v8247
  %v8249 = vrot.slane %v4566, %v8248
  %v8251 = vunpack.c.l.s4 1935823168
  %v8252 = vunpack.c.0.s8 %v8251
  %v8253 = vlaneseq
  %v8254 = vshrl.u32 %v8253, 7
  %v8255 = vsub.s32 %v8252, %v8254
  %v8256 = vrot.slane %v8249, %v8255
  %v8258 = vunpack.c.l.s4 1935823168
  %v8259 = vunpack.c.0.s8 %v8258
  %v8260 = vlaneseq
  %v8261 = vshrl.u32 %v8260, 7
  %v8262 = vsub.s32 %v8259, %v8261
  %v8263 = vrot.slane %v4902, %v8262
  %v8265 = vunpack.c.l.s4 1935823168
  %v8266 = vunpack.c.0.s8 %v8265
  %v8267 = vlaneseq
  %v8268 = vshrl.u32 %v8267, 7
  %v8269 = vsub.s32 %v8266, %v8268
  %v8270 = vrot.slane %v8263, %v8269
  %v8272 = vunpack.c.l.s4 1935823168
  %v8273 = vunpack.c.0.s8 %v8272
  %v8274 = vlaneseq
  %v8275 = vshrl.u32 %v8274, 7
  %v8276 = vsub.s32 %v8273, %v8275
  %v8277 = vrot.slane %v5238, %v8276
  %v8279 = vunpack.c.l.s4 1935823168
  %v8280 = vunpack.c.0.s8 %v8279
  %v8281 = vlaneseq
  %v8282 = vshrl.u32 %v8281, 7
  %v8283 = vsub.s32 %v8280, %v8282
  %v8284 = vrot.slane %v8277, %v8283
  %v8286 = vunpack.c.l.s4 1935823168
  %v8287 = vunpack.c.0.s8 %v8286
  %v8288 = vlaneseq
  %v8289 = vshrl.u32 %v8288, 7
  %v8290 = vsub.s32 %v8287, %v8289
  %v8291 = vrot.slane %v5574, %v8290
  %v8293 = vunpack.c.l.s4 1935823168
  %v8294 = vunpack.c.0.s8 %v8293
  %v8295 = vlaneseq
  %v8296 = vshrl.u32 %v8295, 7
  %v8297 = vsub.s32 %v8294, %v8296
  %v8298 = vrot.slane %v8291, %v8297
  %v8300 = vunpack.c.l.s4 1935823168
  %v8301 = vunpack.c.0.s8 %v8300
  %v8302 = vlaneseq
  %v8303 = vshrl.u32 %v8302, 7
  %v8304 = vsub.s32 %v8301, %v8303
  %v8305 = vrot.slane %v5910, %v8304
  %v8307 = vunpack.c.l.s4 1935823168
  %v8308 = vunpack.c.0.s8 %v8307
  %v8309 = vlaneseq
  %v8310 = vshrl.u32 %v8309, 7
  %v8311 = vsub.s32 %v8308, %v8310
  %v8312 = vrot.slane %v8305, %v8311
  %v8313 = vunpack.c.l.b16 %v8214
  %v8314 = vunpack.c.l.b16 %v8228
  %v8315 = vunpack.c.l.b16 %v8242
  %v8316 = vunpack.c.l.b16 %v8256
  %v8317 = vunpack.c.l.b16 %v8270
  %v8318 = vunpack.c.l.b16 %v8284
  %v8319 = vunpack.c.l.b16 %v8298
  %v8320 = vunpack.c.l.b16 %v8312
  %v8321 = vrot.slane %v8314, 7
  %v8322 = vsel %vm6234, %v8321, %v8313
  %v8323 = vrot.slane %v8315, 6
  %v8324 = vsel %vm6237, %v8323, %v8322
  %v8325 = vrot.slane %v8316, 5
  %v8326 = vsel %vm6240, %v8325, %v8324
  %v8327 = vrot.slane %v8317, 4
  %v8328 = vsel %vm6243, %v8327, %v8326
  %v8329 = vrot.slane %v8318, 3
  %v8330 = vsel %vm6246, %v8329, %v8328
  %v8331 = vrot.slane %v8319, 2
  %v8332 = vsel %vm6249, %v8331, %v8330
  %v8333 = vrot.slane %v8320, 1
  %v8334 = vsel %vm6252, %v8333, %v8332
  %v8335 = vpack.c.b16 %v8334, %v8334
  %8336 = vrot.lane.b32.xlu0 %v8335, 96
  %v8337 = vpop.permute.xlu0 %8336
  %8339 = vst.msk [vmem:[#allocation2 + $0xc] sm:$0xf] %vm6676, %v8337
  %v8341 = vunpack.c.l.s4 1935823168
  %v8342 = vunpack.c.0.s8 %v8341
  %v8343 = vlaneseq
  %v8344 = vshrl.u32 %v8343, 7
  %v8345 = vsub.s32 %v8342, %v8344
  %v8346 = vrot.slane %v3566, %v8345
  %v8348 = vunpack.c.l.s4 1935823168
  %v8349 = vunpack.c.0.s8 %v8348
  %v8350 = vlaneseq
  %v8351 = vshrl.u32 %v8350, 7
  %v8352 = vsub.s32 %v8349, %v8351
  %v8353 = vrot.slane %v8346, %v8352
  %v8355 = vunpack.c.l.s4 1935823168
  %v8356 = vunpack.c.0.s8 %v8355
  %v8357 = vlaneseq
  %v8358 = vshrl.u32 %v8357, 7
  %v8359 = vsub.s32 %v8356, %v8358
  %v8360 = vrot.slane %v3902, %v8359
  %v8362 = vunpack.c.l.s4 1935823168
  %v8363 = vunpack.c.0.s8 %v8362
  %v8364 = vlaneseq
  %v8365 = vshrl.u32 %v8364, 7
  %v8366 = vsub.s32 %v8363, %v8365
  %v8367 = vrot.slane %v8360, %v8366
  %v8369 = vunpack.c.l.s4 1935823168
  %v8370 = vunpack.c.0.s8 %v8369
  %v8371 = vlaneseq
  %v8372 = vshrl.u32 %v8371, 7
  %v8373 = vsub.s32 %v8370, %v8372
  %v8374 = vrot.slane %v4238, %v8373
  %v8376 = vunpack.c.l.s4 1935823168
  %v8377 = vunpack.c.0.s8 %v8376
  %v8378 = vlaneseq
  %v8379 = vshrl.u32 %v8378, 7
  %v8380 = vsub.s32 %v8377, %v8379
  %v8381 = vrot.slane %v8374, %v8380
  %v8383 = vunpack.c.l.s4 1935823168
  %v8384 = vunpack.c.0.s8 %v8383
  %v8385 = vlaneseq
  %v8386 = vshrl.u32 %v8385, 7
  %v8387 = vsub.s32 %v8384, %v8386
  %v8388 = vrot.slane %v4574, %v8387
  %v8390 = vunpack.c.l.s4 1935823168
  %v8391 = vunpack.c.0.s8 %v8390
  %v8392 = vlaneseq
  %v8393 = vshrl.u32 %v8392, 7
  %v8394 = vsub.s32 %v8391, %v8393
  %v8395 = vrot.slane %v8388, %v8394
  %v8397 = vunpack.c.l.s4 1935823168
  %v8398 = vunpack.c.0.s8 %v8397
  %v8399 = vlaneseq
  %v8400 = vshrl.u32 %v8399, 7
  %v8401 = vsub.s32 %v8398, %v8400
  %v8402 = vrot.slane %v4910, %v8401
  %v8404 = vunpack.c.l.s4 1935823168
  %v8405 = vunpack.c.0.s8 %v8404
  %v8406 = vlaneseq
  %v8407 = vshrl.u32 %v8406, 7
  %v8408 = vsub.s32 %v8405, %v8407
  %v8409 = vrot.slane %v8402, %v8408
  %v8411 = vunpack.c.l.s4 1935823168
  %v8412 = vunpack.c.0.s8 %v8411
  %v8413 = vlaneseq
  %v8414 = vshrl.u32 %v8413, 7
  %v8415 = vsub.s32 %v8412, %v8414
  %v8416 = vrot.slane %v5246, %v8415
  %v8418 = vunpack.c.l.s4 1935823168
  %v8419 = vunpack.c.0.s8 %v8418
  %v8420 = vlaneseq
  %v8421 = vshrl.u32 %v8420, 7
  %v8422 = vsub.s32 %v8419, %v8421
  %v8423 = vrot.slane %v8416, %v8422
  %v8425 = vunpack.c.l.s4 1935823168
  %v8426 = vunpack.c.0.s8 %v8425
  %v8427 = vlaneseq
  %v8428 = vshrl.u32 %v8427, 7
  %v8429 = vsub.s32 %v8426, %v8428
  %v8430 = vrot.slane %v5582, %v8429
  %v8432 = vunpack.c.l.s4 1935823168
  %v8433 = vunpack.c.0.s8 %v8432
  %v8434 = vlaneseq
  %v8435 = vshrl.u32 %v8434, 7
  %v8436 = vsub.s32 %v8433, %v8435
  %v8437 = vrot.slane %v8430, %v8436
  %v8439 = vunpack.c.l.s4 1935823168
  %v8440 = vunpack.c.0.s8 %v8439
  %v8441 = vlaneseq
  %v8442 = vshrl.u32 %v8441, 7
  %v8443 = vsub.s32 %v8440, %v8442
  %v8444 = vrot.slane %v5918, %v8443
  %v8446 = vunpack.c.l.s4 1935823168
  %v8447 = vunpack.c.0.s8 %v8446
  %v8448 = vlaneseq
  %v8449 = vshrl.u32 %v8448, 7
  %v8450 = vsub.s32 %v8447, %v8449
  %v8451 = vrot.slane %v8444, %v8450
  %v8452 = vunpack.c.l.b16 %v8353
  %v8453 = vunpack.c.l.b16 %v8367
  %v8454 = vunpack.c.l.b16 %v8381
  %v8455 = vunpack.c.l.b16 %v8395
  %v8456 = vunpack.c.l.b16 %v8409
  %v8457 = vunpack.c.l.b16 %v8423
  %v8458 = vunpack.c.l.b16 %v8437
  %v8459 = vunpack.c.l.b16 %v8451
  %v8460 = vrot.slane %v8453, 7
  %v8461 = vsel %vm6234, %v8460, %v8452
  %v8462 = vrot.slane %v8454, 6
  %v8463 = vsel %vm6237, %v8462, %v8461
  %v8464 = vrot.slane %v8455, 5
  %v8465 = vsel %vm6240, %v8464, %v8463
  %v8466 = vrot.slane %v8456, 4
  %v8467 = vsel %vm6243, %v8466, %v8465
  %v8468 = vrot.slane %v8457, 3
  %v8469 = vsel %vm6246, %v8468, %v8467
  %v8470 = vrot.slane %v8458, 2
  %v8471 = vsel %vm6249, %v8470, %v8469
  %v8472 = vrot.slane %v8459, 1
  %v8473 = vsel %vm6252, %v8472, %v8471
  %v8474 = vpack.c.b16 %v8473, %v8473
  %8476 = vst.msk [vmem:[#allocation2 + $0x10] sm:$0xf] %vm6256, %v8474
  %v8478 = vunpack.c.l.s4 1935823168
  %v8479 = vunpack.c.0.s8 %v8478
  %v8480 = vlaneseq
  %v8481 = vshrl.u32 %v8480, 7
  %v8482 = vsub.s32 %v8479, %v8481
  %v8483 = vrot.slane %v3568, %v8482
  %v8485 = vunpack.c.l.s4 1935823168
  %v8486 = vunpack.c.0.s8 %v8485
  %v8487 = vlaneseq
  %v8488 = vshrl.u32 %v8487, 7
  %v8489 = vsub.s32 %v8486, %v8488
  %v8490 = vrot.slane %v8483, %v8489
  %v8492 = vunpack.c.l.s4 1935823168
  %v8493 = vunpack.c.0.s8 %v8492
  %v8494 = vlaneseq
  %v8495 = vshrl.u32 %v8494, 7
  %v8496 = vsub.s32 %v8493, %v8495
  %v8497 = vrot.slane %v3904, %v8496
  %v8499 = vunpack.c.l.s4 1935823168
  %v8500 = vunpack.c.0.s8 %v8499
  %v8501 = vlaneseq
  %v8502 = vshrl.u32 %v8501, 7
  %v8503 = vsub.s32 %v8500, %v8502
  %v8504 = vrot.slane %v8497, %v8503
  %v8506 = vunpack.c.l.s4 1935823168
  %v8507 = vunpack.c.0.s8 %v8506
  %v8508 = vlaneseq
  %v8509 = vshrl.u32 %v8508, 7
  %v8510 = vsub.s32 %v8507, %v8509
  %v8511 = vrot.slane %v4240, %v8510
  %v8513 = vunpack.c.l.s4 1935823168
  %v8514 = vunpack.c.0.s8 %v8513
  %v8515 = vlaneseq
  %v8516 = vshrl.u32 %v8515, 7
  %v8517 = vsub.s32 %v8514, %v8516
  %v8518 = vrot.slane %v8511, %v8517
  %v8520 = vunpack.c.l.s4 1935823168
  %v8521 = vunpack.c.0.s8 %v8520
  %v8522 = vlaneseq
  %v8523 = vshrl.u32 %v8522, 7
  %v8524 = vsub.s32 %v8521, %v8523
  %v8525 = vrot.slane %v4576, %v8524
  %v8527 = vunpack.c.l.s4 1935823168
  %v8528 = vunpack.c.0.s8 %v8527
  %v8529 = vlaneseq
  %v8530 = vshrl.u32 %v8529, 7
  %v8531 = vsub.s32 %v8528, %v8530
  %v8532 = vrot.slane %v8525, %v8531
  %v8534 = vunpack.c.l.s4 1935823168
  %v8535 = vunpack.c.0.s8 %v8534
  %v8536 = vlaneseq
  %v8537 = vshrl.u32 %v8536, 7
  %v8538 = vsub.s32 %v8535, %v8537
  %v8539 = vrot.slane %v4912, %v8538
  %v8541 = vunpack.c.l.s4 1935823168
  %v8542 = vunpack.c.0.s8 %v8541
  %v8543 = vlaneseq
  %v8544 = vshrl.u32 %v8543, 7
  %v8545 = vsub.s32 %v8542, %v8544
  %v8546 = vrot.slane %v8539, %v8545
  %v8548 = vunpack.c.l.s4 1935823168
  %v8549 = vunpack.c.0.s8 %v8548
  %v8550 = vlaneseq
  %v8551 = vshrl.u32 %v8550, 7
  %v8552 = vsub.s32 %v8549, %v8551
  %v8553 = vrot.slane %v5248, %v8552
  %v8555 = vunpack.c.l.s4 1935823168
  %v8556 = vunpack.c.0.s8 %v8555
  %v8557 = vlaneseq
  %v8558 = vshrl.u32 %v8557, 7
  %v8559 = vsub.s32 %v8556, %v8558
  %v8560 = vrot.slane %v8553, %v8559
  %v8562 = vunpack.c.l.s4 1935823168
  %v8563 = vunpack.c.0.s8 %v8562
  %v8564 = vlaneseq
  %v8565 = vshrl.u32 %v8564, 7
  %v8566 = vsub.s32 %v8563, %v8565
  %v8567 = vrot.slane %v5584, %v8566
  %v8569 = vunpack.c.l.s4 1935823168
  %v8570 = vunpack.c.0.s8 %v8569
  %v8571 = vlaneseq
  %v8572 = vshrl.u32 %v8571, 7
  %v8573 = vsub.s32 %v8570, %v8572
  %v8574 = vrot.slane %v8567, %v8573
  %v8576 = vunpack.c.l.s4 1935823168
  %v8577 = vunpack.c.0.s8 %v8576
  %v8578 = vlaneseq
  %v8579 = vshrl.u32 %v8578, 7
  %v8580 = vsub.s32 %v8577, %v8579
  %v8581 = vrot.slane %v5920, %v8580
  %v8583 = vunpack.c.l.s4 1935823168
  %v8584 = vunpack.c.0.s8 %v8583
  %v8585 = vlaneseq
  %v8586 = vshrl.u32 %v8585, 7
  %v8587 = vsub.s32 %v8584, %v8586
  %v8588 = vrot.slane %v8581, %v8587
  %v8589 = vunpack.c.l.b16 %v8490
  %v8590 = vunpack.c.l.b16 %v8504
  %v8591 = vunpack.c.l.b16 %v8518
  %v8592 = vunpack.c.l.b16 %v8532
  %v8593 = vunpack.c.l.b16 %v8546
  %v8594 = vunpack.c.l.b16 %v8560
  %v8595 = vunpack.c.l.b16 %v8574
  %v8596 = vunpack.c.l.b16 %v8588
  %v8597 = vrot.slane %v8590, 7
  %v8598 = vsel %vm6234, %v8597, %v8589
  %v8599 = vrot.slane %v8591, 6
  %v8600 = vsel %vm6237, %v8599, %v8598
  %v8601 = vrot.slane %v8592, 5
  %v8602 = vsel %vm6240, %v8601, %v8600
  %v8603 = vrot.slane %v8593, 4
  %v8604 = vsel %vm6243, %v8603, %v8602
  %v8605 = vrot.slane %v8594, 3
  %v8606 = vsel %vm6246, %v8605, %v8604
  %v8607 = vrot.slane %v8595, 2
  %v8608 = vsel %vm6249, %v8607, %v8606
  %v8609 = vrot.slane %v8596, 1
  %v8610 = vsel %vm6252, %v8609, %v8608
  %v8611 = vpack.c.b16 %v8610, %v8610
  %8612 = vrot.lane.b32.xlu0 %v8611, 32
  %v8613 = vpop.permute.xlu0 %8612
  %8615 = vst.msk [vmem:[#allocation2 + $0x10] sm:$0xf] %vm6396, %v8613
  %v8617 = vunpack.c.l.s4 1935823168
  %v8618 = vunpack.c.0.s8 %v8617
  %v8619 = vlaneseq
  %v8620 = vshrl.u32 %v8619, 7
  %v8621 = vsub.s32 %v8618, %v8620
  %v8622 = vrot.slane %v3551, %v8621
  %v8624 = vunpack.c.l.s4 1935823168
  %v8625 = vunpack.c.0.s8 %v8624
  %v8626 = vlaneseq
  %v8627 = vshrl.u32 %v8626, 7
  %v8628 = vsub.s32 %v8625, %v8627
  %v8629 = vrot.slane %v8622, %v8628
  %v8631 = vunpack.c.l.s4 1935823168
  %v8632 = vunpack.c.0.s8 %v8631
  %v8633 = vlaneseq
  %v8634 = vshrl.u32 %v8633, 7
  %v8635 = vsub.s32 %v8632, %v8634
  %v8636 = vrot.slane %v3887, %v8635
  %v8638 = vunpack.c.l.s4 1935823168
  %v8639 = vunpack.c.0.s8 %v8638
  %v8640 = vlaneseq
  %v8641 = vshrl.u32 %v8640, 7
  %v8642 = vsub.s32 %v8639, %v8641
  %v8643 = vrot.slane %v8636, %v8642
  %v8645 = vunpack.c.l.s4 1935823168
  %v8646 = vunpack.c.0.s8 %v8645
  %v8647 = vlaneseq
  %v8648 = vshrl.u32 %v8647, 7
  %v8649 = vsub.s32 %v8646, %v8648
  %v8650 = vrot.slane %v4223, %v8649
  %v8652 = vunpack.c.l.s4 1935823168
  %v8653 = vunpack.c.0.s8 %v8652
  %v8654 = vlaneseq
  %v8655 = vshrl.u32 %v8654, 7
  %v8656 = vsub.s32 %v8653, %v8655
  %v8657 = vrot.slane %v8650, %v8656
  %v8659 = vunpack.c.l.s4 1935823168
  %v8660 = vunpack.c.0.s8 %v8659
  %v8661 = vlaneseq
  %v8662 = vshrl.u32 %v8661, 7
  %v8663 = vsub.s32 %v8660, %v8662
  %v8664 = vrot.slane %v4559, %v8663
  %v8666 = vunpack.c.l.s4 1935823168
  %v8667 = vunpack.c.0.s8 %v8666
  %v8668 = vlaneseq
  %v8669 = vshrl.u32 %v8668, 7
  %v8670 = vsub.s32 %v8667, %v8669
  %v8671 = vrot.slane %v8664, %v8670
  %v8673 = vunpack.c.l.s4 1935823168
  %v8674 = vunpack.c.0.s8 %v8673
  %v8675 = vlaneseq
  %v8676 = vshrl.u32 %v8675, 7
  %v8677 = vsub.s32 %v8674, %v8676
  %v8678 = vrot.slane %v4895, %v8677
  %v8680 = vunpack.c.l.s4 1935823168
  %v8681 = vunpack.c.0.s8 %v8680
  %v8682 = vlaneseq
  %v8683 = vshrl.u32 %v8682, 7
  %v8684 = vsub.s32 %v8681, %v8683
  %v8685 = vrot.slane %v8678, %v8684
  %v8687 = vunpack.c.l.s4 1935823168
  %v8688 = vunpack.c.0.s8 %v8687
  %v8689 = vlaneseq
  %v8690 = vshrl.u32 %v8689, 7
  %v8691 = vsub.s32 %v8688, %v8690
  %v8692 = vrot.slane %v5231, %v8691
  %v8694 = vunpack.c.l.s4 1935823168
  %v8695 = vunpack.c.0.s8 %v8694
  %v8696 = vlaneseq
  %v8697 = vshrl.u32 %v8696, 7
  %v8698 = vsub.s32 %v8695, %v8697
  %v8699 = vrot.slane %v8692, %v8698
  %v8701 = vunpack.c.l.s4 1935823168
  %v8702 = vunpack.c.0.s8 %v8701
  %v8703 = vlaneseq
  %v8704 = vshrl.u32 %v8703, 7
  %v8705 = vsub.s32 %v8702, %v8704
  %v8706 = vrot.slane %v5567, %v8705
  %v8708 = vunpack.c.l.s4 1935823168
  %v8709 = vunpack.c.0.s8 %v8708
  %v8710 = vlaneseq
  %v8711 = vshrl.u32 %v8710, 7
  %v8712 = vsub.s32 %v8709, %v8711
  %v8713 = vrot.slane %v8706, %v8712
  %v8715 = vunpack.c.l.s4 1935823168
  %v8716 = vunpack.c.0.s8 %v8715
  %v8717 = vlaneseq
  %v8718 = vshrl.u32 %v8717, 7
  %v8719 = vsub.s32 %v8716, %v8718
  %v8720 = vrot.slane %v5903, %v8719
  %v8722 = vunpack.c.l.s4 1935823168
  %v8723 = vunpack.c.0.s8 %v8722
  %v8724 = vlaneseq
  %v8725 = vshrl.u32 %v8724, 7
  %v8726 = vsub.s32 %v8723, %v8725
  %v8727 = vrot.slane %v8720, %v8726
  %v8728 = vunpack.c.l.b16 %v8629
  %v8729 = vunpack.c.l.b16 %v8643
  %v8730 = vunpack.c.l.b16 %v8657
  %v8731 = vunpack.c.l.b16 %v8671
  %v8732 = vunpack.c.l.b16 %v8685
  %v8733 = vunpack.c.l.b16 %v8699
  %v8734 = vunpack.c.l.b16 %v8713
  %v8735 = vunpack.c.l.b16 %v8727
  %v8736 = vrot.slane %v8729, 7
  %v8737 = vsel %vm6234, %v8736, %v8728
  %v8738 = vrot.slane %v8730, 6
  %v8739 = vsel %vm6237, %v8738, %v8737
  %v8740 = vrot.slane %v8731, 5
  %v8741 = vsel %vm6240, %v8740, %v8739
  %v8742 = vrot.slane %v8732, 4
  %v8743 = vsel %vm6243, %v8742, %v8741
  %v8744 = vrot.slane %v8733, 3
  %v8745 = vsel %vm6246, %v8744, %v8743
  %v8746 = vrot.slane %v8734, 2
  %v8747 = vsel %vm6249, %v8746, %v8745
  %v8748 = vrot.slane %v8735, 1
  %v8749 = vsel %vm6252, %v8748, %v8747
  %v8750 = vpack.c.b16 %v8749, %v8749
  %8751 = vrot.lane.b32.xlu0 %v8750, 64
  %v8752 = vpop.permute.xlu0 %8751
  %8754 = vst.msk [vmem:[#allocation2 + $0x10] sm:$0xf] %vm6536, %v8752
  %v8756 = vunpack.c.l.s4 1935823168
  %v8757 = vunpack.c.0.s8 %v8756
  %v8758 = vlaneseq
  %v8759 = vshrl.u32 %v8758, 7
  %v8760 = vsub.s32 %v8757, %v8759
  %v8761 = vrot.slane %v3565, %v8760
  %v8763 = vunpack.c.l.s4 1935823168
  %v8764 = vunpack.c.0.s8 %v8763
  %v8765 = vlaneseq
  %v8766 = vshrl.u32 %v8765, 7
  %v8767 = vsub.s32 %v8764, %v8766
  %v8768 = vrot.slane %v8761, %v8767
  %v8770 = vunpack.c.l.s4 1935823168
  %v8771 = vunpack.c.0.s8 %v8770
  %v8772 = vlaneseq
  %v8773 = vshrl.u32 %v8772, 7
  %v8774 = vsub.s32 %v8771, %v8773
  %v8775 = vrot.slane %v3901, %v8774
  %v8777 = vunpack.c.l.s4 1935823168
  %v8778 = vunpack.c.0.s8 %v8777
  %v8779 = vlaneseq
  %v8780 = vshrl.u32 %v8779, 7
  %v8781 = vsub.s32 %v8778, %v8780
  %v8782 = vrot.slane %v8775, %v8781
  %v8784 = vunpack.c.l.s4 1935823168
  %v8785 = vunpack.c.0.s8 %v8784
  %v8786 = vlaneseq
  %v8787 = vshrl.u32 %v8786, 7
  %v8788 = vsub.s32 %v8785, %v8787
  %v8789 = vrot.slane %v4237, %v8788
  %v8791 = vunpack.c.l.s4 1935823168
  %v8792 = vunpack.c.0.s8 %v8791
  %v8793 = vlaneseq
  %v8794 = vshrl.u32 %v8793, 7
  %v8795 = vsub.s32 %v8792, %v8794
  %v8796 = vrot.slane %v8789, %v8795
  %v8798 = vunpack.c.l.s4 1935823168
  %v8799 = vunpack.c.0.s8 %v8798
  %v8800 = vlaneseq
  %v8801 = vshrl.u32 %v8800, 7
  %v8802 = vsub.s32 %v8799, %v8801
  %v8803 = vrot.slane %v4573, %v8802
  %v8805 = vunpack.c.l.s4 1935823168
  %v8806 = vunpack.c.0.s8 %v8805
  %v8807 = vlaneseq
  %v8808 = vshrl.u32 %v8807, 7
  %v8809 = vsub.s32 %v8806, %v8808
  %v8810 = vrot.slane %v8803, %v8809
  %v8812 = vunpack.c.l.s4 1935823168
  %v8813 = vunpack.c.0.s8 %v8812
  %v8814 = vlaneseq
  %v8815 = vshrl.u32 %v8814, 7
  %v8816 = vsub.s32 %v8813, %v8815
  %v8817 = vrot.slane %v4909, %v8816
  %v8819 = vunpack.c.l.s4 1935823168
  %v8820 = vunpack.c.0.s8 %v8819
  %v8821 = vlaneseq
  %v8822 = vshrl.u32 %v8821, 7
  %v8823 = vsub.s32 %v8820, %v8822
  %v8824 = vrot.slane %v8817, %v8823
  %v8826 = vunpack.c.l.s4 1935823168
  %v8827 = vunpack.c.0.s8 %v8826
  %v8828 = vlaneseq
  %v8829 = vshrl.u32 %v8828, 7
  %v8830 = vsub.s32 %v8827, %v8829
  %v8831 = vrot.slane %v5245, %v8830
  %v8833 = vunpack.c.l.s4 1935823168
  %v8834 = vunpack.c.0.s8 %v8833
  %v8835 = vlaneseq
  %v8836 = vshrl.u32 %v8835, 7
  %v8837 = vsub.s32 %v8834, %v8836
  %v8838 = vrot.slane %v8831, %v8837
  %v8840 = vunpack.c.l.s4 1935823168
  %v8841 = vunpack.c.0.s8 %v8840
  %v8842 = vlaneseq
  %v8843 = vshrl.u32 %v8842, 7
  %v8844 = vsub.s32 %v8841, %v8843
  %v8845 = vrot.slane %v5581, %v8844
  %v8847 = vunpack.c.l.s4 1935823168
  %v8848 = vunpack.c.0.s8 %v8847
  %v8849 = vlaneseq
  %v8850 = vshrl.u32 %v8849, 7
  %v8851 = vsub.s32 %v8848, %v8850
  %v8852 = vrot.slane %v8845, %v8851
  %v8854 = vunpack.c.l.s4 1935823168
  %v8855 = vunpack.c.0.s8 %v8854
  %v8856 = vlaneseq
  %v8857 = vshrl.u32 %v8856, 7
  %v8858 = vsub.s32 %v8855, %v8857
  %v8859 = vrot.slane %v5917, %v8858
  %v8861 = vunpack.c.l.s4 1935823168
  %v8862 = vunpack.c.0.s8 %v8861
  %v8863 = vlaneseq
  %v8864 = vshrl.u32 %v8863, 7
  %v8865 = vsub.s32 %v8862, %v8864
  %v8866 = vrot.slane %v8859, %v8865
  %v8867 = vunpack.c.l.b16 %v8768
  %v8868 = vunpack.c.l.b16 %v8782
  %v8869 = vunpack.c.l.b16 %v8796
  %v8870 = vunpack.c.l.b16 %v8810
  %v8871 = vunpack.c.l.b16 %v8824
  %v8872 = vunpack.c.l.b16 %v8838
  %v8873 = vunpack.c.l.b16 %v8852
  %v8874 = vunpack.c.l.b16 %v8866
  %v8875 = vrot.slane %v8868, 7
  %v8876 = vsel %vm6234, %v8875, %v8867
  %v8877 = vrot.slane %v8869, 6
  %v8878 = vsel %vm6237, %v8877, %v8876
  %v8879 = vrot.slane %v8870, 5
  %v8880 = vsel %vm6240, %v8879, %v8878
  %v8881 = vrot.slane %v8871, 4
  %v8882 = vsel %vm6243, %v8881, %v8880
  %v8883 = vrot.slane %v8872, 3
  %v8884 = vsel %vm6246, %v8883, %v8882
  %v8885 = vrot.slane %v8873, 2
  %v8886 = vsel %vm6249, %v8885, %v8884
  %v8887 = vrot.slane %v8874, 1
  %v8888 = vsel %vm6252, %v8887, %v8886
  %v8889 = vpack.c.b16 %v8888, %v8888
  %8890 = vrot.lane.b32.xlu0 %v8889, 96
  %v8891 = vpop.permute.xlu0 %8890
  %8893 = vst.msk [vmem:[#allocation2 + $0x10] sm:$0xf] %vm6676, %v8891
  %v8895 = vunpack.c.l.s4 1935823168
  %v8896 = vunpack.c.0.s8 %v8895
  %v8897 = vlaneseq
  %v8898 = vshrl.u32 %v8897, 7
  %v8899 = vsub.s32 %v8896, %v8898
  %v8900 = vrot.slane %v3567, %v8899
  %v8902 = vunpack.c.l.s4 1935823168
  %v8903 = vunpack.c.0.s8 %v8902
  %v8904 = vlaneseq
  %v8905 = vshrl.u32 %v8904, 7
  %v8906 = vsub.s32 %v8903, %v8905
  %v8907 = vrot.slane %v8900, %v8906
  %v8909 = vunpack.c.l.s4 1935823168
  %v8910 = vunpack.c.0.s8 %v8909
  %v8911 = vlaneseq
  %v8912 = vshrl.u32 %v8911, 7
  %v8913 = vsub.s32 %v8910, %v8912
  %v8914 = vrot.slane %v3903, %v8913
  %v8916 = vunpack.c.l.s4 1935823168
  %v8917 = vunpack.c.0.s8 %v8916
  %v8918 = vlaneseq
  %v8919 = vshrl.u32 %v8918, 7
  %v8920 = vsub.s32 %v8917, %v8919
  %v8921 = vrot.slane %v8914, %v8920
  %v8923 = vunpack.c.l.s4 1935823168
  %v8924 = vunpack.c.0.s8 %v8923
  %v8925 = vlaneseq
  %v8926 = vshrl.u32 %v8925, 7
  %v8927 = vsub.s32 %v8924, %v8926
  %v8928 = vrot.slane %v4239, %v8927
  %v8930 = vunpack.c.l.s4 1935823168
  %v8931 = vunpack.c.0.s8 %v8930
  %v8932 = vlaneseq
  %v8933 = vshrl.u32 %v8932, 7
  %v8934 = vsub.s32 %v8931, %v8933
  %v8935 = vrot.slane %v8928, %v8934
  %v8937 = vunpack.c.l.s4 1935823168
  %v8938 = vunpack.c.0.s8 %v8937
  %v8939 = vlaneseq
  %v8940 = vshrl.u32 %v8939, 7
  %v8941 = vsub.s32 %v8938, %v8940
  %v8942 = vrot.slane %v4575, %v8941
  %v8944 = vunpack.c.l.s4 1935823168
  %v8945 = vunpack.c.0.s8 %v8944
  %v8946 = vlaneseq
  %v8947 = vshrl.u32 %v8946, 7
  %v8948 = vsub.s32 %v8945, %v8947
  %v8949 = vrot.slane %v8942, %v8948
  %v8951 = vunpack.c.l.s4 1935823168
  %v8952 = vunpack.c.0.s8 %v8951
  %v8953 = vlaneseq
  %v8954 = vshrl.u32 %v8953, 7
  %v8955 = vsub.s32 %v8952, %v8954
  %v8956 = vrot.slane %v4911, %v8955
  %v8958 = vunpack.c.l.s4 1935823168
  %v8959 = vunpack.c.0.s8 %v8958
  %v8960 = vlaneseq
  %v8961 = vshrl.u32 %v8960, 7
  %v8962 = vsub.s32 %v8959, %v8961
  %v8963 = vrot.slane %v8956, %v8962
  %v8965 = vunpack.c.l.s4 1935823168
  %v8966 = vunpack.c.0.s8 %v8965
  %v8967 = vlaneseq
  %v8968 = vshrl.u32 %v8967, 7
  %v8969 = vsub.s32 %v8966, %v8968
  %v8970 = vrot.slane %v5247, %v8969
  %v8972 = vunpack.c.l.s4 1935823168
  %v8973 = vunpack.c.0.s8 %v8972
  %v8974 = vlaneseq
  %v8975 = vshrl.u32 %v8974, 7
  %v8976 = vsub.s32 %v8973, %v8975
  %v8977 = vrot.slane %v8970, %v8976
  %v8979 = vunpack.c.l.s4 1935823168
  %v8980 = vunpack.c.0.s8 %v8979
  %v8981 = vlaneseq
  %v8982 = vshrl.u32 %v8981, 7
  %v8983 = vsub.s32 %v8980, %v8982
  %v8984 = vrot.slane %v5583, %v8983
  %v8986 = vunpack.c.l.s4 1935823168
  %v8987 = vunpack.c.0.s8 %v8986
  %v8988 = vlaneseq
  %v8989 = vshrl.u32 %v8988, 7
  %v8990 = vsub.s32 %v8987, %v8989
  %v8991 = vrot.slane %v8984, %v8990
  %v8993 = vunpack.c.l.s4 1935823168
  %v8994 = vunpack.c.0.s8 %v8993
  %v8995 = vlaneseq
  %v8996 = vshrl.u32 %v8995, 7
  %v8997 = vsub.s32 %v8994, %v8996
  %v8998 = vrot.slane %v5919, %v8997
  %v9000 = vunpack.c.l.s4 1935823168
  %v9001 = vunpack.c.0.s8 %v9000
  %v9002 = vlaneseq
  %v9003 = vshrl.u32 %v9002, 7
  %v9004 = vsub.s32 %v9001, %v9003
  %v9005 = vrot.slane %v8998, %v9004
  %v9006 = vunpack.c.l.b16 %v8907
  %v9007 = vunpack.c.l.b16 %v8921
  %v9008 = vunpack.c.l.b16 %v8935
  %v9009 = vunpack.c.l.b16 %v8949
  %v9010 = vunpack.c.l.b16 %v8963
  %v9011 = vunpack.c.l.b16 %v8977
  %v9012 = vunpack.c.l.b16 %v8991
  %v9013 = vunpack.c.l.b16 %v9005
  %v9014 = vrot.slane %v9007, 7
  %v9015 = vsel %vm6234, %v9014, %v9006
  %v9016 = vrot.slane %v9008, 6
  %v9017 = vsel %vm6237, %v9016, %v9015
  %v9018 = vrot.slane %v9009, 5
  %v9019 = vsel %vm6240, %v9018, %v9017
  %v9020 = vrot.slane %v9010, 4
  %v9021 = vsel %vm6243, %v9020, %v9019
  %v9022 = vrot.slane %v9011, 3
  %v9023 = vsel %vm6246, %v9022, %v9021
  %v9024 = vrot.slane %v9012, 2
  %v9025 = vsel %vm6249, %v9024, %v9023
  %v9026 = vrot.slane %v9013, 1
  %v9027 = vsel %vm6252, %v9026, %v9025
  %v9028 = vpack.c.b16 %v9027, %v9027
  %9030 = vst.msk [vmem:[#allocation2 + $0x14] sm:$0xf] %vm6256, %v9028
  %v9032 = vunpack.c.l.s4 1935823168
  %v9033 = vunpack.c.0.s8 %v9032
  %v9034 = vlaneseq
  %v9035 = vshrl.u32 %v9034, 7
  %v9036 = vsub.s32 %v9033, %v9035
  %v9037 = vrot.slane %v3592, %v9036
  %v9039 = vunpack.c.l.s4 1935823168
  %v9040 = vunpack.c.0.s8 %v9039
  %v9041 = vlaneseq
  %v9042 = vshrl.u32 %v9041, 7
  %v9043 = vsub.s32 %v9040, %v9042
  %v9044 = vrot.slane %v9037, %v9043
  %v9046 = vunpack.c.l.s4 1935823168
  %v9047 = vunpack.c.0.s8 %v9046
  %v9048 = vlaneseq
  %v9049 = vshrl.u32 %v9048, 7
  %v9050 = vsub.s32 %v9047, %v9049
  %v9051 = vrot.slane %v3928, %v9050
  %v9053 = vunpack.c.l.s4 1935823168
  %v9054 = vunpack.c.0.s8 %v9053
  %v9055 = vlaneseq
  %v9056 = vshrl.u32 %v9055, 7
  %v9057 = vsub.s32 %v9054, %v9056
  %v9058 = vrot.slane %v9051, %v9057
  %v9060 = vunpack.c.l.s4 1935823168
  %v9061 = vunpack.c.0.s8 %v9060
  %v9062 = vlaneseq
  %v9063 = vshrl.u32 %v9062, 7
  %v9064 = vsub.s32 %v9061, %v9063
  %v9065 = vrot.slane %v4264, %v9064
  %v9067 = vunpack.c.l.s4 1935823168
  %v9068 = vunpack.c.0.s8 %v9067
  %v9069 = vlaneseq
  %v9070 = vshrl.u32 %v9069, 7
  %v9071 = vsub.s32 %v9068, %v9070
  %v9072 = vrot.slane %v9065, %v9071
  %v9074 = vunpack.c.l.s4 1935823168
  %v9075 = vunpack.c.0.s8 %v9074
  %v9076 = vlaneseq
  %v9077 = vshrl.u32 %v9076, 7
  %v9078 = vsub.s32 %v9075, %v9077
  %v9079 = vrot.slane %v4600, %v9078
  %v9081 = vunpack.c.l.s4 1935823168
  %v9082 = vunpack.c.0.s8 %v9081
  %v9083 = vlaneseq
  %v9084 = vshrl.u32 %v9083, 7
  %v9085 = vsub.s32 %v9082, %v9084
  %v9086 = vrot.slane %v9079, %v9085
  %v9088 = vunpack.c.l.s4 1935823168
  %v9089 = vunpack.c.0.s8 %v9088
  %v9090 = vlaneseq
  %v9091 = vshrl.u32 %v9090, 7
  %v9092 = vsub.s32 %v9089, %v9091
  %v9093 = vrot.slane %v4936, %v9092
  %v9095 = vunpack.c.l.s4 1935823168
  %v9096 = vunpack.c.0.s8 %v9095
  %v9097 = vlaneseq
  %v9098 = vshrl.u32 %v9097, 7
  %v9099 = vsub.s32 %v9096, %v9098
  %v9100 = vrot.slane %v9093, %v9099
  %v9102 = vunpack.c.l.s4 1935823168
  %v9103 = vunpack.c.0.s8 %v9102
  %v9104 = vlaneseq
  %v9105 = vshrl.u32 %v9104, 7
  %v9106 = vsub.s32 %v9103, %v9105
  %v9107 = vrot.slane %v5272, %v9106
  %v9109 = vunpack.c.l.s4 1935823168
  %v9110 = vunpack.c.0.s8 %v9109
  %v9111 = vlaneseq
  %v9112 = vshrl.u32 %v9111, 7
  %v9113 = vsub.s32 %v9110, %v9112
  %v9114 = vrot.slane %v9107, %v9113
  %v9116 = vunpack.c.l.s4 1935823168
  %v9117 = vunpack.c.0.s8 %v9116
  %v9118 = vlaneseq
  %v9119 = vshrl.u32 %v9118, 7
  %v9120 = vsub.s32 %v9117, %v9119
  %v9121 = vrot.slane %v5608, %v9120
  %v9123 = vunpack.c.l.s4 1935823168
  %v9124 = vunpack.c.0.s8 %v9123
  %v9125 = vlaneseq
  %v9126 = vshrl.u32 %v9125, 7
  %v9127 = vsub.s32 %v9124, %v9126
  %v9128 = vrot.slane %v9121, %v9127
  %v9130 = vunpack.c.l.s4 1935823168
  %v9131 = vunpack.c.0.s8 %v9130
  %v9132 = vlaneseq
  %v9133 = vshrl.u32 %v9132, 7
  %v9134 = vsub.s32 %v9131, %v9133
  %v9135 = vrot.slane %v5944, %v9134
  %v9137 = vunpack.c.l.s4 1935823168
  %v9138 = vunpack.c.0.s8 %v9137
  %v9139 = vlaneseq
  %v9140 = vshrl.u32 %v9139, 7
  %v9141 = vsub.s32 %v9138, %v9140
  %v9142 = vrot.slane %v9135, %v9141
  %v9143 = vunpack.c.l.b16 %v9044
  %v9144 = vunpack.c.l.b16 %v9058
  %v9145 = vunpack.c.l.b16 %v9072
  %v9146 = vunpack.c.l.b16 %v9086
  %v9147 = vunpack.c.l.b16 %v9100
  %v9148 = vunpack.c.l.b16 %v9114
  %v9149 = vunpack.c.l.b16 %v9128
  %v9150 = vunpack.c.l.b16 %v9142
  %v9151 = vrot.slane %v9144, 7
  %v9152 = vsel %vm6234, %v9151, %v9143
  %v9153 = vrot.slane %v9145, 6
  %v9154 = vsel %vm6237, %v9153, %v9152
  %v9155 = vrot.slane %v9146, 5
  %v9156 = vsel %vm6240, %v9155, %v9154
  %v9157 = vrot.slane %v9147, 4
  %v9158 = vsel %vm6243, %v9157, %v9156
  %v9159 = vrot.slane %v9148, 3
  %v9160 = vsel %vm6246, %v9159, %v9158
  %v9161 = vrot.slane %v9149, 2
  %v9162 = vsel %vm6249, %v9161, %v9160
  %v9163 = vrot.slane %v9150, 1
  %v9164 = vsel %vm6252, %v9163, %v9162
  %v9165 = vpack.c.b16 %v9164, %v9164
  %9166 = vrot.lane.b32.xlu0 %v9165, 32
  %v9167 = vpop.permute.xlu0 %9166
  %9169 = vst.msk [vmem:[#allocation2 + $0x14] sm:$0xf] %vm6396, %v9167
  %v9171 = vunpack.c.l.s4 1935823168
  %v9172 = vunpack.c.0.s8 %v9171
  %v9173 = vlaneseq
  %v9174 = vshrl.u32 %v9173, 7
  %v9175 = vsub.s32 %v9172, %v9174
  %v9176 = vrot.slane %v3606, %v9175
  %v9178 = vunpack.c.l.s4 1935823168
  %v9179 = vunpack.c.0.s8 %v9178
  %v9180 = vlaneseq
  %v9181 = vshrl.u32 %v9180, 7
  %v9182 = vsub.s32 %v9179, %v9181
  %v9183 = vrot.slane %v9176, %v9182
  %v9185 = vunpack.c.l.s4 1935823168
  %v9186 = vunpack.c.0.s8 %v9185
  %v9187 = vlaneseq
  %v9188 = vshrl.u32 %v9187, 7
  %v9189 = vsub.s32 %v9186, %v9188
  %v9190 = vrot.slane %v3942, %v9189
  %v9192 = vunpack.c.l.s4 1935823168
  %v9193 = vunpack.c.0.s8 %v9192
  %v9194 = vlaneseq
  %v9195 = vshrl.u32 %v9194, 7
  %v9196 = vsub.s32 %v9193, %v9195
  %v9197 = vrot.slane %v9190, %v9196
  %v9199 = vunpack.c.l.s4 1935823168
  %v9200 = vunpack.c.0.s8 %v9199
  %v9201 = vlaneseq
  %v9202 = vshrl.u32 %v9201, 7
  %v9203 = vsub.s32 %v9200, %v9202
  %v9204 = vrot.slane %v4278, %v9203
  %v9206 = vunpack.c.l.s4 1935823168
  %v9207 = vunpack.c.0.s8 %v9206
  %v9208 = vlaneseq
  %v9209 = vshrl.u32 %v9208, 7
  %v9210 = vsub.s32 %v9207, %v9209
  %v9211 = vrot.slane %v9204, %v9210
  %v9213 = vunpack.c.l.s4 1935823168
  %v9214 = vunpack.c.0.s8 %v9213
  %v9215 = vlaneseq
  %v9216 = vshrl.u32 %v9215, 7
  %v9217 = vsub.s32 %v9214, %v9216
  %v9218 = vrot.slane %v4614, %v9217
  %v9220 = vunpack.c.l.s4 1935823168
  %v9221 = vunpack.c.0.s8 %v9220
  %v9222 = vlaneseq
  %v9223 = vshrl.u32 %v9222, 7
  %v9224 = vsub.s32 %v9221, %v9223
  %v9225 = vrot.slane %v9218, %v9224
  %v9227 = vunpack.c.l.s4 1935823168
  %v9228 = vunpack.c.0.s8 %v9227
  %v9229 = vlaneseq
  %v9230 = vshrl.u32 %v9229, 7
  %v9231 = vsub.s32 %v9228, %v9230
  %v9232 = vrot.slane %v4950, %v9231
  %v9234 = vunpack.c.l.s4 1935823168
  %v9235 = vunpack.c.0.s8 %v9234
  %v9236 = vlaneseq
  %v9237 = vshrl.u32 %v9236, 7
  %v9238 = vsub.s32 %v9235, %v9237
  %v9239 = vrot.slane %v9232, %v9238
  %v9241 = vunpack.c.l.s4 1935823168
  %v9242 = vunpack.c.0.s8 %v9241
  %v9243 = vlaneseq
  %v9244 = vshrl.u32 %v9243, 7
  %v9245 = vsub.s32 %v9242, %v9244
  %v9246 = vrot.slane %v5286, %v9245
  %v9248 = vunpack.c.l.s4 1935823168
  %v9249 = vunpack.c.0.s8 %v9248
  %v9250 = vlaneseq
  %v9251 = vshrl.u32 %v9250, 7
  %v9252 = vsub.s32 %v9249, %v9251
  %v9253 = vrot.slane %v9246, %v9252
  %v9255 = vunpack.c.l.s4 1935823168
  %v9256 = vunpack.c.0.s8 %v9255
  %v9257 = vlaneseq
  %v9258 = vshrl.u32 %v9257, 7
  %v9259 = vsub.s32 %v9256, %v9258
  %v9260 = vrot.slane %v5622, %v9259
  %v9262 = vunpack.c.l.s4 1935823168
  %v9263 = vunpack.c.0.s8 %v9262
  %v9264 = vlaneseq
  %v9265 = vshrl.u32 %v9264, 7
  %v9266 = vsub.s32 %v9263, %v9265
  %v9267 = vrot.slane %v9260, %v9266
  %v9269 = vunpack.c.l.s4 1935823168
  %v9270 = vunpack.c.0.s8 %v9269
  %v9271 = vlaneseq
  %v9272 = vshrl.u32 %v9271, 7
  %v9273 = vsub.s32 %v9270, %v9272
  %v9274 = vrot.slane %v5958, %v9273
  %v9276 = vunpack.c.l.s4 1935823168
  %v9277 = vunpack.c.0.s8 %v9276
  %v9278 = vlaneseq
  %v9279 = vshrl.u32 %v9278, 7
  %v9280 = vsub.s32 %v9277, %v9279
  %v9281 = vrot.slane %v9274, %v9280
  %v9282 = vunpack.c.l.b16 %v9183
  %v9283 = vunpack.c.l.b16 %v9197
  %v9284 = vunpack.c.l.b16 %v9211
  %v9285 = vunpack.c.l.b16 %v9225
  %v9286 = vunpack.c.l.b16 %v9239
  %v9287 = vunpack.c.l.b16 %v9253
  %v9288 = vunpack.c.l.b16 %v9267
  %v9289 = vunpack.c.l.b16 %v9281
  %v9290 = vrot.slane %v9283, 7
  %v9291 = vsel %vm6234, %v9290, %v9282
  %v9292 = vrot.slane %v9284, 6
  %v9293 = vsel %vm6237, %v9292, %v9291
  %v9294 = vrot.slane %v9285, 5
  %v9295 = vsel %vm6240, %v9294, %v9293
  %v9296 = vrot.slane %v9286, 4
  %v9297 = vsel %vm6243, %v9296, %v9295
  %v9298 = vrot.slane %v9287, 3
  %v9299 = vsel %vm6246, %v9298, %v9297
  %v9300 = vrot.slane %v9288, 2
  %v9301 = vsel %vm6249, %v9300, %v9299
  %v9302 = vrot.slane %v9289, 1
  %v9303 = vsel %vm6252, %v9302, %v9301
  %v9304 = vpack.c.b16 %v9303, %v9303
  %9305 = vrot.lane.b32.xlu0 %v9304, 64
  %v9306 = vpop.permute.xlu0 %9305
  %9308 = vst.msk [vmem:[#allocation2 + $0x14] sm:$0xf] %vm6536, %v9306
  %v9310 = vunpack.c.l.s4 1935823168
  %v9311 = vunpack.c.0.s8 %v9310
  %v9312 = vlaneseq
  %v9313 = vshrl.u32 %v9312, 7
  %v9314 = vsub.s32 %v9311, %v9313
  %v9315 = vrot.slane %v3614, %v9314
  %v9317 = vunpack.c.l.s4 1935823168
  %v9318 = vunpack.c.0.s8 %v9317
  %v9319 = vlaneseq
  %v9320 = vshrl.u32 %v9319, 7
  %v9321 = vsub.s32 %v9318, %v9320
  %v9322 = vrot.slane %v9315, %v9321
  %v9324 = vunpack.c.l.s4 1935823168
  %v9325 = vunpack.c.0.s8 %v9324
  %v9326 = vlaneseq
  %v9327 = vshrl.u32 %v9326, 7
  %v9328 = vsub.s32 %v9325, %v9327
  %v9329 = vrot.slane %v3950, %v9328
  %v9331 = vunpack.c.l.s4 1935823168
  %v9332 = vunpack.c.0.s8 %v9331
  %v9333 = vlaneseq
  %v9334 = vshrl.u32 %v9333, 7
  %v9335 = vsub.s32 %v9332, %v9334
  %v9336 = vrot.slane %v9329, %v9335
  %v9338 = vunpack.c.l.s4 1935823168
  %v9339 = vunpack.c.0.s8 %v9338
  %v9340 = vlaneseq
  %v9341 = vshrl.u32 %v9340, 7
  %v9342 = vsub.s32 %v9339, %v9341
  %v9343 = vrot.slane %v4286, %v9342
  %v9345 = vunpack.c.l.s4 1935823168
  %v9346 = vunpack.c.0.s8 %v9345
  %v9347 = vlaneseq
  %v9348 = vshrl.u32 %v9347, 7
  %v9349 = vsub.s32 %v9346, %v9348
  %v9350 = vrot.slane %v9343, %v9349
  %v9352 = vunpack.c.l.s4 1935823168
  %v9353 = vunpack.c.0.s8 %v9352
  %v9354 = vlaneseq
  %v9355 = vshrl.u32 %v9354, 7
  %v9356 = vsub.s32 %v9353, %v9355
  %v9357 = vrot.slane %v4622, %v9356
  %v9359 = vunpack.c.l.s4 1935823168
  %v9360 = vunpack.c.0.s8 %v9359
  %v9361 = vlaneseq
  %v9362 = vshrl.u32 %v9361, 7
  %v9363 = vsub.s32 %v9360, %v9362
  %v9364 = vrot.slane %v9357, %v9363
  %v9366 = vunpack.c.l.s4 1935823168
  %v9367 = vunpack.c.0.s8 %v9366
  %v9368 = vlaneseq
  %v9369 = vshrl.u32 %v9368, 7
  %v9370 = vsub.s32 %v9367, %v9369
  %v9371 = vrot.slane %v4958, %v9370
  %v9373 = vunpack.c.l.s4 1935823168
  %v9374 = vunpack.c.0.s8 %v9373
  %v9375 = vlaneseq
  %v9376 = vshrl.u32 %v9375, 7
  %v9377 = vsub.s32 %v9374, %v9376
  %v9378 = vrot.slane %v9371, %v9377
  %v9380 = vunpack.c.l.s4 1935823168
  %v9381 = vunpack.c.0.s8 %v9380
  %v9382 = vlaneseq
  %v9383 = vshrl.u32 %v9382, 7
  %v9384 = vsub.s32 %v9381, %v9383
  %v9385 = vrot.slane %v5294, %v9384
  %v9387 = vunpack.c.l.s4 1935823168
  %v9388 = vunpack.c.0.s8 %v9387
  %v9389 = vlaneseq
  %v9390 = vshrl.u32 %v9389, 7
  %v9391 = vsub.s32 %v9388, %v9390
  %v9392 = vrot.slane %v9385, %v9391
  %v9394 = vunpack.c.l.s4 1935823168
  %v9395 = vunpack.c.0.s8 %v9394
  %v9396 = vlaneseq
  %v9397 = vshrl.u32 %v9396, 7
  %v9398 = vsub.s32 %v9395, %v9397
  %v9399 = vrot.slane %v5630, %v9398
  %v9401 = vunpack.c.l.s4 1935823168
  %v9402 = vunpack.c.0.s8 %v9401
  %v9403 = vlaneseq
  %v9404 = vshrl.u32 %v9403, 7
  %v9405 = vsub.s32 %v9402, %v9404
  %v9406 = vrot.slane %v9399, %v9405
  %v9408 = vunpack.c.l.s4 1935823168
  %v9409 = vunpack.c.0.s8 %v9408
  %v9410 = vlaneseq
  %v9411 = vshrl.u32 %v9410, 7
  %v9412 = vsub.s32 %v9409, %v9411
  %v9413 = vrot.slane %v5966, %v9412
  %v9415 = vunpack.c.l.s4 1935823168
  %v9416 = vunpack.c.0.s8 %v9415
  %v9417 = vlaneseq
  %v9418 = vshrl.u32 %v9417, 7
  %v9419 = vsub.s32 %v9416, %v9418
  %v9420 = vrot.slane %v9413, %v9419
  %v9421 = vunpack.c.l.b16 %v9322
  %v9422 = vunpack.c.l.b16 %v9336
  %v9423 = vunpack.c.l.b16 %v9350
  %v9424 = vunpack.c.l.b16 %v9364
  %v9425 = vunpack.c.l.b16 %v9378
  %v9426 = vunpack.c.l.b16 %v9392
  %v9427 = vunpack.c.l.b16 %v9406
  %v9428 = vunpack.c.l.b16 %v9420
  %v9429 = vrot.slane %v9422, 7
  %v9430 = vsel %vm6234, %v9429, %v9421
  %v9431 = vrot.slane %v9423, 6
  %v9432 = vsel %vm6237, %v9431, %v9430
  %v9433 = vrot.slane %v9424, 5
  %v9434 = vsel %vm6240, %v9433, %v9432
  %v9435 = vrot.slane %v9425, 4
  %v9436 = vsel %vm6243, %v9435, %v9434
  %v9437 = vrot.slane %v9426, 3
  %v9438 = vsel %vm6246, %v9437, %v9436
  %v9439 = vrot.slane %v9427, 2
  %v9440 = vsel %vm6249, %v9439, %v9438
  %v9441 = vrot.slane %v9428, 1
  %v9442 = vsel %vm6252, %v9441, %v9440
  %v9443 = vpack.c.b16 %v9442, %v9442
  %9444 = vrot.lane.b32.xlu0 %v9443, 96
  %v9445 = vpop.permute.xlu0 %9444
  %9447 = vst.msk [vmem:[#allocation2 + $0x14] sm:$0xf] %vm6676, %v9445
  %v9449 = vunpack.c.l.s4 1935823168
  %v9450 = vunpack.c.0.s8 %v9449
  %v9451 = vlaneseq
  %v9452 = vshrl.u32 %v9451, 7
  %v9453 = vsub.s32 %v9450, %v9452
  %v9454 = vrot.slane %v3616, %v9453
  %v9456 = vunpack.c.l.s4 1935823168
  %v9457 = vunpack.c.0.s8 %v9456
  %v9458 = vlaneseq
  %v9459 = vshrl.u32 %v9458, 7
  %v9460 = vsub.s32 %v9457, %v9459
  %v9461 = vrot.slane %v9454, %v9460
  %v9463 = vunpack.c.l.s4 1935823168
  %v9464 = vunpack.c.0.s8 %v9463
  %v9465 = vlaneseq
  %v9466 = vshrl.u32 %v9465, 7
  %v9467 = vsub.s32 %v9464, %v9466
  %v9468 = vrot.slane %v3952, %v9467
  %v9470 = vunpack.c.l.s4 1935823168
  %v9471 = vunpack.c.0.s8 %v9470
  %v9472 = vlaneseq
  %v9473 = vshrl.u32 %v9472, 7
  %v9474 = vsub.s32 %v9471, %v9473
  %v9475 = vrot.slane %v9468, %v9474
  %v9477 = vunpack.c.l.s4 1935823168
  %v9478 = vunpack.c.0.s8 %v9477
  %v9479 = vlaneseq
  %v9480 = vshrl.u32 %v9479, 7
  %v9481 = vsub.s32 %v9478, %v9480
  %v9482 = vrot.slane %v4288, %v9481
  %v9484 = vunpack.c.l.s4 1935823168
  %v9485 = vunpack.c.0.s8 %v9484
  %v9486 = vlaneseq
  %v9487 = vshrl.u32 %v9486, 7
  %v9488 = vsub.s32 %v9485, %v9487
  %v9489 = vrot.slane %v9482, %v9488
  %v9491 = vunpack.c.l.s4 1935823168
  %v9492 = vunpack.c.0.s8 %v9491
  %v9493 = vlaneseq
  %v9494 = vshrl.u32 %v9493, 7
  %v9495 = vsub.s32 %v9492, %v9494
  %v9496 = vrot.slane %v4624, %v9495
  %v9498 = vunpack.c.l.s4 1935823168
  %v9499 = vunpack.c.0.s8 %v9498
  %v9500 = vlaneseq
  %v9501 = vshrl.u32 %v9500, 7
  %v9502 = vsub.s32 %v9499, %v9501
  %v9503 = vrot.slane %v9496, %v9502
  %v9505 = vunpack.c.l.s4 1935823168
  %v9506 = vunpack.c.0.s8 %v9505
  %v9507 = vlaneseq
  %v9508 = vshrl.u32 %v9507, 7
  %v9509 = vsub.s32 %v9506, %v9508
  %v9510 = vrot.slane %v4960, %v9509
  %v9512 = vunpack.c.l.s4 1935823168
  %v9513 = vunpack.c.0.s8 %v9512
  %v9514 = vlaneseq
  %v9515 = vshrl.u32 %v9514, 7
  %v9516 = vsub.s32 %v9513, %v9515
  %v9517 = vrot.slane %v9510, %v9516
  %v9519 = vunpack.c.l.s4 1935823168
  %v9520 = vunpack.c.0.s8 %v9519
  %v9521 = vlaneseq
  %v9522 = vshrl.u32 %v9521, 7
  %v9523 = vsub.s32 %v9520, %v9522
  %v9524 = vrot.slane %v5296, %v9523
  %v9526 = vunpack.c.l.s4 1935823168
  %v9527 = vunpack.c.0.s8 %v9526
  %v9528 = vlaneseq
  %v9529 = vshrl.u32 %v9528, 7
  %v9530 = vsub.s32 %v9527, %v9529
  %v9531 = vrot.slane %v9524, %v9530
  %v9533 = vunpack.c.l.s4 1935823168
  %v9534 = vunpack.c.0.s8 %v9533
  %v9535 = vlaneseq
  %v9536 = vshrl.u32 %v9535, 7
  %v9537 = vsub.s32 %v9534, %v9536
  %v9538 = vrot.slane %v5632, %v9537
  %v9540 = vunpack.c.l.s4 1935823168
  %v9541 = vunpack.c.0.s8 %v9540
  %v9542 = vlaneseq
  %v9543 = vshrl.u32 %v9542, 7
  %v9544 = vsub.s32 %v9541, %v9543
  %v9545 = vrot.slane %v9538, %v9544
  %v9547 = vunpack.c.l.s4 1935823168
  %v9548 = vunpack.c.0.s8 %v9547
  %v9549 = vlaneseq
  %v9550 = vshrl.u32 %v9549, 7
  %v9551 = vsub.s32 %v9548, %v9550
  %v9552 = vrot.slane %v5968, %v9551
  %v9554 = vunpack.c.l.s4 1935823168
  %v9555 = vunpack.c.0.s8 %v9554
  %v9556 = vlaneseq
  %v9557 = vshrl.u32 %v9556, 7
  %v9558 = vsub.s32 %v9555, %v9557
  %v9559 = vrot.slane %v9552, %v9558
  %v9560 = vunpack.c.l.b16 %v9461
  %v9561 = vunpack.c.l.b16 %v9475
  %v9562 = vunpack.c.l.b16 %v9489
  %v9563 = vunpack.c.l.b16 %v9503
  %v9564 = vunpack.c.l.b16 %v9517
  %v9565 = vunpack.c.l.b16 %v9531
  %v9566 = vunpack.c.l.b16 %v9545
  %v9567 = vunpack.c.l.b16 %v9559
  %v9568 = vrot.slane %v9561, 7
  %v9569 = vsel %vm6234, %v9568, %v9560
  %v9570 = vrot.slane %v9562, 6
  %v9571 = vsel %vm6237, %v9570, %v9569
  %v9572 = vrot.slane %v9563, 5
  %v9573 = vsel %vm6240, %v9572, %v9571
  %v9574 = vrot.slane %v9564, 4
  %v9575 = vsel %vm6243, %v9574, %v9573
  %v9576 = vrot.slane %v9565, 3
  %v9577 = vsel %vm6246, %v9576, %v9575
  %v9578 = vrot.slane %v9566, 2
  %v9579 = vsel %vm6249, %v9578, %v9577
  %v9580 = vrot.slane %v9567, 1
  %v9581 = vsel %vm6252, %v9580, %v9579
  %v9582 = vpack.c.b16 %v9581, %v9581
  %9584 = vst.msk [vmem:[#allocation2 + $0x18] sm:$0xf] %vm6256, %v9582
  %v9586 = vunpack.c.l.s4 1935823168
  %v9587 = vunpack.c.0.s8 %v9586
  %v9588 = vlaneseq
  %v9589 = vshrl.u32 %v9588, 7
  %v9590 = vsub.s32 %v9587, %v9589
  %v9591 = vrot.slane %v3599, %v9590
  %v9593 = vunpack.c.l.s4 1935823168
  %v9594 = vunpack.c.0.s8 %v9593
  %v9595 = vlaneseq
  %v9596 = vshrl.u32 %v9595, 7
  %v9597 = vsub.s32 %v9594, %v9596
  %v9598 = vrot.slane %v9591, %v9597
  %v9600 = vunpack.c.l.s4 1935823168
  %v9601 = vunpack.c.0.s8 %v9600
  %v9602 = vlaneseq
  %v9603 = vshrl.u32 %v9602, 7
  %v9604 = vsub.s32 %v9601, %v9603
  %v9605 = vrot.slane %v3935, %v9604
  %v9607 = vunpack.c.l.s4 1935823168
  %v9608 = vunpack.c.0.s8 %v9607
  %v9609 = vlaneseq
  %v9610 = vshrl.u32 %v9609, 7
  %v9611 = vsub.s32 %v9608, %v9610
  %v9612 = vrot.slane %v9605, %v9611
  %v9614 = vunpack.c.l.s4 1935823168
  %v9615 = vunpack.c.0.s8 %v9614
  %v9616 = vlaneseq
  %v9617 = vshrl.u32 %v9616, 7
  %v9618 = vsub.s32 %v9615, %v9617
  %v9619 = vrot.slane %v4271, %v9618
  %v9621 = vunpack.c.l.s4 1935823168
  %v9622 = vunpack.c.0.s8 %v9621
  %v9623 = vlaneseq
  %v9624 = vshrl.u32 %v9623, 7
  %v9625 = vsub.s32 %v9622, %v9624
  %v9626 = vrot.slane %v9619, %v9625
  %v9628 = vunpack.c.l.s4 1935823168
  %v9629 = vunpack.c.0.s8 %v9628
  %v9630 = vlaneseq
  %v9631 = vshrl.u32 %v9630, 7
  %v9632 = vsub.s32 %v9629, %v9631
  %v9633 = vrot.slane %v4607, %v9632
  %v9635 = vunpack.c.l.s4 1935823168
  %v9636 = vunpack.c.0.s8 %v9635
  %v9637 = vlaneseq
  %v9638 = vshrl.u32 %v9637, 7
  %v9639 = vsub.s32 %v9636, %v9638
  %v9640 = vrot.slane %v9633, %v9639
  %v9642 = vunpack.c.l.s4 1935823168
  %v9643 = vunpack.c.0.s8 %v9642
  %v9644 = vlaneseq
  %v9645 = vshrl.u32 %v9644, 7
  %v9646 = vsub.s32 %v9643, %v9645
  %v9647 = vrot.slane %v4943, %v9646
  %v9649 = vunpack.c.l.s4 1935823168
  %v9650 = vunpack.c.0.s8 %v9649
  %v9651 = vlaneseq
  %v9652 = vshrl.u32 %v9651, 7
  %v9653 = vsub.s32 %v9650, %v9652
  %v9654 = vrot.slane %v9647, %v9653
  %v9656 = vunpack.c.l.s4 1935823168
  %v9657 = vunpack.c.0.s8 %v9656
  %v9658 = vlaneseq
  %v9659 = vshrl.u32 %v9658, 7
  %v9660 = vsub.s32 %v9657, %v9659
  %v9661 = vrot.slane %v5279, %v9660
  %v9663 = vunpack.c.l.s4 1935823168
  %v9664 = vunpack.c.0.s8 %v9663
  %v9665 = vlaneseq
  %v9666 = vshrl.u32 %v9665, 7
  %v9667 = vsub.s32 %v9664, %v9666
  %v9668 = vrot.slane %v9661, %v9667
  %v9670 = vunpack.c.l.s4 1935823168
  %v9671 = vunpack.c.0.s8 %v9670
  %v9672 = vlaneseq
  %v9673 = vshrl.u32 %v9672, 7
  %v9674 = vsub.s32 %v9671, %v9673
  %v9675 = vrot.slane %v5615, %v9674
  %v9677 = vunpack.c.l.s4 1935823168
  %v9678 = vunpack.c.0.s8 %v9677
  %v9679 = vlaneseq
  %v9680 = vshrl.u32 %v9679, 7
  %v9681 = vsub.s32 %v9678, %v9680
  %v9682 = vrot.slane %v9675, %v9681
  %v9684 = vunpack.c.l.s4 1935823168
  %v9685 = vunpack.c.0.s8 %v9684
  %v9686 = vlaneseq
  %v9687 = vshrl.u32 %v9686, 7
  %v9688 = vsub.s32 %v9685, %v9687
  %v9689 = vrot.slane %v5951, %v9688
  %v9691 = vunpack.c.l.s4 1935823168
  %v9692 = vunpack.c.0.s8 %v9691
  %v9693 = vlaneseq
  %v9694 = vshrl.u32 %v9693, 7
  %v9695 = vsub.s32 %v9692, %v9694
  %v9696 = vrot.slane %v9689, %v9695
  %v9697 = vunpack.c.l.b16 %v9598
  %v9698 = vunpack.c.l.b16 %v9612
  %v9699 = vunpack.c.l.b16 %v9626
  %v9700 = vunpack.c.l.b16 %v9640
  %v9701 = vunpack.c.l.b16 %v9654
  %v9702 = vunpack.c.l.b16 %v9668
  %v9703 = vunpack.c.l.b16 %v9682
  %v9704 = vunpack.c.l.b16 %v9696
  %v9705 = vrot.slane %v9698, 7
  %v9706 = vsel %vm6234, %v9705, %v9697
  %v9707 = vrot.slane %v9699, 6
  %v9708 = vsel %vm6237, %v9707, %v9706
  %v9709 = vrot.slane %v9700, 5
  %v9710 = vsel %vm6240, %v9709, %v9708
  %v9711 = vrot.slane %v9701, 4
  %v9712 = vsel %vm6243, %v9711, %v9710
  %v9713 = vrot.slane %v9702, 3
  %v9714 = vsel %vm6246, %v9713, %v9712
  %v9715 = vrot.slane %v9703, 2
  %v9716 = vsel %vm6249, %v9715, %v9714
  %v9717 = vrot.slane %v9704, 1
  %v9718 = vsel %vm6252, %v9717, %v9716
  %v9719 = vpack.c.b16 %v9718, %v9718
  %9720 = vrot.lane.b32.xlu0 %v9719, 32
  %v9721 = vpop.permute.xlu0 %9720
  %9723 = vst.msk [vmem:[#allocation2 + $0x18] sm:$0xf] %vm6396, %v9721
  %v9725 = vunpack.c.l.s4 1935823168
  %v9726 = vunpack.c.0.s8 %v9725
  %v9727 = vlaneseq
  %v9728 = vshrl.u32 %v9727, 7
  %v9729 = vsub.s32 %v9726, %v9728
  %v9730 = vrot.slane %v3613, %v9729
  %v9732 = vunpack.c.l.s4 1935823168
  %v9733 = vunpack.c.0.s8 %v9732
  %v9734 = vlaneseq
  %v9735 = vshrl.u32 %v9734, 7
  %v9736 = vsub.s32 %v9733, %v9735
  %v9737 = vrot.slane %v9730, %v9736
  %v9739 = vunpack.c.l.s4 1935823168
  %v9740 = vunpack.c.0.s8 %v9739
  %v9741 = vlaneseq
  %v9742 = vshrl.u32 %v9741, 7
  %v9743 = vsub.s32 %v9740, %v9742
  %v9744 = vrot.slane %v3949, %v9743
  %v9746 = vunpack.c.l.s4 1935823168
  %v9747 = vunpack.c.0.s8 %v9746
  %v9748 = vlaneseq
  %v9749 = vshrl.u32 %v9748, 7
  %v9750 = vsub.s32 %v9747, %v9749
  %v9751 = vrot.slane %v9744, %v9750
  %v9753 = vunpack.c.l.s4 1935823168
  %v9754 = vunpack.c.0.s8 %v9753
  %v9755 = vlaneseq
  %v9756 = vshrl.u32 %v9755, 7
  %v9757 = vsub.s32 %v9754, %v9756
  %v9758 = vrot.slane %v4285, %v9757
  %v9760 = vunpack.c.l.s4 1935823168
  %v9761 = vunpack.c.0.s8 %v9760
  %v9762 = vlaneseq
  %v9763 = vshrl.u32 %v9762, 7
  %v9764 = vsub.s32 %v9761, %v9763
  %v9765 = vrot.slane %v9758, %v9764
  %v9767 = vunpack.c.l.s4 1935823168
  %v9768 = vunpack.c.0.s8 %v9767
  %v9769 = vlaneseq
  %v9770 = vshrl.u32 %v9769, 7
  %v9771 = vsub.s32 %v9768, %v9770
  %v9772 = vrot.slane %v4621, %v9771
  %v9774 = vunpack.c.l.s4 1935823168
  %v9775 = vunpack.c.0.s8 %v9774
  %v9776 = vlaneseq
  %v9777 = vshrl.u32 %v9776, 7
  %v9778 = vsub.s32 %v9775, %v9777
  %v9779 = vrot.slane %v9772, %v9778
  %v9781 = vunpack.c.l.s4 1935823168
  %v9782 = vunpack.c.0.s8 %v9781
  %v9783 = vlaneseq
  %v9784 = vshrl.u32 %v9783, 7
  %v9785 = vsub.s32 %v9782, %v9784
  %v9786 = vrot.slane %v4957, %v9785
  %v9788 = vunpack.c.l.s4 1935823168
  %v9789 = vunpack.c.0.s8 %v9788
  %v9790 = vlaneseq
  %v9791 = vshrl.u32 %v9790, 7
  %v9792 = vsub.s32 %v9789, %v9791
  %v9793 = vrot.slane %v9786, %v9792
  %v9795 = vunpack.c.l.s4 1935823168
  %v9796 = vunpack.c.0.s8 %v9795
  %v9797 = vlaneseq
  %v9798 = vshrl.u32 %v9797, 7
  %v9799 = vsub.s32 %v9796, %v9798
  %v9800 = vrot.slane %v5293, %v9799
  %v9802 = vunpack.c.l.s4 1935823168
  %v9803 = vunpack.c.0.s8 %v9802
  %v9804 = vlaneseq
  %v9805 = vshrl.u32 %v9804, 7
  %v9806 = vsub.s32 %v9803, %v9805
  %v9807 = vrot.slane %v9800, %v9806
  %v9809 = vunpack.c.l.s4 1935823168
  %v9810 = vunpack.c.0.s8 %v9809
  %v9811 = vlaneseq
  %v9812 = vshrl.u32 %v9811, 7
  %v9813 = vsub.s32 %v9810, %v9812
  %v9814 = vrot.slane %v5629, %v9813
  %v9816 = vunpack.c.l.s4 1935823168
  %v9817 = vunpack.c.0.s8 %v9816
  %v9818 = vlaneseq
  %v9819 = vshrl.u32 %v9818, 7
  %v9820 = vsub.s32 %v9817, %v9819
  %v9821 = vrot.slane %v9814, %v9820
  %v9823 = vunpack.c.l.s4 1935823168
  %v9824 = vunpack.c.0.s8 %v9823
  %v9825 = vlaneseq
  %v9826 = vshrl.u32 %v9825, 7
  %v9827 = vsub.s32 %v9824, %v9826
  %v9828 = vrot.slane %v5965, %v9827
  %v9830 = vunpack.c.l.s4 1935823168
  %v9831 = vunpack.c.0.s8 %v9830
  %v9832 = vlaneseq
  %v9833 = vshrl.u32 %v9832, 7
  %v9834 = vsub.s32 %v9831, %v9833
  %v9835 = vrot.slane %v9828, %v9834
  %v9836 = vunpack.c.l.b16 %v9737
  %v9837 = vunpack.c.l.b16 %v9751
  %v9838 = vunpack.c.l.b16 %v9765
  %v9839 = vunpack.c.l.b16 %v9779
  %v9840 = vunpack.c.l.b16 %v9793
  %v9841 = vunpack.c.l.b16 %v9807
  %v9842 = vunpack.c.l.b16 %v9821
  %v9843 = vunpack.c.l.b16 %v9835
  %v9844 = vrot.slane %v9837, 7
  %v9845 = vsel %vm6234, %v9844, %v9836
  %v9846 = vrot.slane %v9838, 6
  %v9847 = vsel %vm6237, %v9846, %v9845
  %v9848 = vrot.slane %v9839, 5
  %v9849 = vsel %vm6240, %v9848, %v9847
  %v9850 = vrot.slane %v9840, 4
  %v9851 = vsel %vm6243, %v9850, %v9849
  %v9852 = vrot.slane %v9841, 3
  %v9853 = vsel %vm6246, %v9852, %v9851
  %v9854 = vrot.slane %v9842, 2
  %v9855 = vsel %vm6249, %v9854, %v9853
  %v9856 = vrot.slane %v9843, 1
  %v9857 = vsel %vm6252, %v9856, %v9855
  %v9858 = vpack.c.b16 %v9857, %v9857
  %9859 = vrot.lane.b32.xlu0 %v9858, 64
  %v9860 = vpop.permute.xlu0 %9859
  %9862 = vst.msk [vmem:[#allocation2 + $0x18] sm:$0xf] %vm6536, %v9860
  %v9864 = vunpack.c.l.s4 1935823168
  %v9865 = vunpack.c.0.s8 %v9864
  %v9866 = vlaneseq
  %v9867 = vshrl.u32 %v9866, 7
  %v9868 = vsub.s32 %v9865, %v9867
  %v9869 = vrot.slane %v3615, %v9868
  %v9871 = vunpack.c.l.s4 1935823168
  %v9872 = vunpack.c.0.s8 %v9871
  %v9873 = vlaneseq
  %v9874 = vshrl.u32 %v9873, 7
  %v9875 = vsub.s32 %v9872, %v9874
  %v9876 = vrot.slane %v9869, %v9875
  %v9878 = vunpack.c.l.s4 1935823168
  %v9879 = vunpack.c.0.s8 %v9878
  %v9880 = vlaneseq
  %v9881 = vshrl.u32 %v9880, 7
  %v9882 = vsub.s32 %v9879, %v9881
  %v9883 = vrot.slane %v3951, %v9882
  %v9885 = vunpack.c.l.s4 1935823168
  %v9886 = vunpack.c.0.s8 %v9885
  %v9887 = vlaneseq
  %v9888 = vshrl.u32 %v9887, 7
  %v9889 = vsub.s32 %v9886, %v9888
  %v9890 = vrot.slane %v9883, %v9889
  %v9892 = vunpack.c.l.s4 1935823168
  %v9893 = vunpack.c.0.s8 %v9892
  %v9894 = vlaneseq
  %v9895 = vshrl.u32 %v9894, 7
  %v9896 = vsub.s32 %v9893, %v9895
  %v9897 = vrot.slane %v4287, %v9896
  %v9899 = vunpack.c.l.s4 1935823168
  %v9900 = vunpack.c.0.s8 %v9899
  %v9901 = vlaneseq
  %v9902 = vshrl.u32 %v9901, 7
  %v9903 = vsub.s32 %v9900, %v9902
  %v9904 = vrot.slane %v9897, %v9903
  %v9906 = vunpack.c.l.s4 1935823168
  %v9907 = vunpack.c.0.s8 %v9906
  %v9908 = vlaneseq
  %v9909 = vshrl.u32 %v9908, 7
  %v9910 = vsub.s32 %v9907, %v9909
  %v9911 = vrot.slane %v4623, %v9910
  %v9913 = vunpack.c.l.s4 1935823168
  %v9914 = vunpack.c.0.s8 %v9913
  %v9915 = vlaneseq
  %v9916 = vshrl.u32 %v9915, 7
  %v9917 = vsub.s32 %v9914, %v9916
  %v9918 = vrot.slane %v9911, %v9917
  %v9920 = vunpack.c.l.s4 1935823168
  %v9921 = vunpack.c.0.s8 %v9920
  %v9922 = vlaneseq
  %v9923 = vshrl.u32 %v9922, 7
  %v9924 = vsub.s32 %v9921, %v9923
  %v9925 = vrot.slane %v4959, %v9924
  %v9927 = vunpack.c.l.s4 1935823168
  %v9928 = vunpack.c.0.s8 %v9927
  %v9929 = vlaneseq
  %v9930 = vshrl.u32 %v9929, 7
  %v9931 = vsub.s32 %v9928, %v9930
  %v9932 = vrot.slane %v9925, %v9931
  %v9934 = vunpack.c.l.s4 1935823168
  %v9935 = vunpack.c.0.s8 %v9934
  %v9936 = vlaneseq
  %v9937 = vshrl.u32 %v9936, 7
  %v9938 = vsub.s32 %v9935, %v9937
  %v9939 = vrot.slane %v5295, %v9938
  %v9941 = vunpack.c.l.s4 1935823168
  %v9942 = vunpack.c.0.s8 %v9941
  %v9943 = vlaneseq
  %v9944 = vshrl.u32 %v9943, 7
  %v9945 = vsub.s32 %v9942, %v9944
  %v9946 = vrot.slane %v9939, %v9945
  %v9948 = vunpack.c.l.s4 1935823168
  %v9949 = vunpack.c.0.s8 %v9948
  %v9950 = vlaneseq
  %v9951 = vshrl.u32 %v9950, 7
  %v9952 = vsub.s32 %v9949, %v9951
  %v9953 = vrot.slane %v5631, %v9952
  %v9955 = vunpack.c.l.s4 1935823168
  %v9956 = vunpack.c.0.s8 %v9955
  %v9957 = vlaneseq
  %v9958 = vshrl.u32 %v9957, 7
  %v9959 = vsub.s32 %v9956, %v9958
  %v9960 = vrot.slane %v9953, %v9959
  %v9962 = vunpack.c.l.s4 1935823168
  %v9963 = vunpack.c.0.s8 %v9962
  %v9964 = vlaneseq
  %v9965 = vshrl.u32 %v9964, 7
  %v9966 = vsub.s32 %v9963, %v9965
  %v9967 = vrot.slane %v5967, %v9966
  %v9969 = vunpack.c.l.s4 1935823168
  %v9970 = vunpack.c.0.s8 %v9969
  %v9971 = vlaneseq
  %v9972 = vshrl.u32 %v9971, 7
  %v9973 = vsub.s32 %v9970, %v9972
  %v9974 = vrot.slane %v9967, %v9973
  %v9975 = vunpack.c.l.b16 %v9876
  %v9976 = vunpack.c.l.b16 %v9890
  %v9977 = vunpack.c.l.b16 %v9904
  %v9978 = vunpack.c.l.b16 %v9918
  %v9979 = vunpack.c.l.b16 %v9932
  %v9980 = vunpack.c.l.b16 %v9946
  %v9981 = vunpack.c.l.b16 %v9960
  %v9982 = vunpack.c.l.b16 %v9974
  %v9983 = vrot.slane %v9976, 7
  %v9984 = vsel %vm6234, %v9983, %v9975
  %v9985 = vrot.slane %v9977, 6
  %v9986 = vsel %vm6237, %v9985, %v9984
  %v9987 = vrot.slane %v9978, 5
  %v9988 = vsel %vm6240, %v9987, %v9986
  %v9989 = vrot.slane %v9979, 4
  %v9990 = vsel %vm6243, %v9989, %v9988
  %v9991 = vrot.slane %v9980, 3
  %v9992 = vsel %vm6246, %v9991, %v9990
  %v9993 = vrot.slane %v9981, 2
  %v9994 = vsel %vm6249, %v9993, %v9992
  %v9995 = vrot.slane %v9982, 1
  %v9996 = vsel %vm6252, %v9995, %v9994
  %v9997 = vpack.c.b16 %v9996, %v9996
  %9998 = vrot.lane.b32.xlu0 %v9997, 96
  %v9999 = vpop.permute.xlu0 %9998
  %10001 = vst.msk [vmem:[#allocation2 + $0x18] sm:$0xf] %vm6676, %v9999
  %v10003 = vunpack.c.l.s4 1935823168
  %v10004 = vunpack.c.0.s8 %v10003
  %v10005 = vlaneseq
  %v10006 = vshrl.u32 %v10005, 7
  %v10007 = vsub.s32 %v10004, %v10006
  %v10008 = vrot.slane %v3640, %v10007
  %v10010 = vunpack.c.l.s4 1935823168
  %v10011 = vunpack.c.0.s8 %v10010
  %v10012 = vlaneseq
  %v10013 = vshrl.u32 %v10012, 7
  %v10014 = vsub.s32 %v10011, %v10013
  %v10015 = vrot.slane %v10008, %v10014
  %v10017 = vunpack.c.l.s4 1935823168
  %v10018 = vunpack.c.0.s8 %v10017
  %v10019 = vlaneseq
  %v10020 = vshrl.u32 %v10019, 7
  %v10021 = vsub.s32 %v10018, %v10020
  %v10022 = vrot.slane %v3976, %v10021
  %v10024 = vunpack.c.l.s4 1935823168
  %v10025 = vunpack.c.0.s8 %v10024
  %v10026 = vlaneseq
  %v10027 = vshrl.u32 %v10026, 7
  %v10028 = vsub.s32 %v10025, %v10027
  %v10029 = vrot.slane %v10022, %v10028
  %v10031 = vunpack.c.l.s4 1935823168
  %v10032 = vunpack.c.0.s8 %v10031
  %v10033 = vlaneseq
  %v10034 = vshrl.u32 %v10033, 7
  %v10035 = vsub.s32 %v10032, %v10034
  %v10036 = vrot.slane %v4312, %v10035
  %v10038 = vunpack.c.l.s4 1935823168
  %v10039 = vunpack.c.0.s8 %v10038
  %v10040 = vlaneseq
  %v10041 = vshrl.u32 %v10040, 7
  %v10042 = vsub.s32 %v10039, %v10041
  %v10043 = vrot.slane %v10036, %v10042
  %v10045 = vunpack.c.l.s4 1935823168
  %v10046 = vunpack.c.0.s8 %v10045
  %v10047 = vlaneseq
  %v10048 = vshrl.u32 %v10047, 7
  %v10049 = vsub.s32 %v10046, %v10048
  %v10050 = vrot.slane %v4648, %v10049
  %v10052 = vunpack.c.l.s4 1935823168
  %v10053 = vunpack.c.0.s8 %v10052
  %v10054 = vlaneseq
  %v10055 = vshrl.u32 %v10054, 7
  %v10056 = vsub.s32 %v10053, %v10055
  %v10057 = vrot.slane %v10050, %v10056
  %v10059 = vunpack.c.l.s4 1935823168
  %v10060 = vunpack.c.0.s8 %v10059
  %v10061 = vlaneseq
  %v10062 = vshrl.u32 %v10061, 7
  %v10063 = vsub.s32 %v10060, %v10062
  %v10064 = vrot.slane %v4984, %v10063
  %v10066 = vunpack.c.l.s4 1935823168
  %v10067 = vunpack.c.0.s8 %v10066
  %v10068 = vlaneseq
  %v10069 = vshrl.u32 %v10068, 7
  %v10070 = vsub.s32 %v10067, %v10069
  %v10071 = vrot.slane %v10064, %v10070
  %v10073 = vunpack.c.l.s4 1935823168
  %v10074 = vunpack.c.0.s8 %v10073
  %v10075 = vlaneseq
  %v10076 = vshrl.u32 %v10075, 7
  %v10077 = vsub.s32 %v10074, %v10076
  %v10078 = vrot.slane %v5320, %v10077
  %v10080 = vunpack.c.l.s4 1935823168
  %v10081 = vunpack.c.0.s8 %v10080
  %v10082 = vlaneseq
  %v10083 = vshrl.u32 %v10082, 7
  %v10084 = vsub.s32 %v10081, %v10083
  %v10085 = vrot.slane %v10078, %v10084
  %v10087 = vunpack.c.l.s4 1935823168
  %v10088 = vunpack.c.0.s8 %v10087
  %v10089 = vlaneseq
  %v10090 = vshrl.u32 %v10089, 7
  %v10091 = vsub.s32 %v10088, %v10090
  %v10092 = vrot.slane %v5656, %v10091
  %v10094 = vunpack.c.l.s4 1935823168
  %v10095 = vunpack.c.0.s8 %v10094
  %v10096 = vlaneseq
  %v10097 = vshrl.u32 %v10096, 7
  %v10098 = vsub.s32 %v10095, %v10097
  %v10099 = vrot.slane %v10092, %v10098
  %v10101 = vunpack.c.l.s4 1935823168
  %v10102 = vunpack.c.0.s8 %v10101
  %v10103 = vlaneseq
  %v10104 = vshrl.u32 %v10103, 7
  %v10105 = vsub.s32 %v10102, %v10104
  %v10106 = vrot.slane %v5992, %v10105
  %v10108 = vunpack.c.l.s4 1935823168
  %v10109 = vunpack.c.0.s8 %v10108
  %v10110 = vlaneseq
  %v10111 = vshrl.u32 %v10110, 7
  %v10112 = vsub.s32 %v10109, %v10111
  %v10113 = vrot.slane %v10106, %v10112
  %v10114 = vunpack.c.l.b16 %v10015
  %v10115 = vunpack.c.l.b16 %v10029
  %v10116 = vunpack.c.l.b16 %v10043
  %v10117 = vunpack.c.l.b16 %v10057
  %v10118 = vunpack.c.l.b16 %v10071
  %v10119 = vunpack.c.l.b16 %v10085
  %v10120 = vunpack.c.l.b16 %v10099
  %v10121 = vunpack.c.l.b16 %v10113
  %v10122 = vrot.slane %v10115, 7
  %v10123 = vsel %vm6234, %v10122, %v10114
  %v10124 = vrot.slane %v10116, 6
  %v10125 = vsel %vm6237, %v10124, %v10123
  %v10126 = vrot.slane %v10117, 5
  %v10127 = vsel %vm6240, %v10126, %v10125
  %v10128 = vrot.slane %v10118, 4
  %v10129 = vsel %vm6243, %v10128, %v10127
  %v10130 = vrot.slane %v10119, 3
  %v10131 = vsel %vm6246, %v10130, %v10129
  %v10132 = vrot.slane %v10120, 2
  %v10133 = vsel %vm6249, %v10132, %v10131
  %v10134 = vrot.slane %v10121, 1
  %v10135 = vsel %vm6252, %v10134, %v10133
  %v10136 = vpack.c.b16 %v10135, %v10135
  %10138 = vst.msk [vmem:[#allocation2 + $0x1c] sm:$0xf] %vm6256, %v10136
  %v10140 = vunpack.c.l.s4 1935823168
  %v10141 = vunpack.c.0.s8 %v10140
  %v10142 = vlaneseq
  %v10143 = vshrl.u32 %v10142, 7
  %v10144 = vsub.s32 %v10141, %v10143
  %v10145 = vrot.slane %v3654, %v10144
  %v10147 = vunpack.c.l.s4 1935823168
  %v10148 = vunpack.c.0.s8 %v10147
  %v10149 = vlaneseq
  %v10150 = vshrl.u32 %v10149, 7
  %v10151 = vsub.s32 %v10148, %v10150
  %v10152 = vrot.slane %v10145, %v10151
  %v10154 = vunpack.c.l.s4 1935823168
  %v10155 = vunpack.c.0.s8 %v10154
  %v10156 = vlaneseq
  %v10157 = vshrl.u32 %v10156, 7
  %v10158 = vsub.s32 %v10155, %v10157
  %v10159 = vrot.slane %v3990, %v10158
  %v10161 = vunpack.c.l.s4 1935823168
  %v10162 = vunpack.c.0.s8 %v10161
  %v10163 = vlaneseq
  %v10164 = vshrl.u32 %v10163, 7
  %v10165 = vsub.s32 %v10162, %v10164
  %v10166 = vrot.slane %v10159, %v10165
  %v10168 = vunpack.c.l.s4 1935823168
  %v10169 = vunpack.c.0.s8 %v10168
  %v10170 = vlaneseq
  %v10171 = vshrl.u32 %v10170, 7
  %v10172 = vsub.s32 %v10169, %v10171
  %v10173 = vrot.slane %v4326, %v10172
  %v10175 = vunpack.c.l.s4 1935823168
  %v10176 = vunpack.c.0.s8 %v10175
  %v10177 = vlaneseq
  %v10178 = vshrl.u32 %v10177, 7
  %v10179 = vsub.s32 %v10176, %v10178
  %v10180 = vrot.slane %v10173, %v10179
  %v10182 = vunpack.c.l.s4 1935823168
  %v10183 = vunpack.c.0.s8 %v10182
  %v10184 = vlaneseq
  %v10185 = vshrl.u32 %v10184, 7
  %v10186 = vsub.s32 %v10183, %v10185
  %v10187 = vrot.slane %v4662, %v10186
  %v10189 = vunpack.c.l.s4 1935823168
  %v10190 = vunpack.c.0.s8 %v10189
  %v10191 = vlaneseq
  %v10192 = vshrl.u32 %v10191, 7
  %v10193 = vsub.s32 %v10190, %v10192
  %v10194 = vrot.slane %v10187, %v10193
  %v10196 = vunpack.c.l.s4 1935823168
  %v10197 = vunpack.c.0.s8 %v10196
  %v10198 = vlaneseq
  %v10199 = vshrl.u32 %v10198, 7
  %v10200 = vsub.s32 %v10197, %v10199
  %v10201 = vrot.slane %v4998, %v10200
  %v10203 = vunpack.c.l.s4 1935823168
  %v10204 = vunpack.c.0.s8 %v10203
  %v10205 = vlaneseq
  %v10206 = vshrl.u32 %v10205, 7
  %v10207 = vsub.s32 %v10204, %v10206
  %v10208 = vrot.slane %v10201, %v10207
  %v10210 = vunpack.c.l.s4 1935823168
  %v10211 = vunpack.c.0.s8 %v10210
  %v10212 = vlaneseq
  %v10213 = vshrl.u32 %v10212, 7
  %v10214 = vsub.s32 %v10211, %v10213
  %v10215 = vrot.slane %v5334, %v10214
  %v10217 = vunpack.c.l.s4 1935823168
  %v10218 = vunpack.c.0.s8 %v10217
  %v10219 = vlaneseq
  %v10220 = vshrl.u32 %v10219, 7
  %v10221 = vsub.s32 %v10218, %v10220
  %v10222 = vrot.slane %v10215, %v10221
  %v10224 = vunpack.c.l.s4 1935823168
  %v10225 = vunpack.c.0.s8 %v10224
  %v10226 = vlaneseq
  %v10227 = vshrl.u32 %v10226, 7
  %v10228 = vsub.s32 %v10225, %v10227
  %v10229 = vrot.slane %v5670, %v10228
  %v10231 = vunpack.c.l.s4 1935823168
  %v10232 = vunpack.c.0.s8 %v10231
  %v10233 = vlaneseq
  %v10234 = vshrl.u32 %v10233, 7
  %v10235 = vsub.s32 %v10232, %v10234
  %v10236 = vrot.slane %v10229, %v10235
  %v10238 = vunpack.c.l.s4 1935823168
  %v10239 = vunpack.c.0.s8 %v10238
  %v10240 = vlaneseq
  %v10241 = vshrl.u32 %v10240, 7
  %v10242 = vsub.s32 %v10239, %v10241
  %v10243 = vrot.slane %v6006, %v10242
  %v10245 = vunpack.c.l.s4 1935823168
  %v10246 = vunpack.c.0.s8 %v10245
  %v10247 = vlaneseq
  %v10248 = vshrl.u32 %v10247, 7
  %v10249 = vsub.s32 %v10246, %v10248
  %v10250 = vrot.slane %v10243, %v10249
  %v10251 = vunpack.c.l.b16 %v10152
  %v10252 = vunpack.c.l.b16 %v10166
  %v10253 = vunpack.c.l.b16 %v10180
  %v10254 = vunpack.c.l.b16 %v10194
  %v10255 = vunpack.c.l.b16 %v10208
  %v10256 = vunpack.c.l.b16 %v10222
  %v10257 = vunpack.c.l.b16 %v10236
  %v10258 = vunpack.c.l.b16 %v10250
  %v10259 = vrot.slane %v10252, 7
  %v10260 = vsel %vm6234, %v10259, %v10251
  %v10261 = vrot.slane %v10253, 6
  %v10262 = vsel %vm6237, %v10261, %v10260
  %v10263 = vrot.slane %v10254, 5
  %v10264 = vsel %vm6240, %v10263, %v10262
  %v10265 = vrot.slane %v10255, 4
  %v10266 = vsel %vm6243, %v10265, %v10264
  %v10267 = vrot.slane %v10256, 3
  %v10268 = vsel %vm6246, %v10267, %v10266
  %v10269 = vrot.slane %v10257, 2
  %v10270 = vsel %vm6249, %v10269, %v10268
  %v10271 = vrot.slane %v10258, 1
  %v10272 = vsel %vm6252, %v10271, %v10270
  %v10273 = vpack.c.b16 %v10272, %v10272
  %10274 = vrot.lane.b32.xlu0 %v10273, 32
  %v10275 = vpop.permute.xlu0 %10274
  %10277 = vst.msk [vmem:[#allocation2 + $0x1c] sm:$0xf] %vm6396, %v10275
  %v10279 = vunpack.c.l.s4 1935823168
  %v10280 = vunpack.c.0.s8 %v10279
  %v10281 = vlaneseq
  %v10282 = vshrl.u32 %v10281, 7
  %v10283 = vsub.s32 %v10280, %v10282
  %v10284 = vrot.slane %v3662, %v10283
  %v10286 = vunpack.c.l.s4 1935823168
  %v10287 = vunpack.c.0.s8 %v10286
  %v10288 = vlaneseq
  %v10289 = vshrl.u32 %v10288, 7
  %v10290 = vsub.s32 %v10287, %v10289
  %v10291 = vrot.slane %v10284, %v10290
  %v10293 = vunpack.c.l.s4 1935823168
  %v10294 = vunpack.c.0.s8 %v10293
  %v10295 = vlaneseq
  %v10296 = vshrl.u32 %v10295, 7
  %v10297 = vsub.s32 %v10294, %v10296
  %v10298 = vrot.slane %v3998, %v10297
  %v10300 = vunpack.c.l.s4 1935823168
  %v10301 = vunpack.c.0.s8 %v10300
  %v10302 = vlaneseq
  %v10303 = vshrl.u32 %v10302, 7
  %v10304 = vsub.s32 %v10301, %v10303
  %v10305 = vrot.slane %v10298, %v10304
  %v10307 = vunpack.c.l.s4 1935823168
  %v10308 = vunpack.c.0.s8 %v10307
  %v10309 = vlaneseq
  %v10310 = vshrl.u32 %v10309, 7
  %v10311 = vsub.s32 %v10308, %v10310
  %v10312 = vrot.slane %v4334, %v10311
  %v10314 = vunpack.c.l.s4 1935823168
  %v10315 = vunpack.c.0.s8 %v10314
  %v10316 = vlaneseq
  %v10317 = vshrl.u32 %v10316, 7
  %v10318 = vsub.s32 %v10315, %v10317
  %v10319 = vrot.slane %v10312, %v10318
  %v10321 = vunpack.c.l.s4 1935823168
  %v10322 = vunpack.c.0.s8 %v10321
  %v10323 = vlaneseq
  %v10324 = vshrl.u32 %v10323, 7
  %v10325 = vsub.s32 %v10322, %v10324
  %v10326 = vrot.slane %v4670, %v10325
  %v10328 = vunpack.c.l.s4 1935823168
  %v10329 = vunpack.c.0.s8 %v10328
  %v10330 = vlaneseq
  %v10331 = vshrl.u32 %v10330, 7
  %v10332 = vsub.s32 %v10329, %v10331
  %v10333 = vrot.slane %v10326, %v10332
  %v10335 = vunpack.c.l.s4 1935823168
  %v10336 = vunpack.c.0.s8 %v10335
  %v10337 = vlaneseq
  %v10338 = vshrl.u32 %v10337, 7
  %v10339 = vsub.s32 %v10336, %v10338
  %v10340 = vrot.slane %v5006, %v10339
  %v10342 = vunpack.c.l.s4 1935823168
  %v10343 = vunpack.c.0.s8 %v10342
  %v10344 = vlaneseq
  %v10345 = vshrl.u32 %v10344, 7
  %v10346 = vsub.s32 %v10343, %v10345
  %v10347 = vrot.slane %v10340, %v10346
  %v10349 = vunpack.c.l.s4 1935823168
  %v10350 = vunpack.c.0.s8 %v10349
  %v10351 = vlaneseq
  %v10352 = vshrl.u32 %v10351, 7
  %v10353 = vsub.s32 %v10350, %v10352
  %v10354 = vrot.slane %v5342, %v10353
  %v10356 = vunpack.c.l.s4 1935823168
  %v10357 = vunpack.c.0.s8 %v10356
  %v10358 = vlaneseq
  %v10359 = vshrl.u32 %v10358, 7
  %v10360 = vsub.s32 %v10357, %v10359
  %v10361 = vrot.slane %v10354, %v10360
  %v10363 = vunpack.c.l.s4 1935823168
  %v10364 = vunpack.c.0.s8 %v10363
  %v10365 = vlaneseq
  %v10366 = vshrl.u32 %v10365, 7
  %v10367 = vsub.s32 %v10364, %v10366
  %v10368 = vrot.slane %v5678, %v10367
  %v10370 = vunpack.c.l.s4 1935823168
  %v10371 = vunpack.c.0.s8 %v10370
  %v10372 = vlaneseq
  %v10373 = vshrl.u32 %v10372, 7
  %v10374 = vsub.s32 %v10371, %v10373
  %v10375 = vrot.slane %v10368, %v10374
  %v10377 = vunpack.c.l.s4 1935823168
  %v10378 = vunpack.c.0.s8 %v10377
  %v10379 = vlaneseq
  %v10380 = vshrl.u32 %v10379, 7
  %v10381 = vsub.s32 %v10378, %v10380
  %v10382 = vrot.slane %v6014, %v10381
  %v10384 = vunpack.c.l.s4 1935823168
  %v10385 = vunpack.c.0.s8 %v10384
  %v10386 = vlaneseq
  %v10387 = vshrl.u32 %v10386, 7
  %v10388 = vsub.s32 %v10385, %v10387
  %v10389 = vrot.slane %v10382, %v10388
  %v10390 = vunpack.c.l.b16 %v10291
  %v10391 = vunpack.c.l.b16 %v10305
  %v10392 = vunpack.c.l.b16 %v10319
  %v10393 = vunpack.c.l.b16 %v10333
  %v10394 = vunpack.c.l.b16 %v10347
  %v10395 = vunpack.c.l.b16 %v10361
  %v10396 = vunpack.c.l.b16 %v10375
  %v10397 = vunpack.c.l.b16 %v10389
  %v10398 = vrot.slane %v10391, 7
  %v10399 = vsel %vm6234, %v10398, %v10390
  %v10400 = vrot.slane %v10392, 6
  %v10401 = vsel %vm6237, %v10400, %v10399
  %v10402 = vrot.slane %v10393, 5
  %v10403 = vsel %vm6240, %v10402, %v10401
  %v10404 = vrot.slane %v10394, 4
  %v10405 = vsel %vm6243, %v10404, %v10403
  %v10406 = vrot.slane %v10395, 3
  %v10407 = vsel %vm6246, %v10406, %v10405
  %v10408 = vrot.slane %v10396, 2
  %v10409 = vsel %vm6249, %v10408, %v10407
  %v10410 = vrot.slane %v10397, 1
  %v10411 = vsel %vm6252, %v10410, %v10409
  %v10412 = vpack.c.b16 %v10411, %v10411
  %10413 = vrot.lane.b32.xlu0 %v10412, 64
  %v10414 = vpop.permute.xlu0 %10413
  %10416 = vst.msk [vmem:[#allocation2 + $0x1c] sm:$0xf] %vm6536, %v10414
  %v10418 = vunpack.c.l.s4 1935823168
  %v10419 = vunpack.c.0.s8 %v10418
  %v10420 = vlaneseq
  %v10421 = vshrl.u32 %v10420, 7
  %v10422 = vsub.s32 %v10419, %v10421
  %v10423 = vrot.slane %v3664, %v10422
  %v10425 = vunpack.c.l.s4 1935823168
  %v10426 = vunpack.c.0.s8 %v10425
  %v10427 = vlaneseq
  %v10428 = vshrl.u32 %v10427, 7
  %v10429 = vsub.s32 %v10426, %v10428
  %v10430 = vrot.slane %v10423, %v10429
  %v10432 = vunpack.c.l.s4 1935823168
  %v10433 = vunpack.c.0.s8 %v10432
  %v10434 = vlaneseq
  %v10435 = vshrl.u32 %v10434, 7
  %v10436 = vsub.s32 %v10433, %v10435
  %v10437 = vrot.slane %v4000, %v10436
  %v10439 = vunpack.c.l.s4 1935823168
  %v10440 = vunpack.c.0.s8 %v10439
  %v10441 = vlaneseq
  %v10442 = vshrl.u32 %v10441, 7
  %v10443 = vsub.s32 %v10440, %v10442
  %v10444 = vrot.slane %v10437, %v10443
  %v10446 = vunpack.c.l.s4 1935823168
  %v10447 = vunpack.c.0.s8 %v10446
  %v10448 = vlaneseq
  %v10449 = vshrl.u32 %v10448, 7
  %v10450 = vsub.s32 %v10447, %v10449
  %v10451 = vrot.slane %v4336, %v10450
  %v10453 = vunpack.c.l.s4 1935823168
  %v10454 = vunpack.c.0.s8 %v10453
  %v10455 = vlaneseq
  %v10456 = vshrl.u32 %v10455, 7
  %v10457 = vsub.s32 %v10454, %v10456
  %v10458 = vrot.slane %v10451, %v10457
  %v10460 = vunpack.c.l.s4 1935823168
  %v10461 = vunpack.c.0.s8 %v10460
  %v10462 = vlaneseq
  %v10463 = vshrl.u32 %v10462, 7
  %v10464 = vsub.s32 %v10461, %v10463
  %v10465 = vrot.slane %v4672, %v10464
  %v10467 = vunpack.c.l.s4 1935823168
  %v10468 = vunpack.c.0.s8 %v10467
  %v10469 = vlaneseq
  %v10470 = vshrl.u32 %v10469, 7
  %v10471 = vsub.s32 %v10468, %v10470
  %v10472 = vrot.slane %v10465, %v10471
  %v10474 = vunpack.c.l.s4 1935823168
  %v10475 = vunpack.c.0.s8 %v10474
  %v10476 = vlaneseq
  %v10477 = vshrl.u32 %v10476, 7
  %v10478 = vsub.s32 %v10475, %v10477
  %v10479 = vrot.slane %v5008, %v10478
  %v10481 = vunpack.c.l.s4 1935823168
  %v10482 = vunpack.c.0.s8 %v10481
  %v10483 = vlaneseq
  %v10484 = vshrl.u32 %v10483, 7
  %v10485 = vsub.s32 %v10482, %v10484
  %v10486 = vrot.slane %v10479, %v10485
  %v10488 = vunpack.c.l.s4 1935823168
  %v10489 = vunpack.c.0.s8 %v10488
  %v10490 = vlaneseq
  %v10491 = vshrl.u32 %v10490, 7
  %v10492 = vsub.s32 %v10489, %v10491
  %v10493 = vrot.slane %v5344, %v10492
  %v10495 = vunpack.c.l.s4 1935823168
  %v10496 = vunpack.c.0.s8 %v10495
  %v10497 = vlaneseq
  %v10498 = vshrl.u32 %v10497, 7
  %v10499 = vsub.s32 %v10496, %v10498
  %v10500 = vrot.slane %v10493, %v10499
  %v10502 = vunpack.c.l.s4 1935823168
  %v10503 = vunpack.c.0.s8 %v10502
  %v10504 = vlaneseq
  %v10505 = vshrl.u32 %v10504, 7
  %v10506 = vsub.s32 %v10503, %v10505
  %v10507 = vrot.slane %v5680, %v10506
  %v10509 = vunpack.c.l.s4 1935823168
  %v10510 = vunpack.c.0.s8 %v10509
  %v10511 = vlaneseq
  %v10512 = vshrl.u32 %v10511, 7
  %v10513 = vsub.s32 %v10510, %v10512
  %v10514 = vrot.slane %v10507, %v10513
  %v10516 = vunpack.c.l.s4 1935823168
  %v10517 = vunpack.c.0.s8 %v10516
  %v10518 = vlaneseq
  %v10519 = vshrl.u32 %v10518, 7
  %v10520 = vsub.s32 %v10517, %v10519
  %v10521 = vrot.slane %v6016, %v10520
  %v10523 = vunpack.c.l.s4 1935823168
  %v10524 = vunpack.c.0.s8 %v10523
  %v10525 = vlaneseq
  %v10526 = vshrl.u32 %v10525, 7
  %v10527 = vsub.s32 %v10524, %v10526
  %v10528 = vrot.slane %v10521, %v10527
  %v10529 = vunpack.c.l.b16 %v10430
  %v10530 = vunpack.c.l.b16 %v10444
  %v10531 = vunpack.c.l.b16 %v10458
  %v10532 = vunpack.c.l.b16 %v10472
  %v10533 = vunpack.c.l.b16 %v10486
  %v10534 = vunpack.c.l.b16 %v10500
  %v10535 = vunpack.c.l.b16 %v10514
  %v10536 = vunpack.c.l.b16 %v10528
  %v10537 = vrot.slane %v10530, 7
  %v10538 = vsel %vm6234, %v10537, %v10529
  %v10539 = vrot.slane %v10531, 6
  %v10540 = vsel %vm6237, %v10539, %v10538
  %v10541 = vrot.slane %v10532, 5
  %v10542 = vsel %vm6240, %v10541, %v10540
  %v10543 = vrot.slane %v10533, 4
  %v10544 = vsel %vm6243, %v10543, %v10542
  %v10545 = vrot.slane %v10534, 3
  %v10546 = vsel %vm6246, %v10545, %v10544
  %v10547 = vrot.slane %v10535, 2
  %v10548 = vsel %vm6249, %v10547, %v10546
  %v10549 = vrot.slane %v10536, 1
  %v10550 = vsel %vm6252, %v10549, %v10548
  %v10551 = vpack.c.b16 %v10550, %v10550
  %10552 = vrot.lane.b32.xlu0 %v10551, 96
  %v10553 = vpop.permute.xlu0 %10552
  %10555 = vst.msk [vmem:[#allocation2 + $0x1c] sm:$0xf] %vm6676, %v10553
  %v10557 = vunpack.c.l.s4 1935823168
  %v10558 = vunpack.c.0.s8 %v10557
  %v10559 = vlaneseq
  %v10560 = vshrl.u32 %v10559, 7
  %v10561 = vsub.s32 %v10558, %v10560
  %v10562 = vrot.slane %v3647, %v10561
  %v10564 = vunpack.c.l.s4 1935823168
  %v10565 = vunpack.c.0.s8 %v10564
  %v10566 = vlaneseq
  %v10567 = vshrl.u32 %v10566, 7
  %v10568 = vsub.s32 %v10565, %v10567
  %v10569 = vrot.slane %v10562, %v10568
  %v10571 = vunpack.c.l.s4 1935823168
  %v10572 = vunpack.c.0.s8 %v10571
  %v10573 = vlaneseq
  %v10574 = vshrl.u32 %v10573, 7
  %v10575 = vsub.s32 %v10572, %v10574
  %v10576 = vrot.slane %v3983, %v10575
  %v10578 = vunpack.c.l.s4 1935823168
  %v10579 = vunpack.c.0.s8 %v10578
  %v10580 = vlaneseq
  %v10581 = vshrl.u32 %v10580, 7
  %v10582 = vsub.s32 %v10579, %v10581
  %v10583 = vrot.slane %v10576, %v10582
  %v10585 = vunpack.c.l.s4 1935823168
  %v10586 = vunpack.c.0.s8 %v10585
  %v10587 = vlaneseq
  %v10588 = vshrl.u32 %v10587, 7
  %v10589 = vsub.s32 %v10586, %v10588
  %v10590 = vrot.slane %v4319, %v10589
  %v10592 = vunpack.c.l.s4 1935823168
  %v10593 = vunpack.c.0.s8 %v10592
  %v10594 = vlaneseq
  %v10595 = vshrl.u32 %v10594, 7
  %v10596 = vsub.s32 %v10593, %v10595
  %v10597 = vrot.slane %v10590, %v10596
  %v10599 = vunpack.c.l.s4 1935823168
  %v10600 = vunpack.c.0.s8 %v10599
  %v10601 = vlaneseq
  %v10602 = vshrl.u32 %v10601, 7
  %v10603 = vsub.s32 %v10600, %v10602
  %v10604 = vrot.slane %v4655, %v10603
  %v10606 = vunpack.c.l.s4 1935823168
  %v10607 = vunpack.c.0.s8 %v10606
  %v10608 = vlaneseq
  %v10609 = vshrl.u32 %v10608, 7
  %v10610 = vsub.s32 %v10607, %v10609
  %v10611 = vrot.slane %v10604, %v10610
  %v10613 = vunpack.c.l.s4 1935823168
  %v10614 = vunpack.c.0.s8 %v10613
  %v10615 = vlaneseq
  %v10616 = vshrl.u32 %v10615, 7
  %v10617 = vsub.s32 %v10614, %v10616
  %v10618 = vrot.slane %v4991, %v10617
  %v10620 = vunpack.c.l.s4 1935823168
  %v10621 = vunpack.c.0.s8 %v10620
  %v10622 = vlaneseq
  %v10623 = vshrl.u32 %v10622, 7
  %v10624 = vsub.s32 %v10621, %v10623
  %v10625 = vrot.slane %v10618, %v10624
  %v10627 = vunpack.c.l.s4 1935823168
  %v10628 = vunpack.c.0.s8 %v10627
  %v10629 = vlaneseq
  %v10630 = vshrl.u32 %v10629, 7
  %v10631 = vsub.s32 %v10628, %v10630
  %v10632 = vrot.slane %v5327, %v10631
  %v10634 = vunpack.c.l.s4 1935823168
  %v10635 = vunpack.c.0.s8 %v10634
  %v10636 = vlaneseq
  %v10637 = vshrl.u32 %v10636, 7
  %v10638 = vsub.s32 %v10635, %v10637
  %v10639 = vrot.slane %v10632, %v10638
  %v10641 = vunpack.c.l.s4 1935823168
  %v10642 = vunpack.c.0.s8 %v10641
  %v10643 = vlaneseq
  %v10644 = vshrl.u32 %v10643, 7
  %v10645 = vsub.s32 %v10642, %v10644
  %v10646 = vrot.slane %v5663, %v10645
  %v10648 = vunpack.c.l.s4 1935823168
  %v10649 = vunpack.c.0.s8 %v10648
  %v10650 = vlaneseq
  %v10651 = vshrl.u32 %v10650, 7
  %v10652 = vsub.s32 %v10649, %v10651
  %v10653 = vrot.slane %v10646, %v10652
  %v10655 = vunpack.c.l.s4 1935823168
  %v10656 = vunpack.c.0.s8 %v10655
  %v10657 = vlaneseq
  %v10658 = vshrl.u32 %v10657, 7
  %v10659 = vsub.s32 %v10656, %v10658
  %v10660 = vrot.slane %v5999, %v10659
  %v10662 = vunpack.c.l.s4 1935823168
  %v10663 = vunpack.c.0.s8 %v10662
  %v10664 = vlaneseq
  %v10665 = vshrl.u32 %v10664, 7
  %v10666 = vsub.s32 %v10663, %v10665
  %v10667 = vrot.slane %v10660, %v10666
  %v10668 = vunpack.c.l.b16 %v10569
  %v10669 = vunpack.c.l.b16 %v10583
  %v10670 = vunpack.c.l.b16 %v10597
  %v10671 = vunpack.c.l.b16 %v10611
  %v10672 = vunpack.c.l.b16 %v10625
  %v10673 = vunpack.c.l.b16 %v10639
  %v10674 = vunpack.c.l.b16 %v10653
  %v10675 = vunpack.c.l.b16 %v10667
  %v10676 = vrot.slane %v10669, 7
  %v10677 = vsel %vm6234, %v10676, %v10668
  %v10678 = vrot.slane %v10670, 6
  %v10679 = vsel %vm6237, %v10678, %v10677
  %v10680 = vrot.slane %v10671, 5
  %v10681 = vsel %vm6240, %v10680, %v10679
  %v10682 = vrot.slane %v10672, 4
  %v10683 = vsel %vm6243, %v10682, %v10681
  %v10684 = vrot.slane %v10673, 3
  %v10685 = vsel %vm6246, %v10684, %v10683
  %v10686 = vrot.slane %v10674, 2
  %v10687 = vsel %vm6249, %v10686, %v10685
  %v10688 = vrot.slane %v10675, 1
  %v10689 = vsel %vm6252, %v10688, %v10687
  %v10690 = vpack.c.b16 %v10689, %v10689
  %10692 = vst.msk [vmem:[#allocation2 + $0x20] sm:$0xf] %vm6256, %v10690
  %v10694 = vunpack.c.l.s4 1935823168
  %v10695 = vunpack.c.0.s8 %v10694
  %v10696 = vlaneseq
  %v10697 = vshrl.u32 %v10696, 7
  %v10698 = vsub.s32 %v10695, %v10697
  %v10699 = vrot.slane %v3661, %v10698
  %v10701 = vunpack.c.l.s4 1935823168
  %v10702 = vunpack.c.0.s8 %v10701
  %v10703 = vlaneseq
  %v10704 = vshrl.u32 %v10703, 7
  %v10705 = vsub.s32 %v10702, %v10704
  %v10706 = vrot.slane %v10699, %v10705
  %v10708 = vunpack.c.l.s4 1935823168
  %v10709 = vunpack.c.0.s8 %v10708
  %v10710 = vlaneseq
  %v10711 = vshrl.u32 %v10710, 7
  %v10712 = vsub.s32 %v10709, %v10711
  %v10713 = vrot.slane %v3997, %v10712
  %v10715 = vunpack.c.l.s4 1935823168
  %v10716 = vunpack.c.0.s8 %v10715
  %v10717 = vlaneseq
  %v10718 = vshrl.u32 %v10717, 7
  %v10719 = vsub.s32 %v10716, %v10718
  %v10720 = vrot.slane %v10713, %v10719
  %v10722 = vunpack.c.l.s4 1935823168
  %v10723 = vunpack.c.0.s8 %v10722
  %v10724 = vlaneseq
  %v10725 = vshrl.u32 %v10724, 7
  %v10726 = vsub.s32 %v10723, %v10725
  %v10727 = vrot.slane %v4333, %v10726
  %v10729 = vunpack.c.l.s4 1935823168
  %v10730 = vunpack.c.0.s8 %v10729
  %v10731 = vlaneseq
  %v10732 = vshrl.u32 %v10731, 7
  %v10733 = vsub.s32 %v10730, %v10732
  %v10734 = vrot.slane %v10727, %v10733
  %v10736 = vunpack.c.l.s4 1935823168
  %v10737 = vunpack.c.0.s8 %v10736
  %v10738 = vlaneseq
  %v10739 = vshrl.u32 %v10738, 7
  %v10740 = vsub.s32 %v10737, %v10739
  %v10741 = vrot.slane %v4669, %v10740
  %v10743 = vunpack.c.l.s4 1935823168
  %v10744 = vunpack.c.0.s8 %v10743
  %v10745 = vlaneseq
  %v10746 = vshrl.u32 %v10745, 7
  %v10747 = vsub.s32 %v10744, %v10746
  %v10748 = vrot.slane %v10741, %v10747
  %v10750 = vunpack.c.l.s4 1935823168
  %v10751 = vunpack.c.0.s8 %v10750
  %v10752 = vlaneseq
  %v10753 = vshrl.u32 %v10752, 7
  %v10754 = vsub.s32 %v10751, %v10753
  %v10755 = vrot.slane %v5005, %v10754
  %v10757 = vunpack.c.l.s4 1935823168
  %v10758 = vunpack.c.0.s8 %v10757
  %v10759 = vlaneseq
  %v10760 = vshrl.u32 %v10759, 7
  %v10761 = vsub.s32 %v10758, %v10760
  %v10762 = vrot.slane %v10755, %v10761
  %v10764 = vunpack.c.l.s4 1935823168
  %v10765 = vunpack.c.0.s8 %v10764
  %v10766 = vlaneseq
  %v10767 = vshrl.u32 %v10766, 7
  %v10768 = vsub.s32 %v10765, %v10767
  %v10769 = vrot.slane %v5341, %v10768
  %v10771 = vunpack.c.l.s4 1935823168
  %v10772 = vunpack.c.0.s8 %v10771
  %v10773 = vlaneseq
  %v10774 = vshrl.u32 %v10773, 7
  %v10775 = vsub.s32 %v10772, %v10774
  %v10776 = vrot.slane %v10769, %v10775
  %v10778 = vunpack.c.l.s4 1935823168
  %v10779 = vunpack.c.0.s8 %v10778
  %v10780 = vlaneseq
  %v10781 = vshrl.u32 %v10780, 7
  %v10782 = vsub.s32 %v10779, %v10781
  %v10783 = vrot.slane %v5677, %v10782
  %v10785 = vunpack.c.l.s4 1935823168
  %v10786 = vunpack.c.0.s8 %v10785
  %v10787 = vlaneseq
  %v10788 = vshrl.u32 %v10787, 7
  %v10789 = vsub.s32 %v10786, %v10788
  %v10790 = vrot.slane %v10783, %v10789
  %v10792 = vunpack.c.l.s4 1935823168
  %v10793 = vunpack.c.0.s8 %v10792
  %v10794 = vlaneseq
  %v10795 = vshrl.u32 %v10794, 7
  %v10796 = vsub.s32 %v10793, %v10795
  %v10797 = vrot.slane %v6013, %v10796
  %v10799 = vunpack.c.l.s4 1935823168
  %v10800 = vunpack.c.0.s8 %v10799
  %v10801 = vlaneseq
  %v10802 = vshrl.u32 %v10801, 7
  %v10803 = vsub.s32 %v10800, %v10802
  %v10804 = vrot.slane %v10797, %v10803
  %v10805 = vunpack.c.l.b16 %v10706
  %v10806 = vunpack.c.l.b16 %v10720
  %v10807 = vunpack.c.l.b16 %v10734
  %v10808 = vunpack.c.l.b16 %v10748
  %v10809 = vunpack.c.l.b16 %v10762
  %v10810 = vunpack.c.l.b16 %v10776
  %v10811 = vunpack.c.l.b16 %v10790
  %v10812 = vunpack.c.l.b16 %v10804
  %v10813 = vrot.slane %v10806, 7
  %v10814 = vsel %vm6234, %v10813, %v10805
  %v10815 = vrot.slane %v10807, 6
  %v10816 = vsel %vm6237, %v10815, %v10814
  %v10817 = vrot.slane %v10808, 5
  %v10818 = vsel %vm6240, %v10817, %v10816
  %v10819 = vrot.slane %v10809, 4
  %v10820 = vsel %vm6243, %v10819, %v10818
  %v10821 = vrot.slane %v10810, 3
  %v10822 = vsel %vm6246, %v10821, %v10820
  %v10823 = vrot.slane %v10811, 2
  %v10824 = vsel %vm6249, %v10823, %v10822
  %v10825 = vrot.slane %v10812, 1
  %v10826 = vsel %vm6252, %v10825, %v10824
  %v10827 = vpack.c.b16 %v10826, %v10826
  %10828 = vrot.lane.b32.xlu0 %v10827, 32
  %v10829 = vpop.permute.xlu0 %10828
  %10831 = vst.msk [vmem:[#allocation2 + $0x20] sm:$0xf] %vm6396, %v10829
  %v10833 = vunpack.c.l.s4 1935823168
  %v10834 = vunpack.c.0.s8 %v10833
  %v10835 = vlaneseq
  %v10836 = vshrl.u32 %v10835, 7
  %v10837 = vsub.s32 %v10834, %v10836
  %v10838 = vrot.slane %v3663, %v10837
  %v10840 = vunpack.c.l.s4 1935823168
  %v10841 = vunpack.c.0.s8 %v10840
  %v10842 = vlaneseq
  %v10843 = vshrl.u32 %v10842, 7
  %v10844 = vsub.s32 %v10841, %v10843
  %v10845 = vrot.slane %v10838, %v10844
  %v10847 = vunpack.c.l.s4 1935823168
  %v10848 = vunpack.c.0.s8 %v10847
  %v10849 = vlaneseq
  %v10850 = vshrl.u32 %v10849, 7
  %v10851 = vsub.s32 %v10848, %v10850
  %v10852 = vrot.slane %v3999, %v10851
  %v10854 = vunpack.c.l.s4 1935823168
  %v10855 = vunpack.c.0.s8 %v10854
  %v10856 = vlaneseq
  %v10857 = vshrl.u32 %v10856, 7
  %v10858 = vsub.s32 %v10855, %v10857
  %v10859 = vrot.slane %v10852, %v10858
  %v10861 = vunpack.c.l.s4 1935823168
  %v10862 = vunpack.c.0.s8 %v10861
  %v10863 = vlaneseq
  %v10864 = vshrl.u32 %v10863, 7
  %v10865 = vsub.s32 %v10862, %v10864
  %v10866 = vrot.slane %v4335, %v10865
  %v10868 = vunpack.c.l.s4 1935823168
  %v10869 = vunpack.c.0.s8 %v10868
  %v10870 = vlaneseq
  %v10871 = vshrl.u32 %v10870, 7
  %v10872 = vsub.s32 %v10869, %v10871
  %v10873 = vrot.slane %v10866, %v10872
  %v10875 = vunpack.c.l.s4 1935823168
  %v10876 = vunpack.c.0.s8 %v10875
  %v10877 = vlaneseq
  %v10878 = vshrl.u32 %v10877, 7
  %v10879 = vsub.s32 %v10876, %v10878
  %v10880 = vrot.slane %v4671, %v10879
  %v10882 = vunpack.c.l.s4 1935823168
  %v10883 = vunpack.c.0.s8 %v10882
  %v10884 = vlaneseq
  %v10885 = vshrl.u32 %v10884, 7
  %v10886 = vsub.s32 %v10883, %v10885
  %v10887 = vrot.slane %v10880, %v10886
  %v10889 = vunpack.c.l.s4 1935823168
  %v10890 = vunpack.c.0.s8 %v10889
  %v10891 = vlaneseq
  %v10892 = vshrl.u32 %v10891, 7
  %v10893 = vsub.s32 %v10890, %v10892
  %v10894 = vrot.slane %v5007, %v10893
  %v10896 = vunpack.c.l.s4 1935823168
  %v10897 = vunpack.c.0.s8 %v10896
  %v10898 = vlaneseq
  %v10899 = vshrl.u32 %v10898, 7
  %v10900 = vsub.s32 %v10897, %v10899
  %v10901 = vrot.slane %v10894, %v10900
  %v10903 = vunpack.c.l.s4 1935823168
  %v10904 = vunpack.c.0.s8 %v10903
  %v10905 = vlaneseq
  %v10906 = vshrl.u32 %v10905, 7
  %v10907 = vsub.s32 %v10904, %v10906
  %v10908 = vrot.slane %v5343, %v10907
  %v10910 = vunpack.c.l.s4 1935823168
  %v10911 = vunpack.c.0.s8 %v10910
  %v10912 = vlaneseq
  %v10913 = vshrl.u32 %v10912, 7
  %v10914 = vsub.s32 %v10911, %v10913
  %v10915 = vrot.slane %v10908, %v10914
  %v10917 = vunpack.c.l.s4 1935823168
  %v10918 = vunpack.c.0.s8 %v10917
  %v10919 = vlaneseq
  %v10920 = vshrl.u32 %v10919, 7
  %v10921 = vsub.s32 %v10918, %v10920
  %v10922 = vrot.slane %v5679, %v10921
  %v10924 = vunpack.c.l.s4 1935823168
  %v10925 = vunpack.c.0.s8 %v10924
  %v10926 = vlaneseq
  %v10927 = vshrl.u32 %v10926, 7
  %v10928 = vsub.s32 %v10925, %v10927
  %v10929 = vrot.slane %v10922, %v10928
  %v10931 = vunpack.c.l.s4 1935823168
  %v10932 = vunpack.c.0.s8 %v10931
  %v10933 = vlaneseq
  %v10934 = vshrl.u32 %v10933, 7
  %v10935 = vsub.s32 %v10932, %v10934
  %v10936 = vrot.slane %v6015, %v10935
  %v10938 = vunpack.c.l.s4 1935823168
  %v10939 = vunpack.c.0.s8 %v10938
  %v10940 = vlaneseq
  %v10941 = vshrl.u32 %v10940, 7
  %v10942 = vsub.s32 %v10939, %v10941
  %v10943 = vrot.slane %v10936, %v10942
  %v10944 = vunpack.c.l.b16 %v10845
  %v10945 = vunpack.c.l.b16 %v10859
  %v10946 = vunpack.c.l.b16 %v10873
  %v10947 = vunpack.c.l.b16 %v10887
  %v10948 = vunpack.c.l.b16 %v10901
  %v10949 = vunpack.c.l.b16 %v10915
  %v10950 = vunpack.c.l.b16 %v10929
  %v10951 = vunpack.c.l.b16 %v10943
  %v10952 = vrot.slane %v10945, 7
  %v10953 = vsel %vm6234, %v10952, %v10944
  %v10954 = vrot.slane %v10946, 6
  %v10955 = vsel %vm6237, %v10954, %v10953
  %v10956 = vrot.slane %v10947, 5
  %v10957 = vsel %vm6240, %v10956, %v10955
  %v10958 = vrot.slane %v10948, 4
  %v10959 = vsel %vm6243, %v10958, %v10957
  %v10960 = vrot.slane %v10949, 3
  %v10961 = vsel %vm6246, %v10960, %v10959
  %v10962 = vrot.slane %v10950, 2
  %v10963 = vsel %vm6249, %v10962, %v10961
  %v10964 = vrot.slane %v10951, 1
  %v10965 = vsel %vm6252, %v10964, %v10963
  %v10966 = vpack.c.b16 %v10965, %v10965
  %10967 = vrot.lane.b32.xlu0 %v10966, 64
  %v10968 = vpop.permute.xlu0 %10967
  %10970 = vst.msk [vmem:[#allocation2 + $0x20] sm:$0xf] %vm6536, %v10968
  %v10972 = vunpack.c.l.s4 1935823168
  %v10973 = vunpack.c.0.s8 %v10972
  %v10974 = vlaneseq
  %v10975 = vshrl.u32 %v10974, 7
  %v10976 = vsub.s32 %v10973, %v10975
  %v10977 = vrot.slane %v3688, %v10976
  %v10979 = vunpack.c.l.s4 1935823168
  %v10980 = vunpack.c.0.s8 %v10979
  %v10981 = vlaneseq
  %v10982 = vshrl.u32 %v10981, 7
  %v10983 = vsub.s32 %v10980, %v10982
  %v10984 = vrot.slane %v10977, %v10983
  %v10986 = vunpack.c.l.s4 1935823168
  %v10987 = vunpack.c.0.s8 %v10986
  %v10988 = vlaneseq
  %v10989 = vshrl.u32 %v10988, 7
  %v10990 = vsub.s32 %v10987, %v10989
  %v10991 = vrot.slane %v4024, %v10990
  %v10993 = vunpack.c.l.s4 1935823168
  %v10994 = vunpack.c.0.s8 %v10993
  %v10995 = vlaneseq
  %v10996 = vshrl.u32 %v10995, 7
  %v10997 = vsub.s32 %v10994, %v10996
  %v10998 = vrot.slane %v10991, %v10997
  %v11000 = vunpack.c.l.s4 1935823168
  %v11001 = vunpack.c.0.s8 %v11000
  %v11002 = vlaneseq
  %v11003 = vshrl.u32 %v11002, 7
  %v11004 = vsub.s32 %v11001, %v11003
  %v11005 = vrot.slane %v4360, %v11004
  %v11007 = vunpack.c.l.s4 1935823168
  %v11008 = vunpack.c.0.s8 %v11007
  %v11009 = vlaneseq
  %v11010 = vshrl.u32 %v11009, 7
  %v11011 = vsub.s32 %v11008, %v11010
  %v11012 = vrot.slane %v11005, %v11011
  %v11014 = vunpack.c.l.s4 1935823168
  %v11015 = vunpack.c.0.s8 %v11014
  %v11016 = vlaneseq
  %v11017 = vshrl.u32 %v11016, 7
  %v11018 = vsub.s32 %v11015, %v11017
  %v11019 = vrot.slane %v4696, %v11018
  %v11021 = vunpack.c.l.s4 1935823168
  %v11022 = vunpack.c.0.s8 %v11021
  %v11023 = vlaneseq
  %v11024 = vshrl.u32 %v11023, 7
  %v11025 = vsub.s32 %v11022, %v11024
  %v11026 = vrot.slane %v11019, %v11025
  %v11028 = vunpack.c.l.s4 1935823168
  %v11029 = vunpack.c.0.s8 %v11028
  %v11030 = vlaneseq
  %v11031 = vshrl.u32 %v11030, 7
  %v11032 = vsub.s32 %v11029, %v11031
  %v11033 = vrot.slane %v5032, %v11032
  %v11035 = vunpack.c.l.s4 1935823168
  %v11036 = vunpack.c.0.s8 %v11035
  %v11037 = vlaneseq
  %v11038 = vshrl.u32 %v11037, 7
  %v11039 = vsub.s32 %v11036, %v11038
  %v11040 = vrot.slane %v11033, %v11039
  %v11042 = vunpack.c.l.s4 1935823168
  %v11043 = vunpack.c.0.s8 %v11042
  %v11044 = vlaneseq
  %v11045 = vshrl.u32 %v11044, 7
  %v11046 = vsub.s32 %v11043, %v11045
  %v11047 = vrot.slane %v5368, %v11046
  %v11049 = vunpack.c.l.s4 1935823168
  %v11050 = vunpack.c.0.s8 %v11049
  %v11051 = vlaneseq
  %v11052 = vshrl.u32 %v11051, 7
  %v11053 = vsub.s32 %v11050, %v11052
  %v11054 = vrot.slane %v11047, %v11053
  %v11056 = vunpack.c.l.s4 1935823168
  %v11057 = vunpack.c.0.s8 %v11056
  %v11058 = vlaneseq
  %v11059 = vshrl.u32 %v11058, 7
  %v11060 = vsub.s32 %v11057, %v11059
  %v11061 = vrot.slane %v5704, %v11060
  %v11063 = vunpack.c.l.s4 1935823168
  %v11064 = vunpack.c.0.s8 %v11063
  %v11065 = vlaneseq
  %v11066 = vshrl.u32 %v11065, 7
  %v11067 = vsub.s32 %v11064, %v11066
  %v11068 = vrot.slane %v11061, %v11067
  %v11070 = vunpack.c.l.s4 1935823168
  %v11071 = vunpack.c.0.s8 %v11070
  %v11072 = vlaneseq
  %v11073 = vshrl.u32 %v11072, 7
  %v11074 = vsub.s32 %v11071, %v11073
  %v11075 = vrot.slane %v6040, %v11074
  %v11077 = vunpack.c.l.s4 1935823168
  %v11078 = vunpack.c.0.s8 %v11077
  %v11079 = vlaneseq
  %v11080 = vshrl.u32 %v11079, 7
  %v11081 = vsub.s32 %v11078, %v11080
  %v11082 = vrot.slane %v11075, %v11081
  %v11083 = vunpack.c.l.b16 %v10984
  %v11084 = vunpack.c.l.b16 %v10998
  %v11085 = vunpack.c.l.b16 %v11012
  %v11086 = vunpack.c.l.b16 %v11026
  %v11087 = vunpack.c.l.b16 %v11040
  %v11088 = vunpack.c.l.b16 %v11054
  %v11089 = vunpack.c.l.b16 %v11068
  %v11090 = vunpack.c.l.b16 %v11082
  %v11091 = vrot.slane %v11084, 7
  %v11092 = vsel %vm6234, %v11091, %v11083
  %v11093 = vrot.slane %v11085, 6
  %v11094 = vsel %vm6237, %v11093, %v11092
  %v11095 = vrot.slane %v11086, 5
  %v11096 = vsel %vm6240, %v11095, %v11094
  %v11097 = vrot.slane %v11087, 4
  %v11098 = vsel %vm6243, %v11097, %v11096
  %v11099 = vrot.slane %v11088, 3
  %v11100 = vsel %vm6246, %v11099, %v11098
  %v11101 = vrot.slane %v11089, 2
  %v11102 = vsel %vm6249, %v11101, %v11100
  %v11103 = vrot.slane %v11090, 1
  %v11104 = vsel %vm6252, %v11103, %v11102
  %v11105 = vpack.c.b16 %v11104, %v11104
  %11106 = vrot.lane.b32.xlu0 %v11105, 96
  %v11107 = vpop.permute.xlu0 %11106
  %11109 = vst.msk [vmem:[#allocation2 + $0x20] sm:$0xf] %vm6676, %v11107
  %v11111 = vunpack.c.l.s4 1935823168
  %v11112 = vunpack.c.0.s8 %v11111
  %v11113 = vlaneseq
  %v11114 = vshrl.u32 %v11113, 7
  %v11115 = vsub.s32 %v11112, %v11114
  %v11116 = vrot.slane %v3702, %v11115
  %v11118 = vunpack.c.l.s4 1935823168
  %v11119 = vunpack.c.0.s8 %v11118
  %v11120 = vlaneseq
  %v11121 = vshrl.u32 %v11120, 7
  %v11122 = vsub.s32 %v11119, %v11121
  %v11123 = vrot.slane %v11116, %v11122
  %v11125 = vunpack.c.l.s4 1935823168
  %v11126 = vunpack.c.0.s8 %v11125
  %v11127 = vlaneseq
  %v11128 = vshrl.u32 %v11127, 7
  %v11129 = vsub.s32 %v11126, %v11128
  %v11130 = vrot.slane %v4038, %v11129
  %v11132 = vunpack.c.l.s4 1935823168
  %v11133 = vunpack.c.0.s8 %v11132
  %v11134 = vlaneseq
  %v11135 = vshrl.u32 %v11134, 7
  %v11136 = vsub.s32 %v11133, %v11135
  %v11137 = vrot.slane %v11130, %v11136
  %v11139 = vunpack.c.l.s4 1935823168
  %v11140 = vunpack.c.0.s8 %v11139
  %v11141 = vlaneseq
  %v11142 = vshrl.u32 %v11141, 7
  %v11143 = vsub.s32 %v11140, %v11142
  %v11144 = vrot.slane %v4374, %v11143
  %v11146 = vunpack.c.l.s4 1935823168
  %v11147 = vunpack.c.0.s8 %v11146
  %v11148 = vlaneseq
  %v11149 = vshrl.u32 %v11148, 7
  %v11150 = vsub.s32 %v11147, %v11149
  %v11151 = vrot.slane %v11144, %v11150
  %v11153 = vunpack.c.l.s4 1935823168
  %v11154 = vunpack.c.0.s8 %v11153
  %v11155 = vlaneseq
  %v11156 = vshrl.u32 %v11155, 7
  %v11157 = vsub.s32 %v11154, %v11156
  %v11158 = vrot.slane %v4710, %v11157
  %v11160 = vunpack.c.l.s4 1935823168
  %v11161 = vunpack.c.0.s8 %v11160
  %v11162 = vlaneseq
  %v11163 = vshrl.u32 %v11162, 7
  %v11164 = vsub.s32 %v11161, %v11163
  %v11165 = vrot.slane %v11158, %v11164
  %v11167 = vunpack.c.l.s4 1935823168
  %v11168 = vunpack.c.0.s8 %v11167
  %v11169 = vlaneseq
  %v11170 = vshrl.u32 %v11169, 7
  %v11171 = vsub.s32 %v11168, %v11170
  %v11172 = vrot.slane %v5046, %v11171
  %v11174 = vunpack.c.l.s4 1935823168
  %v11175 = vunpack.c.0.s8 %v11174
  %v11176 = vlaneseq
  %v11177 = vshrl.u32 %v11176, 7
  %v11178 = vsub.s32 %v11175, %v11177
  %v11179 = vrot.slane %v11172, %v11178
  %v11181 = vunpack.c.l.s4 1935823168
  %v11182 = vunpack.c.0.s8 %v11181
  %v11183 = vlaneseq
  %v11184 = vshrl.u32 %v11183, 7
  %v11185 = vsub.s32 %v11182, %v11184
  %v11186 = vrot.slane %v5382, %v11185
  %v11188 = vunpack.c.l.s4 1935823168
  %v11189 = vunpack.c.0.s8 %v11188
  %v11190 = vlaneseq
  %v11191 = vshrl.u32 %v11190, 7
  %v11192 = vsub.s32 %v11189, %v11191
  %v11193 = vrot.slane %v11186, %v11192
  %v11195 = vunpack.c.l.s4 1935823168
  %v11196 = vunpack.c.0.s8 %v11195
  %v11197 = vlaneseq
  %v11198 = vshrl.u32 %v11197, 7
  %v11199 = vsub.s32 %v11196, %v11198
  %v11200 = vrot.slane %v5718, %v11199
  %v11202 = vunpack.c.l.s4 1935823168
  %v11203 = vunpack.c.0.s8 %v11202
  %v11204 = vlaneseq
  %v11205 = vshrl.u32 %v11204, 7
  %v11206 = vsub.s32 %v11203, %v11205
  %v11207 = vrot.slane %v11200, %v11206
  %v11209 = vunpack.c.l.s4 1935823168
  %v11210 = vunpack.c.0.s8 %v11209
  %v11211 = vlaneseq
  %v11212 = vshrl.u32 %v11211, 7
  %v11213 = vsub.s32 %v11210, %v11212
  %v11214 = vrot.slane %v6054, %v11213
  %v11216 = vunpack.c.l.s4 1935823168
  %v11217 = vunpack.c.0.s8 %v11216
  %v11218 = vlaneseq
  %v11219 = vshrl.u32 %v11218, 7
  %v11220 = vsub.s32 %v11217, %v11219
  %v11221 = vrot.slane %v11214, %v11220
  %v11222 = vunpack.c.l.b16 %v11123
  %v11223 = vunpack.c.l.b16 %v11137
  %v11224 = vunpack.c.l.b16 %v11151
  %v11225 = vunpack.c.l.b16 %v11165
  %v11226 = vunpack.c.l.b16 %v11179
  %v11227 = vunpack.c.l.b16 %v11193
  %v11228 = vunpack.c.l.b16 %v11207
  %v11229 = vunpack.c.l.b16 %v11221
  %v11230 = vrot.slane %v11223, 7
  %v11231 = vsel %vm6234, %v11230, %v11222
  %v11232 = vrot.slane %v11224, 6
  %v11233 = vsel %vm6237, %v11232, %v11231
  %v11234 = vrot.slane %v11225, 5
  %v11235 = vsel %vm6240, %v11234, %v11233
  %v11236 = vrot.slane %v11226, 4
  %v11237 = vsel %vm6243, %v11236, %v11235
  %v11238 = vrot.slane %v11227, 3
  %v11239 = vsel %vm6246, %v11238, %v11237
  %v11240 = vrot.slane %v11228, 2
  %v11241 = vsel %vm6249, %v11240, %v11239
  %v11242 = vrot.slane %v11229, 1
  %v11243 = vsel %vm6252, %v11242, %v11241
  %v11244 = vpack.c.b16 %v11243, %v11243
  %11246 = vst.msk [vmem:[#allocation2 + $0x24] sm:$0xf] %vm6256, %v11244
  %v11248 = vunpack.c.l.s4 1935823168
  %v11249 = vunpack.c.0.s8 %v11248
  %v11250 = vlaneseq
  %v11251 = vshrl.u32 %v11250, 7
  %v11252 = vsub.s32 %v11249, %v11251
  %v11253 = vrot.slane %v3710, %v11252
  %v11255 = vunpack.c.l.s4 1935823168
  %v11256 = vunpack.c.0.s8 %v11255
  %v11257 = vlaneseq
  %v11258 = vshrl.u32 %v11257, 7
  %v11259 = vsub.s32 %v11256, %v11258
  %v11260 = vrot.slane %v11253, %v11259
  %v11262 = vunpack.c.l.s4 1935823168
  %v11263 = vunpack.c.0.s8 %v11262
  %v11264 = vlaneseq
  %v11265 = vshrl.u32 %v11264, 7
  %v11266 = vsub.s32 %v11263, %v11265
  %v11267 = vrot.slane %v4046, %v11266
  %v11269 = vunpack.c.l.s4 1935823168
  %v11270 = vunpack.c.0.s8 %v11269
  %v11271 = vlaneseq
  %v11272 = vshrl.u32 %v11271, 7
  %v11273 = vsub.s32 %v11270, %v11272
  %v11274 = vrot.slane %v11267, %v11273
  %v11276 = vunpack.c.l.s4 1935823168
  %v11277 = vunpack.c.0.s8 %v11276
  %v11278 = vlaneseq
  %v11279 = vshrl.u32 %v11278, 7
  %v11280 = vsub.s32 %v11277, %v11279
  %v11281 = vrot.slane %v4382, %v11280
  %v11283 = vunpack.c.l.s4 1935823168
  %v11284 = vunpack.c.0.s8 %v11283
  %v11285 = vlaneseq
  %v11286 = vshrl.u32 %v11285, 7
  %v11287 = vsub.s32 %v11284, %v11286
  %v11288 = vrot.slane %v11281, %v11287
  %v11290 = vunpack.c.l.s4 1935823168
  %v11291 = vunpack.c.0.s8 %v11290
  %v11292 = vlaneseq
  %v11293 = vshrl.u32 %v11292, 7
  %v11294 = vsub.s32 %v11291, %v11293
  %v11295 = vrot.slane %v4718, %v11294
  %v11297 = vunpack.c.l.s4 1935823168
  %v11298 = vunpack.c.0.s8 %v11297
  %v11299 = vlaneseq
  %v11300 = vshrl.u32 %v11299, 7
  %v11301 = vsub.s32 %v11298, %v11300
  %v11302 = vrot.slane %v11295, %v11301
  %v11304 = vunpack.c.l.s4 1935823168
  %v11305 = vunpack.c.0.s8 %v11304
  %v11306 = vlaneseq
  %v11307 = vshrl.u32 %v11306, 7
  %v11308 = vsub.s32 %v11305, %v11307
  %v11309 = vrot.slane %v5054, %v11308
  %v11311 = vunpack.c.l.s4 1935823168
  %v11312 = vunpack.c.0.s8 %v11311
  %v11313 = vlaneseq
  %v11314 = vshrl.u32 %v11313, 7
  %v11315 = vsub.s32 %v11312, %v11314
  %v11316 = vrot.slane %v11309, %v11315
  %v11318 = vunpack.c.l.s4 1935823168
  %v11319 = vunpack.c.0.s8 %v11318
  %v11320 = vlaneseq
  %v11321 = vshrl.u32 %v11320, 7
  %v11322 = vsub.s32 %v11319, %v11321
  %v11323 = vrot.slane %v5390, %v11322
  %v11325 = vunpack.c.l.s4 1935823168
  %v11326 = vunpack.c.0.s8 %v11325
  %v11327 = vlaneseq
  %v11328 = vshrl.u32 %v11327, 7
  %v11329 = vsub.s32 %v11326, %v11328
  %v11330 = vrot.slane %v11323, %v11329
  %v11332 = vunpack.c.l.s4 1935823168
  %v11333 = vunpack.c.0.s8 %v11332
  %v11334 = vlaneseq
  %v11335 = vshrl.u32 %v11334, 7
  %v11336 = vsub.s32 %v11333, %v11335
  %v11337 = vrot.slane %v5726, %v11336
  %v11339 = vunpack.c.l.s4 1935823168
  %v11340 = vunpack.c.0.s8 %v11339
  %v11341 = vlaneseq
  %v11342 = vshrl.u32 %v11341, 7
  %v11343 = vsub.s32 %v11340, %v11342
  %v11344 = vrot.slane %v11337, %v11343
  %v11346 = vunpack.c.l.s4 1935823168
  %v11347 = vunpack.c.0.s8 %v11346
  %v11348 = vlaneseq
  %v11349 = vshrl.u32 %v11348, 7
  %v11350 = vsub.s32 %v11347, %v11349
  %v11351 = vrot.slane %v6062, %v11350
  %v11353 = vunpack.c.l.s4 1935823168
  %v11354 = vunpack.c.0.s8 %v11353
  %v11355 = vlaneseq
  %v11356 = vshrl.u32 %v11355, 7
  %v11357 = vsub.s32 %v11354, %v11356
  %v11358 = vrot.slane %v11351, %v11357
  %v11359 = vunpack.c.l.b16 %v11260
  %v11360 = vunpack.c.l.b16 %v11274
  %v11361 = vunpack.c.l.b16 %v11288
  %v11362 = vunpack.c.l.b16 %v11302
  %v11363 = vunpack.c.l.b16 %v11316
  %v11364 = vunpack.c.l.b16 %v11330
  %v11365 = vunpack.c.l.b16 %v11344
  %v11366 = vunpack.c.l.b16 %v11358
  %v11367 = vrot.slane %v11360, 7
  %v11368 = vsel %vm6234, %v11367, %v11359
  %v11369 = vrot.slane %v11361, 6
  %v11370 = vsel %vm6237, %v11369, %v11368
  %v11371 = vrot.slane %v11362, 5
  %v11372 = vsel %vm6240, %v11371, %v11370
  %v11373 = vrot.slane %v11363, 4
  %v11374 = vsel %vm6243, %v11373, %v11372
  %v11375 = vrot.slane %v11364, 3
  %v11376 = vsel %vm6246, %v11375, %v11374
  %v11377 = vrot.slane %v11365, 2
  %v11378 = vsel %vm6249, %v11377, %v11376
  %v11379 = vrot.slane %v11366, 1
  %v11380 = vsel %vm6252, %v11379, %v11378
  %v11381 = vpack.c.b16 %v11380, %v11380
  %11382 = vrot.lane.b32.xlu0 %v11381, 32
  %v11383 = vpop.permute.xlu0 %11382
  %11385 = vst.msk [vmem:[#allocation2 + $0x24] sm:$0xf] %vm6396, %v11383
  %v11387 = vunpack.c.l.s4 1935823168
  %v11388 = vunpack.c.0.s8 %v11387
  %v11389 = vlaneseq
  %v11390 = vshrl.u32 %v11389, 7
  %v11391 = vsub.s32 %v11388, %v11390
  %v11392 = vrot.slane %v3712, %v11391
  %v11394 = vunpack.c.l.s4 1935823168
  %v11395 = vunpack.c.0.s8 %v11394
  %v11396 = vlaneseq
  %v11397 = vshrl.u32 %v11396, 7
  %v11398 = vsub.s32 %v11395, %v11397
  %v11399 = vrot.slane %v11392, %v11398
  %v11401 = vunpack.c.l.s4 1935823168
  %v11402 = vunpack.c.0.s8 %v11401
  %v11403 = vlaneseq
  %v11404 = vshrl.u32 %v11403, 7
  %v11405 = vsub.s32 %v11402, %v11404
  %v11406 = vrot.slane %v4048, %v11405
  %v11408 = vunpack.c.l.s4 1935823168
  %v11409 = vunpack.c.0.s8 %v11408
  %v11410 = vlaneseq
  %v11411 = vshrl.u32 %v11410, 7
  %v11412 = vsub.s32 %v11409, %v11411
  %v11413 = vrot.slane %v11406, %v11412
  %v11415 = vunpack.c.l.s4 1935823168
  %v11416 = vunpack.c.0.s8 %v11415
  %v11417 = vlaneseq
  %v11418 = vshrl.u32 %v11417, 7
  %v11419 = vsub.s32 %v11416, %v11418
  %v11420 = vrot.slane %v4384, %v11419
  %v11422 = vunpack.c.l.s4 1935823168
  %v11423 = vunpack.c.0.s8 %v11422
  %v11424 = vlaneseq
  %v11425 = vshrl.u32 %v11424, 7
  %v11426 = vsub.s32 %v11423, %v11425
  %v11427 = vrot.slane %v11420, %v11426
  %v11429 = vunpack.c.l.s4 1935823168
  %v11430 = vunpack.c.0.s8 %v11429
  %v11431 = vlaneseq
  %v11432 = vshrl.u32 %v11431, 7
  %v11433 = vsub.s32 %v11430, %v11432
  %v11434 = vrot.slane %v4720, %v11433
  %v11436 = vunpack.c.l.s4 1935823168
  %v11437 = vunpack.c.0.s8 %v11436
  %v11438 = vlaneseq
  %v11439 = vshrl.u32 %v11438, 7
  %v11440 = vsub.s32 %v11437, %v11439
  %v11441 = vrot.slane %v11434, %v11440
  %v11443 = vunpack.c.l.s4 1935823168
  %v11444 = vunpack.c.0.s8 %v11443
  %v11445 = vlaneseq
  %v11446 = vshrl.u32 %v11445, 7
  %v11447 = vsub.s32 %v11444, %v11446
  %v11448 = vrot.slane %v5056, %v11447
  %v11450 = vunpack.c.l.s4 1935823168
  %v11451 = vunpack.c.0.s8 %v11450
  %v11452 = vlaneseq
  %v11453 = vshrl.u32 %v11452, 7
  %v11454 = vsub.s32 %v11451, %v11453
  %v11455 = vrot.slane %v11448, %v11454
  %v11457 = vunpack.c.l.s4 1935823168
  %v11458 = vunpack.c.0.s8 %v11457
  %v11459 = vlaneseq
  %v11460 = vshrl.u32 %v11459, 7
  %v11461 = vsub.s32 %v11458, %v11460
  %v11462 = vrot.slane %v5392, %v11461
  %v11464 = vunpack.c.l.s4 1935823168
  %v11465 = vunpack.c.0.s8 %v11464
  %v11466 = vlaneseq
  %v11467 = vshrl.u32 %v11466, 7
  %v11468 = vsub.s32 %v11465, %v11467
  %v11469 = vrot.slane %v11462, %v11468
  %v11471 = vunpack.c.l.s4 1935823168
  %v11472 = vunpack.c.0.s8 %v11471
  %v11473 = vlaneseq
  %v11474 = vshrl.u32 %v11473, 7
  %v11475 = vsub.s32 %v11472, %v11474
  %v11476 = vrot.slane %v5728, %v11475
  %v11478 = vunpack.c.l.s4 1935823168
  %v11479 = vunpack.c.0.s8 %v11478
  %v11480 = vlaneseq
  %v11481 = vshrl.u32 %v11480, 7
  %v11482 = vsub.s32 %v11479, %v11481
  %v11483 = vrot.slane %v11476, %v11482
  %v11485 = vunpack.c.l.s4 1935823168
  %v11486 = vunpack.c.0.s8 %v11485
  %v11487 = vlaneseq
  %v11488 = vshrl.u32 %v11487, 7
  %v11489 = vsub.s32 %v11486, %v11488
  %v11490 = vrot.slane %v6064, %v11489
  %v11492 = vunpack.c.l.s4 1935823168
  %v11493 = vunpack.c.0.s8 %v11492
  %v11494 = vlaneseq
  %v11495 = vshrl.u32 %v11494, 7
  %v11496 = vsub.s32 %v11493, %v11495
  %v11497 = vrot.slane %v11490, %v11496
  %v11498 = vunpack.c.l.b16 %v11399
  %v11499 = vunpack.c.l.b16 %v11413
  %v11500 = vunpack.c.l.b16 %v11427
  %v11501 = vunpack.c.l.b16 %v11441
  %v11502 = vunpack.c.l.b16 %v11455
  %v11503 = vunpack.c.l.b16 %v11469
  %v11504 = vunpack.c.l.b16 %v11483
  %v11505 = vunpack.c.l.b16 %v11497
  %v11506 = vrot.slane %v11499, 7
  %v11507 = vsel %vm6234, %v11506, %v11498
  %v11508 = vrot.slane %v11500, 6
  %v11509 = vsel %vm6237, %v11508, %v11507
  %v11510 = vrot.slane %v11501, 5
  %v11511 = vsel %vm6240, %v11510, %v11509
  %v11512 = vrot.slane %v11502, 4
  %v11513 = vsel %vm6243, %v11512, %v11511
  %v11514 = vrot.slane %v11503, 3
  %v11515 = vsel %vm6246, %v11514, %v11513
  %v11516 = vrot.slane %v11504, 2
  %v11517 = vsel %vm6249, %v11516, %v11515
  %v11518 = vrot.slane %v11505, 1
  %v11519 = vsel %vm6252, %v11518, %v11517
  %v11520 = vpack.c.b16 %v11519, %v11519
  %11521 = vrot.lane.b32.xlu0 %v11520, 64
  %v11522 = vpop.permute.xlu0 %11521
  %11524 = vst.msk [vmem:[#allocation2 + $0x24] sm:$0xf] %vm6536, %v11522
  %v11526 = vunpack.c.l.s4 1935823168
  %v11527 = vunpack.c.0.s8 %v11526
  %v11528 = vlaneseq
  %v11529 = vshrl.u32 %v11528, 7
  %v11530 = vsub.s32 %v11527, %v11529
  %v11531 = vrot.slane %v3695, %v11530
  %v11533 = vunpack.c.l.s4 1935823168
  %v11534 = vunpack.c.0.s8 %v11533
  %v11535 = vlaneseq
  %v11536 = vshrl.u32 %v11535, 7
  %v11537 = vsub.s32 %v11534, %v11536
  %v11538 = vrot.slane %v11531, %v11537
  %v11540 = vunpack.c.l.s4 1935823168
  %v11541 = vunpack.c.0.s8 %v11540
  %v11542 = vlaneseq
  %v11543 = vshrl.u32 %v11542, 7
  %v11544 = vsub.s32 %v11541, %v11543
  %v11545 = vrot.slane %v4031, %v11544
  %v11547 = vunpack.c.l.s4 1935823168
  %v11548 = vunpack.c.0.s8 %v11547
  %v11549 = vlaneseq
  %v11550 = vshrl.u32 %v11549, 7
  %v11551 = vsub.s32 %v11548, %v11550
  %v11552 = vrot.slane %v11545, %v11551
  %v11554 = vunpack.c.l.s4 1935823168
  %v11555 = vunpack.c.0.s8 %v11554
  %v11556 = vlaneseq
  %v11557 = vshrl.u32 %v11556, 7
  %v11558 = vsub.s32 %v11555, %v11557
  %v11559 = vrot.slane %v4367, %v11558
  %v11561 = vunpack.c.l.s4 1935823168
  %v11562 = vunpack.c.0.s8 %v11561
  %v11563 = vlaneseq
  %v11564 = vshrl.u32 %v11563, 7
  %v11565 = vsub.s32 %v11562, %v11564
  %v11566 = vrot.slane %v11559, %v11565
  %v11568 = vunpack.c.l.s4 1935823168
  %v11569 = vunpack.c.0.s8 %v11568
  %v11570 = vlaneseq
  %v11571 = vshrl.u32 %v11570, 7
  %v11572 = vsub.s32 %v11569, %v11571
  %v11573 = vrot.slane %v4703, %v11572
  %v11575 = vunpack.c.l.s4 1935823168
  %v11576 = vunpack.c.0.s8 %v11575
  %v11577 = vlaneseq
  %v11578 = vshrl.u32 %v11577, 7
  %v11579 = vsub.s32 %v11576, %v11578
  %v11580 = vrot.slane %v11573, %v11579
  %v11582 = vunpack.c.l.s4 1935823168
  %v11583 = vunpack.c.0.s8 %v11582
  %v11584 = vlaneseq
  %v11585 = vshrl.u32 %v11584, 7
  %v11586 = vsub.s32 %v11583, %v11585
  %v11587 = vrot.slane %v5039, %v11586
  %v11589 = vunpack.c.l.s4 1935823168
  %v11590 = vunpack.c.0.s8 %v11589
  %v11591 = vlaneseq
  %v11592 = vshrl.u32 %v11591, 7
  %v11593 = vsub.s32 %v11590, %v11592
  %v11594 = vrot.slane %v11587, %v11593
  %v11596 = vunpack.c.l.s4 1935823168
  %v11597 = vunpack.c.0.s8 %v11596
  %v11598 = vlaneseq
  %v11599 = vshrl.u32 %v11598, 7
  %v11600 = vsub.s32 %v11597, %v11599
  %v11601 = vrot.slane %v5375, %v11600
  %v11603 = vunpack.c.l.s4 1935823168
  %v11604 = vunpack.c.0.s8 %v11603
  %v11605 = vlaneseq
  %v11606 = vshrl.u32 %v11605, 7
  %v11607 = vsub.s32 %v11604, %v11606
  %v11608 = vrot.slane %v11601, %v11607
  %v11610 = vunpack.c.l.s4 1935823168
  %v11611 = vunpack.c.0.s8 %v11610
  %v11612 = vlaneseq
  %v11613 = vshrl.u32 %v11612, 7
  %v11614 = vsub.s32 %v11611, %v11613
  %v11615 = vrot.slane %v5711, %v11614
  %v11617 = vunpack.c.l.s4 1935823168
  %v11618 = vunpack.c.0.s8 %v11617
  %v11619 = vlaneseq
  %v11620 = vshrl.u32 %v11619, 7
  %v11621 = vsub.s32 %v11618, %v11620
  %v11622 = vrot.slane %v11615, %v11621
  %v11624 = vunpack.c.l.s4 1935823168
  %v11625 = vunpack.c.0.s8 %v11624
  %v11626 = vlaneseq
  %v11627 = vshrl.u32 %v11626, 7
  %v11628 = vsub.s32 %v11625, %v11627
  %v11629 = vrot.slane %v6047, %v11628
  %v11631 = vunpack.c.l.s4 1935823168
  %v11632 = vunpack.c.0.s8 %v11631
  %v11633 = vlaneseq
  %v11634 = vshrl.u32 %v11633, 7
  %v11635 = vsub.s32 %v11632, %v11634
  %v11636 = vrot.slane %v11629, %v11635
  %v11637 = vunpack.c.l.b16 %v11538
  %v11638 = vunpack.c.l.b16 %v11552
  %v11639 = vunpack.c.l.b16 %v11566
  %v11640 = vunpack.c.l.b16 %v11580
  %v11641 = vunpack.c.l.b16 %v11594
  %v11642 = vunpack.c.l.b16 %v11608
  %v11643 = vunpack.c.l.b16 %v11622
  %v11644 = vunpack.c.l.b16 %v11636
  %v11645 = vrot.slane %v11638, 7
  %v11646 = vsel %vm6234, %v11645, %v11637
  %v11647 = vrot.slane %v11639, 6
  %v11648 = vsel %vm6237, %v11647, %v11646
  %v11649 = vrot.slane %v11640, 5
  %v11650 = vsel %vm6240, %v11649, %v11648
  %v11651 = vrot.slane %v11641, 4
  %v11652 = vsel %vm6243, %v11651, %v11650
  %v11653 = vrot.slane %v11642, 3
  %v11654 = vsel %vm6246, %v11653, %v11652
  %v11655 = vrot.slane %v11643, 2
  %v11656 = vsel %vm6249, %v11655, %v11654
  %v11657 = vrot.slane %v11644, 1
  %v11658 = vsel %vm6252, %v11657, %v11656
  %v11659 = vpack.c.b16 %v11658, %v11658
  %11660 = vrot.lane.b32.xlu0 %v11659, 96
  %v11661 = vpop.permute.xlu0 %11660
  %11663 = vst.msk [vmem:[#allocation2 + $0x24] sm:$0xf] %vm6676, %v11661
  %v11665 = vunpack.c.l.s4 1935823168
  %v11666 = vunpack.c.0.s8 %v11665
  %v11667 = vlaneseq
  %v11668 = vshrl.u32 %v11667, 7
  %v11669 = vsub.s32 %v11666, %v11668
  %v11670 = vrot.slane %v3709, %v11669
  %v11672 = vunpack.c.l.s4 1935823168
  %v11673 = vunpack.c.0.s8 %v11672
  %v11674 = vlaneseq
  %v11675 = vshrl.u32 %v11674, 7
  %v11676 = vsub.s32 %v11673, %v11675
  %v11677 = vrot.slane %v11670, %v11676
  %v11679 = vunpack.c.l.s4 1935823168
  %v11680 = vunpack.c.0.s8 %v11679
  %v11681 = vlaneseq
  %v11682 = vshrl.u32 %v11681, 7
  %v11683 = vsub.s32 %v11680, %v11682
  %v11684 = vrot.slane %v4045, %v11683
  %v11686 = vunpack.c.l.s4 1935823168
  %v11687 = vunpack.c.0.s8 %v11686
  %v11688 = vlaneseq
  %v11689 = vshrl.u32 %v11688, 7
  %v11690 = vsub.s32 %v11687, %v11689
  %v11691 = vrot.slane %v11684, %v11690
  %v11693 = vunpack.c.l.s4 1935823168
  %v11694 = vunpack.c.0.s8 %v11693
  %v11695 = vlaneseq
  %v11696 = vshrl.u32 %v11695, 7
  %v11697 = vsub.s32 %v11694, %v11696
  %v11698 = vrot.slane %v4381, %v11697
  %v11700 = vunpack.c.l.s4 1935823168
  %v11701 = vunpack.c.0.s8 %v11700
  %v11702 = vlaneseq
  %v11703 = vshrl.u32 %v11702, 7
  %v11704 = vsub.s32 %v11701, %v11703
  %v11705 = vrot.slane %v11698, %v11704
  %v11707 = vunpack.c.l.s4 1935823168
  %v11708 = vunpack.c.0.s8 %v11707
  %v11709 = vlaneseq
  %v11710 = vshrl.u32 %v11709, 7
  %v11711 = vsub.s32 %v11708, %v11710
  %v11712 = vrot.slane %v4717, %v11711
  %v11714 = vunpack.c.l.s4 1935823168
  %v11715 = vunpack.c.0.s8 %v11714
  %v11716 = vlaneseq
  %v11717 = vshrl.u32 %v11716, 7
  %v11718 = vsub.s32 %v11715, %v11717
  %v11719 = vrot.slane %v11712, %v11718
  %v11721 = vunpack.c.l.s4 1935823168
  %v11722 = vunpack.c.0.s8 %v11721
  %v11723 = vlaneseq
  %v11724 = vshrl.u32 %v11723, 7
  %v11725 = vsub.s32 %v11722, %v11724
  %v11726 = vrot.slane %v5053, %v11725
  %v11728 = vunpack.c.l.s4 1935823168
  %v11729 = vunpack.c.0.s8 %v11728
  %v11730 = vlaneseq
  %v11731 = vshrl.u32 %v11730, 7
  %v11732 = vsub.s32 %v11729, %v11731
  %v11733 = vrot.slane %v11726, %v11732
  %v11735 = vunpack.c.l.s4 1935823168
  %v11736 = vunpack.c.0.s8 %v11735
  %v11737 = vlaneseq
  %v11738 = vshrl.u32 %v11737, 7
  %v11739 = vsub.s32 %v11736, %v11738
  %v11740 = vrot.slane %v5389, %v11739
  %v11742 = vunpack.c.l.s4 1935823168
  %v11743 = vunpack.c.0.s8 %v11742
  %v11744 = vlaneseq
  %v11745 = vshrl.u32 %v11744, 7
  %v11746 = vsub.s32 %v11743, %v11745
  %v11747 = vrot.slane %v11740, %v11746
  %v11749 = vunpack.c.l.s4 1935823168
  %v11750 = vunpack.c.0.s8 %v11749
  %v11751 = vlaneseq
  %v11752 = vshrl.u32 %v11751, 7
  %v11753 = vsub.s32 %v11750, %v11752
  %v11754 = vrot.slane %v5725, %v11753
  %v11756 = vunpack.c.l.s4 1935823168
  %v11757 = vunpack.c.0.s8 %v11756
  %v11758 = vlaneseq
  %v11759 = vshrl.u32 %v11758, 7
  %v11760 = vsub.s32 %v11757, %v11759
  %v11761 = vrot.slane %v11754, %v11760
  %v11763 = vunpack.c.l.s4 1935823168
  %v11764 = vunpack.c.0.s8 %v11763
  %v11765 = vlaneseq
  %v11766 = vshrl.u32 %v11765, 7
  %v11767 = vsub.s32 %v11764, %v11766
  %v11768 = vrot.slane %v6061, %v11767
  %v11770 = vunpack.c.l.s4 1935823168
  %v11771 = vunpack.c.0.s8 %v11770
  %v11772 = vlaneseq
  %v11773 = vshrl.u32 %v11772, 7
  %v11774 = vsub.s32 %v11771, %v11773
  %v11775 = vrot.slane %v11768, %v11774
  %v11776 = vunpack.c.l.b16 %v11677
  %v11777 = vunpack.c.l.b16 %v11691
  %v11778 = vunpack.c.l.b16 %v11705
  %v11779 = vunpack.c.l.b16 %v11719
  %v11780 = vunpack.c.l.b16 %v11733
  %v11781 = vunpack.c.l.b16 %v11747
  %v11782 = vunpack.c.l.b16 %v11761
  %v11783 = vunpack.c.l.b16 %v11775
  %v11784 = vrot.slane %v11777, 7
  %v11785 = vsel %vm6234, %v11784, %v11776
  %v11786 = vrot.slane %v11778, 6
  %v11787 = vsel %vm6237, %v11786, %v11785
  %v11788 = vrot.slane %v11779, 5
  %v11789 = vsel %vm6240, %v11788, %v11787
  %v11790 = vrot.slane %v11780, 4
  %v11791 = vsel %vm6243, %v11790, %v11789
  %v11792 = vrot.slane %v11781, 3
  %v11793 = vsel %vm6246, %v11792, %v11791
  %v11794 = vrot.slane %v11782, 2
  %v11795 = vsel %vm6249, %v11794, %v11793
  %v11796 = vrot.slane %v11783, 1
  %v11797 = vsel %vm6252, %v11796, %v11795
  %v11798 = vpack.c.b16 %v11797, %v11797
  %11800 = vst.msk [vmem:[#allocation2 + $0x28] sm:$0xf] %vm6256, %v11798
  %v11802 = vunpack.c.l.s4 1935823168
  %v11803 = vunpack.c.0.s8 %v11802
  %v11804 = vlaneseq
  %v11805 = vshrl.u32 %v11804, 7
  %v11806 = vsub.s32 %v11803, %v11805
  %v11807 = vrot.slane %v3711, %v11806
  %v11809 = vunpack.c.l.s4 1935823168
  %v11810 = vunpack.c.0.s8 %v11809
  %v11811 = vlaneseq
  %v11812 = vshrl.u32 %v11811, 7
  %v11813 = vsub.s32 %v11810, %v11812
  %v11814 = vrot.slane %v11807, %v11813
  %v11816 = vunpack.c.l.s4 1935823168
  %v11817 = vunpack.c.0.s8 %v11816
  %v11818 = vlaneseq
  %v11819 = vshrl.u32 %v11818, 7
  %v11820 = vsub.s32 %v11817, %v11819
  %v11821 = vrot.slane %v4047, %v11820
  %v11823 = vunpack.c.l.s4 1935823168
  %v11824 = vunpack.c.0.s8 %v11823
  %v11825 = vlaneseq
  %v11826 = vshrl.u32 %v11825, 7
  %v11827 = vsub.s32 %v11824, %v11826
  %v11828 = vrot.slane %v11821, %v11827
  %v11830 = vunpack.c.l.s4 1935823168
  %v11831 = vunpack.c.0.s8 %v11830
  %v11832 = vlaneseq
  %v11833 = vshrl.u32 %v11832, 7
  %v11834 = vsub.s32 %v11831, %v11833
  %v11835 = vrot.slane %v4383, %v11834
  %v11837 = vunpack.c.l.s4 1935823168
  %v11838 = vunpack.c.0.s8 %v11837
  %v11839 = vlaneseq
  %v11840 = vshrl.u32 %v11839, 7
  %v11841 = vsub.s32 %v11838, %v11840
  %v11842 = vrot.slane %v11835, %v11841
  %v11844 = vunpack.c.l.s4 1935823168
  %v11845 = vunpack.c.0.s8 %v11844
  %v11846 = vlaneseq
  %v11847 = vshrl.u32 %v11846, 7
  %v11848 = vsub.s32 %v11845, %v11847
  %v11849 = vrot.slane %v4719, %v11848
  %v11851 = vunpack.c.l.s4 1935823168
  %v11852 = vunpack.c.0.s8 %v11851
  %v11853 = vlaneseq
  %v11854 = vshrl.u32 %v11853, 7
  %v11855 = vsub.s32 %v11852, %v11854
  %v11856 = vrot.slane %v11849, %v11855
  %v11858 = vunpack.c.l.s4 1935823168
  %v11859 = vunpack.c.0.s8 %v11858
  %v11860 = vlaneseq
  %v11861 = vshrl.u32 %v11860, 7
  %v11862 = vsub.s32 %v11859, %v11861
  %v11863 = vrot.slane %v5055, %v11862
  %v11865 = vunpack.c.l.s4 1935823168
  %v11866 = vunpack.c.0.s8 %v11865
  %v11867 = vlaneseq
  %v11868 = vshrl.u32 %v11867, 7
  %v11869 = vsub.s32 %v11866, %v11868
  %v11870 = vrot.slane %v11863, %v11869
  %v11872 = vunpack.c.l.s4 1935823168
  %v11873 = vunpack.c.0.s8 %v11872
  %v11874 = vlaneseq
  %v11875 = vshrl.u32 %v11874, 7
  %v11876 = vsub.s32 %v11873, %v11875
  %v11877 = vrot.slane %v5391, %v11876
  %v11879 = vunpack.c.l.s4 1935823168
  %v11880 = vunpack.c.0.s8 %v11879
  %v11881 = vlaneseq
  %v11882 = vshrl.u32 %v11881, 7
  %v11883 = vsub.s32 %v11880, %v11882
  %v11884 = vrot.slane %v11877, %v11883
  %v11886 = vunpack.c.l.s4 1935823168
  %v11887 = vunpack.c.0.s8 %v11886
  %v11888 = vlaneseq
  %v11889 = vshrl.u32 %v11888, 7
  %v11890 = vsub.s32 %v11887, %v11889
  %v11891 = vrot.slane %v5727, %v11890
  %v11893 = vunpack.c.l.s4 1935823168
  %v11894 = vunpack.c.0.s8 %v11893
  %v11895 = vlaneseq
  %v11896 = vshrl.u32 %v11895, 7
  %v11897 = vsub.s32 %v11894, %v11896
  %v11898 = vrot.slane %v11891, %v11897
  %v11900 = vunpack.c.l.s4 1935823168
  %v11901 = vunpack.c.0.s8 %v11900
  %v11902 = vlaneseq
  %v11903 = vshrl.u32 %v11902, 7
  %v11904 = vsub.s32 %v11901, %v11903
  %v11905 = vrot.slane %v6063, %v11904
  %v11907 = vunpack.c.l.s4 1935823168
  %v11908 = vunpack.c.0.s8 %v11907
  %v11909 = vlaneseq
  %v11910 = vshrl.u32 %v11909, 7
  %v11911 = vsub.s32 %v11908, %v11910
  %v11912 = vrot.slane %v11905, %v11911
  %v11913 = vunpack.c.l.b16 %v11814
  %v11914 = vunpack.c.l.b16 %v11828
  %v11915 = vunpack.c.l.b16 %v11842
  %v11916 = vunpack.c.l.b16 %v11856
  %v11917 = vunpack.c.l.b16 %v11870
  %v11918 = vunpack.c.l.b16 %v11884
  %v11919 = vunpack.c.l.b16 %v11898
  %v11920 = vunpack.c.l.b16 %v11912
  %v11921 = vrot.slane %v11914, 7
  %v11922 = vsel %vm6234, %v11921, %v11913
  %v11923 = vrot.slane %v11915, 6
  %v11924 = vsel %vm6237, %v11923, %v11922
  %v11925 = vrot.slane %v11916, 5
  %v11926 = vsel %vm6240, %v11925, %v11924
  %v11927 = vrot.slane %v11917, 4
  %v11928 = vsel %vm6243, %v11927, %v11926
  %v11929 = vrot.slane %v11918, 3
  %v11930 = vsel %vm6246, %v11929, %v11928
  %v11931 = vrot.slane %v11919, 2
  %v11932 = vsel %vm6249, %v11931, %v11930
  %v11933 = vrot.slane %v11920, 1
  %v11934 = vsel %vm6252, %v11933, %v11932
  %v11935 = vpack.c.b16 %v11934, %v11934
  %11936 = vrot.lane.b32.xlu0 %v11935, 32
  %v11937 = vpop.permute.xlu0 %11936
  %11939 = vst.msk [vmem:[#allocation2 + $0x28] sm:$0xf] %vm6396, %v11937
  %v11941 = vunpack.c.l.s4 1935823168
  %v11942 = vunpack.c.0.s8 %v11941
  %v11943 = vlaneseq
  %v11944 = vshrl.u32 %v11943, 7
  %v11945 = vsub.s32 %v11942, %v11944
  %v11946 = vrot.slane %v3736, %v11945
  %v11948 = vunpack.c.l.s4 1935823168
  %v11949 = vunpack.c.0.s8 %v11948
  %v11950 = vlaneseq
  %v11951 = vshrl.u32 %v11950, 7
  %v11952 = vsub.s32 %v11949, %v11951
  %v11953 = vrot.slane %v11946, %v11952
  %v11955 = vunpack.c.l.s4 1935823168
  %v11956 = vunpack.c.0.s8 %v11955
  %v11957 = vlaneseq
  %v11958 = vshrl.u32 %v11957, 7
  %v11959 = vsub.s32 %v11956, %v11958
  %v11960 = vrot.slane %v4072, %v11959
  %v11962 = vunpack.c.l.s4 1935823168
  %v11963 = vunpack.c.0.s8 %v11962
  %v11964 = vlaneseq
  %v11965 = vshrl.u32 %v11964, 7
  %v11966 = vsub.s32 %v11963, %v11965
  %v11967 = vrot.slane %v11960, %v11966
  %v11969 = vunpack.c.l.s4 1935823168
  %v11970 = vunpack.c.0.s8 %v11969
  %v11971 = vlaneseq
  %v11972 = vshrl.u32 %v11971, 7
  %v11973 = vsub.s32 %v11970, %v11972
  %v11974 = vrot.slane %v4408, %v11973
  %v11976 = vunpack.c.l.s4 1935823168
  %v11977 = vunpack.c.0.s8 %v11976
  %v11978 = vlaneseq
  %v11979 = vshrl.u32 %v11978, 7
  %v11980 = vsub.s32 %v11977, %v11979
  %v11981 = vrot.slane %v11974, %v11980
  %v11983 = vunpack.c.l.s4 1935823168
  %v11984 = vunpack.c.0.s8 %v11983
  %v11985 = vlaneseq
  %v11986 = vshrl.u32 %v11985, 7
  %v11987 = vsub.s32 %v11984, %v11986
  %v11988 = vrot.slane %v4744, %v11987
  %v11990 = vunpack.c.l.s4 1935823168
  %v11991 = vunpack.c.0.s8 %v11990
  %v11992 = vlaneseq
  %v11993 = vshrl.u32 %v11992, 7
  %v11994 = vsub.s32 %v11991, %v11993
  %v11995 = vrot.slane %v11988, %v11994
  %v11997 = vunpack.c.l.s4 1935823168
  %v11998 = vunpack.c.0.s8 %v11997
  %v11999 = vlaneseq
  %v12000 = vshrl.u32 %v11999, 7
  %v12001 = vsub.s32 %v11998, %v12000
  %v12002 = vrot.slane %v5080, %v12001
  %v12004 = vunpack.c.l.s4 1935823168
  %v12005 = vunpack.c.0.s8 %v12004
  %v12006 = vlaneseq
  %v12007 = vshrl.u32 %v12006, 7
  %v12008 = vsub.s32 %v12005, %v12007
  %v12009 = vrot.slane %v12002, %v12008
  %v12011 = vunpack.c.l.s4 1935823168
  %v12012 = vunpack.c.0.s8 %v12011
  %v12013 = vlaneseq
  %v12014 = vshrl.u32 %v12013, 7
  %v12015 = vsub.s32 %v12012, %v12014
  %v12016 = vrot.slane %v5416, %v12015
  %v12018 = vunpack.c.l.s4 1935823168
  %v12019 = vunpack.c.0.s8 %v12018
  %v12020 = vlaneseq
  %v12021 = vshrl.u32 %v12020, 7
  %v12022 = vsub.s32 %v12019, %v12021
  %v12023 = vrot.slane %v12016, %v12022
  %v12025 = vunpack.c.l.s4 1935823168
  %v12026 = vunpack.c.0.s8 %v12025
  %v12027 = vlaneseq
  %v12028 = vshrl.u32 %v12027, 7
  %v12029 = vsub.s32 %v12026, %v12028
  %v12030 = vrot.slane %v5752, %v12029
  %v12032 = vunpack.c.l.s4 1935823168
  %v12033 = vunpack.c.0.s8 %v12032
  %v12034 = vlaneseq
  %v12035 = vshrl.u32 %v12034, 7
  %v12036 = vsub.s32 %v12033, %v12035
  %v12037 = vrot.slane %v12030, %v12036
  %v12039 = vunpack.c.l.s4 1935823168
  %v12040 = vunpack.c.0.s8 %v12039
  %v12041 = vlaneseq
  %v12042 = vshrl.u32 %v12041, 7
  %v12043 = vsub.s32 %v12040, %v12042
  %v12044 = vrot.slane %v6088, %v12043
  %v12046 = vunpack.c.l.s4 1935823168
  %v12047 = vunpack.c.0.s8 %v12046
  %v12048 = vlaneseq
  %v12049 = vshrl.u32 %v12048, 7
  %v12050 = vsub.s32 %v12047, %v12049
  %v12051 = vrot.slane %v12044, %v12050
  %v12052 = vunpack.c.l.b16 %v11953
  %v12053 = vunpack.c.l.b16 %v11967
  %v12054 = vunpack.c.l.b16 %v11981
  %v12055 = vunpack.c.l.b16 %v11995
  %v12056 = vunpack.c.l.b16 %v12009
  %v12057 = vunpack.c.l.b16 %v12023
  %v12058 = vunpack.c.l.b16 %v12037
  %v12059 = vunpack.c.l.b16 %v12051
  %v12060 = vrot.slane %v12053, 7
  %v12061 = vsel %vm6234, %v12060, %v12052
  %v12062 = vrot.slane %v12054, 6
  %v12063 = vsel %vm6237, %v12062, %v12061
  %v12064 = vrot.slane %v12055, 5
  %v12065 = vsel %vm6240, %v12064, %v12063
  %v12066 = vrot.slane %v12056, 4
  %v12067 = vsel %vm6243, %v12066, %v12065
  %v12068 = vrot.slane %v12057, 3
  %v12069 = vsel %vm6246, %v12068, %v12067
  %v12070 = vrot.slane %v12058, 2
  %v12071 = vsel %vm6249, %v12070, %v12069
  %v12072 = vrot.slane %v12059, 1
  %v12073 = vsel %vm6252, %v12072, %v12071
  %v12074 = vpack.c.b16 %v12073, %v12073
  %12075 = vrot.lane.b32.xlu0 %v12074, 64
  %v12076 = vpop.permute.xlu0 %12075
  %12078 = vst.msk [vmem:[#allocation2 + $0x28] sm:$0xf] %vm6536, %v12076
  %v12080 = vunpack.c.l.s4 1935823168
  %v12081 = vunpack.c.0.s8 %v12080
  %v12082 = vlaneseq
  %v12083 = vshrl.u32 %v12082, 7
  %v12084 = vsub.s32 %v12081, %v12083
  %v12085 = vrot.slane %v3750, %v12084
  %v12087 = vunpack.c.l.s4 1935823168
  %v12088 = vunpack.c.0.s8 %v12087
  %v12089 = vlaneseq
  %v12090 = vshrl.u32 %v12089, 7
  %v12091 = vsub.s32 %v12088, %v12090
  %v12092 = vrot.slane %v12085, %v12091
  %v12094 = vunpack.c.l.s4 1935823168
  %v12095 = vunpack.c.0.s8 %v12094
  %v12096 = vlaneseq
  %v12097 = vshrl.u32 %v12096, 7
  %v12098 = vsub.s32 %v12095, %v12097
  %v12099 = vrot.slane %v4086, %v12098
  %v12101 = vunpack.c.l.s4 1935823168
  %v12102 = vunpack.c.0.s8 %v12101
  %v12103 = vlaneseq
  %v12104 = vshrl.u32 %v12103, 7
  %v12105 = vsub.s32 %v12102, %v12104
  %v12106 = vrot.slane %v12099, %v12105
  %v12108 = vunpack.c.l.s4 1935823168
  %v12109 = vunpack.c.0.s8 %v12108
  %v12110 = vlaneseq
  %v12111 = vshrl.u32 %v12110, 7
  %v12112 = vsub.s32 %v12109, %v12111
  %v12113 = vrot.slane %v4422, %v12112
  %v12115 = vunpack.c.l.s4 1935823168
  %v12116 = vunpack.c.0.s8 %v12115
  %v12117 = vlaneseq
  %v12118 = vshrl.u32 %v12117, 7
  %v12119 = vsub.s32 %v12116, %v12118
  %v12120 = vrot.slane %v12113, %v12119
  %v12122 = vunpack.c.l.s4 1935823168
  %v12123 = vunpack.c.0.s8 %v12122
  %v12124 = vlaneseq
  %v12125 = vshrl.u32 %v12124, 7
  %v12126 = vsub.s32 %v12123, %v12125
  %v12127 = vrot.slane %v4758, %v12126
  %v12129 = vunpack.c.l.s4 1935823168
  %v12130 = vunpack.c.0.s8 %v12129
  %v12131 = vlaneseq
  %v12132 = vshrl.u32 %v12131, 7
  %v12133 = vsub.s32 %v12130, %v12132
  %v12134 = vrot.slane %v12127, %v12133
  %v12136 = vunpack.c.l.s4 1935823168
  %v12137 = vunpack.c.0.s8 %v12136
  %v12138 = vlaneseq
  %v12139 = vshrl.u32 %v12138, 7
  %v12140 = vsub.s32 %v12137, %v12139
  %v12141 = vrot.slane %v5094, %v12140
  %v12143 = vunpack.c.l.s4 1935823168
  %v12144 = vunpack.c.0.s8 %v12143
  %v12145 = vlaneseq
  %v12146 = vshrl.u32 %v12145, 7
  %v12147 = vsub.s32 %v12144, %v12146
  %v12148 = vrot.slane %v12141, %v12147
  %v12150 = vunpack.c.l.s4 1935823168
  %v12151 = vunpack.c.0.s8 %v12150
  %v12152 = vlaneseq
  %v12153 = vshrl.u32 %v12152, 7
  %v12154 = vsub.s32 %v12151, %v12153
  %v12155 = vrot.slane %v5430, %v12154
  %v12157 = vunpack.c.l.s4 1935823168
  %v12158 = vunpack.c.0.s8 %v12157
  %v12159 = vlaneseq
  %v12160 = vshrl.u32 %v12159, 7
  %v12161 = vsub.s32 %v12158, %v12160
  %v12162 = vrot.slane %v12155, %v12161
  %v12164 = vunpack.c.l.s4 1935823168
  %v12165 = vunpack.c.0.s8 %v12164
  %v12166 = vlaneseq
  %v12167 = vshrl.u32 %v12166, 7
  %v12168 = vsub.s32 %v12165, %v12167
  %v12169 = vrot.slane %v5766, %v12168
  %v12171 = vunpack.c.l.s4 1935823168
  %v12172 = vunpack.c.0.s8 %v12171
  %v12173 = vlaneseq
  %v12174 = vshrl.u32 %v12173, 7
  %v12175 = vsub.s32 %v12172, %v12174
  %v12176 = vrot.slane %v12169, %v12175
  %v12178 = vunpack.c.l.s4 1935823168
  %v12179 = vunpack.c.0.s8 %v12178
  %v12180 = vlaneseq
  %v12181 = vshrl.u32 %v12180, 7
  %v12182 = vsub.s32 %v12179, %v12181
  %v12183 = vrot.slane %v6102, %v12182
  %v12185 = vunpack.c.l.s4 1935823168
  %v12186 = vunpack.c.0.s8 %v12185
  %v12187 = vlaneseq
  %v12188 = vshrl.u32 %v12187, 7
  %v12189 = vsub.s32 %v12186, %v12188
  %v12190 = vrot.slane %v12183, %v12189
  %v12191 = vunpack.c.l.b16 %v12092
  %v12192 = vunpack.c.l.b16 %v12106
  %v12193 = vunpack.c.l.b16 %v12120
  %v12194 = vunpack.c.l.b16 %v12134
  %v12195 = vunpack.c.l.b16 %v12148
  %v12196 = vunpack.c.l.b16 %v12162
  %v12197 = vunpack.c.l.b16 %v12176
  %v12198 = vunpack.c.l.b16 %v12190
  %v12199 = vrot.slane %v12192, 7
  %v12200 = vsel %vm6234, %v12199, %v12191
  %v12201 = vrot.slane %v12193, 6
  %v12202 = vsel %vm6237, %v12201, %v12200
  %v12203 = vrot.slane %v12194, 5
  %v12204 = vsel %vm6240, %v12203, %v12202
  %v12205 = vrot.slane %v12195, 4
  %v12206 = vsel %vm6243, %v12205, %v12204
  %v12207 = vrot.slane %v12196, 3
  %v12208 = vsel %vm6246, %v12207, %v12206
  %v12209 = vrot.slane %v12197, 2
  %v12210 = vsel %vm6249, %v12209, %v12208
  %v12211 = vrot.slane %v12198, 1
  %v12212 = vsel %vm6252, %v12211, %v12210
  %v12213 = vpack.c.b16 %v12212, %v12212
  %12214 = vrot.lane.b32.xlu0 %v12213, 96
  %v12215 = vpop.permute.xlu0 %12214
  %12217 = vst.msk [vmem:[#allocation2 + $0x28] sm:$0xf] %vm6676, %v12215
  %v12219 = vunpack.c.l.s4 1935823168
  %v12220 = vunpack.c.0.s8 %v12219
  %v12221 = vlaneseq
  %v12222 = vshrl.u32 %v12221, 7
  %v12223 = vsub.s32 %v12220, %v12222
  %v12224 = vrot.slane %v3758, %v12223
  %v12226 = vunpack.c.l.s4 1935823168
  %v12227 = vunpack.c.0.s8 %v12226
  %v12228 = vlaneseq
  %v12229 = vshrl.u32 %v12228, 7
  %v12230 = vsub.s32 %v12227, %v12229
  %v12231 = vrot.slane %v12224, %v12230
  %v12233 = vunpack.c.l.s4 1935823168
  %v12234 = vunpack.c.0.s8 %v12233
  %v12235 = vlaneseq
  %v12236 = vshrl.u32 %v12235, 7
  %v12237 = vsub.s32 %v12234, %v12236
  %v12238 = vrot.slane %v4094, %v12237
  %v12240 = vunpack.c.l.s4 1935823168
  %v12241 = vunpack.c.0.s8 %v12240
  %v12242 = vlaneseq
  %v12243 = vshrl.u32 %v12242, 7
  %v12244 = vsub.s32 %v12241, %v12243
  %v12245 = vrot.slane %v12238, %v12244
  %v12247 = vunpack.c.l.s4 1935823168
  %v12248 = vunpack.c.0.s8 %v12247
  %v12249 = vlaneseq
  %v12250 = vshrl.u32 %v12249, 7
  %v12251 = vsub.s32 %v12248, %v12250
  %v12252 = vrot.slane %v4430, %v12251
  %v12254 = vunpack.c.l.s4 1935823168
  %v12255 = vunpack.c.0.s8 %v12254
  %v12256 = vlaneseq
  %v12257 = vshrl.u32 %v12256, 7
  %v12258 = vsub.s32 %v12255, %v12257
  %v12259 = vrot.slane %v12252, %v12258
  %v12261 = vunpack.c.l.s4 1935823168
  %v12262 = vunpack.c.0.s8 %v12261
  %v12263 = vlaneseq
  %v12264 = vshrl.u32 %v12263, 7
  %v12265 = vsub.s32 %v12262, %v12264
  %v12266 = vrot.slane %v4766, %v12265
  %v12268 = vunpack.c.l.s4 1935823168
  %v12269 = vunpack.c.0.s8 %v12268
  %v12270 = vlaneseq
  %v12271 = vshrl.u32 %v12270, 7
  %v12272 = vsub.s32 %v12269, %v12271
  %v12273 = vrot.slane %v12266, %v12272
  %v12275 = vunpack.c.l.s4 1935823168
  %v12276 = vunpack.c.0.s8 %v12275
  %v12277 = vlaneseq
  %v12278 = vshrl.u32 %v12277, 7
  %v12279 = vsub.s32 %v12276, %v12278
  %v12280 = vrot.slane %v5102, %v12279
  %v12282 = vunpack.c.l.s4 1935823168
  %v12283 = vunpack.c.0.s8 %v12282
  %v12284 = vlaneseq
  %v12285 = vshrl.u32 %v12284, 7
  %v12286 = vsub.s32 %v12283, %v12285
  %v12287 = vrot.slane %v12280, %v12286
  %v12289 = vunpack.c.l.s4 1935823168
  %v12290 = vunpack.c.0.s8 %v12289
  %v12291 = vlaneseq
  %v12292 = vshrl.u32 %v12291, 7
  %v12293 = vsub.s32 %v12290, %v12292
  %v12294 = vrot.slane %v5438, %v12293
  %v12296 = vunpack.c.l.s4 1935823168
  %v12297 = vunpack.c.0.s8 %v12296
  %v12298 = vlaneseq
  %v12299 = vshrl.u32 %v12298, 7
  %v12300 = vsub.s32 %v12297, %v12299
  %v12301 = vrot.slane %v12294, %v12300
  %v12303 = vunpack.c.l.s4 1935823168
  %v12304 = vunpack.c.0.s8 %v12303
  %v12305 = vlaneseq
  %v12306 = vshrl.u32 %v12305, 7
  %v12307 = vsub.s32 %v12304, %v12306
  %v12308 = vrot.slane %v5774, %v12307
  %v12310 = vunpack.c.l.s4 1935823168
  %v12311 = vunpack.c.0.s8 %v12310
  %v12312 = vlaneseq
  %v12313 = vshrl.u32 %v12312, 7
  %v12314 = vsub.s32 %v12311, %v12313
  %v12315 = vrot.slane %v12308, %v12314
  %v12317 = vunpack.c.l.s4 1935823168
  %v12318 = vunpack.c.0.s8 %v12317
  %v12319 = vlaneseq
  %v12320 = vshrl.u32 %v12319, 7
  %v12321 = vsub.s32 %v12318, %v12320
  %v12322 = vrot.slane %v6110, %v12321
  %v12324 = vunpack.c.l.s4 1935823168
  %v12325 = vunpack.c.0.s8 %v12324
  %v12326 = vlaneseq
  %v12327 = vshrl.u32 %v12326, 7
  %v12328 = vsub.s32 %v12325, %v12327
  %v12329 = vrot.slane %v12322, %v12328
  %v12330 = vunpack.c.l.b16 %v12231
  %v12331 = vunpack.c.l.b16 %v12245
  %v12332 = vunpack.c.l.b16 %v12259
  %v12333 = vunpack.c.l.b16 %v12273
  %v12334 = vunpack.c.l.b16 %v12287
  %v12335 = vunpack.c.l.b16 %v12301
  %v12336 = vunpack.c.l.b16 %v12315
  %v12337 = vunpack.c.l.b16 %v12329
  %v12338 = vrot.slane %v12331, 7
  %v12339 = vsel %vm6234, %v12338, %v12330
  %v12340 = vrot.slane %v12332, 6
  %v12341 = vsel %vm6237, %v12340, %v12339
  %v12342 = vrot.slane %v12333, 5
  %v12343 = vsel %vm6240, %v12342, %v12341
  %v12344 = vrot.slane %v12334, 4
  %v12345 = vsel %vm6243, %v12344, %v12343
  %v12346 = vrot.slane %v12335, 3
  %v12347 = vsel %vm6246, %v12346, %v12345
  %v12348 = vrot.slane %v12336, 2
  %v12349 = vsel %vm6249, %v12348, %v12347
  %v12350 = vrot.slane %v12337, 1
  %v12351 = vsel %vm6252, %v12350, %v12349
  %v12352 = vpack.c.b16 %v12351, %v12351
  %12354 = vst.msk [vmem:[#allocation2 + $0x2c] sm:$0xf] %vm6256, %v12352
  %v12356 = vunpack.c.l.s4 1935823168
  %v12357 = vunpack.c.0.s8 %v12356
  %v12358 = vlaneseq
  %v12359 = vshrl.u32 %v12358, 7
  %v12360 = vsub.s32 %v12357, %v12359
  %v12361 = vrot.slane %v3760, %v12360
  %v12363 = vunpack.c.l.s4 1935823168
  %v12364 = vunpack.c.0.s8 %v12363
  %v12365 = vlaneseq
  %v12366 = vshrl.u32 %v12365, 7
  %v12367 = vsub.s32 %v12364, %v12366
  %v12368 = vrot.slane %v12361, %v12367
  %v12370 = vunpack.c.l.s4 1935823168
  %v12371 = vunpack.c.0.s8 %v12370
  %v12372 = vlaneseq
  %v12373 = vshrl.u32 %v12372, 7
  %v12374 = vsub.s32 %v12371, %v12373
  %v12375 = vrot.slane %v4096, %v12374
  %v12377 = vunpack.c.l.s4 1935823168
  %v12378 = vunpack.c.0.s8 %v12377
  %v12379 = vlaneseq
  %v12380 = vshrl.u32 %v12379, 7
  %v12381 = vsub.s32 %v12378, %v12380
  %v12382 = vrot.slane %v12375, %v12381
  %v12384 = vunpack.c.l.s4 1935823168
  %v12385 = vunpack.c.0.s8 %v12384
  %v12386 = vlaneseq
  %v12387 = vshrl.u32 %v12386, 7
  %v12388 = vsub.s32 %v12385, %v12387
  %v12389 = vrot.slane %v4432, %v12388
  %v12391 = vunpack.c.l.s4 1935823168
  %v12392 = vunpack.c.0.s8 %v12391
  %v12393 = vlaneseq
  %v12394 = vshrl.u32 %v12393, 7
  %v12395 = vsub.s32 %v12392, %v12394
  %v12396 = vrot.slane %v12389, %v12395
  %v12398 = vunpack.c.l.s4 1935823168
  %v12399 = vunpack.c.0.s8 %v12398
  %v12400 = vlaneseq
  %v12401 = vshrl.u32 %v12400, 7
  %v12402 = vsub.s32 %v12399, %v12401
  %v12403 = vrot.slane %v4768, %v12402
  %v12405 = vunpack.c.l.s4 1935823168
  %v12406 = vunpack.c.0.s8 %v12405
  %v12407 = vlaneseq
  %v12408 = vshrl.u32 %v12407, 7
  %v12409 = vsub.s32 %v12406, %v12408
  %v12410 = vrot.slane %v12403, %v12409
  %v12412 = vunpack.c.l.s4 1935823168
  %v12413 = vunpack.c.0.s8 %v12412
  %v12414 = vlaneseq
  %v12415 = vshrl.u32 %v12414, 7
  %v12416 = vsub.s32 %v12413, %v12415
  %v12417 = vrot.slane %v5104, %v12416
  %v12419 = vunpack.c.l.s4 1935823168
  %v12420 = vunpack.c.0.s8 %v12419
  %v12421 = vlaneseq
  %v12422 = vshrl.u32 %v12421, 7
  %v12423 = vsub.s32 %v12420, %v12422
  %v12424 = vrot.slane %v12417, %v12423
  %v12426 = vunpack.c.l.s4 1935823168
  %v12427 = vunpack.c.0.s8 %v12426
  %v12428 = vlaneseq
  %v12429 = vshrl.u32 %v12428, 7
  %v12430 = vsub.s32 %v12427, %v12429
  %v12431 = vrot.slane %v5440, %v12430
  %v12433 = vunpack.c.l.s4 1935823168
  %v12434 = vunpack.c.0.s8 %v12433
  %v12435 = vlaneseq
  %v12436 = vshrl.u32 %v12435, 7
  %v12437 = vsub.s32 %v12434, %v12436
  %v12438 = vrot.slane %v12431, %v12437
  %v12440 = vunpack.c.l.s4 1935823168
  %v12441 = vunpack.c.0.s8 %v12440
  %v12442 = vlaneseq
  %v12443 = vshrl.u32 %v12442, 7
  %v12444 = vsub.s32 %v12441, %v12443
  %v12445 = vrot.slane %v5776, %v12444
  %v12447 = vunpack.c.l.s4 1935823168
  %v12448 = vunpack.c.0.s8 %v12447
  %v12449 = vlaneseq
  %v12450 = vshrl.u32 %v12449, 7
  %v12451 = vsub.s32 %v12448, %v12450
  %v12452 = vrot.slane %v12445, %v12451
  %v12454 = vunpack.c.l.s4 1935823168
  %v12455 = vunpack.c.0.s8 %v12454
  %v12456 = vlaneseq
  %v12457 = vshrl.u32 %v12456, 7
  %v12458 = vsub.s32 %v12455, %v12457
  %v12459 = vrot.slane %v6112, %v12458
  %v12461 = vunpack.c.l.s4 1935823168
  %v12462 = vunpack.c.0.s8 %v12461
  %v12463 = vlaneseq
  %v12464 = vshrl.u32 %v12463, 7
  %v12465 = vsub.s32 %v12462, %v12464
  %v12466 = vrot.slane %v12459, %v12465
  %v12467 = vunpack.c.l.b16 %v12368
  %v12468 = vunpack.c.l.b16 %v12382
  %v12469 = vunpack.c.l.b16 %v12396
  %v12470 = vunpack.c.l.b16 %v12410
  %v12471 = vunpack.c.l.b16 %v12424
  %v12472 = vunpack.c.l.b16 %v12438
  %v12473 = vunpack.c.l.b16 %v12452
  %v12474 = vunpack.c.l.b16 %v12466
  %v12475 = vrot.slane %v12468, 7
  %v12476 = vsel %vm6234, %v12475, %v12467
  %v12477 = vrot.slane %v12469, 6
  %v12478 = vsel %vm6237, %v12477, %v12476
  %v12479 = vrot.slane %v12470, 5
  %v12480 = vsel %vm6240, %v12479, %v12478
  %v12481 = vrot.slane %v12471, 4
  %v12482 = vsel %vm6243, %v12481, %v12480
  %v12483 = vrot.slane %v12472, 3
  %v12484 = vsel %vm6246, %v12483, %v12482
  %v12485 = vrot.slane %v12473, 2
  %v12486 = vsel %vm6249, %v12485, %v12484
  %v12487 = vrot.slane %v12474, 1
  %v12488 = vsel %vm6252, %v12487, %v12486
  %v12489 = vpack.c.b16 %v12488, %v12488
  %12490 = vrot.lane.b32.xlu0 %v12489, 32
  %v12491 = vpop.permute.xlu0 %12490
  %12493 = vst.msk [vmem:[#allocation2 + $0x2c] sm:$0xf] %vm6396, %v12491
  %v12495 = vunpack.c.l.s4 1935823168
  %v12496 = vunpack.c.0.s8 %v12495
  %v12497 = vlaneseq
  %v12498 = vshrl.u32 %v12497, 7
  %v12499 = vsub.s32 %v12496, %v12498
  %v12500 = vrot.slane %v3743, %v12499
  %v12502 = vunpack.c.l.s4 1935823168
  %v12503 = vunpack.c.0.s8 %v12502
  %v12504 = vlaneseq
  %v12505 = vshrl.u32 %v12504, 7
  %v12506 = vsub.s32 %v12503, %v12505
  %v12507 = vrot.slane %v12500, %v12506
  %v12509 = vunpack.c.l.s4 1935823168
  %v12510 = vunpack.c.0.s8 %v12509
  %v12511 = vlaneseq
  %v12512 = vshrl.u32 %v12511, 7
  %v12513 = vsub.s32 %v12510, %v12512
  %v12514 = vrot.slane %v4079, %v12513
  %v12516 = vunpack.c.l.s4 1935823168
  %v12517 = vunpack.c.0.s8 %v12516
  %v12518 = vlaneseq
  %v12519 = vshrl.u32 %v12518, 7
  %v12520 = vsub.s32 %v12517, %v12519
  %v12521 = vrot.slane %v12514, %v12520
  %v12523 = vunpack.c.l.s4 1935823168
  %v12524 = vunpack.c.0.s8 %v12523
  %v12525 = vlaneseq
  %v12526 = vshrl.u32 %v12525, 7
  %v12527 = vsub.s32 %v12524, %v12526
  %v12528 = vrot.slane %v4415, %v12527
  %v12530 = vunpack.c.l.s4 1935823168
  %v12531 = vunpack.c.0.s8 %v12530
  %v12532 = vlaneseq
  %v12533 = vshrl.u32 %v12532, 7
  %v12534 = vsub.s32 %v12531, %v12533
  %v12535 = vrot.slane %v12528, %v12534
  %v12537 = vunpack.c.l.s4 1935823168
  %v12538 = vunpack.c.0.s8 %v12537
  %v12539 = vlaneseq
  %v12540 = vshrl.u32 %v12539, 7
  %v12541 = vsub.s32 %v12538, %v12540
  %v12542 = vrot.slane %v4751, %v12541
  %v12544 = vunpack.c.l.s4 1935823168
  %v12545 = vunpack.c.0.s8 %v12544
  %v12546 = vlaneseq
  %v12547 = vshrl.u32 %v12546, 7
  %v12548 = vsub.s32 %v12545, %v12547
  %v12549 = vrot.slane %v12542, %v12548
  %v12551 = vunpack.c.l.s4 1935823168
  %v12552 = vunpack.c.0.s8 %v12551
  %v12553 = vlaneseq
  %v12554 = vshrl.u32 %v12553, 7
  %v12555 = vsub.s32 %v12552, %v12554
  %v12556 = vrot.slane %v5087, %v12555
  %v12558 = vunpack.c.l.s4 1935823168
  %v12559 = vunpack.c.0.s8 %v12558
  %v12560 = vlaneseq
  %v12561 = vshrl.u32 %v12560, 7
  %v12562 = vsub.s32 %v12559, %v12561
  %v12563 = vrot.slane %v12556, %v12562
  %v12565 = vunpack.c.l.s4 1935823168
  %v12566 = vunpack.c.0.s8 %v12565
  %v12567 = vlaneseq
  %v12568 = vshrl.u32 %v12567, 7
  %v12569 = vsub.s32 %v12566, %v12568
  %v12570 = vrot.slane %v5423, %v12569
  %v12572 = vunpack.c.l.s4 1935823168
  %v12573 = vunpack.c.0.s8 %v12572
  %v12574 = vlaneseq
  %v12575 = vshrl.u32 %v12574, 7
  %v12576 = vsub.s32 %v12573, %v12575
  %v12577 = vrot.slane %v12570, %v12576
  %v12579 = vunpack.c.l.s4 1935823168
  %v12580 = vunpack.c.0.s8 %v12579
  %v12581 = vlaneseq
  %v12582 = vshrl.u32 %v12581, 7
  %v12583 = vsub.s32 %v12580, %v12582
  %v12584 = vrot.slane %v5759, %v12583
  %v12586 = vunpack.c.l.s4 1935823168
  %v12587 = vunpack.c.0.s8 %v12586
  %v12588 = vlaneseq
  %v12589 = vshrl.u32 %v12588, 7
  %v12590 = vsub.s32 %v12587, %v12589
  %v12591 = vrot.slane %v12584, %v12590
  %v12593 = vunpack.c.l.s4 1935823168
  %v12594 = vunpack.c.0.s8 %v12593
  %v12595 = vlaneseq
  %v12596 = vshrl.u32 %v12595, 7
  %v12597 = vsub.s32 %v12594, %v12596
  %v12598 = vrot.slane %v6095, %v12597
  %v12600 = vunpack.c.l.s4 1935823168
  %v12601 = vunpack.c.0.s8 %v12600
  %v12602 = vlaneseq
  %v12603 = vshrl.u32 %v12602, 7
  %v12604 = vsub.s32 %v12601, %v12603
  %v12605 = vrot.slane %v12598, %v12604
  %v12606 = vunpack.c.l.b16 %v12507
  %v12607 = vunpack.c.l.b16 %v12521
  %v12608 = vunpack.c.l.b16 %v12535
  %v12609 = vunpack.c.l.b16 %v12549
  %v12610 = vunpack.c.l.b16 %v12563
  %v12611 = vunpack.c.l.b16 %v12577
  %v12612 = vunpack.c.l.b16 %v12591
  %v12613 = vunpack.c.l.b16 %v12605
  %v12614 = vrot.slane %v12607, 7
  %v12615 = vsel %vm6234, %v12614, %v12606
  %v12616 = vrot.slane %v12608, 6
  %v12617 = vsel %vm6237, %v12616, %v12615
  %v12618 = vrot.slane %v12609, 5
  %v12619 = vsel %vm6240, %v12618, %v12617
  %v12620 = vrot.slane %v12610, 4
  %v12621 = vsel %vm6243, %v12620, %v12619
  %v12622 = vrot.slane %v12611, 3
  %v12623 = vsel %vm6246, %v12622, %v12621
  %v12624 = vrot.slane %v12612, 2
  %v12625 = vsel %vm6249, %v12624, %v12623
  %v12626 = vrot.slane %v12613, 1
  %v12627 = vsel %vm6252, %v12626, %v12625
  %v12628 = vpack.c.b16 %v12627, %v12627
  %12629 = vrot.lane.b32.xlu0 %v12628, 64
  %v12630 = vpop.permute.xlu0 %12629
  %12632 = vst.msk [vmem:[#allocation2 + $0x2c] sm:$0xf] %vm6536, %v12630
  %v12634 = vunpack.c.l.s4 1935823168
  %v12635 = vunpack.c.0.s8 %v12634
  %v12636 = vlaneseq
  %v12637 = vshrl.u32 %v12636, 7
  %v12638 = vsub.s32 %v12635, %v12637
  %v12639 = vrot.slane %v3757, %v12638
  %v12641 = vunpack.c.l.s4 1935823168
  %v12642 = vunpack.c.0.s8 %v12641
  %v12643 = vlaneseq
  %v12644 = vshrl.u32 %v12643, 7
  %v12645 = vsub.s32 %v12642, %v12644
  %v12646 = vrot.slane %v12639, %v12645
  %v12648 = vunpack.c.l.s4 1935823168
  %v12649 = vunpack.c.0.s8 %v12648
  %v12650 = vlaneseq
  %v12651 = vshrl.u32 %v12650, 7
  %v12652 = vsub.s32 %v12649, %v12651
  %v12653 = vrot.slane %v4093, %v12652
  %v12655 = vunpack.c.l.s4 1935823168
  %v12656 = vunpack.c.0.s8 %v12655
  %v12657 = vlaneseq
  %v12658 = vshrl.u32 %v12657, 7
  %v12659 = vsub.s32 %v12656, %v12658
  %v12660 = vrot.slane %v12653, %v12659
  %v12662 = vunpack.c.l.s4 1935823168
  %v12663 = vunpack.c.0.s8 %v12662
  %v12664 = vlaneseq
  %v12665 = vshrl.u32 %v12664, 7
  %v12666 = vsub.s32 %v12663, %v12665
  %v12667 = vrot.slane %v4429, %v12666
  %v12669 = vunpack.c.l.s4 1935823168
  %v12670 = vunpack.c.0.s8 %v12669
  %v12671 = vlaneseq
  %v12672 = vshrl.u32 %v12671, 7
  %v12673 = vsub.s32 %v12670, %v12672
  %v12674 = vrot.slane %v12667, %v12673
  %v12676 = vunpack.c.l.s4 1935823168
  %v12677 = vunpack.c.0.s8 %v12676
  %v12678 = vlaneseq
  %v12679 = vshrl.u32 %v12678, 7
  %v12680 = vsub.s32 %v12677, %v12679
  %v12681 = vrot.slane %v4765, %v12680
  %v12683 = vunpack.c.l.s4 1935823168
  %v12684 = vunpack.c.0.s8 %v12683
  %v12685 = vlaneseq
  %v12686 = vshrl.u32 %v12685, 7
  %v12687 = vsub.s32 %v12684, %v12686
  %v12688 = vrot.slane %v12681, %v12687
  %v12690 = vunpack.c.l.s4 1935823168
  %v12691 = vunpack.c.0.s8 %v12690
  %v12692 = vlaneseq
  %v12693 = vshrl.u32 %v12692, 7
  %v12694 = vsub.s32 %v12691, %v12693
  %v12695 = vrot.slane %v5101, %v12694
  %v12697 = vunpack.c.l.s4 1935823168
  %v12698 = vunpack.c.0.s8 %v12697
  %v12699 = vlaneseq
  %v12700 = vshrl.u32 %v12699, 7
  %v12701 = vsub.s32 %v12698, %v12700
  %v12702 = vrot.slane %v12695, %v12701
  %v12704 = vunpack.c.l.s4 1935823168
  %v12705 = vunpack.c.0.s8 %v12704
  %v12706 = vlaneseq
  %v12707 = vshrl.u32 %v12706, 7
  %v12708 = vsub.s32 %v12705, %v12707
  %v12709 = vrot.slane %v5437, %v12708
  %v12711 = vunpack.c.l.s4 1935823168
  %v12712 = vunpack.c.0.s8 %v12711
  %v12713 = vlaneseq
  %v12714 = vshrl.u32 %v12713, 7
  %v12715 = vsub.s32 %v12712, %v12714
  %v12716 = vrot.slane %v12709, %v12715
  %v12718 = vunpack.c.l.s4 1935823168
  %v12719 = vunpack.c.0.s8 %v12718
  %v12720 = vlaneseq
  %v12721 = vshrl.u32 %v12720, 7
  %v12722 = vsub.s32 %v12719, %v12721
  %v12723 = vrot.slane %v5773, %v12722
  %v12725 = vunpack.c.l.s4 1935823168
  %v12726 = vunpack.c.0.s8 %v12725
  %v12727 = vlaneseq
  %v12728 = vshrl.u32 %v12727, 7
  %v12729 = vsub.s32 %v12726, %v12728
  %v12730 = vrot.slane %v12723, %v12729
  %v12732 = vunpack.c.l.s4 1935823168
  %v12733 = vunpack.c.0.s8 %v12732
  %v12734 = vlaneseq
  %v12735 = vshrl.u32 %v12734, 7
  %v12736 = vsub.s32 %v12733, %v12735
  %v12737 = vrot.slane %v6109, %v12736
  %v12739 = vunpack.c.l.s4 1935823168
  %v12740 = vunpack.c.0.s8 %v12739
  %v12741 = vlaneseq
  %v12742 = vshrl.u32 %v12741, 7
  %v12743 = vsub.s32 %v12740, %v12742
  %v12744 = vrot.slane %v12737, %v12743
  %v12745 = vunpack.c.l.b16 %v12646
  %v12746 = vunpack.c.l.b16 %v12660
  %v12747 = vunpack.c.l.b16 %v12674
  %v12748 = vunpack.c.l.b16 %v12688
  %v12749 = vunpack.c.l.b16 %v12702
  %v12750 = vunpack.c.l.b16 %v12716
  %v12751 = vunpack.c.l.b16 %v12730
  %v12752 = vunpack.c.l.b16 %v12744
  %v12753 = vrot.slane %v12746, 7
  %v12754 = vsel %vm6234, %v12753, %v12745
  %v12755 = vrot.slane %v12747, 6
  %v12756 = vsel %vm6237, %v12755, %v12754
  %v12757 = vrot.slane %v12748, 5
  %v12758 = vsel %vm6240, %v12757, %v12756
  %v12759 = vrot.slane %v12749, 4
  %v12760 = vsel %vm6243, %v12759, %v12758
  %v12761 = vrot.slane %v12750, 3
  %v12762 = vsel %vm6246, %v12761, %v12760
  %v12763 = vrot.slane %v12751, 2
  %v12764 = vsel %vm6249, %v12763, %v12762
  %v12765 = vrot.slane %v12752, 1
  %v12766 = vsel %vm6252, %v12765, %v12764
  %v12767 = vpack.c.b16 %v12766, %v12766
  %12768 = vrot.lane.b32.xlu0 %v12767, 96
  %v12769 = vpop.permute.xlu0 %12768
  %12771 = vst.msk [vmem:[#allocation2 + $0x2c] sm:$0xf] %vm6676, %v12769
  %v12773 = vunpack.c.l.s4 1935823168
  %v12774 = vunpack.c.0.s8 %v12773
  %v12775 = vlaneseq
  %v12776 = vshrl.u32 %v12775, 7
  %v12777 = vsub.s32 %v12774, %v12776
  %v12778 = vrot.slane %v3759, %v12777
  %v12780 = vunpack.c.l.s4 1935823168
  %v12781 = vunpack.c.0.s8 %v12780
  %v12782 = vlaneseq
  %v12783 = vshrl.u32 %v12782, 7
  %v12784 = vsub.s32 %v12781, %v12783
  %v12785 = vrot.slane %v12778, %v12784
  %v12787 = vunpack.c.l.s4 1935823168
  %v12788 = vunpack.c.0.s8 %v12787
  %v12789 = vlaneseq
  %v12790 = vshrl.u32 %v12789, 7
  %v12791 = vsub.s32 %v12788, %v12790
  %v12792 = vrot.slane %v4095, %v12791
  %v12794 = vunpack.c.l.s4 1935823168
  %v12795 = vunpack.c.0.s8 %v12794
  %v12796 = vlaneseq
  %v12797 = vshrl.u32 %v12796, 7
  %v12798 = vsub.s32 %v12795, %v12797
  %v12799 = vrot.slane %v12792, %v12798
  %v12801 = vunpack.c.l.s4 1935823168
  %v12802 = vunpack.c.0.s8 %v12801
  %v12803 = vlaneseq
  %v12804 = vshrl.u32 %v12803, 7
  %v12805 = vsub.s32 %v12802, %v12804
  %v12806 = vrot.slane %v4431, %v12805
  %v12808 = vunpack.c.l.s4 1935823168
  %v12809 = vunpack.c.0.s8 %v12808
  %v12810 = vlaneseq
  %v12811 = vshrl.u32 %v12810, 7
  %v12812 = vsub.s32 %v12809, %v12811
  %v12813 = vrot.slane %v12806, %v12812
  %v12815 = vunpack.c.l.s4 1935823168
  %v12816 = vunpack.c.0.s8 %v12815
  %v12817 = vlaneseq
  %v12818 = vshrl.u32 %v12817, 7
  %v12819 = vsub.s32 %v12816, %v12818
  %v12820 = vrot.slane %v4767, %v12819
  %v12822 = vunpack.c.l.s4 1935823168
  %v12823 = vunpack.c.0.s8 %v12822
  %v12824 = vlaneseq
  %v12825 = vshrl.u32 %v12824, 7
  %v12826 = vsub.s32 %v12823, %v12825
  %v12827 = vrot.slane %v12820, %v12826
  %v12829 = vunpack.c.l.s4 1935823168
  %v12830 = vunpack.c.0.s8 %v12829
  %v12831 = vlaneseq
  %v12832 = vshrl.u32 %v12831, 7
  %v12833 = vsub.s32 %v12830, %v12832
  %v12834 = vrot.slane %v5103, %v12833
  %v12836 = vunpack.c.l.s4 1935823168
  %v12837 = vunpack.c.0.s8 %v12836
  %v12838 = vlaneseq
  %v12839 = vshrl.u32 %v12838, 7
  %v12840 = vsub.s32 %v12837, %v12839
  %v12841 = vrot.slane %v12834, %v12840
  %v12843 = vunpack.c.l.s4 1935823168
  %v12844 = vunpack.c.0.s8 %v12843
  %v12845 = vlaneseq
  %v12846 = vshrl.u32 %v12845, 7
  %v12847 = vsub.s32 %v12844, %v12846
  %v12848 = vrot.slane %v5439, %v12847
  %v12850 = vunpack.c.l.s4 1935823168
  %v12851 = vunpack.c.0.s8 %v12850
  %v12852 = vlaneseq
  %v12853 = vshrl.u32 %v12852, 7
  %v12854 = vsub.s32 %v12851, %v12853
  %v12855 = vrot.slane %v12848, %v12854
  %v12857 = vunpack.c.l.s4 1935823168
  %v12858 = vunpack.c.0.s8 %v12857
  %v12859 = vlaneseq
  %v12860 = vshrl.u32 %v12859, 7
  %v12861 = vsub.s32 %v12858, %v12860
  %v12862 = vrot.slane %v5775, %v12861
  %v12864 = vunpack.c.l.s4 1935823168
  %v12865 = vunpack.c.0.s8 %v12864
  %v12866 = vlaneseq
  %v12867 = vshrl.u32 %v12866, 7
  %v12868 = vsub.s32 %v12865, %v12867
  %v12869 = vrot.slane %v12862, %v12868
  %v12871 = vunpack.c.l.s4 1935823168
  %v12872 = vunpack.c.0.s8 %v12871
  %v12873 = vlaneseq
  %v12874 = vshrl.u32 %v12873, 7
  %v12875 = vsub.s32 %v12872, %v12874
  %v12876 = vrot.slane %v6111, %v12875
  %v12878 = vunpack.c.l.s4 1935823168
  %v12879 = vunpack.c.0.s8 %v12878
  %v12880 = vlaneseq
  %v12881 = vshrl.u32 %v12880, 7
  %v12882 = vsub.s32 %v12879, %v12881
  %v12883 = vrot.slane %v12876, %v12882
  %v12884 = vunpack.c.l.b16 %v12785
  %v12885 = vunpack.c.l.b16 %v12799
  %v12886 = vunpack.c.l.b16 %v12813
  %v12887 = vunpack.c.l.b16 %v12827
  %v12888 = vunpack.c.l.b16 %v12841
  %v12889 = vunpack.c.l.b16 %v12855
  %v12890 = vunpack.c.l.b16 %v12869
  %v12891 = vunpack.c.l.b16 %v12883
  %v12892 = vrot.slane %v12885, 7
  %v12893 = vsel %vm6234, %v12892, %v12884
  %v12894 = vrot.slane %v12886, 6
  %v12895 = vsel %vm6237, %v12894, %v12893
  %v12896 = vrot.slane %v12887, 5
  %v12897 = vsel %vm6240, %v12896, %v12895
  %v12898 = vrot.slane %v12888, 4
  %v12899 = vsel %vm6243, %v12898, %v12897
  %v12900 = vrot.slane %v12889, 3
  %v12901 = vsel %vm6246, %v12900, %v12899
  %v12902 = vrot.slane %v12890, 2
  %v12903 = vsel %vm6249, %v12902, %v12901
  %v12904 = vrot.slane %v12891, 1
  %v12905 = vsel %vm6252, %v12904, %v12903
  %v12906 = vpack.c.b16 %v12905, %v12905
  %12908 = vst.msk [vmem:[#allocation2 + $0x30] sm:$0xf] %vm6256, %v12906
  %v12909 = vld [vmem:[#allocation2] sm:$0xff]
  %v12910 = vld [vmem:[#allocation2 + $0x8] sm:$0xff]
  %v12911 = vld [vmem:[#allocation2 + $0x10] sm:$0xff]
  %v12912 = vld [vmem:[#allocation2 + $0x18] sm:$0xff]
  %v12913 = vld [vmem:[#allocation2 + $0x20] sm:$0xff]
  %v12914 = vld [vmem:[#allocation2 + $0x28] sm:$0xff]
  %v12915 = vld [vmem:[#allocation2 + $0x30] sm:$0xf]
  %v12916 = vld [vmem:[%s3] sm:$0xff]
  %v12917 = vld [vmem:[%s3 + $0x8] sm:$0xff]
  %v12918 = vld [vmem:[%s3 + $0x10] sm:$0xff]
  %v12919 = vld [vmem:[%s3 + $0x18] sm:$0xff]
  %v12920 = vld [vmem:[%s3 + $0x20] sm:$0xff]
  %v12921 = vld [vmem:[%s3 + $0x28] sm:$0xff]
  %v12922 = vld [vmem:[%s3 + $0x30] sm:$0xff]
  %v12923 = vld [vmem:[%s3 + $0x38] sm:$0xff]
  %v12924 = vld [vmem:[%s3 + $0x40] sm:$0xff]
  %v12925 = vld [vmem:[%s3 + $0x48] sm:$0xff]
  %v12926 = vld [vmem:[%s3 + $0x50] sm:$0xff]
  %v12927 = vld [vmem:[%s3 + $0x58] sm:$0xff]
  %v12928 = vld [vmem:[%s3 + $0x60] sm:$0xff]
  %v12929 = vld [vmem:[%s3 + $0x68] sm:$0xff]
  %v12930 = vld [vmem:[%s3 + $0x70] sm:$0xff]
  %v12931 = vld [vmem:[%s3 + $0x78] sm:$0xff]
  %v12932 = vld [vmem:[%s3 + $0x80] sm:$0xff]
  %v12933 = vld [vmem:[%s3 + $0x88] sm:$0xff]
  %v12934 = vld [vmem:[%s3 + $0x90] sm:$0xff]
  %v12935 = vld [vmem:[%s3 + $0x98] sm:$0xff]
  %v12936 = vld [vmem:[%s3 + $0xa0] sm:$0xff]
  %v12937 = vld [vmem:[%s3 + $0xa8] sm:$0xff]
  %v12938 = vld [vmem:[%s3 + $0xb0] sm:$0xff]
  %v12939 = vld [vmem:[%s3 + $0xb8] sm:$0xff]
  %v12940 = vld [vmem:[%s3 + $0xc0] sm:$0xff]
  %v12941 = vld [vmem:[%s3 + $0xc8] sm:$0xff]
  %v12942 = vld [vmem:[%s3 + $0xd0] sm:$0xff]
  %v12943 = vld [vmem:[%s3 + $0xd8] sm:$0xff]
  %v12944 = vld [vmem:[%s3 + $0xe0] sm:$0xff]
  %v12945 = vld [vmem:[%s3 + $0xe8] sm:$0xff]
  %v12946 = vld [vmem:[%s3 + $0xf0] sm:$0xff]
  %v12947 = vld [vmem:[%s3 + $0xf8] sm:$0xff]
  %v12948 = vld [vmem:[%s3 + $0x100] sm:$0xff]
  %v12949 = vld [vmem:[%s3 + $0x108] sm:$0xff]
  %v12950 = vld [vmem:[%s3 + $0x110] sm:$0xff]
  %v12951 = vld [vmem:[%s3 + $0x118] sm:$0xff]
  %v12952 = vld [vmem:[%s3 + $0x120] sm:$0xff]
  %v12953 = vld [vmem:[%s3 + $0x128] sm:$0xff]
  %v12954 = vld [vmem:[%s3 + $0x130] sm:$0xff]
  %v12955 = vld [vmem:[%s3 + $0x138] sm:$0xff]
  %v12956 = vld [vmem:[%s3 + $0x140] sm:$0xff]
  %v12957 = vld [vmem:[%s3 + $0x148] sm:$0xff]
  %v12958 = vld [vmem:[%s3 + $0x150] sm:$0xff]
  %v12959 = vld [vmem:[%s3 + $0x158] sm:$0xff]
  %v12960 = vld [vmem:[%s3 + $0x160] sm:$0xff]
  %v12961 = vld [vmem:[%s3 + $0x168] sm:$0xff]
  %v12962 = vld [vmem:[%s3 + $0x170] sm:$0xff]
  %v12963 = vld [vmem:[%s3 + $0x178] sm:$0xff]
  %v12964 = vld [vmem:[%s3 + $0x180] sm:$0xff]
  %v12965 = vld [vmem:[%s3 + $0x188] sm:$0xff]
  %v12966 = vld [vmem:[%s3 + $0x190] sm:$0xff]
  %v12967 = vld [vmem:[%s3 + $0x198] sm:$0xff]
  %v12968 = vld [vmem:[%s3 + $0x1a0] sm:$0xff]
  %v12969 = vld [vmem:[%s3 + $0x1a8] sm:$0xff]
  %v12970 = vld [vmem:[%s3 + $0x1b0] sm:$0xff]
  %v12971 = vld [vmem:[%s3 + $0x1b8] sm:$0xff]
  %v12972 = vld [vmem:[%s3 + $0x1c0] sm:$0xff]
  %v12973 = vld [vmem:[%s3 + $0x1c8] sm:$0xff]
  %v12974 = vld [vmem:[%s3 + $0x1d0] sm:$0xff]
  %v12975 = vld [vmem:[%s3 + $0x1d8] sm:$0xff]
  %v12976 = vld [vmem:[%s3 + $0x1e0] sm:$0xff]
  %v12977 = vld [vmem:[%s3 + $0x1e8] sm:$0xff]
  %v12978 = vld [vmem:[%s3 + $0x1f0] sm:$0xff]
  %v12979 = vld [vmem:[%s3 + $0x1f8] sm:$0xff]
  %v12980 = vld [vmem:[%s3 + $0x200] sm:$0xff]
  %v12981 = vld [vmem:[%s3 + $0x208] sm:$0xff]
  %v12982 = vld [vmem:[%s3 + $0x210] sm:$0xff]
  %v12983 = vld [vmem:[%s3 + $0x218] sm:$0xff]
  %v12984 = vld [vmem:[%s3 + $0x220] sm:$0xff]
  %v12985 = vld [vmem:[%s3 + $0x228] sm:$0xff]
  %v12986 = vld [vmem:[%s3 + $0x230] sm:$0xff]
  %v12987 = vld [vmem:[%s3 + $0x238] sm:$0xff]
  %v12988 = vld [vmem:[%s3 + $0x240] sm:$0xff]
  %v12989 = vld [vmem:[%s3 + $0x248] sm:$0xff]
  %v12990 = vld [vmem:[%s3 + $0x250] sm:$0xff]
  %v12991 = vld [vmem:[%s3 + $0x258] sm:$0xff]
  %v12992 = vld [vmem:[%s3 + $0x260] sm:$0xff]
  %v12993 = vld [vmem:[%s3 + $0x268] sm:$0xff]
  %v12994 = vld [vmem:[%s3 + $0x270] sm:$0xff]
  %v12995 = vld [vmem:[%s3 + $0x278] sm:$0xff]
  %v12996 = vld [vmem:[%s3 + $0x280] sm:$0xff]
  %v12997 = vld [vmem:[%s3 + $0x288] sm:$0xff]
  %v12998 = vld [vmem:[%s3 + $0x290] sm:$0xff]
  %v12999 = vld [vmem:[%s3 + $0x298] sm:$0xff]
  %v13000 = vld [vmem:[%s3 + $0x2a0] sm:$0xff]
  %v13001 = vld [vmem:[%s3 + $0x2a8] sm:$0xff]
  %v13002 = vld [vmem:[%s3 + $0x2b0] sm:$0xff]
  %v13003 = vld [vmem:[%s3 + $0x2b8] sm:$0xff]
  %v13004 = vld [vmem:[%s3 + $0x2c0] sm:$0xff]
  %v13005 = vld [vmem:[%s3 + $0x2c8] sm:$0xff]
  %v13006 = vld [vmem:[%s3 + $0x2d0] sm:$0xff]
  %v13007 = vld [vmem:[%s3 + $0x2d8] sm:$0xff]
  %v13008 = vld [vmem:[%s3 + $0x2e0] sm:$0xff]
  %v13009 = vld [vmem:[%s3 + $0x2e8] sm:$0xff]
  %v13010 = vld [vmem:[%s3 + $0x2f0] sm:$0xff]
  %v13011 = vld [vmem:[%s3 + $0x2f8] sm:$0xff]
  %v13012 = vld [vmem:[%s3 + $0x300] sm:$0xff]
  %v13013 = vld [vmem:[%s3 + $0x308] sm:$0xff]
  %v13014 = vld [vmem:[%s3 + $0x310] sm:$0xff]
  %v13015 = vld [vmem:[%s3 + $0x318] sm:$0xff]
  %v13016 = vld [vmem:[%s3 + $0x320] sm:$0xff]
  %v13017 = vld [vmem:[%s3 + $0x328] sm:$0xff]
  %v13018 = vld [vmem:[%s3 + $0x330] sm:$0xff]
  %v13019 = vld [vmem:[%s3 + $0x338] sm:$0xff]
  %v13020 = vld [vmem:[%s3 + $0x340] sm:$0xff]
  %v13021 = vld [vmem:[%s3 + $0x348] sm:$0xff]
  %v13022 = vld [vmem:[%s3 + $0x350] sm:$0xff]
  %v13023 = vld [vmem:[%s3 + $0x358] sm:$0xff]
  %v13024 = vld [vmem:[%s3 + $0x360] sm:$0xff]
  %v13025 = vld [vmem:[%s3 + $0x368] sm:$0xff]
  %v13026 = vld [vmem:[%s3 + $0x370] sm:$0xff]
  %v13027 = vld [vmem:[%s3 + $0x378] sm:$0xff]
  %v13028 = vld [vmem:[%s3 + $0x380] sm:$0xff]
  %v13029 = vld [vmem:[%s3 + $0x388] sm:$0xff]
  %v13030 = vld [vmem:[%s3 + $0x390] sm:$0xff]
  %v13031 = vld [vmem:[%s3 + $0x398] sm:$0xff]
  %v13032 = vld [vmem:[%s3 + $0x3a0] sm:$0xff]
  %v13033 = vld [vmem:[%s3 + $0x3a8] sm:$0xff]
  %v13034 = vld [vmem:[%s3 + $0x3b0] sm:$0xff]
  %v13035 = vld [vmem:[%s3 + $0x3b8] sm:$0xff]
  %v13036 = vld [vmem:[%s3 + $0x3c0] sm:$0xff]
  %v13037 = vld [vmem:[%s3 + $0x3c8] sm:$0xff]
  %v13038 = vld [vmem:[%s3 + $0x3d0] sm:$0xff]
  %v13039 = vld [vmem:[%s3 + $0x3d8] sm:$0xff]
  %v13040 = vld [vmem:[%s3 + $0x3e0] sm:$0xff]
  %v13041 = vld [vmem:[%s3 + $0x3e8] sm:$0xff]
  %v13042 = vld [vmem:[%s3 + $0x3f0] sm:$0xff]
  %v13043 = vld [vmem:[%s3 + $0x3f8] sm:$0xff]
  %v13044 = vld [vmem:[%s3 + $0x400] sm:$0xff]
  %v13045 = vld [vmem:[%s3 + $0x408] sm:$0xff]
  %v13046 = vld [vmem:[%s3 + $0x410] sm:$0xff]
  %v13047 = vld [vmem:[%s3 + $0x418] sm:$0xff]
  %v13048 = vld [vmem:[%s3 + $0x420] sm:$0xff]
  %v13049 = vld [vmem:[%s3 + $0x428] sm:$0xff]
  %v13050 = vld [vmem:[%s3 + $0x430] sm:$0xff]
  %v13051 = vld [vmem:[%s3 + $0x438] sm:$0xff]
  %v13052 = vld [vmem:[%s3 + $0x440] sm:$0xff]
  %v13053 = vld [vmem:[%s3 + $0x448] sm:$0xff]
  %v13054 = vld [vmem:[%s3 + $0x450] sm:$0xff]
  %v13055 = vld [vmem:[%s3 + $0x458] sm:$0xff]
  %v13056 = vld [vmem:[%s3 + $0x460] sm:$0xff]
  %v13057 = vld [vmem:[%s3 + $0x468] sm:$0xff]
  %v13058 = vld [vmem:[%s3 + $0x470] sm:$0xff]
  %v13059 = vld [vmem:[%s3 + $0x478] sm:$0xff]
  %v13060 = vld [vmem:[%s3 + $0x480] sm:$0xff]
  %v13061 = vld [vmem:[%s3 + $0x488] sm:$0xff]
  %v13062 = vld [vmem:[%s3 + $0x490] sm:$0xff]
  %v13063 = vld [vmem:[%s3 + $0x498] sm:$0xff]
  %v13064 = vld [vmem:[%s3 + $0x4a0] sm:$0xff]
  %v13065 = vld [vmem:[%s3 + $0x4a8] sm:$0xff]
  %v13066 = vld [vmem:[%s3 + $0x4b0] sm:$0xff]
  %v13067 = vld [vmem:[%s3 + $0x4b8] sm:$0xff]
  %v13068 = vld [vmem:[%s3 + $0x4c0] sm:$0xff]
  %v13069 = vld [vmem:[%s3 + $0x4c8] sm:$0xff]
  %v13070 = vld [vmem:[%s3 + $0x4d0] sm:$0xff]
  %v13071 = vld [vmem:[%s3 + $0x4d8] sm:$0xff]
  %v13072 = vld [vmem:[%s3 + $0x4e0] sm:$0xff]
  %v13073 = vld [vmem:[%s3 + $0x4e8] sm:$0xff]
  %v13074 = vld [vmem:[%s3 + $0x4f0] sm:$0xff]
  %v13075 = vld [vmem:[%s3 + $0x4f8] sm:$0xff]
  %v13076 = vld [vmem:[%s3 + $0x500] sm:$0xff]
  %v13077 = vld [vmem:[%s3 + $0x508] sm:$0xff]
  %v13078 = vld [vmem:[%s3 + $0x510] sm:$0xff]
  %v13079 = vld [vmem:[%s3 + $0x518] sm:$0xff]
  %v13080 = vld [vmem:[%s3 + $0x520] sm:$0xff]
  %v13081 = vld [vmem:[%s3 + $0x528] sm:$0xff]
  %v13082 = vld [vmem:[%s3 + $0x530] sm:$0xff]
  %v13083 = vld [vmem:[%s3 + $0x538] sm:$0xff]
  %v13084 = vld [vmem:[%s3 + $0x540] sm:$0xff]
  %v13085 = vld [vmem:[%s3 + $0x548] sm:$0xff]
  %v13086 = vld [vmem:[%s3 + $0x550] sm:$0xff]
  %v13087 = vld [vmem:[%s3 + $0x558] sm:$0xff]
  %v13088 = vld [vmem:[%s3 + $0x560] sm:$0xff]
  %v13089 = vld [vmem:[%s3 + $0x568] sm:$0xff]
  %v13090 = vld [vmem:[%s3 + $0x570] sm:$0xff]
  %v13091 = vld [vmem:[%s3 + $0x578] sm:$0xff]
  %v13092 = vld [vmem:[%s3 + $0x580] sm:$0xff]
  %v13093 = vld [vmem:[%s3 + $0x588] sm:$0xff]
  %v13094 = vld [vmem:[%s3 + $0x590] sm:$0xff]
  %v13095 = vld [vmem:[%s3 + $0x598] sm:$0xff]
  %v13096 = vld [vmem:[%s3 + $0x5a0] sm:$0xff]
  %v13097 = vld [vmem:[%s3 + $0x5a8] sm:$0xff]
  %v13098 = vld [vmem:[%s3 + $0x5b0] sm:$0xff]
  %v13099 = vld [vmem:[%s3 + $0x5b8] sm:$0xff]
  %v13100 = vld [vmem:[%s3 + $0x5c0] sm:$0xff]
  %v13101 = vld [vmem:[%s3 + $0x5c8] sm:$0xff]
  %v13102 = vld [vmem:[%s3 + $0x5d0] sm:$0xff]
  %v13103 = vld [vmem:[%s3 + $0x5d8] sm:$0xff]
  %v13104 = vld [vmem:[%s3 + $0x5e0] sm:$0xff]
  %v13105 = vld [vmem:[%s3 + $0x5e8] sm:$0xff]
  %v13106 = vld [vmem:[%s3 + $0x5f0] sm:$0xff]
  %v13107 = vld [vmem:[%s3 + $0x5f8] sm:$0xff]
  %v13108 = vld [vmem:[%s3 + $0x600] sm:$0xff]
  %v13109 = vld [vmem:[%s3 + $0x608] sm:$0xff]
  %v13110 = vld [vmem:[%s3 + $0x610] sm:$0xff]
  %v13111 = vld [vmem:[%s3 + $0x618] sm:$0xff]
  %v13112 = vld [vmem:[%s4] sm:$0x3]
  %v13114 = vlaneseq
  %v13115 = vshrl.u32 %v13114, 7
  %v13116 = vsub.s32 0, %v13115
  %v13117 = vrot.slane %v13112, %v13116
  %v13118 = vlaneseq
  %v13119 = vshrl.u32 %v13118, 7
  %v13120 = vsub.s32 1, %v13119
  %v13121 = vrot.slane %v13112, %v13120
  %v13131 = vunpack.c.l.b16 %v12909
  %v13132 = vunpack.c.h.b16 %v12909
  %v13133 = vunpack.c.l.b16 %v12910
  %v13134 = vunpack.c.h.b16 %v12910
  %v13135 = vunpack.c.l.b16 %v12911
  %v13136 = vunpack.c.h.b16 %v12911
  %v13137 = vunpack.c.l.b16 %v12912
  %v13138 = vunpack.c.h.b16 %v12912
  %v13139 = vunpack.c.l.b16 %v12913
  %v13140 = vunpack.c.h.b16 %v12913
  %v13141 = vunpack.c.l.b16 %v12914
  %v13142 = vunpack.c.h.b16 %v12914
  %v13143 = vunpack.c.l.b16 %v12915
  %v13144 = vpack.c.b16 %v13131, %v13131
  %v13145 = vpack.c.b16 %v13132, %v13132
  %v13146 = vpack.c.b16 %v13133, %v13133
  %v13147 = vpack.c.b16 %v13134, %v13134
  %v13148 = vpack.c.b16 %v13135, %v13135
  %v13149 = vpack.c.b16 %v13136, %v13136
  %v13150 = vpack.c.b16 %v13137, %v13137
  %v13151 = vpack.c.b16 %v13138, %v13138
  %v13152 = vpack.c.b16 %v13139, %v13139
  %v13153 = vpack.c.b16 %v13140, %v13140
  %v13154 = vpack.c.b16 %v13141, %v13141
  %v13155 = vpack.c.b16 %v13142, %v13142
  %v13156 = vpack.c.b16 %v13143, %v13143
  %v13365 = vunpack.c.l.b16 %v12916
  %v13366 = vunpack.c.h.b16 %v12916
  %v13367 = vunpack.c.l.b16 %v12917
  %v13368 = vunpack.c.h.b16 %v12917
  %v13369 = vunpack.c.l.b16 %v12918
  %v13370 = vunpack.c.h.b16 %v12918
  %v13371 = vunpack.c.l.b16 %v12919
  %v13372 = vunpack.c.h.b16 %v12919
  %v13373 = vunpack.c.l.b16 %v12920
  %v13374 = vunpack.c.h.b16 %v12920
  %v13375 = vunpack.c.l.b16 %v12921
  %v13376 = vunpack.c.h.b16 %v12921
  %v13377 = vunpack.c.l.b16 %v12922
  %v13378 = vunpack.c.h.b16 %v12922
  %v13379 = vunpack.c.l.b16 %v12923
  %v13380 = vunpack.c.h.b16 %v12923
  %v13381 = vunpack.c.l.b16 %v12924
  %v13382 = vunpack.c.h.b16 %v12924
  %v13383 = vunpack.c.l.b16 %v12925
  %v13384 = vunpack.c.h.b16 %v12925
  %v13385 = vunpack.c.l.b16 %v12926
  %v13386 = vunpack.c.h.b16 %v12926
  %v13387 = vunpack.c.l.b16 %v12927
  %v13388 = vunpack.c.h.b16 %v12927
  %v13389 = vunpack.c.l.b16 %v12928
  %v13390 = vunpack.c.h.b16 %v12928
  %v13391 = vunpack.c.l.b16 %v12929
  %v13392 = vunpack.c.h.b16 %v12929
  %v13393 = vunpack.c.l.b16 %v12930
  %v13394 = vunpack.c.h.b16 %v12930
  %v13395 = vunpack.c.l.b16 %v12931
  %v13396 = vunpack.c.h.b16 %v12931
  %v13397 = vunpack.c.l.b16 %v12932
  %v13398 = vunpack.c.h.b16 %v12932
  %v13399 = vunpack.c.l.b16 %v12933
  %v13400 = vunpack.c.h.b16 %v12933
  %v13401 = vunpack.c.l.b16 %v12934
  %v13402 = vunpack.c.h.b16 %v12934
  %v13403 = vunpack.c.l.b16 %v12935
  %v13404 = vunpack.c.h.b16 %v12935
  %v13405 = vunpack.c.l.b16 %v12936
  %v13406 = vunpack.c.h.b16 %v12936
  %v13407 = vunpack.c.l.b16 %v12937
  %v13408 = vunpack.c.h.b16 %v12937
  %v13409 = vunpack.c.l.b16 %v12938
  %v13410 = vunpack.c.h.b16 %v12938
  %v13411 = vunpack.c.l.b16 %v12939
  %v13412 = vunpack.c.h.b16 %v12939
  %v13413 = vunpack.c.l.b16 %v12940
  %v13414 = vunpack.c.h.b16 %v12940
  %v13415 = vunpack.c.l.b16 %v12941
  %v13416 = vunpack.c.h.b16 %v12941
  %v13417 = vunpack.c.l.b16 %v12942
  %v13418 = vunpack.c.h.b16 %v12942
  %v13419 = vunpack.c.l.b16 %v12943
  %v13420 = vunpack.c.h.b16 %v12943
  %v13421 = vunpack.c.l.b16 %v12944
  %v13422 = vunpack.c.h.b16 %v12944
  %v13423 = vunpack.c.l.b16 %v12945
  %v13424 = vunpack.c.h.b16 %v12945
  %v13425 = vunpack.c.l.b16 %v12946
  %v13426 = vunpack.c.h.b16 %v12946
  %v13427 = vunpack.c.l.b16 %v12947
  %v13428 = vunpack.c.h.b16 %v12947
  %v13429 = vunpack.c.l.b16 %v12948
  %v13430 = vunpack.c.h.b16 %v12948
  %v13431 = vunpack.c.l.b16 %v12949
  %v13432 = vunpack.c.h.b16 %v12949
  %v13433 = vunpack.c.l.b16 %v12950
  %v13434 = vunpack.c.h.b16 %v12950
  %v13435 = vunpack.c.l.b16 %v12951
  %v13436 = vunpack.c.h.b16 %v12951
  %v13437 = vunpack.c.l.b16 %v12952
  %v13438 = vunpack.c.h.b16 %v12952
  %v13439 = vunpack.c.l.b16 %v12953
  %v13440 = vunpack.c.h.b16 %v12953
  %v13441 = vunpack.c.l.b16 %v12954
  %v13442 = vunpack.c.h.b16 %v12954
  %v13443 = vunpack.c.l.b16 %v12955
  %v13444 = vunpack.c.h.b16 %v12955
  %v13445 = vunpack.c.l.b16 %v12956
  %v13446 = vunpack.c.h.b16 %v12956
  %v13447 = vunpack.c.l.b16 %v12957
  %v13448 = vunpack.c.h.b16 %v12957
  %v13449 = vunpack.c.l.b16 %v12958
  %v13450 = vunpack.c.h.b16 %v12958
  %v13451 = vunpack.c.l.b16 %v12959
  %v13452 = vunpack.c.h.b16 %v12959
  %v13453 = vunpack.c.l.b16 %v12960
  %v13454 = vunpack.c.h.b16 %v12960
  %v13455 = vunpack.c.l.b16 %v12961
  %v13456 = vunpack.c.h.b16 %v12961
  %v13457 = vunpack.c.l.b16 %v12962
  %v13458 = vunpack.c.h.b16 %v12962
  %v13459 = vunpack.c.l.b16 %v12963
  %v13460 = vunpack.c.h.b16 %v12963
  %v13461 = vunpack.c.l.b16 %v12964
  %v13462 = vunpack.c.h.b16 %v12964
  %v13463 = vunpack.c.l.b16 %v12965
  %v13464 = vunpack.c.h.b16 %v12965
  %v13465 = vunpack.c.l.b16 %v12966
  %v13466 = vunpack.c.h.b16 %v12966
  %v13467 = vunpack.c.l.b16 %v12967
  %v13468 = vunpack.c.h.b16 %v12967
  %v13469 = vunpack.c.l.b16 %v12968
  %v13470 = vunpack.c.h.b16 %v12968
  %v13471 = vunpack.c.l.b16 %v12969
  %v13472 = vunpack.c.h.b16 %v12969
  %v13473 = vunpack.c.l.b16 %v12970
  %v13474 = vunpack.c.h.b16 %v12970
  %v13475 = vunpack.c.l.b16 %v12971
  %v13476 = vunpack.c.h.b16 %v12971
  %v13477 = vunpack.c.l.b16 %v12972
  %v13478 = vunpack.c.h.b16 %v12972
  %v13479 = vunpack.c.l.b16 %v12973
  %v13480 = vunpack.c.h.b16 %v12973
  %v13481 = vunpack.c.l.b16 %v12974
  %v13482 = vunpack.c.h.b16 %v12974
  %v13483 = vunpack.c.l.b16 %v12975
  %v13484 = vunpack.c.h.b16 %v12975
  %v13485 = vunpack.c.l.b16 %v12976
  %v13486 = vunpack.c.h.b16 %v12976
  %v13487 = vunpack.c.l.b16 %v12977
  %v13488 = vunpack.c.h.b16 %v12977
  %v13489 = vunpack.c.l.b16 %v12978
  %v13490 = vunpack.c.h.b16 %v12978
  %v13491 = vunpack.c.l.b16 %v12979
  %v13492 = vunpack.c.h.b16 %v12979
  %v13493 = vunpack.c.l.b16 %v12980
  %v13494 = vunpack.c.h.b16 %v12980
  %v13495 = vunpack.c.l.b16 %v12981
  %v13496 = vunpack.c.h.b16 %v12981
  %v13497 = vunpack.c.l.b16 %v12982
  %v13498 = vunpack.c.h.b16 %v12982
  %v13499 = vunpack.c.l.b16 %v12983
  %v13500 = vunpack.c.h.b16 %v12983
  %v13501 = vunpack.c.l.b16 %v12984
  %v13502 = vunpack.c.h.b16 %v12984
  %v13503 = vunpack.c.l.b16 %v12985
  %v13504 = vunpack.c.h.b16 %v12985
  %v13505 = vunpack.c.l.b16 %v12986
  %v13506 = vunpack.c.h.b16 %v12986
  %v13507 = vunpack.c.l.b16 %v12987
  %v13508 = vunpack.c.h.b16 %v12987
  %v13509 = vunpack.c.l.b16 %v12988
  %v13510 = vunpack.c.h.b16 %v12988
  %v13511 = vunpack.c.l.b16 %v12989
  %v13512 = vunpack.c.h.b16 %v12989
  %v13513 = vunpack.c.l.b16 %v12990
  %v13514 = vunpack.c.h.b16 %v12990
  %v13515 = vunpack.c.l.b16 %v12991
  %v13516 = vunpack.c.h.b16 %v12991
  %v13517 = vunpack.c.l.b16 %v12992
  %v13518 = vunpack.c.h.b16 %v12992
  %v13519 = vunpack.c.l.b16 %v12993
  %v13520 = vunpack.c.h.b16 %v12993
  %v13521 = vunpack.c.l.b16 %v12994
  %v13522 = vunpack.c.h.b16 %v12994
  %v13523 = vunpack.c.l.b16 %v12995
  %v13524 = vunpack.c.h.b16 %v12995
  %v13525 = vunpack.c.l.b16 %v12996
  %v13526 = vunpack.c.h.b16 %v12996
  %v13527 = vunpack.c.l.b16 %v12997
  %v13528 = vunpack.c.h.b16 %v12997
  %v13529 = vunpack.c.l.b16 %v12998
  %v13530 = vunpack.c.h.b16 %v12998
  %v13531 = vunpack.c.l.b16 %v12999
  %v13532 = vunpack.c.h.b16 %v12999
  %v13533 = vunpack.c.l.b16 %v13000
  %v13534 = vunpack.c.h.b16 %v13000
  %v13535 = vunpack.c.l.b16 %v13001
  %v13536 = vunpack.c.h.b16 %v13001
  %v13537 = vunpack.c.l.b16 %v13002
  %v13538 = vunpack.c.h.b16 %v13002
  %v13539 = vunpack.c.l.b16 %v13003
  %v13540 = vunpack.c.h.b16 %v13003
  %v13541 = vunpack.c.l.b16 %v13004
  %v13542 = vunpack.c.h.b16 %v13004
  %v13543 = vunpack.c.l.b16 %v13005
  %v13544 = vunpack.c.h.b16 %v13005
  %v13545 = vunpack.c.l.b16 %v13006
  %v13546 = vunpack.c.h.b16 %v13006
  %v13547 = vunpack.c.l.b16 %v13007
  %v13548 = vunpack.c.h.b16 %v13007
  %v13549 = vunpack.c.l.b16 %v13008
  %v13550 = vunpack.c.h.b16 %v13008
  %v13551 = vunpack.c.l.b16 %v13009
  %v13552 = vunpack.c.h.b16 %v13009
  %v13553 = vunpack.c.l.b16 %v13010
  %v13554 = vunpack.c.h.b16 %v13010
  %v13555 = vunpack.c.l.b16 %v13011
  %v13556 = vunpack.c.h.b16 %v13011
  %v13557 = vunpack.c.l.b16 %v13012
  %v13558 = vunpack.c.h.b16 %v13012
  %v13559 = vunpack.c.l.b16 %v13013
  %v13560 = vunpack.c.h.b16 %v13013
  %v13561 = vunpack.c.l.b16 %v13014
  %v13562 = vunpack.c.h.b16 %v13014
  %v13563 = vunpack.c.l.b16 %v13015
  %v13564 = vunpack.c.h.b16 %v13015
  %v13565 = vunpack.c.l.b16 %v13016
  %v13566 = vunpack.c.h.b16 %v13016
  %v13567 = vunpack.c.l.b16 %v13017
  %v13568 = vunpack.c.h.b16 %v13017
  %v13569 = vunpack.c.l.b16 %v13018
  %v13570 = vunpack.c.h.b16 %v13018
  %v13571 = vunpack.c.l.b16 %v13019
  %v13572 = vunpack.c.h.b16 %v13019
  %v13573 = vunpack.c.l.b16 %v13020
  %v13574 = vunpack.c.h.b16 %v13020
  %v13575 = vunpack.c.l.b16 %v13021
  %v13576 = vunpack.c.h.b16 %v13021
  %v13577 = vunpack.c.l.b16 %v13022
  %v13578 = vunpack.c.h.b16 %v13022
  %v13579 = vunpack.c.l.b16 %v13023
  %v13580 = vunpack.c.h.b16 %v13023
  %v13581 = vunpack.c.l.b16 %v13024
  %v13582 = vunpack.c.h.b16 %v13024
  %v13583 = vunpack.c.l.b16 %v13025
  %v13584 = vunpack.c.h.b16 %v13025
  %v13585 = vunpack.c.l.b16 %v13026
  %v13586 = vunpack.c.h.b16 %v13026
  %v13587 = vunpack.c.l.b16 %v13027
  %v13588 = vunpack.c.h.b16 %v13027
  %v13589 = vunpack.c.l.b16 %v13028
  %v13590 = vunpack.c.h.b16 %v13028
  %v13591 = vunpack.c.l.b16 %v13029
  %v13592 = vunpack.c.h.b16 %v13029
  %v13593 = vunpack.c.l.b16 %v13030
  %v13594 = vunpack.c.h.b16 %v13030
  %v13595 = vunpack.c.l.b16 %v13031
  %v13596 = vunpack.c.h.b16 %v13031
  %v13597 = vunpack.c.l.b16 %v13032
  %v13598 = vunpack.c.h.b16 %v13032
  %v13599 = vunpack.c.l.b16 %v13033
  %v13600 = vunpack.c.h.b16 %v13033
  %v13601 = vunpack.c.l.b16 %v13034
  %v13602 = vunpack.c.h.b16 %v13034
  %v13603 = vunpack.c.l.b16 %v13035
  %v13604 = vunpack.c.h.b16 %v13035
  %v13605 = vunpack.c.l.b16 %v13036
  %v13606 = vunpack.c.h.b16 %v13036
  %v13607 = vunpack.c.l.b16 %v13037
  %v13608 = vunpack.c.h.b16 %v13037
  %v13609 = vunpack.c.l.b16 %v13038
  %v13610 = vunpack.c.h.b16 %v13038
  %v13611 = vunpack.c.l.b16 %v13039
  %v13612 = vunpack.c.h.b16 %v13039
  %v13613 = vunpack.c.l.b16 %v13040
  %v13614 = vunpack.c.h.b16 %v13040
  %v13615 = vunpack.c.l.b16 %v13041
  %v13616 = vunpack.c.h.b16 %v13041
  %v13617 = vunpack.c.l.b16 %v13042
  %v13618 = vunpack.c.h.b16 %v13042
  %v13619 = vunpack.c.l.b16 %v13043
  %v13620 = vunpack.c.h.b16 %v13043
  %v13621 = vunpack.c.l.b16 %v13044
  %v13622 = vunpack.c.h.b16 %v13044
  %v13623 = vunpack.c.l.b16 %v13045
  %v13624 = vunpack.c.h.b16 %v13045
  %v13625 = vunpack.c.l.b16 %v13046
  %v13626 = vunpack.c.h.b16 %v13046
  %v13627 = vunpack.c.l.b16 %v13047
  %v13628 = vunpack.c.h.b16 %v13047
  %v13629 = vunpack.c.l.b16 %v13048
  %v13630 = vunpack.c.h.b16 %v13048
  %v13631 = vunpack.c.l.b16 %v13049
  %v13632 = vunpack.c.h.b16 %v13049
  %v13633 = vunpack.c.l.b16 %v13050
  %v13634 = vunpack.c.h.b16 %v13050
  %v13635 = vunpack.c.l.b16 %v13051
  %v13636 = vunpack.c.h.b16 %v13051
  %v13637 = vunpack.c.l.b16 %v13052
  %v13638 = vunpack.c.h.b16 %v13052
  %v13639 = vunpack.c.l.b16 %v13053
  %v13640 = vunpack.c.h.b16 %v13053
  %v13641 = vunpack.c.l.b16 %v13054
  %v13642 = vunpack.c.h.b16 %v13054
  %v13643 = vunpack.c.l.b16 %v13055
  %v13644 = vunpack.c.h.b16 %v13055
  %v13645 = vunpack.c.l.b16 %v13056
  %v13646 = vunpack.c.h.b16 %v13056
  %v13647 = vunpack.c.l.b16 %v13057
  %v13648 = vunpack.c.h.b16 %v13057
  %v13649 = vunpack.c.l.b16 %v13058
  %v13650 = vunpack.c.h.b16 %v13058
  %v13651 = vunpack.c.l.b16 %v13059
  %v13652 = vunpack.c.h.b16 %v13059
  %v13653 = vunpack.c.l.b16 %v13060
  %v13654 = vunpack.c.h.b16 %v13060
  %v13655 = vunpack.c.l.b16 %v13061
  %v13656 = vunpack.c.h.b16 %v13061
  %v13657 = vunpack.c.l.b16 %v13062
  %v13658 = vunpack.c.h.b16 %v13062
  %v13659 = vunpack.c.l.b16 %v13063
  %v13660 = vunpack.c.h.b16 %v13063
  %v13661 = vunpack.c.l.b16 %v13064
  %v13662 = vunpack.c.h.b16 %v13064
  %v13663 = vunpack.c.l.b16 %v13065
  %v13664 = vunpack.c.h.b16 %v13065
  %v13665 = vunpack.c.l.b16 %v13066
  %v13666 = vunpack.c.h.b16 %v13066
  %v13667 = vunpack.c.l.b16 %v13067
  %v13668 = vunpack.c.h.b16 %v13067
  %v13669 = vunpack.c.l.b16 %v13068
  %v13670 = vunpack.c.h.b16 %v13068
  %v13671 = vunpack.c.l.b16 %v13069
  %v13672 = vunpack.c.h.b16 %v13069
  %v13673 = vunpack.c.l.b16 %v13070
  %v13674 = vunpack.c.h.b16 %v13070
  %v13675 = vunpack.c.l.b16 %v13071
  %v13676 = vunpack.c.h.b16 %v13071
  %v13677 = vunpack.c.l.b16 %v13072
  %v13678 = vunpack.c.h.b16 %v13072
  %v13679 = vunpack.c.l.b16 %v13073
  %v13680 = vunpack.c.h.b16 %v13073
  %v13681 = vunpack.c.l.b16 %v13074
  %v13682 = vunpack.c.h.b16 %v13074
  %v13683 = vunpack.c.l.b16 %v13075
  %v13684 = vunpack.c.h.b16 %v13075
  %v13685 = vunpack.c.l.b16 %v13076
  %v13686 = vunpack.c.h.b16 %v13076
  %v13687 = vunpack.c.l.b16 %v13077
  %v13688 = vunpack.c.h.b16 %v13077
  %v13689 = vunpack.c.l.b16 %v13078
  %v13690 = vunpack.c.h.b16 %v13078
  %v13691 = vunpack.c.l.b16 %v13079
  %v13692 = vunpack.c.h.b16 %v13079
  %v13693 = vunpack.c.l.b16 %v13080
  %v13694 = vunpack.c.h.b16 %v13080
  %v13695 = vunpack.c.l.b16 %v13081
  %v13696 = vunpack.c.h.b16 %v13081
  %v13697 = vunpack.c.l.b16 %v13082
  %v13698 = vunpack.c.h.b16 %v13082
  %v13699 = vunpack.c.l.b16 %v13083
  %v13700 = vunpack.c.h.b16 %v13083
  %v13701 = vunpack.c.l.b16 %v13084
  %v13702 = vunpack.c.h.b16 %v13084
  %v13703 = vunpack.c.l.b16 %v13085
  %v13704 = vunpack.c.h.b16 %v13085
  %v13705 = vunpack.c.l.b16 %v13086
  %v13706 = vunpack.c.h.b16 %v13086
  %v13707 = vunpack.c.l.b16 %v13087
  %v13708 = vunpack.c.h.b16 %v13087
  %v13709 = vunpack.c.l.b16 %v13088
  %v13710 = vunpack.c.h.b16 %v13088
  %v13711 = vunpack.c.l.b16 %v13089
  %v13712 = vunpack.c.h.b16 %v13089
  %v13713 = vunpack.c.l.b16 %v13090
  %v13714 = vunpack.c.h.b16 %v13090
  %v13715 = vunpack.c.l.b16 %v13091
  %v13716 = vunpack.c.h.b16 %v13091
  %v13717 = vunpack.c.l.b16 %v13092
  %v13718 = vunpack.c.h.b16 %v13092
  %v13719 = vunpack.c.l.b16 %v13093
  %v13720 = vunpack.c.h.b16 %v13093
  %v13721 = vunpack.c.l.b16 %v13094
  %v13722 = vunpack.c.h.b16 %v13094
  %v13723 = vunpack.c.l.b16 %v13095
  %v13724 = vunpack.c.h.b16 %v13095
  %v13725 = vunpack.c.l.b16 %v13096
  %v13726 = vunpack.c.h.b16 %v13096
  %v13727 = vunpack.c.l.b16 %v13097
  %v13728 = vunpack.c.h.b16 %v13097
  %v13729 = vunpack.c.l.b16 %v13098
  %v13730 = vunpack.c.h.b16 %v13098
  %v13731 = vunpack.c.l.b16 %v13099
  %v13732 = vunpack.c.h.b16 %v13099
  %v13733 = vunpack.c.l.b16 %v13100
  %v13734 = vunpack.c.h.b16 %v13100
  %v13735 = vunpack.c.l.b16 %v13101
  %v13736 = vunpack.c.h.b16 %v13101
  %v13737 = vunpack.c.l.b16 %v13102
  %v13738 = vunpack.c.h.b16 %v13102
  %v13739 = vunpack.c.l.b16 %v13103
  %v13740 = vunpack.c.h.b16 %v13103
  %v13741 = vunpack.c.l.b16 %v13104
  %v13742 = vunpack.c.h.b16 %v13104
  %v13743 = vunpack.c.l.b16 %v13105
  %v13744 = vunpack.c.h.b16 %v13105
  %v13745 = vunpack.c.l.b16 %v13106
  %v13746 = vunpack.c.h.b16 %v13106
  %v13747 = vunpack.c.l.b16 %v13107
  %v13748 = vunpack.c.h.b16 %v13107
  %v13749 = vunpack.c.l.b16 %v13108
  %v13750 = vunpack.c.h.b16 %v13108
  %v13751 = vunpack.c.l.b16 %v13109
  %v13752 = vunpack.c.h.b16 %v13109
  %v13753 = vunpack.c.l.b16 %v13110
  %v13754 = vunpack.c.h.b16 %v13110
  %v13755 = vunpack.c.l.b16 %v13111
  %v13756 = vunpack.c.h.b16 %v13111
  %v13757 = vpack.c.b16 %v13367, %v13365
  %v13758 = vpack.c.b16 %v13368, %v13366
  %v13759 = vpack.c.b16 %v13371, %v13369
  %v13760 = vpack.c.b16 %v13372, %v13370
  %v13761 = vpack.c.b16 %v13375, %v13373
  %v13762 = vpack.c.b16 %v13376, %v13374
  %v13763 = vpack.c.b16 %v13379, %v13377
  %v13764 = vpack.c.b16 %v13380, %v13378
  %v13765 = vpack.c.b16 %v13383, %v13381
  %v13766 = vpack.c.b16 %v13384, %v13382
  %v13767 = vpack.c.b16 %v13387, %v13385
  %v13768 = vpack.c.b16 %v13388, %v13386
  %v13769 = vpack.c.b16 %v13391, %v13389
  %v13770 = vpack.c.b16 %v13392, %v13390
  %v13771 = vpack.c.b16 %v13395, %v13393
  %v13772 = vpack.c.b16 %v13396, %v13394
  %v13773 = vpack.c.b16 %v13399, %v13397
  %v13774 = vpack.c.b16 %v13400, %v13398
  %v13775 = vpack.c.b16 %v13403, %v13401
  %v13776 = vpack.c.b16 %v13404, %v13402
  %v13777 = vpack.c.b16 %v13407, %v13405
  %v13778 = vpack.c.b16 %v13408, %v13406
  %v13779 = vpack.c.b16 %v13411, %v13409
  %v13780 = vpack.c.b16 %v13412, %v13410
  %v13781 = vpack.c.b16 %v13415, %v13413
  %v13782 = vpack.c.b16 %v13416, %v13414
  %v13783 = vpack.c.b16 %v13419, %v13417
  %v13784 = vpack.c.b16 %v13420, %v13418
  %v13785 = vpack.c.b16 %v13423, %v13421
  %v13786 = vpack.c.b16 %v13424, %v13422
  %v13787 = vpack.c.b16 %v13427, %v13425
  %v13788 = vpack.c.b16 %v13428, %v13426
  %v13789 = vpack.c.b16 %v13431, %v13429
  %v13790 = vpack.c.b16 %v13432, %v13430
  %v13791 = vpack.c.b16 %v13435, %v13433
  %v13792 = vpack.c.b16 %v13436, %v13434
  %v13793 = vpack.c.b16 %v13439, %v13437
  %v13794 = vpack.c.b16 %v13440, %v13438
  %v13795 = vpack.c.b16 %v13443, %v13441
  %v13796 = vpack.c.b16 %v13444, %v13442
  %v13797 = vpack.c.b16 %v13447, %v13445
  %v13798 = vpack.c.b16 %v13448, %v13446
  %v13799 = vpack.c.b16 %v13451, %v13449
  %v13800 = vpack.c.b16 %v13452, %v13450
  %v13801 = vpack.c.b16 %v13455, %v13453
  %v13802 = vpack.c.b16 %v13456, %v13454
  %v13803 = vpack.c.b16 %v13459, %v13457
  %v13804 = vpack.c.b16 %v13460, %v13458
  %v13805 = vpack.c.b16 %v13463, %v13461
  %v13806 = vpack.c.b16 %v13464, %v13462
  %v13807 = vpack.c.b16 %v13467, %v13465
  %v13808 = vpack.c.b16 %v13468, %v13466
  %v13809 = vpack.c.b16 %v13471, %v13469
  %v13810 = vpack.c.b16 %v13472, %v13470
  %v13811 = vpack.c.b16 %v13475, %v13473
  %v13812 = vpack.c.b16 %v13476, %v13474
  %v13813 = vpack.c.b16 %v13479, %v13477
  %v13814 = vpack.c.b16 %v13480, %v13478
  %v13815 = vpack.c.b16 %v13483, %v13481
  %v13816 = vpack.c.b16 %v13484, %v13482
  %v13817 = vpack.c.b16 %v13487, %v13485
  %v13818 = vpack.c.b16 %v13488, %v13486
  %v13819 = vpack.c.b16 %v13491, %v13489
  %v13820 = vpack.c.b16 %v13492, %v13490
  %v13821 = vpack.c.b16 %v13495, %v13493
  %v13822 = vpack.c.b16 %v13496, %v13494
  %v13823 = vpack.c.b16 %v13499, %v13497
  %v13824 = vpack.c.b16 %v13500, %v13498
  %v13825 = vpack.c.b16 %v13503, %v13501
  %v13826 = vpack.c.b16 %v13504, %v13502
  %v13827 = vpack.c.b16 %v13507, %v13505
  %v13828 = vpack.c.b16 %v13508, %v13506
  %v13829 = vpack.c.b16 %v13511, %v13509
  %v13830 = vpack.c.b16 %v13512, %v13510
  %v13831 = vpack.c.b16 %v13515, %v13513
  %v13832 = vpack.c.b16 %v13516, %v13514
  %v13833 = vpack.c.b16 %v13519, %v13517
  %v13834 = vpack.c.b16 %v13520, %v13518
  %v13835 = vpack.c.b16 %v13523, %v13521
  %v13836 = vpack.c.b16 %v13524, %v13522
  %v13837 = vpack.c.b16 %v13527, %v13525
  %v13838 = vpack.c.b16 %v13528, %v13526
  %v13839 = vpack.c.b16 %v13531, %v13529
  %v13840 = vpack.c.b16 %v13532, %v13530
  %v13841 = vpack.c.b16 %v13535, %v13533
  %v13842 = vpack.c.b16 %v13536, %v13534
  %v13843 = vpack.c.b16 %v13539, %v13537
  %v13844 = vpack.c.b16 %v13540, %v13538
  %v13845 = vpack.c.b16 %v13543, %v13541
  %v13846 = vpack.c.b16 %v13544, %v13542
  %v13847 = vpack.c.b16 %v13547, %v13545
  %v13848 = vpack.c.b16 %v13548, %v13546
  %v13849 = vpack.c.b16 %v13551, %v13549
  %v13850 = vpack.c.b16 %v13552, %v13550
  %v13851 = vpack.c.b16 %v13555, %v13553
  %v13852 = vpack.c.b16 %v13556, %v13554
  %v13853 = vpack.c.b16 %v13559, %v13557
  %v13854 = vpack.c.b16 %v13560, %v13558
  %v13855 = vpack.c.b16 %v13563, %v13561
  %v13856 = vpack.c.b16 %v13564, %v13562
  %v13857 = vpack.c.b16 %v13567, %v13565
  %v13858 = vpack.c.b16 %v13568, %v13566
  %v13859 = vpack.c.b16 %v13571, %v13569
  %v13860 = vpack.c.b16 %v13572, %v13570
  %v13861 = vpack.c.b16 %v13575, %v13573
  %v13862 = vpack.c.b16 %v13576, %v13574
  %v13863 = vpack.c.b16 %v13579, %v13577
  %v13864 = vpack.c.b16 %v13580, %v13578
  %v13865 = vpack.c.b16 %v13583, %v13581
  %v13866 = vpack.c.b16 %v13584, %v13582
  %v13867 = vpack.c.b16 %v13587, %v13585
  %v13868 = vpack.c.b16 %v13588, %v13586
  %v13869 = vpack.c.b16 %v13591, %v13589
  %v13870 = vpack.c.b16 %v13592, %v13590
  %v13871 = vpack.c.b16 %v13595, %v13593
  %v13872 = vpack.c.b16 %v13596, %v13594
  %v13873 = vpack.c.b16 %v13599, %v13597
  %v13874 = vpack.c.b16 %v13600, %v13598
  %v13875 = vpack.c.b16 %v13603, %v13601
  %v13876 = vpack.c.b16 %v13604, %v13602
  %v13877 = vpack.c.b16 %v13607, %v13605
  %v13878 = vpack.c.b16 %v13608, %v13606
  %v13879 = vpack.c.b16 %v13611, %v13609
  %v13880 = vpack.c.b16 %v13612, %v13610
  %v13881 = vpack.c.b16 %v13615, %v13613
  %v13882 = vpack.c.b16 %v13616, %v13614
  %v13883 = vpack.c.b16 %v13619, %v13617
  %v13884 = vpack.c.b16 %v13620, %v13618
  %v13885 = vpack.c.b16 %v13623, %v13621
  %v13886 = vpack.c.b16 %v13624, %v13622
  %v13887 = vpack.c.b16 %v13627, %v13625
  %v13888 = vpack.c.b16 %v13628, %v13626
  %v13889 = vpack.c.b16 %v13631, %v13629
  %v13890 = vpack.c.b16 %v13632, %v13630
  %v13891 = vpack.c.b16 %v13635, %v13633
  %v13892 = vpack.c.b16 %v13636, %v13634
  %v13893 = vpack.c.b16 %v13639, %v13637
  %v13894 = vpack.c.b16 %v13640, %v13638
  %v13895 = vpack.c.b16 %v13643, %v13641
  %v13896 = vpack.c.b16 %v13644, %v13642
  %v13897 = vpack.c.b16 %v13647, %v13645
  %v13898 = vpack.c.b16 %v13648, %v13646
  %v13899 = vpack.c.b16 %v13651, %v13649
  %v13900 = vpack.c.b16 %v13652, %v13650
  %v13901 = vpack.c.b16 %v13655, %v13653
  %v13902 = vpack.c.b16 %v13656, %v13654
  %v13903 = vpack.c.b16 %v13659, %v13657
  %v13904 = vpack.c.b16 %v13660, %v13658
  %v13905 = vpack.c.b16 %v13663, %v13661
  %v13906 = vpack.c.b16 %v13664, %v13662
  %v13907 = vpack.c.b16 %v13667, %v13665
  %v13908 = vpack.c.b16 %v13668, %v13666
  %v13909 = vpack.c.b16 %v13671, %v13669
  %v13910 = vpack.c.b16 %v13672, %v13670
  %v13911 = vpack.c.b16 %v13675, %v13673
  %v13912 = vpack.c.b16 %v13676, %v13674
  %v13913 = vpack.c.b16 %v13679, %v13677
  %v13914 = vpack.c.b16 %v13680, %v13678
  %v13915 = vpack.c.b16 %v13683, %v13681
  %v13916 = vpack.c.b16 %v13684, %v13682
  %v13917 = vpack.c.b16 %v13687, %v13685
  %v13918 = vpack.c.b16 %v13688, %v13686
  %v13919 = vpack.c.b16 %v13691, %v13689
  %v13920 = vpack.c.b16 %v13692, %v13690
  %v13921 = vpack.c.b16 %v13695, %v13693
  %v13922 = vpack.c.b16 %v13696, %v13694
  %v13923 = vpack.c.b16 %v13699, %v13697
  %v13924 = vpack.c.b16 %v13700, %v13698
  %v13925 = vpack.c.b16 %v13703, %v13701
  %v13926 = vpack.c.b16 %v13704, %v13702
  %v13927 = vpack.c.b16 %v13707, %v13705
  %v13928 = vpack.c.b16 %v13708, %v13706
  %v13929 = vpack.c.b16 %v13711, %v13709
  %v13930 = vpack.c.b16 %v13712, %v13710
  %v13931 = vpack.c.b16 %v13715, %v13713
  %v13932 = vpack.c.b16 %v13716, %v13714
  %v13933 = vpack.c.b16 %v13719, %v13717
  %v13934 = vpack.c.b16 %v13720, %v13718
  %v13935 = vpack.c.b16 %v13723, %v13721
  %v13936 = vpack.c.b16 %v13724, %v13722
  %v13937 = vpack.c.b16 %v13727, %v13725
  %v13938 = vpack.c.b16 %v13728, %v13726
  %v13939 = vpack.c.b16 %v13731, %v13729
  %v13940 = vpack.c.b16 %v13732, %v13730
  %v13941 = vpack.c.b16 %v13735, %v13733
  %v13942 = vpack.c.b16 %v13736, %v13734
  %v13943 = vpack.c.b16 %v13739, %v13737
  %v13944 = vpack.c.b16 %v13740, %v13738
  %v13945 = vpack.c.b16 %v13743, %v13741
  %v13946 = vpack.c.b16 %v13744, %v13742
  %v13947 = vpack.c.b16 %v13747, %v13745
  %v13948 = vpack.c.b16 %v13748, %v13746
  %v13949 = vpack.c.b16 %v13751, %v13749
  %v13950 = vpack.c.b16 %v13752, %v13750
  %v13951 = vpack.c.b16 %v13755, %v13753
  %v13952 = vpack.c.b16 %v13756, %v13754
  %vm14149 = vcmask 261120
  %v14151 = vsel %vm14149, %v13156, 0
  %14153 = vmatprep.subr.bf16.mxu0 %v13772
  %14154 = vmatpush1.bf16.msra.mxu0 %v13771
  %14155 = vmatprep.subr.bf16.mxu0 %v13770
  %14156 = vmatpush1.bf16.msra.mxu0 %v13769
  %14157 = vmatprep.subr.bf16.mxu0 %v13768
  %14158 = vmatpush1.bf16.msra.mxu0 %v13767
  %14159 = vmatprep.subr.bf16.mxu0 %v13766
  %14160 = vmatpush1.bf16.msra.mxu0 %v13765
  %14161 = vmatprep.subr.bf16.mxu0 %v13764
  %14162 = vmatpush1.bf16.msra.mxu0 %v13763
  %14163 = vmatprep.subr.bf16.mxu0 %v13762
  %14164 = vmatpush1.bf16.msra.mxu0 %v13761
  %14165 = vmatprep.subr.bf16.mxu0 %v13760
  %14166 = vmatpush1.bf16.msra.mxu0 %v13759
  %14167 = vmatprep.subr.bf16.mxu0 %v13758
  %14168 = vmatpush1.bf16.msra.mxu0 %v13757
  %14169 = vmatprep.subr.bf16.mxu0 %v13788
  %14170 = vmatpush2.bf16.msra.mxu0 %v13787
  %14171 = vmatprep.subr.bf16.mxu0 %v13786
  %14172 = vmatpush2.bf16.msra.mxu0 %v13785
  %14173 = vmatprep.subr.bf16.mxu0 %v13784
  %14174 = vmatpush2.bf16.msra.mxu0 %v13783
  %14175 = vmatprep.subr.bf16.mxu0 %v13782
  %14176 = vmatpush2.bf16.msra.mxu0 %v13781
  %14177 = vmatprep.subr.bf16.mxu0 %v13780
  %14178 = vmatpush2.bf16.msra.mxu0 %v13779
  %14179 = vmatprep.subr.bf16.mxu0 %v13778
  %14180 = vmatpush2.bf16.msra.mxu0 %v13777
  %14181 = vmatprep.subr.bf16.mxu0 %v13776
  %14182 = vmatpush2.bf16.msra.mxu0 %v13775
  %14183 = vmatprep.subr.bf16.mxu0 %v13774
  %14184 = vmatpush2.bf16.msra.mxu0 %v13773
  %14185 = vmatprep.mubr.bf16.mxu0 %v13145
  %14186 = vmatmul.mubr.bf16.gmra.mxu0 %v13144
  %v14187 = vpop.f32.mrf.mxu0
  %v14188 = vadd.f32 %v13117, %v14187
  %v14189 = vpop.f32.mrf.mxu0
  %v14190 = vadd.f32 %v13121, %v14189
  %v14191 = vpop.f32.mrf.mxu0
  %v14192 = vpop.f32.mrf.mxu0
  %14193 = vdwg.mxu0
  %14194 = vmatprep.subr.bf16.mxu0 %v13804
  %14195 = vmatpush1.bf16.msra.mxu0 %v13803
  %14196 = vmatprep.subr.bf16.mxu0 %v13802
  %14197 = vmatpush1.bf16.msra.mxu0 %v13801
  %14198 = vmatprep.subr.bf16.mxu0 %v13800
  %14199 = vmatpush1.bf16.msra.mxu0 %v13799
  %14200 = vmatprep.subr.bf16.mxu0 %v13798
  %14201 = vmatpush1.bf16.msra.mxu0 %v13797
  %14202 = vmatprep.subr.bf16.mxu0 %v13796
  %14203 = vmatpush1.bf16.msra.mxu0 %v13795
  %14204 = vmatprep.subr.bf16.mxu0 %v13794
  %14205 = vmatpush1.bf16.msra.mxu0 %v13793
  %14206 = vmatprep.subr.bf16.mxu0 %v13792
  %14207 = vmatpush1.bf16.msra.mxu0 %v13791
  %14208 = vmatprep.subr.bf16.mxu0 %v13790
  %14209 = vmatpush1.bf16.msra.mxu0 %v13789
  %14210 = vmatprep.subr.bf16.mxu0 %v13820
  %14211 = vmatpush2.bf16.msra.mxu0 %v13819
  %14212 = vmatprep.subr.bf16.mxu0 %v13818
  %14213 = vmatpush2.bf16.msra.mxu0 %v13817
  %14214 = vmatprep.subr.bf16.mxu0 %v13816
  %14215 = vmatpush2.bf16.msra.mxu0 %v13815
  %14216 = vmatprep.subr.bf16.mxu0 %v13814
  %14217 = vmatpush2.bf16.msra.mxu0 %v13813
  %14218 = vmatprep.subr.bf16.mxu0 %v13812
  %14219 = vmatpush2.bf16.msra.mxu0 %v13811
  %14220 = vmatprep.subr.bf16.mxu0 %v13810
  %14221 = vmatpush2.bf16.msra.mxu0 %v13809
  %14222 = vmatprep.subr.bf16.mxu0 %v13808
  %14223 = vmatpush2.bf16.msra.mxu0 %v13807
  %14224 = vmatprep.subr.bf16.mxu0 %v13806
  %14225 = vmatpush2.bf16.msra.mxu0 %v13805
  %14226 = vmatprep.mubr.bf16.mxu0 %v13147
  %14227 = vmatmul.mubr.bf16.gmra.mxu0 %v13146
  %v14228 = vpop.f32.mrf.mxu0
  %v14229 = vadd.f32 %v14188, %v14228
  %v14230 = vpop.f32.mrf.mxu0
  %v14231 = vadd.f32 %v14190, %v14230
  %v14232 = vpop.f32.mrf.mxu0
  %v14233 = vpop.f32.mrf.mxu0
  %14234 = vdwg.mxu0
  %14235 = vmatprep.subr.bf16.mxu0 %v13836
  %14236 = vmatpush1.bf16.msra.mxu0 %v13835
  %14237 = vmatprep.subr.bf16.mxu0 %v13834
  %14238 = vmatpush1.bf16.msra.mxu0 %v13833
  %14239 = vmatprep.subr.bf16.mxu0 %v13832
  %14240 = vmatpush1.bf16.msra.mxu0 %v13831
  %14241 = vmatprep.subr.bf16.mxu0 %v13830
  %14242 = vmatpush1.bf16.msra.mxu0 %v13829
  %14243 = vmatprep.subr.bf16.mxu0 %v13828
  %14244 = vmatpush1.bf16.msra.mxu0 %v13827
  %14245 = vmatprep.subr.bf16.mxu0 %v13826
  %14246 = vmatpush1.bf16.msra.mxu0 %v13825
  %14247 = vmatprep.subr.bf16.mxu0 %v13824
  %14248 = vmatpush1.bf16.msra.mxu0 %v13823
  %14249 = vmatprep.subr.bf16.mxu0 %v13822
  %14250 = vmatpush1.bf16.msra.mxu0 %v13821
  %14251 = vmatprep.subr.bf16.mxu0 %v13852
  %14252 = vmatpush2.bf16.msra.mxu0 %v13851
  %14253 = vmatprep.subr.bf16.mxu0 %v13850
  %14254 = vmatpush2.bf16.msra.mxu0 %v13849
  %14255 = vmatprep.subr.bf16.mxu0 %v13848
  %14256 = vmatpush2.bf16.msra.mxu0 %v13847
  %14257 = vmatprep.subr.bf16.mxu0 %v13846
  %14258 = vmatpush2.bf16.msra.mxu0 %v13845
  %14259 = vmatprep.subr.bf16.mxu0 %v13844
  %14260 = vmatpush2.bf16.msra.mxu0 %v13843
  %14261 = vmatprep.subr.bf16.mxu0 %v13842
  %14262 = vmatpush2.bf16.msra.mxu0 %v13841
  %14263 = vmatprep.subr.bf16.mxu0 %v13840
  %14264 = vmatpush2.bf16.msra.mxu0 %v13839
  %14265 = vmatprep.subr.bf16.mxu0 %v13838
  %14266 = vmatpush2.bf16.msra.mxu0 %v13837
  %14267 = vmatprep.mubr.bf16.mxu0 %v13149
  %14268 = vmatmul.mubr.bf16.gmra.mxu0 %v13148
  %v14269 = vpop.f32.mrf.mxu0
  %v14270 = vadd.f32 %v14229, %v14269
  %v14271 = vpop.f32.mrf.mxu0
  %v14272 = vadd.f32 %v14231, %v14271
  %v14273 = vpop.f32.mrf.mxu0
  %v14274 = vpop.f32.mrf.mxu0
  %14275 = vdwg.mxu0
  %14276 = vmatprep.subr.bf16.mxu0 %v13868
  %14277 = vmatpush1.bf16.msra.mxu0 %v13867
  %14278 = vmatprep.subr.bf16.mxu0 %v13866
  %14279 = vmatpush1.bf16.msra.mxu0 %v13865
  %14280 = vmatprep.subr.bf16.mxu0 %v13864
  %14281 = vmatpush1.bf16.msra.mxu0 %v13863
  %14282 = vmatprep.subr.bf16.mxu0 %v13862
  %14283 = vmatpush1.bf16.msra.mxu0 %v13861
  %14284 = vmatprep.subr.bf16.mxu0 %v13860
  %14285 = vmatpush1.bf16.msra.mxu0 %v13859
  %14286 = vmatprep.subr.bf16.mxu0 %v13858
  %14287 = vmatpush1.bf16.msra.mxu0 %v13857
  %14288 = vmatprep.subr.bf16.mxu0 %v13856
  %14289 = vmatpush1.bf16.msra.mxu0 %v13855
  %14290 = vmatprep.subr.bf16.mxu0 %v13854
  %14291 = vmatpush1.bf16.msra.mxu0 %v13853
  %14292 = vmatprep.subr.bf16.mxu0 %v13884
  %14293 = vmatpush2.bf16.msra.mxu0 %v13883
  %14294 = vmatprep.subr.bf16.mxu0 %v13882
  %14295 = vmatpush2.bf16.msra.mxu0 %v13881
  %14296 = vmatprep.subr.bf16.mxu0 %v13880
  %14297 = vmatpush2.bf16.msra.mxu0 %v13879
  %14298 = vmatprep.subr.bf16.mxu0 %v13878
  %14299 = vmatpush2.bf16.msra.mxu0 %v13877
  %14300 = vmatprep.subr.bf16.mxu0 %v13876
  %14301 = vmatpush2.bf16.msra.mxu0 %v13875
  %14302 = vmatprep.subr.bf16.mxu0 %v13874
  %14303 = vmatpush2.bf16.msra.mxu0 %v13873
  %14304 = vmatprep.subr.bf16.mxu0 %v13872
  %14305 = vmatpush2.bf16.msra.mxu0 %v13871
  %14306 = vmatprep.subr.bf16.mxu0 %v13870
  %14307 = vmatpush2.bf16.msra.mxu0 %v13869
  %14308 = vmatprep.mubr.bf16.mxu0 %v13151
  %14309 = vmatmul.mubr.bf16.gmra.mxu0 %v13150
  %v14310 = vpop.f32.mrf.mxu0
  %v14311 = vadd.f32 %v14270, %v14310
  %v14312 = vpop.f32.mrf.mxu0
  %v14313 = vadd.f32 %v14272, %v14312
  %v14314 = vpop.f32.mrf.mxu0
  %v14315 = vpop.f32.mrf.mxu0
  %14316 = vdwg.mxu0
  %14317 = vmatprep.subr.bf16.mxu0 %v13900
  %14318 = vmatpush1.bf16.msra.mxu0 %v13899
  %14319 = vmatprep.subr.bf16.mxu0 %v13898
  %14320 = vmatpush1.bf16.msra.mxu0 %v13897
  %14321 = vmatprep.subr.bf16.mxu0 %v13896
  %14322 = vmatpush1.bf16.msra.mxu0 %v13895
  %14323 = vmatprep.subr.bf16.mxu0 %v13894
  %14324 = vmatpush1.bf16.msra.mxu0 %v13893
  %14325 = vmatprep.subr.bf16.mxu0 %v13892
  %14326 = vmatpush1.bf16.msra.mxu0 %v13891
  %14327 = vmatprep.subr.bf16.mxu0 %v13890
  %14328 = vmatpush1.bf16.msra.mxu0 %v13889
  %14329 = vmatprep.subr.bf16.mxu0 %v13888
  %14330 = vmatpush1.bf16.msra.mxu0 %v13887
  %14331 = vmatprep.subr.bf16.mxu0 %v13886
  %14332 = vmatpush1.bf16.msra.mxu0 %v13885
  %14333 = vmatprep.subr.bf16.mxu0 %v13916
  %14334 = vmatpush2.bf16.msra.mxu0 %v13915
  %14335 = vmatprep.subr.bf16.mxu0 %v13914
  %14336 = vmatpush2.bf16.msra.mxu0 %v13913
  %14337 = vmatprep.subr.bf16.mxu0 %v13912
  %14338 = vmatpush2.bf16.msra.mxu0 %v13911
  %14339 = vmatprep.subr.bf16.mxu0 %v13910
  %14340 = vmatpush2.bf16.msra.mxu0 %v13909
  %14341 = vmatprep.subr.bf16.mxu0 %v13908
  %14342 = vmatpush2.bf16.msra.mxu0 %v13907
  %14343 = vmatprep.subr.bf16.mxu0 %v13906
  %14344 = vmatpush2.bf16.msra.mxu0 %v13905
  %14345 = vmatprep.subr.bf16.mxu0 %v13904
  %14346 = vmatpush2.bf16.msra.mxu0 %v13903
  %14347 = vmatprep.subr.bf16.mxu0 %v13902
  %14348 = vmatpush2.bf16.msra.mxu0 %v13901
  %14349 = vmatprep.mubr.bf16.mxu0 %v13153
  %14350 = vmatmul.mubr.bf16.gmra.mxu0 %v13152
  %v14351 = vpop.f32.mrf.mxu0
  %v14352 = vadd.f32 %v14311, %v14351
  %v14353 = vpop.f32.mrf.mxu0
  %v14354 = vadd.f32 %v14313, %v14353
  %v14355 = vpop.f32.mrf.mxu0
  %v14356 = vpop.f32.mrf.mxu0
  %14357 = vdwg.mxu0
  %14358 = vmatprep.subr.bf16.mxu0 %v13932
  %14359 = vmatpush1.bf16.msra.mxu0 %v13931
  %14360 = vmatprep.subr.bf16.mxu0 %v13930
  %14361 = vmatpush1.bf16.msra.mxu0 %v13929
  %14362 = vmatprep.subr.bf16.mxu0 %v13928
  %14363 = vmatpush1.bf16.msra.mxu0 %v13927
  %14364 = vmatprep.subr.bf16.mxu0 %v13926
  %14365 = vmatpush1.bf16.msra.mxu0 %v13925
  %14366 = vmatprep.subr.bf16.mxu0 %v13924
  %14367 = vmatpush1.bf16.msra.mxu0 %v13923
  %14368 = vmatprep.subr.bf16.mxu0 %v13922
  %14369 = vmatpush1.bf16.msra.mxu0 %v13921
  %14370 = vmatprep.subr.bf16.mxu0 %v13920
  %14371 = vmatpush1.bf16.msra.mxu0 %v13919
  %14372 = vmatprep.subr.bf16.mxu0 %v13918
  %14373 = vmatpush1.bf16.msra.mxu0 %v13917
  %14374 = vmatprep.subr.bf16.mxu0 %v13948
  %14375 = vmatpush2.bf16.msra.mxu0 %v13947
  %14376 = vmatprep.subr.bf16.mxu0 %v13946
  %14377 = vmatpush2.bf16.msra.mxu0 %v13945
  %14378 = vmatprep.subr.bf16.mxu0 %v13944
  %14379 = vmatpush2.bf16.msra.mxu0 %v13943
  %14380 = vmatprep.subr.bf16.mxu0 %v13942
  %14381 = vmatpush2.bf16.msra.mxu0 %v13941
  %14382 = vmatprep.subr.bf16.mxu0 %v13940
  %14383 = vmatpush2.bf16.msra.mxu0 %v13939
  %14384 = vmatprep.subr.bf16.mxu0 %v13938
  %14385 = vmatpush2.bf16.msra.mxu0 %v13937
  %14386 = vmatprep.subr.bf16.mxu0 %v13936
  %14387 = vmatpush2.bf16.msra.mxu0 %v13935
  %14388 = vmatprep.subr.bf16.mxu0 %v13934
  %14389 = vmatpush2.bf16.msra.mxu0 %v13933
  %14390 = vmatprep.mubr.bf16.mxu0 %v13155
  %14391 = vmatmul.mubr.bf16.gmra.mxu0 %v13154
  %v14392 = vpop.f32.mrf.mxu0
  %v14393 = vadd.f32 %v14352, %v14392
  %v14394 = vpop.f32.mrf.mxu0
  %v14395 = vadd.f32 %v14354, %v14394
  %v14396 = vpop.f32.mrf.mxu0
  %v14397 = vpop.f32.mrf.mxu0
  %14398 = vdwg.mxu0
  %14399 = vmatprep.subr.bf16.mxu0 0
  %14400 = vmatpush1.bf16.msra.mxu0 0
  %14401 = vmatprep.subr.bf16.mxu0 0
  %14402 = vmatpush1.bf16.msra.mxu0 0
  %14403 = vmatprep.subr.bf16.mxu0 0
  %14404 = vmatpush1.bf16.msra.mxu0 0
  %14405 = vmatprep.subr.bf16.mxu0 0
  %14406 = vmatpush1.bf16.msra.mxu0 0
  %14407 = vmatprep.subr.bf16.mxu0 0
  %14408 = vmatpush1.bf16.msra.mxu0 0
  %14409 = vmatprep.subr.bf16.mxu0 0
  %14410 = vmatpush1.bf16.msra.mxu0 0
  %14411 = vmatprep.subr.bf16.mxu0 %v13952
  %14412 = vmatpush1.bf16.msra.mxu0 %v13951
  %14413 = vmatprep.subr.bf16.mxu0 %v13950
  %14414 = vmatpush1.bf16.msra.mxu0 %v13949
  %14415 = vmatprep.subr.bf16.mxu0 0
  %14416 = vmatpush2.bf16.msra.mxu0 0
  %14417 = vmatprep.subr.bf16.mxu0 0
  %14418 = vmatpush2.bf16.msra.mxu0 0
  %14419 = vmatprep.subr.bf16.mxu0 0
  %14420 = vmatpush2.bf16.msra.mxu0 0
  %14421 = vmatprep.subr.bf16.mxu0 0
  %14422 = vmatpush2.bf16.msra.mxu0 0
  %14423 = vmatprep.subr.bf16.mxu0 0
  %14424 = vmatpush2.bf16.msra.mxu0 0
  %14425 = vmatprep.subr.bf16.mxu0 0
  %14426 = vmatpush2.bf16.msra.mxu0 0
  %14427 = vmatprep.subr.bf16.mxu0 0
  %14428 = vmatpush2.bf16.msra.mxu0 0
  %14429 = vmatprep.subr.bf16.mxu0 0
  %14430 = vmatpush2.bf16.msra.mxu0 0
  %14431 = vmatprep.mubr.bf16.mxu0 0
  %14432 = vmatmul.mubr.bf16.gmra.mxu0 %v14151
  %v14433 = vpop.f32.mrf.mxu0
  %v14434 = vadd.f32 %v14393, %v14433
  %v14435 = vpop.f32.mrf.mxu0
  %v14436 = vadd.f32 %v14395, %v14435
  %v14437 = vpop.f32.mrf.mxu0
  %v14438 = vpop.f32.mrf.mxu0
  %14439 = vdwg.mxu0
  %v14440 = vmax.f32 %v14434, 0.0
  %v14441 = vmax.f32 %v14436, 0.0
  %v14442 = vpack.c.bf16 %v14440, %v14440
  %v14443 = vpack.c.bf16 %v14441, %v14441
  %v14444 = vld [vmem:[%s5] sm:$0xf]
  %v14445 = vld [vmem:[%s5 + $0x4] sm:$0xf]
  %v14446 = vld [vmem:[%s5 + $0x8] sm:$0xf]
  %v14447 = vld [vmem:[%s5 + $0xc] sm:$0xf]
  %v14448 = vld [vmem:[%s5 + $0x10] sm:$0xf]
  %v14449 = vld [vmem:[%s5 + $0x14] sm:$0xf]
  %v14450 = vld [vmem:[%s5 + $0x18] sm:$0xf]
  %v14451 = vld [vmem:[%s5 + $0x1c] sm:$0xf]
  %v14452 = vld [vmem:[%s5 + $0x20] sm:$0xf]
  %v14453 = vld [vmem:[%s5 + $0x24] sm:$0xf]
  %v14454 = vld [vmem:[%s5 + $0x28] sm:$0xf]
  %v14455 = vld [vmem:[%s5 + $0x2c] sm:$0xf]
  %v14456 = vld [vmem:[%s5 + $0x30] sm:$0xf]
  %v14457 = vld [vmem:[%s5 + $0x34] sm:$0xf]
  %v14458 = vld [vmem:[%s5 + $0x38] sm:$0xf]
  %v14459 = vld [vmem:[%s5 + $0x3c] sm:$0xf]
  %v14460 = vld [vmem:[%s5 + $0x40] sm:$0xf]
  %v14461 = vld [vmem:[%s5 + $0x44] sm:$0xf]
  %v14462 = vld [vmem:[%s5 + $0x48] sm:$0xf]
  %v14463 = vld [vmem:[%s5 + $0x4c] sm:$0xf]
  %v14464 = vld [vmem:[%s5 + $0x50] sm:$0xf]
  %v14465 = vld [vmem:[%s5 + $0x54] sm:$0xf]
  %v14466 = vld [vmem:[%s5 + $0x58] sm:$0xf]
  %v14467 = vld [vmem:[%s5 + $0x5c] sm:$0xf]
  %v14468 = vld [vmem:[%s5 + $0x60] sm:$0xf]
  %v14469 = vld [vmem:[%s5 + $0x64] sm:$0xf]
  %v14470 = vld [vmem:[%s5 + $0x68] sm:$0xf]
  %v14471 = vld [vmem:[%s5 + $0x6c] sm:$0xf]
  %v14472 = vld [vmem:[%s5 + $0x70] sm:$0xf]
  %v14473 = vld [vmem:[%s5 + $0x74] sm:$0xf]
  %v14474 = vld [vmem:[%s5 + $0x78] sm:$0xf]
  %v14475 = vld [vmem:[%s5 + $0x7c] sm:$0xf]
  %v14476 = vld [vmem:[%s6] sm:$0x1]
  %v14478 = vlaneseq
  %v14479 = vshrl.u32 %v14478, 7
  %v14480 = vsub.s32 0, %v14479
  %v14481 = vrot.slane %v14476, %v14480
  %v14515 = vunpack.c.l.b16 %v14444
  %v14516 = vunpack.c.l.b16 %v14445
  %v14517 = vunpack.c.l.b16 %v14446
  %v14518 = vunpack.c.l.b16 %v14447
  %v14519 = vunpack.c.l.b16 %v14448
  %v14520 = vunpack.c.l.b16 %v14449
  %v14521 = vunpack.c.l.b16 %v14450
  %v14522 = vunpack.c.l.b16 %v14451
  %v14523 = vunpack.c.l.b16 %v14452
  %v14524 = vunpack.c.l.b16 %v14453
  %v14525 = vunpack.c.l.b16 %v14454
  %v14526 = vunpack.c.l.b16 %v14455
  %v14527 = vunpack.c.l.b16 %v14456
  %v14528 = vunpack.c.l.b16 %v14457
  %v14529 = vunpack.c.l.b16 %v14458
  %v14530 = vunpack.c.l.b16 %v14459
  %v14531 = vunpack.c.l.b16 %v14460
  %v14532 = vunpack.c.l.b16 %v14461
  %v14533 = vunpack.c.l.b16 %v14462
  %v14534 = vunpack.c.l.b16 %v14463
  %v14535 = vunpack.c.l.b16 %v14464
  %v14536 = vunpack.c.l.b16 %v14465
  %v14537 = vunpack.c.l.b16 %v14466
  %v14538 = vunpack.c.l.b16 %v14467
  %v14539 = vunpack.c.l.b16 %v14468
  %v14540 = vunpack.c.l.b16 %v14469
  %v14541 = vunpack.c.l.b16 %v14470
  %v14542 = vunpack.c.l.b16 %v14471
  %v14543 = vunpack.c.l.b16 %v14472
  %v14544 = vunpack.c.l.b16 %v14473
  %v14545 = vunpack.c.l.b16 %v14474
  %v14546 = vunpack.c.l.b16 %v14475
  %v14547 = vpack.c.b16 %v14516, %v14515
  %v14548 = vpack.c.b16 %v14518, %v14517
  %v14549 = vpack.c.b16 %v14520, %v14519
  %v14550 = vpack.c.b16 %v14522, %v14521
  %v14551 = vpack.c.b16 %v14524, %v14523
  %v14552 = vpack.c.b16 %v14526, %v14525
  %v14553 = vpack.c.b16 %v14528, %v14527
  %v14554 = vpack.c.b16 %v14530, %v14529
  %v14555 = vpack.c.b16 %v14532, %v14531
  %v14556 = vpack.c.b16 %v14534, %v14533
  %v14557 = vpack.c.b16 %v14536, %v14535
  %v14558 = vpack.c.b16 %v14538, %v14537
  %v14559 = vpack.c.b16 %v14540, %v14539
  %v14560 = vpack.c.b16 %v14542, %v14541
  %v14561 = vpack.c.b16 %v14544, %v14543
  %v14562 = vpack.c.b16 %v14546, %v14545
  %14579 = vmatprep.subr.bf16.mxu0 0
  %14580 = vmatpush1.bf16.msra.mxu0 %v14554
  %14581 = vmatprep.subr.bf16.mxu0 0
  %14582 = vmatpush1.bf16.msra.mxu0 %v14553
  %14583 = vmatprep.subr.bf16.mxu0 0
  %14584 = vmatpush1.bf16.msra.mxu0 %v14552
  %14585 = vmatprep.subr.bf16.mxu0 0
  %14586 = vmatpush1.bf16.msra.mxu0 %v14551
  %14587 = vmatprep.subr.bf16.mxu0 0
  %14588 = vmatpush1.bf16.msra.mxu0 %v14550
  %14589 = vmatprep.subr.bf16.mxu0 0
  %14590 = vmatpush1.bf16.msra.mxu0 %v14549
  %14591 = vmatprep.subr.bf16.mxu0 0
  %14592 = vmatpush1.bf16.msra.mxu0 %v14548
  %14593 = vmatprep.subr.bf16.mxu0 0
  %14594 = vmatpush1.bf16.msra.mxu0 %v14547
  %14595 = vmatprep.subr.bf16.mxu0 0
  %14596 = vmatpush2.bf16.msra.mxu0 %v14562
  %14597 = vmatprep.subr.bf16.mxu0 0
  %14598 = vmatpush2.bf16.msra.mxu0 %v14561
  %14599 = vmatprep.subr.bf16.mxu0 0
  %14600 = vmatpush2.bf16.msra.mxu0 %v14560
  %14601 = vmatprep.subr.bf16.mxu0 0
  %14602 = vmatpush2.bf16.msra.mxu0 %v14559
  %14603 = vmatprep.subr.bf16.mxu0 0
  %14604 = vmatpush2.bf16.msra.mxu0 %v14558
  %14605 = vmatprep.subr.bf16.mxu0 0
  %14606 = vmatpush2.bf16.msra.mxu0 %v14557
  %14607 = vmatprep.subr.bf16.mxu0 0
  %14608 = vmatpush2.bf16.msra.mxu0 %v14556
  %14609 = vmatprep.subr.bf16.mxu0 0
  %14610 = vmatpush2.bf16.msra.mxu0 %v14555
  %14611 = vmatprep.mubr.bf16.mxu0 %v14443
  %14612 = vmatmul.mubr.bf16.gmra.mxu0 %v14442
  %v14613 = vpop.f32.mrf.mxu0
  %v14614 = vadd.f32 %v14481, %v14613
  %v14615 = vpop.f32.mrf.mxu0
  %v14616 = vpop.f32.mrf.mxu0
  %v14617 = vpop.f32.mrf.mxu0
  %14618 = vdwg.mxu0
  %v14619 = vmax.f32 %v14614, 0.0
  %v14620 = vpack.c.bf16 %v14619, %v14619
  %v14621 = vld [vmem:[%s7] sm:$0xf]
  %v14622 = vld [vmem:[%s7 + $0x4] sm:$0xf]
  %v14623 = vld [vmem:[%s7 + $0x8] sm:$0xf]
  %v14624 = vld [vmem:[%s7 + $0xc] sm:$0xf]
  %v14625 = vld [vmem:[%s7 + $0x10] sm:$0xf]
  %v14626 = vld [vmem:[%s7 + $0x14] sm:$0xf]
  %v14627 = vld [vmem:[%s7 + $0x18] sm:$0xf]
  %v14628 = vld [vmem:[%s7 + $0x1c] sm:$0xf]
  %v14629 = vld [vmem:[%s7 + $0x20] sm:$0xf]
  %v14630 = vld [vmem:[%s7 + $0x24] sm:$0xf]
  %v14631 = vld [vmem:[%s7 + $0x28] sm:$0xf]
  %v14632 = vld [vmem:[%s7 + $0x2c] sm:$0xf]
  %v14633 = vld [vmem:[%s7 + $0x30] sm:$0xf]
  %v14634 = vld [vmem:[%s7 + $0x34] sm:$0xf]
  %v14635 = vld [vmem:[%s7 + $0x38] sm:$0xf]
  %v14636 = vld [vmem:[%s7 + $0x3c] sm:$0xf]
  %v14637 = vld [vmem:[%s8] sm:$0x1]
  %v14639 = vlaneseq
  %v14640 = vshrl.u32 %v14639, 7
  %v14641 = vsub.s32 0, %v14640
  %v14642 = vrot.slane %v14637, %v14641
  %v14660 = vunpack.c.l.b16 %v14621
  %v14661 = vunpack.c.l.b16 %v14622
  %v14662 = vunpack.c.l.b16 %v14623
  %v14663 = vunpack.c.l.b16 %v14624
  %v14664 = vunpack.c.l.b16 %v14625
  %v14665 = vunpack.c.l.b16 %v14626
  %v14666 = vunpack.c.l.b16 %v14627
  %v14667 = vunpack.c.l.b16 %v14628
  %v14668 = vunpack.c.l.b16 %v14629
  %v14669 = vunpack.c.l.b16 %v14630
  %v14670 = vunpack.c.l.b16 %v14631
  %v14671 = vunpack.c.l.b16 %v14632
  %v14672 = vunpack.c.l.b16 %v14633
  %v14673 = vunpack.c.l.b16 %v14634
  %v14674 = vunpack.c.l.b16 %v14635
  %v14675 = vunpack.c.l.b16 %v14636
  %v14676 = vpack.c.b16 %v14661, %v14660
  %v14677 = vpack.c.b16 %v14663, %v14662
  %v14678 = vpack.c.b16 %v14665, %v14664
  %v14679 = vpack.c.b16 %v14667, %v14666
  %v14680 = vpack.c.b16 %v14669, %v14668
  %v14681 = vpack.c.b16 %v14671, %v14670
  %v14682 = vpack.c.b16 %v14673, %v14672
  %v14683 = vpack.c.b16 %v14675, %v14674
  %14692 = vmatprep.subr.bf16.mxu0 0
  %14693 = vmatpush1.bf16.msra.mxu0 %v14683
  %14694 = vmatprep.subr.bf16.mxu0 0
  %14695 = vmatpush1.bf16.msra.mxu0 %v14682
  %14696 = vmatprep.subr.bf16.mxu0 0
  %14697 = vmatpush1.bf16.msra.mxu0 %v14681
  %14698 = vmatprep.subr.bf16.mxu0 0
  %14699 = vmatpush1.bf16.msra.mxu0 %v14680
  %14700 = vmatprep.subr.bf16.mxu0 0
  %14701 = vmatpush1.bf16.msra.mxu0 %v14679
  %14702 = vmatprep.subr.bf16.mxu0 0
  %14703 = vmatpush1.bf16.msra.mxu0 %v14678
  %14704 = vmatprep.subr.bf16.mxu0 0
  %14705 = vmatpush1.bf16.msra.mxu0 %v14677
  %14706 = vmatprep.subr.bf16.mxu0 0
  %14707 = vmatpush1.bf16.msra.mxu0 %v14676
  %14708 = vmatprep.subr.bf16.mxu0 0
  %14709 = vmatpush2.bf16.msra.mxu0 0
  %14710 = vmatprep.subr.bf16.mxu0 0
  %14711 = vmatpush2.bf16.msra.mxu0 0
  %14712 = vmatprep.subr.bf16.mxu0 0
  %14713 = vmatpush2.bf16.msra.mxu0 0
  %14714 = vmatprep.subr.bf16.mxu0 0
  %14715 = vmatpush2.bf16.msra.mxu0 0
  %14716 = vmatprep.subr.bf16.mxu0 0
  %14717 = vmatpush2.bf16.msra.mxu0 0
  %14718 = vmatprep.subr.bf16.mxu0 0
  %14719 = vmatpush2.bf16.msra.mxu0 0
  %14720 = vmatprep.subr.bf16.mxu0 0
  %14721 = vmatpush2.bf16.msra.mxu0 0
  %14722 = vmatprep.subr.bf16.mxu0 0
  %14723 = vmatpush2.bf16.msra.mxu0 0
  %14724 = vmatprep.mubr.bf16.mxu0 0
  %14725 = vmatmul.mubr.bf16.gmra.mxu0 %v14620
  %v14726 = vpop.f32.mrf.mxu0
  %v14727 = vadd.f32 %v14642, %v14726
  %v14728 = vpop.f32.mrf.mxu0
  %v14729 = vpop.f32.mrf.mxu0
  %v14730 = vpop.f32.mrf.mxu0
  %14731 = vdwg.mxu0
  %14732 = vst [vmem:[%s9] sm:$0xff] %v14727
  // Predicated region
  $region38: #{simple_model_forward.1} parent=0 // pred_check
    _
  $region39: #{simple_model_forward.1} parent=0 // pred_check_branch
    %14734 = sbr.rel (0) target = $region41
  $region40: #{simple_model_forward.1} parent=0 // pred_region
    _
  $region41: #{simple_model_forward.1} parent=0 // pred_fallthru
    _
  // Predicated region
  $region42: #{simple_model_forward.1} parent=0 // pred_check
    _
  $region43: #{simple_model_forward.1} parent=0 // pred_check_branch
    %14736 = sbr.rel (0) target = $region45
  $region44: #{simple_model_forward.1} parent=0 // pred_region
    _
  $region45: #{simple_model_forward.1} parent=0 // pred_fallthru
    _

</llo_original>
